<compile_context>
chip_gen: v7x
topology: tpu7x:2x2x1
jax: 0.10.0
libtpu: 0.0.40
codegen_flags: <defaults>
</compile_context>

<pallas_src>
import functools

import jax
import jax.numpy as jnp
from jax.experimental import pallas as pl
from jax.experimental.pallas import tpu as pltpu

LABEL_RANGES = [(151, 268), (281, 285), (30, 32), (33, 37), (80, 100),
                (365, 382), (389, 397), (118, 121), (300, 319)]
NUM_LABELS = len(LABEL_RANGES)   # torch forward: logits = logits[:, :num_labels]

C1 = 16       # stand-in backbone width
NCLS = 1000   # ImageNet classes produced by the backbone head


# --------------------------- fused backbone kernel ---------------------------

def _fused_backbone_kernel(H, W,
                           x_ref, meanpad_ref,
                           w1_ref, b1_ref, w2_ref, b2_ref, w3_ref, b3_ref,
                           wfc_ref, bfc_ref,
                           o_ref,
                           pad_x, pad_a, pad_b):
    """One grid step == one image.  Everything after the input DMA lives in VMEM."""
    HW = H * W

    def conv3x3(pad_ref, w_ref, b_ref, cin):
        # "same" 3x3 conv as 9 shifted-window MXU matmuls, f32 accumulation.
        acc = jnp.zeros((HW, C1), jnp.float32)
        for dy in range(3):
            for dx in range(3):
                t = dy * 3 + dx
                win = pad_ref[dy:dy + H, dx:dx + W, :].reshape(HW, cin)
                acc = acc + jnp.dot(win, w_ref[t],
                                    preferred_element_type=jnp.float32)
        return acc + b_ref[...]

    # ---- conv1 with the normalization folded into (w1, b1) ----
    # Border = raw per-channel mean so that padded taps contribute exactly
    # zero after the fold (== zero-padding the normalized image).
    pad_x[...] = jnp.broadcast_to(meanpad_ref[...], (H + 2, W + 2, 3))
    pad_x[1:H + 1, 1:W + 1, :] = x_ref[0]
    h1 = jnp.maximum(conv3x3(pad_x, w1_ref, b1_ref, 3), 0.0)        # (HW, C1)

    # ---- residual block: conv2 -> relu -> conv3 -> (+ h1) -> relu ----
    pad_a[...] = jnp.zeros_like(pad_a)
    pad_a[1:H + 1, 1:W + 1, :] = h1.reshape(H, W, C1)
    h2 = jnp.maximum(conv3x3(pad_a, w2_ref, b2_ref, C1), 0.0)       # (HW, C1)

    pad_b[...] = jnp.zeros_like(pad_b)
    pad_b[1:H + 1, 1:W + 1, :] = h2.reshape(H, W, C1)
    h3 = conv3x3(pad_b, w3_ref, b3_ref, C1)                         # (HW, C1)

    # Residual skip re-read from VMEM (pad_a still holds padded h1).
    skip = pad_a[1:H + 1, 1:W + 1, :].reshape(HW, C1)
    h4 = jnp.maximum(h3 + skip, 0.0)                                # (HW, C1)

    # ---- global average pool + FC(1000) head, still fully in VMEM ----
    pooled = jnp.sum(h4, axis=0, keepdims=True) * (1.0 / HW)        # (1, C1)
    logits = jnp.dot(pooled, wfc_ref[...],
                     preferred_element_type=jnp.float32) + bfc_ref[...]
    o_ref[0] = logits                                               # (1, NCLS)


def tsipras_backbone(x, params):
    """x: NHWC float32 [N, H, W, 3] -> full 1000-class logits [N, 1000]."""
    N, H, W, C = x.shape
    assert C == 3

    # image_preprocess with bgr=True default: reversed ImageNet mean/std.
    mean = jnp.array([0.485, 0.456, 0.406][::-1], jnp.float32)
    std = jnp.array([0.229, 0.224, 0.225][::-1], jnp.float32)
    inv_std = 1.0 / std

    # Fold (x - mean) * (1/std) into conv1 (exact; see border handling above).
    w1f = params['w1'] * inv_std[None, :, None]                      # (9, 3, C1)
    b1f = params['b1'] - jnp.einsum('tco,c->o', params['w1'], mean * inv_std)

    kernel = functools.partial(_fused_backbone_kernel, H, W)

    logits3 = pl.pallas_call(
        kernel,
        out_shape=jax.ShapeDtypeStruct((N, 1, NCLS), jnp.float32),
        grid=(N,),
        in_specs=[
            pl.BlockSpec((1, H, W, 3), lambda i: (i, 0, 0, 0)),      # image i
            pl.BlockSpec((1, 1, 3), lambda i: (0, 0, 0)),            # raw mean (pad value)
            pl.BlockSpec((9, 3, C1), lambda i: (0, 0, 0)),           # w1 (folded)
            pl.BlockSpec((1, C1), lambda i: (0, 0)),                 # b1 (folded)
            pl.BlockSpec((9, C1, C1), lambda i: (0, 0, 0)),          # w2
            pl.BlockSpec((1, C1), lambda i: (0, 0)),                 # b2
            pl.BlockSpec((9, C1, C1), lambda i: (0, 0, 0)),          # w3
            pl.BlockSpec((1, C1), lambda i: (0, 0)),                 # b3
            pl.BlockSpec((C1, NCLS), lambda i: (0, 0)),              # wfc
            pl.BlockSpec((1, NCLS), lambda i: (0, 0)),               # bfc
        ],
        out_specs=pl.BlockSpec((1, 1, NCLS), lambda i: (i, 0, 0)),
        scratch_shapes=[
            pltpu.VMEM((H + 2, W + 2, 3), jnp.float32),    # padded raw image
            pltpu.VMEM((H + 2, W + 2, C1), jnp.float32),   # padded h1 (+ skip source)
            pltpu.VMEM((H + 2, W + 2, C1), jnp.float32),   # padded h2
        ],
        compiler_params=pltpu.CompilerParams(
            dimension_semantics=("parallel",)),            # batch split across TCs (v7x)
    )(x, mean.reshape(1, 1, 3),
      w1f, b1f.reshape(1, C1),
      params['w2'], params['b2'].reshape(1, C1),
      params['w3'], params['b3'].reshape(1, C1),
      params['wfc'], params['bfc'].reshape(1, NCLS))

    return logits3.reshape(N, NCLS)


# --------------------------------- forward ----------------------------------

def tsipras_cnn_forward(x, params, wrap_outputs=True):
    logits_full = tsipras_backbone(x, params)
    # Matches the torch spec literally: logits[:, :len(LABEL_RANGES)].
    logits = logits_full[:, :NUM_LABELS]
    if wrap_outputs:
        # emulated add_default_end_points
        return {'logits': logits,
                'prob': jax.nn.softmax(logits, axis=-1),
                'pred': jnp.argmax(logits, axis=-1)}
    return logits


def init_params(key):
    ks = jax.random.split(key, 4)

    def he(k, shape, fan_in):
        return jax.random.normal(k, shape, jnp.float32) * jnp.sqrt(2.0 / fan_in)

    return {
        'w1': he(ks[0], (9, 3, C1), 9 * 3),      # taps-major, (tap, cin, cout)
        'b1': jnp.zeros((C1,), jnp.float32),
        'w2': he(ks[1], (9, C1, C1), 9 * C1),
        'b2': jnp.zeros((C1,), jnp.float32),
        'w3': he(ks[2], (9, C1, C1), 9 * C1),
        'b3': jnp.zeros((C1,), jnp.float32),
        'wfc': he(ks[3], (C1, NCLS), C1),
        'bfc': jnp.zeros((NCLS,), jnp.float32),
    }


# ----------------------------------- main ------------------------------------

if __name__ == "__main__":
    key = jax.random.PRNGKey(0)
    x = jax.random.uniform(key, (2, 16, 16, 3), dtype=jnp.float32)   # NHWC image
    params = init_params(jax.random.PRNGKey(1))

    fwd = jax.jit(tsipras_cnn_forward)
    out = fwd(x, params)
    jax.block_until_ready(out)

    assert out['logits'].shape == (2, NUM_LABELS)
    assert out['prob'].shape == (2, NUM_LABELS)
    assert out['pred'].shape == (2,)
    print("KERNEL_OK")
</pallas_src>

<mosaic_0001>
module attributes {stable_mosaic.version = 11 : i64} {
  func.func @_fused_backbone_kernel(%arg0: i32, %arg1: memref<1x16x16x3xf32, #tpu.memory_space<vmem>>, %arg2: memref<1x1x3xf32, #tpu.memory_space<vmem>>, %arg3: memref<9x3x16xf32, #tpu.memory_space<vmem>>, %arg4: memref<1x16xf32, #tpu.memory_space<vmem>>, %arg5: memref<9x16x16xf32, #tpu.memory_space<vmem>>, %arg6: memref<1x16xf32, #tpu.memory_space<vmem>>, %arg7: memref<9x16x16xf32, #tpu.memory_space<vmem>>, %arg8: memref<1x16xf32, #tpu.memory_space<vmem>>, %arg9: memref<16x1000xf32, #tpu.memory_space<vmem>>, %arg10: memref<1x1000xf32, #tpu.memory_space<vmem>>, %arg11: memref<1x1x1000xf32, #tpu.memory_space<vmem>>, %arg12: memref<18x18x3xf32, #tpu.memory_space<vmem>>, %arg13: memref<18x18x16xf32, #tpu.memory_space<vmem>>, %arg14: memref<18x18x16xf32, #tpu.memory_space<vmem>>) attributes {dimension_semantics = [#tpu.dimension_semantics<parallel>], iteration_bounds = array<i64: 2>, scalar_prefetch = 0 : i64, scratch_operands = 3 : i64, tpu.core_type = #tpu.core_type<tc>, window_params = [{transform_indices = @transform_0, window_bounds = array<i64: 1, 16, 16, 3>}, {pipeline_mode = #tpu.pipeline_mode<synchronous>, transform_indices = @transform_1, window_bounds = array<i64: 1, 1, 3>}, {pipeline_mode = #tpu.pipeline_mode<synchronous>, transform_indices = @transform_2, window_bounds = array<i64: 9, 3, 16>}, {pipeline_mode = #tpu.pipeline_mode<synchronous>, transform_indices = @transform_3, window_bounds = array<i64: 1, 16>}, {pipeline_mode = #tpu.pipeline_mode<synchronous>, transform_indices = @transform_4, window_bounds = array<i64: 9, 16, 16>}, {pipeline_mode = #tpu.pipeline_mode<synchronous>, transform_indices = @transform_5, window_bounds = array<i64: 1, 16>}, {pipeline_mode = #tpu.pipeline_mode<synchronous>, transform_indices = @transform_6, window_bounds = array<i64: 9, 16, 16>}, {pipeline_mode = #tpu.pipeline_mode<synchronous>, transform_indices = @transform_7, window_bounds = array<i64: 1, 16>}, {pipeline_mode = #tpu.pipeline_mode<synchronous>, transform_indices = @transform_8, window_bounds = array<i64: 16, 1000>}, {pipeline_mode = #tpu.pipeline_mode<synchronous>, transform_indices = @transform_9, window_bounds = array<i64: 1, 1000>}, {transform_indices = @transform_10, window_bounds = array<i64: 1, 1, 1000>}]} {
    %c0 = arith.constant 0 : index
    %c0_0 = arith.constant 0 : index
    %c0_1 = arith.constant 0 : index
    %0 = vector.load %arg2[%c0, %c0_0, %c0_1] : memref<1x1x3xf32, #tpu.memory_space<vmem>>, vector<1x1x3xf32>
    %1 = vector.shape_cast %0 : vector<1x1x3xf32> to vector<1x1x3xf32>
    %2 = vector.broadcast %1 : vector<1x1x3xf32> to vector<18x18x3xf32>
    %c0_2 = arith.constant 0 : index
    %c0_3 = arith.constant 0 : index
    %c0_4 = arith.constant 0 : index
    %3 = vector.load %arg12[%c0_2, %c0_3, %c0_4] : memref<18x18x3xf32, #tpu.memory_space<vmem>>, vector<18x18x3xf32>
    tpu.vector_store %arg12[%c0_2, %c0_3, %c0_4], %2 {strides = array<i32>} : memref<18x18x3xf32, #tpu.memory_space<vmem>>, vector<18x18x3xf32>,
    %c0_5 = arith.constant 0 : index
    %c0_6 = arith.constant 0 : index
    %c0_7 = arith.constant 0 : index
    %c0_8 = arith.constant 0 : index
    %4 = vector.load %arg1[%c0_5, %c0_6, %c0_7, %c0_8] : memref<1x16x16x3xf32, #tpu.memory_space<vmem>>, vector<1x16x16x3xf32>
    %5 = vector.shape_cast %4 : vector<1x16x16x3xf32> to vector<16x16x3xf32>
    %c1 = arith.constant 1 : index
    %c1_9 = arith.constant 1 : index
    %c0_10 = arith.constant 0 : index
    %6 = vector.load %arg12[%c1, %c1_9, %c0_10] : memref<18x18x3xf32, #tpu.memory_space<vmem>>, vector<16x16x3xf32>
    tpu.vector_store %arg12[%c1, %c1_9, %c0_10], %5 {strides = array<i32>} : memref<18x18x3xf32, #tpu.memory_space<vmem>>, vector<16x16x3xf32>,
    %cst = arith.constant 0.000000e+00 : f32
    %7 = vector.broadcast %cst : f32 to vector<256x16xf32>
    %c0_11 = arith.constant 0 : index
    %c0_12 = arith.constant 0 : index
    %c0_13 = arith.constant 0 : index
    %8 = vector.load %arg12[%c0_11, %c0_12, %c0_13] : memref<18x18x3xf32, #tpu.memory_space<vmem>>, vector<16x16x3xf32>
    %9 = vector.shape_cast %8 : vector<16x16x3xf32> to vector<256x3xf32>
    %c0_14 = arith.constant 0 : index
    %c0_15 = arith.constant 0 : index
    %c0_16 = arith.constant 0 : index
    %10 = vector.load %arg3[%c0_14, %c0_15, %c0_16] : memref<9x3x16xf32, #tpu.memory_space<vmem>>, vector<1x3x16xf32>
    %11 = vector.shape_cast %10 : vector<1x3x16xf32> to vector<3x16xf32>
    %cst_17 = arith.constant dense<0.000000e+00> : vector<256x16xf32>
    %12 = tpu.matmul %9, %11, %cst_17 {dimension_numbers = #tpu.dot_dimension_numbers<[1], [0], [0], [1], [0, 0, 1, 1], [], []>} : vector<256x3xf32>, vector<3x16xf32>, vector<256x16xf32> -> vector<256x16xf32>
    %13 = arith.addf %7, %12 : vector<256x16xf32>
    %c0_18 = arith.constant 0 : index
    %c1_19 = arith.constant 1 : index
    %c0_20 = arith.constant 0 : index
    %14 = vector.load %arg12[%c0_18, %c1_19, %c0_20] : memref<18x18x3xf32, #tpu.memory_space<vmem>>, vector<16x16x3xf32>
    %15 = vector.shape_cast %14 : vector<16x16x3xf32> to vector<256x3xf32>
    %c1_21 = arith.constant 1 : index
    %c0_22 = arith.constant 0 : index
    %c0_23 = arith.constant 0 : index
    %16 = vector.load %arg3[%c1_21, %c0_22, %c0_23] : memref<9x3x16xf32, #tpu.memory_space<vmem>>, vector<1x3x16xf32>
    %17 = vector.shape_cast %16 : vector<1x3x16xf32> to vector<3x16xf32>
    %cst_24 = arith.constant dense<0.000000e+00> : vector<256x16xf32>
    %18 = tpu.matmul %15, %17, %cst_24 {dimension_numbers = #tpu.dot_dimension_numbers<[1], [0], [0], [1], [0, 0, 1, 1], [], []>} : vector<256x3xf32>, vector<3x16xf32>, vector<256x16xf32> -> vector<256x16xf32>
    %19 = arith.addf %13, %18 : vector<256x16xf32>
    %c0_25 = arith.constant 0 : index
    %c2 = arith.constant 2 : index
    %c0_26 = arith.constant 0 : index
    %20 = vector.load %arg12[%c0_25, %c2, %c0_26] : memref<18x18x3xf32, #tpu.memory_space<vmem>>, vector<16x16x3xf32>
    %21 = vector.shape_cast %20 : vector<16x16x3xf32> to vector<256x3xf32>
    %c2_27 = arith.constant 2 : index
    %c0_28 = arith.constant 0 : index
    %c0_29 = arith.constant 0 : index
    %22 = vector.load %arg3[%c2_27, %c0_28, %c0_29] : memref<9x3x16xf32, #tpu.memory_space<vmem>>, vector<1x3x16xf32>
    %23 = vector.shape_cast %22 : vector<1x3x16xf32> to vector<3x16xf32>
    %cst_30 = arith.constant dense<0.000000e+00> : vector<256x16xf32>
    %24 = tpu.matmul %21, %23, %cst_30 {dimension_numbers = #tpu.dot_dimension_numbers<[1], [0], [0], [1], [0, 0, 1, 1], [], []>} : vector<256x3xf32>, vector<3x16xf32>, vector<256x16xf32> -> vector<256x16xf32>
    %25 = arith.addf %19, %24 : vector<256x16xf32>
    %c1_31 = arith.constant 1 : index
    %c0_32 = arith.constant 0 : index
    %c0_33 = arith.constant 0 : index
    %26 = vector.load %arg12[%c1_31, %c0_32, %c0_33] : memref<18x18x3xf32, #tpu.memory_space<vmem>>, vector<16x16x3xf32>
    %27 = vector.shape_cast %26 : vector<16x16x3xf32> to vector<256x3xf32>
    %c3 = arith.constant 3 : index
    %c0_34 = arith.constant 0 : index
    %c0_35 = arith.constant 0 : index
    %28 = vector.load %arg3[%c3, %c0_34, %c0_35] : memref<9x3x16xf32, #tpu.memory_space<vmem>>, vector<1x3x16xf32>
    %29 = vector.shape_cast %28 : vector<1x3x16xf32> to vector<3x16xf32>
    %cst_36 = arith.constant dense<0.000000e+00> : vector<256x16xf32>
    %30 = tpu.matmul %27, %29, %cst_36 {dimension_numbers = #tpu.dot_dimension_numbers<[1], [0], [0], [1], [0, 0, 1, 1], [], []>} : vector<256x3xf32>, vector<3x16xf32>, vector<256x16xf32> -> vector<256x16xf32>
    %31 = arith.addf %25, %30 : vector<256x16xf32>
    %c1_37 = arith.constant 1 : index
    %c1_38 = arith.constant 1 : index
    %c0_39 = arith.constant 0 : index
    %32 = vector.load %arg12[%c1_37, %c1_38, %c0_39] : memref<18x18x3xf32, #tpu.memory_space<vmem>>, vector<16x16x3xf32>
    %33 = vector.shape_cast %32 : vector<16x16x3xf32> to vector<256x3xf32>
    %c4 = arith.constant 4 : index
    %c0_40 = arith.constant 0 : index
    %c0_41 = arith.constant 0 : index
    %34 = vector.load %arg3[%c4, %c0_40, %c0_41] : memref<9x3x16xf32, #tpu.memory_space<vmem>>, vector<1x3x16xf32>
    %35 = vector.shape_cast %34 : vector<1x3x16xf32> to vector<3x16xf32>
    %cst_42 = arith.constant dense<0.000000e+00> : vector<256x16xf32>
    %36 = tpu.matmul %33, %35, %cst_42 {dimension_numbers = #tpu.dot_dimension_numbers<[1], [0], [0], [1], [0, 0, 1, 1], [], []>} : vector<256x3xf32>, vector<3x16xf32>, vector<256x16xf32> -> vector<256x16xf32>
    %37 = arith.addf %31, %36 : vector<256x16xf32>
    %c1_43 = arith.constant 1 : index
    %c2_44 = arith.constant 2 : index
    %c0_45 = arith.constant 0 : index
    %38 = vector.load %arg12[%c1_43, %c2_44, %c0_45] : memref<18x18x3xf32, #tpu.memory_space<vmem>>, vector<16x16x3xf32>
    %39 = vector.shape_cast %38 : vector<16x16x3xf32> to vector<256x3xf32>
    %c5 = arith.constant 5 : index
    %c0_46 = arith.constant 0 : index
    %c0_47 = arith.constant 0 : index
    %40 = vector.load %arg3[%c5, %c0_46, %c0_47] : memref<9x3x16xf32, #tpu.memory_space<vmem>>, vector<1x3x16xf32>
    %41 = vector.shape_cast %40 : vector<1x3x16xf32> to vector<3x16xf32>
    %cst_48 = arith.constant dense<0.000000e+00> : vector<256x16xf32>
    %42 = tpu.matmul %39, %41, %cst_48 {dimension_numbers = #tpu.dot_dimension_numbers<[1], [0], [0], [1], [0, 0, 1, 1], [], []>} : vector<256x3xf32>, vector<3x16xf32>, vector<256x16xf32> -> vector<256x16xf32>
    %43 = arith.addf %37, %42 : vector<256x16xf32>
    %c2_49 = arith.constant 2 : index
    %c0_50 = arith.constant 0 : index
    %c0_51 = arith.constant 0 : index
    %44 = vector.load %arg12[%c2_49, %c0_50, %c0_51] : memref<18x18x3xf32, #tpu.memory_space<vmem>>, vector<16x16x3xf32>
    %45 = vector.shape_cast %44 : vector<16x16x3xf32> to vector<256x3xf32>
    %c6 = arith.constant 6 : index
    %c0_52 = arith.constant 0 : index
    %c0_53 = arith.constant 0 : index
    %46 = vector.load %arg3[%c6, %c0_52, %c0_53] : memref<9x3x16xf32, #tpu.memory_space<vmem>>, vector<1x3x16xf32>
    %47 = vector.shape_cast %46 : vector<1x3x16xf32> to vector<3x16xf32>
    %cst_54 = arith.constant dense<0.000000e+00> : vector<256x16xf32>
    %48 = tpu.matmul %45, %47, %cst_54 {dimension_numbers = #tpu.dot_dimension_numbers<[1], [0], [0], [1], [0, 0, 1, 1], [], []>} : vector<256x3xf32>, vector<3x16xf32>, vector<256x16xf32> -> vector<256x16xf32>
    %49 = arith.addf %43, %48 : vector<256x16xf32>
    %c2_55 = arith.constant 2 : index
    %c1_56 = arith.constant 1 : index
    %c0_57 = arith.constant 0 : index
    %50 = vector.load %arg12[%c2_55, %c1_56, %c0_57] : memref<18x18x3xf32, #tpu.memory_space<vmem>>, vector<16x16x3xf32>
    %51 = vector.shape_cast %50 : vector<16x16x3xf32> to vector<256x3xf32>
    %c7 = arith.constant 7 : index
    %c0_58 = arith.constant 0 : index
    %c0_59 = arith.constant 0 : index
    %52 = vector.load %arg3[%c7, %c0_58, %c0_59] : memref<9x3x16xf32, #tpu.memory_space<vmem>>, vector<1x3x16xf32>
    %53 = vector.shape_cast %52 : vector<1x3x16xf32> to vector<3x16xf32>
    %cst_60 = arith.constant dense<0.000000e+00> : vector<256x16xf32>
    %54 = tpu.matmul %51, %53, %cst_60 {dimension_numbers = #tpu.dot_dimension_numbers<[1], [0], [0], [1], [0, 0, 1, 1], [], []>} : vector<256x3xf32>, vector<3x16xf32>, vector<256x16xf32> -> vector<256x16xf32>
    %55 = arith.addf %49, %54 : vector<256x16xf32>
    %c2_61 = arith.constant 2 : index
    %c2_62 = arith.constant 2 : index
    %c0_63 = arith.constant 0 : index
    %56 = vector.load %arg12[%c2_61, %c2_62, %c0_63] : memref<18x18x3xf32, #tpu.memory_space<vmem>>, vector<16x16x3xf32>
    %57 = vector.shape_cast %56 : vector<16x16x3xf32> to vector<256x3xf32>
    %c8 = arith.constant 8 : index
    %c0_64 = arith.constant 0 : index
    %c0_65 = arith.constant 0 : index
    %58 = vector.load %arg3[%c8, %c0_64, %c0_65] : memref<9x3x16xf32, #tpu.memory_space<vmem>>, vector<1x3x16xf32>
    %59 = vector.shape_cast %58 : vector<1x3x16xf32> to vector<3x16xf32>
    %cst_66 = arith.constant dense<0.000000e+00> : vector<256x16xf32>
    %60 = tpu.matmul %57, %59, %cst_66 {dimension_numbers = #tpu.dot_dimension_numbers<[1], [0], [0], [1], [0, 0, 1, 1], [], []>} : vector<256x3xf32>, vector<3x16xf32>, vector<256x16xf32> -> vector<256x16xf32>
    %61 = arith.addf %55, %60 : vector<256x16xf32>
    %c0_67 = arith.constant 0 : index
    %c0_68 = arith.constant 0 : index
    %62 = vector.load %arg4[%c0_67, %c0_68] : memref<1x16xf32, #tpu.memory_space<vmem>>, vector<1x16xf32>
    %63 = vector.broadcast %62 : vector<1x16xf32> to vector<256x16xf32>
    %64 = arith.addf %61, %63 : vector<256x16xf32>
    %cst_69 = arith.constant 0.000000e+00 : f32
    %65 = vector.broadcast %cst_69 : f32 to vector<256x16xf32>
    %66 = arith.maximumf %64, %65 : vector<256x16xf32>
    %cst_70 = arith.constant 0.000000e+00 : f32
    %67 = vector.broadcast %cst_70 : f32 to vector<18x18x16xf32>
    %c0_71 = arith.constant 0 : index
    %c0_72 = arith.constant 0 : index
    %c0_73 = arith.constant 0 : index
    %68 = vector.load %arg13[%c0_71, %c0_72, %c0_73] : memref<18x18x16xf32, #tpu.memory_space<vmem>>, vector<18x18x16xf32>
    tpu.vector_store %arg13[%c0_71, %c0_72, %c0_73], %67 {strides = array<i32>} : memref<18x18x16xf32, #tpu.memory_space<vmem>>, vector<18x18x16xf32>,
    %69 = vector.shape_cast %66 : vector<256x16xf32> to vector<16x16x16xf32>
    %c1_74 = arith.constant 1 : index
    %c1_75 = arith.constant 1 : index
    %c0_76 = arith.constant 0 : index
    %70 = vector.load %arg13[%c1_74, %c1_75, %c0_76] : memref<18x18x16xf32, #tpu.memory_space<vmem>>, vector<16x16x16xf32>
    tpu.vector_store %arg13[%c1_74, %c1_75, %c0_76], %69 {strides = array<i32>} : memref<18x18x16xf32, #tpu.memory_space<vmem>>, vector<16x16x16xf32>,
    %cst_77 = arith.constant 0.000000e+00 : f32
    %71 = vector.broadcast %cst_77 : f32 to vector<256x16xf32>
    %c0_78 = arith.constant 0 : index
    %c0_79 = arith.constant 0 : index
    %c0_80 = arith.constant 0 : index
    %72 = vector.load %arg13[%c0_78, %c0_79, %c0_80] : memref<18x18x16xf32, #tpu.memory_space<vmem>>, vector<16x16x16xf32>
    %73 = vector.shape_cast %72 : vector<16x16x16xf32> to vector<256x16xf32>
    %c0_81 = arith.constant 0 : index
    %c0_82 = arith.constant 0 : index
    %c0_83 = arith.constant 0 : index
    %74 = vector.load %arg5[%c0_81, %c0_82, %c0_83] : memref<9x16x16xf32, #tpu.memory_space<vmem>>, vector<1x16x16xf32>
    %75 = vector.shape_cast %74 : vector<1x16x16xf32> to vector<16x16xf32>
    %cst_84 = arith.constant dense<0.000000e+00> : vector<256x16xf32>
    %76 = tpu.matmul %73, %75, %cst_84 {dimension_numbers = #tpu.dot_dimension_numbers<[1], [0], [0], [1], [0, 0, 1, 1], [], []>} : vector<256x16xf32>, vector<16x16xf32>, vector<256x16xf32> -> vector<256x16xf32>
    %77 = arith.addf %71, %76 : vector<256x16xf32>
    %c0_85 = arith.constant 0 : index
    %c1_86 = arith.constant 1 : index
    %c0_87 = arith.constant 0 : index
    %78 = vector.load %arg13[%c0_85, %c1_86, %c0_87] : memref<18x18x16xf32, #tpu.memory_space<vmem>>, vector<16x16x16xf32>
    %79 = vector.shape_cast %78 : vector<16x16x16xf32> to vector<256x16xf32>
    %c1_88 = arith.constant 1 : index
    %c0_89 = arith.constant 0 : index
    %c0_90 = arith.constant 0 : index
    %80 = vector.load %arg5[%c1_88, %c0_89, %c0_90] : memref<9x16x16xf32, #tpu.memory_space<vmem>>, vector<1x16x16xf32>
    %81 = vector.shape_cast %80 : vector<1x16x16xf32> to vector<16x16xf32>
    %cst_91 = arith.constant dense<0.000000e+00> : vector<256x16xf32>
    %82 = tpu.matmul %79, %81, %cst_91 {dimension_numbers = #tpu.dot_dimension_numbers<[1], [0], [0], [1], [0, 0, 1, 1], [], []>} : vector<256x16xf32>, vector<16x16xf32>, vector<256x16xf32> -> vector<256x16xf32>
    %83 = arith.addf %77, %82 : vector<256x16xf32>
    %c0_92 = arith.constant 0 : index
    %c2_93 = arith.constant 2 : index
    %c0_94 = arith.constant 0 : index
    %84 = vector.load %arg13[%c0_92, %c2_93, %c0_94] : memref<18x18x16xf32, #tpu.memory_space<vmem>>, vector<16x16x16xf32>
    %85 = vector.shape_cast %84 : vector<16x16x16xf32> to vector<256x16xf32>
    %c2_95 = arith.constant 2 : index
    %c0_96 = arith.constant 0 : index
    %c0_97 = arith.constant 0 : index
    %86 = vector.load %arg5[%c2_95, %c0_96, %c0_97] : memref<9x16x16xf32, #tpu.memory_space<vmem>>, vector<1x16x16xf32>
    %87 = vector.shape_cast %86 : vector<1x16x16xf32> to vector<16x16xf32>
    %cst_98 = arith.constant dense<0.000000e+00> : vector<256x16xf32>
    %88 = tpu.matmul %85, %87, %cst_98 {dimension_numbers = #tpu.dot_dimension_numbers<[1], [0], [0], [1], [0, 0, 1, 1], [], []>} : vector<256x16xf32>, vector<16x16xf32>, vector<256x16xf32> -> vector<256x16xf32>
    %89 = arith.addf %83, %88 : vector<256x16xf32>
    %c1_99 = arith.constant 1 : index
    %c0_100 = arith.constant 0 : index
    %c0_101 = arith.constant 0 : index
    %90 = vector.load %arg13[%c1_99, %c0_100, %c0_101] : memref<18x18x16xf32, #tpu.memory_space<vmem>>, vector<16x16x16xf32>
    %91 = vector.shape_cast %90 : vector<16x16x16xf32> to vector<256x16xf32>
    %c3_102 = arith.constant 3 : index
    %c0_103 = arith.constant 0 : index
    %c0_104 = arith.constant 0 : index
    %92 = vector.load %arg5[%c3_102, %c0_103, %c0_104] : memref<9x16x16xf32, #tpu.memory_space<vmem>>, vector<1x16x16xf32>
    %93 = vector.shape_cast %92 : vector<1x16x16xf32> to vector<16x16xf32>
    %cst_105 = arith.constant dense<0.000000e+00> : vector<256x16xf32>
    %94 = tpu.matmul %91, %93, %cst_105 {dimension_numbers = #tpu.dot_dimension_numbers<[1], [0], [0], [1], [0, 0, 1, 1], [], []>} : vector<256x16xf32>, vector<16x16xf32>, vector<256x16xf32> -> vector<256x16xf32>
    %95 = arith.addf %89, %94 : vector<256x16xf32>
    %c1_106 = arith.constant 1 : index
    %c1_107 = arith.constant 1 : index
    %c0_108 = arith.constant 0 : index
    %96 = vector.load %arg13[%c1_106, %c1_107, %c0_108] : memref<18x18x16xf32, #tpu.memory_space<vmem>>, vector<16x16x16xf32>
    %97 = vector.shape_cast %96 : vector<16x16x16xf32> to vector<256x16xf32>
    %c4_109 = arith.constant 4 : index
    %c0_110 = arith.constant 0 : index
    %c0_111 = arith.constant 0 : index
    %98 = vector.load %arg5[%c4_109, %c0_110, %c0_111] : memref<9x16x16xf32, #tpu.memory_space<vmem>>, vector<1x16x16xf32>
    %99 = vector.shape_cast %98 : vector<1x16x16xf32> to vector<16x16xf32>
    %cst_112 = arith.constant dense<0.000000e+00> : vector<256x16xf32>
    %100 = tpu.matmul %97, %99, %cst_112 {dimension_numbers = #tpu.dot_dimension_numbers<[1], [0], [0], [1], [0, 0, 1, 1], [], []>} : vector<256x16xf32>, vector<16x16xf32>, vector<256x16xf32> -> vector<256x16xf32>
    %101 = arith.addf %95, %100 : vector<256x16xf32>
    %c1_113 = arith.constant 1 : index
    %c2_114 = arith.constant 2 : index
    %c0_115 = arith.constant 0 : index
    %102 = vector.load %arg13[%c1_113, %c2_114, %c0_115] : memref<18x18x16xf32, #tpu.memory_space<vmem>>, vector<16x16x16xf32>
    %103 = vector.shape_cast %102 : vector<16x16x16xf32> to vector<256x16xf32>
    %c5_116 = arith.constant 5 : index
    %c0_117 = arith.constant 0 : index
    %c0_118 = arith.constant 0 : index
    %104 = vector.load %arg5[%c5_116, %c0_117, %c0_118] : memref<9x16x16xf32, #tpu.memory_space<vmem>>, vector<1x16x16xf32>
    %105 = vector.shape_cast %104 : vector<1x16x16xf32> to vector<16x16xf32>
    %cst_119 = arith.constant dense<0.000000e+00> : vector<256x16xf32>
    %106 = tpu.matmul %103, %105, %cst_119 {dimension_numbers = #tpu.dot_dimension_numbers<[1], [0], [0], [1], [0, 0, 1, 1], [], []>} : vector<256x16xf32>, vector<16x16xf32>, vector<256x16xf32> -> vector<256x16xf32>
    %107 = arith.addf %101, %106 : vector<256x16xf32>
    %c2_120 = arith.constant 2 : index
    %c0_121 = arith.constant 0 : index
    %c0_122 = arith.constant 0 : index
    %108 = vector.load %arg13[%c2_120, %c0_121, %c0_122] : memref<18x18x16xf32, #tpu.memory_space<vmem>>, vector<16x16x16xf32>
    %109 = vector.shape_cast %108 : vector<16x16x16xf32> to vector<256x16xf32>
    %c6_123 = arith.constant 6 : index
    %c0_124 = arith.constant 0 : index
    %c0_125 = arith.constant 0 : index
    %110 = vector.load %arg5[%c6_123, %c0_124, %c0_125] : memref<9x16x16xf32, #tpu.memory_space<vmem>>, vector<1x16x16xf32>
    %111 = vector.shape_cast %110 : vector<1x16x16xf32> to vector<16x16xf32>
    %cst_126 = arith.constant dense<0.000000e+00> : vector<256x16xf32>
    %112 = tpu.matmul %109, %111, %cst_126 {dimension_numbers = #tpu.dot_dimension_numbers<[1], [0], [0], [1], [0, 0, 1, 1], [], []>} : vector<256x16xf32>, vector<16x16xf32>, vector<256x16xf32> -> vector<256x16xf32>
    %113 = arith.addf %107, %112 : vector<256x16xf32>
    %c2_127 = arith.constant 2 : index
    %c1_128 = arith.constant 1 : index
    %c0_129 = arith.constant 0 : index
    %114 = vector.load %arg13[%c2_127, %c1_128, %c0_129] : memref<18x18x16xf32, #tpu.memory_space<vmem>>, vector<16x16x16xf32>
    %115 = vector.shape_cast %114 : vector<16x16x16xf32> to vector<256x16xf32>
    %c7_130 = arith.constant 7 : index
    %c0_131 = arith.constant 0 : index
    %c0_132 = arith.constant 0 : index
    %116 = vector.load %arg5[%c7_130, %c0_131, %c0_132] : memref<9x16x16xf32, #tpu.memory_space<vmem>>, vector<1x16x16xf32>
    %117 = vector.shape_cast %116 : vector<1x16x16xf32> to vector<16x16xf32>
    %cst_133 = arith.constant dense<0.000000e+00> : vector<256x16xf32>
    %118 = tpu.matmul %115, %117, %cst_133 {dimension_numbers = #tpu.dot_dimension_numbers<[1], [0], [0], [1], [0, 0, 1, 1], [], []>} : vector<256x16xf32>, vector<16x16xf32>, vector<256x16xf32> -> vector<256x16xf32>
    %119 = arith.addf %113, %118 : vector<256x16xf32>
    %c2_134 = arith.constant 2 : index
    %c2_135 = arith.constant 2 : index
    %c0_136 = arith.constant 0 : index
    %120 = vector.load %arg13[%c2_134, %c2_135, %c0_136] : memref<18x18x16xf32, #tpu.memory_space<vmem>>, vector<16x16x16xf32>
    %121 = vector.shape_cast %120 : vector<16x16x16xf32> to vector<256x16xf32>
    %c8_137 = arith.constant 8 : index
    %c0_138 = arith.constant 0 : index
    %c0_139 = arith.constant 0 : index
    %122 = vector.load %arg5[%c8_137, %c0_138, %c0_139] : memref<9x16x16xf32, #tpu.memory_space<vmem>>, vector<1x16x16xf32>
    %123 = vector.shape_cast %122 : vector<1x16x16xf32> to vector<16x16xf32>
    %cst_140 = arith.constant dense<0.000000e+00> : vector<256x16xf32>
    %124 = tpu.matmul %121, %123, %cst_140 {dimension_numbers = #tpu.dot_dimension_numbers<[1], [0], [0], [1], [0, 0, 1, 1], [], []>} : vector<256x16xf32>, vector<16x16xf32>, vector<256x16xf32> -> vector<256x16xf32>
    %125 = arith.addf %119, %124 : vector<256x16xf32>
    %c0_141 = arith.constant 0 : index
    %c0_142 = arith.constant 0 : index
    %126 = vector.load %arg6[%c0_141, %c0_142] : memref<1x16xf32, #tpu.memory_space<vmem>>, vector<1x16xf32>
    %127 = vector.broadcast %126 : vector<1x16xf32> to vector<256x16xf32>
    %128 = arith.addf %125, %127 : vector<256x16xf32>
    %cst_143 = arith.constant 0.000000e+00 : f32
    %129 = vector.broadcast %cst_143 : f32 to vector<256x16xf32>
    %130 = arith.maximumf %128, %129 : vector<256x16xf32>
    %cst_144 = arith.constant 0.000000e+00 : f32
    %131 = vector.broadcast %cst_144 : f32 to vector<18x18x16xf32>
    %c0_145 = arith.constant 0 : index
    %c0_146 = arith.constant 0 : index
    %c0_147 = arith.constant 0 : index
    %132 = vector.load %arg14[%c0_145, %c0_146, %c0_147] : memref<18x18x16xf32, #tpu.memory_space<vmem>>, vector<18x18x16xf32>
    tpu.vector_store %arg14[%c0_145, %c0_146, %c0_147], %131 {strides = array<i32>} : memref<18x18x16xf32, #tpu.memory_space<vmem>>, vector<18x18x16xf32>,
    %133 = vector.shape_cast %130 : vector<256x16xf32> to vector<16x16x16xf32>
    %c1_148 = arith.constant 1 : index
    %c1_149 = arith.constant 1 : index
    %c0_150 = arith.constant 0 : index
    %134 = vector.load %arg14[%c1_148, %c1_149, %c0_150] : memref<18x18x16xf32, #tpu.memory_space<vmem>>, vector<16x16x16xf32>
    tpu.vector_store %arg14[%c1_148, %c1_149, %c0_150], %133 {strides = array<i32>} : memref<18x18x16xf32, #tpu.memory_space<vmem>>, vector<16x16x16xf32>,
    %cst_151 = arith.constant 0.000000e+00 : f32
    %135 = vector.broadcast %cst_151 : f32 to vector<256x16xf32>
    %c0_152 = arith.constant 0 : index
    %c0_153 = arith.constant 0 : index
    %c0_154 = arith.constant 0 : index
    %136 = vector.load %arg14[%c0_152, %c0_153, %c0_154] : memref<18x18x16xf32, #tpu.memory_space<vmem>>, vector<16x16x16xf32>
    %137 = vector.shape_cast %136 : vector<16x16x16xf32> to vector<256x16xf32>
    %c0_155 = arith.constant 0 : index
    %c0_156 = arith.constant 0 : index
    %c0_157 = arith.constant 0 : index
    %138 = vector.load %arg7[%c0_155, %c0_156, %c0_157] : memref<9x16x16xf32, #tpu.memory_space<vmem>>, vector<1x16x16xf32>
    %139 = vector.shape_cast %138 : vector<1x16x16xf32> to vector<16x16xf32>
    %cst_158 = arith.constant dense<0.000000e+00> : vector<256x16xf32>
    %140 = tpu.matmul %137, %139, %cst_158 {dimension_numbers = #tpu.dot_dimension_numbers<[1], [0], [0], [1], [0, 0, 1, 1], [], []>} : vector<256x16xf32>, vector<16x16xf32>, vector<256x16xf32> -> vector<256x16xf32>
    %141 = arith.addf %135, %140 : vector<256x16xf32>
    %c0_159 = arith.constant 0 : index
    %c1_160 = arith.constant 1 : index
    %c0_161 = arith.constant 0 : index
    %142 = vector.load %arg14[%c0_159, %c1_160, %c0_161] : memref<18x18x16xf32, #tpu.memory_space<vmem>>, vector<16x16x16xf32>
    %143 = vector.shape_cast %142 : vector<16x16x16xf32> to vector<256x16xf32>
    %c1_162 = arith.constant 1 : index
    %c0_163 = arith.constant 0 : index
    %c0_164 = arith.constant 0 : index
    %144 = vector.load %arg7[%c1_162, %c0_163, %c0_164] : memref<9x16x16xf32, #tpu.memory_space<vmem>>, vector<1x16x16xf32>
    %145 = vector.shape_cast %144 : vector<1x16x16xf32> to vector<16x16xf32>
    %cst_165 = arith.constant dense<0.000000e+00> : vector<256x16xf32>
    %146 = tpu.matmul %143, %145, %cst_165 {dimension_numbers = #tpu.dot_dimension_numbers<[1], [0], [0], [1], [0, 0, 1, 1], [], []>} : vector<256x16xf32>, vector<16x16xf32>, vector<256x16xf32> -> vector<256x16xf32>
    %147 = arith.addf %141, %146 : vector<256x16xf32>
    %c0_166 = arith.constant 0 : index
    %c2_167 = arith.constant 2 : index
    %c0_168 = arith.constant 0 : index
    %148 = vector.load %arg14[%c0_166, %c2_167, %c0_168] : memref<18x18x16xf32, #tpu.memory_space<vmem>>, vector<16x16x16xf32>
    %149 = vector.shape_cast %148 : vector<16x16x16xf32> to vector<256x16xf32>
    %c2_169 = arith.constant 2 : index
    %c0_170 = arith.constant 0 : index
    %c0_171 = arith.constant 0 : index
    %150 = vector.load %arg7[%c2_169, %c0_170, %c0_171] : memref<9x16x16xf32, #tpu.memory_space<vmem>>, vector<1x16x16xf32>
    %151 = vector.shape_cast %150 : vector<1x16x16xf32> to vector<16x16xf32>
    %cst_172 = arith.constant dense<0.000000e+00> : vector<256x16xf32>
    %152 = tpu.matmul %149, %151, %cst_172 {dimension_numbers = #tpu.dot_dimension_numbers<[1], [0], [0], [1], [0, 0, 1, 1], [], []>} : vector<256x16xf32>, vector<16x16xf32>, vector<256x16xf32> -> vector<256x16xf32>
    %153 = arith.addf %147, %152 : vector<256x16xf32>
    %c1_173 = arith.constant 1 : index
    %c0_174 = arith.constant 0 : index
    %c0_175 = arith.constant 0 : index
    %154 = vector.load %arg14[%c1_173, %c0_174, %c0_175] : memref<18x18x16xf32, #tpu.memory_space<vmem>>, vector<16x16x16xf32>
    %155 = vector.shape_cast %154 : vector<16x16x16xf32> to vector<256x16xf32>
    %c3_176 = arith.constant 3 : index
    %c0_177 = arith.constant 0 : index
    %c0_178 = arith.constant 0 : index
    %156 = vector.load %arg7[%c3_176, %c0_177, %c0_178] : memref<9x16x16xf32, #tpu.memory_space<vmem>>, vector<1x16x16xf32>
    %157 = vector.shape_cast %156 : vector<1x16x16xf32> to vector<16x16xf32>
    %cst_179 = arith.constant dense<0.000000e+00> : vector<256x16xf32>
    %158 = tpu.matmul %155, %157, %cst_179 {dimension_numbers = #tpu.dot_dimension_numbers<[1], [0], [0], [1], [0, 0, 1, 1], [], []>} : vector<256x16xf32>, vector<16x16xf32>, vector<256x16xf32> -> vector<256x16xf32>
    %159 = arith.addf %153, %158 : vector<256x16xf32>
    %c1_180 = arith.constant 1 : index
    %c1_181 = arith.constant 1 : index
    %c0_182 = arith.constant 0 : index
    %160 = vector.load %arg14[%c1_180, %c1_181, %c0_182] : memref<18x18x16xf32, #tpu.memory_space<vmem>>, vector<16x16x16xf32>
    %161 = vector.shape_cast %160 : vector<16x16x16xf32> to vector<256x16xf32>
    %c4_183 = arith.constant 4 : index
    %c0_184 = arith.constant 0 : index
    %c0_185 = arith.constant 0 : index
    %162 = vector.load %arg7[%c4_183, %c0_184, %c0_185] : memref<9x16x16xf32, #tpu.memory_space<vmem>>, vector<1x16x16xf32>
    %163 = vector.shape_cast %162 : vector<1x16x16xf32> to vector<16x16xf32>
    %cst_186 = arith.constant dense<0.000000e+00> : vector<256x16xf32>
    %164 = tpu.matmul %161, %163, %cst_186 {dimension_numbers = #tpu.dot_dimension_numbers<[1], [0], [0], [1], [0, 0, 1, 1], [], []>} : vector<256x16xf32>, vector<16x16xf32>, vector<256x16xf32> -> vector<256x16xf32>
    %165 = arith.addf %159, %164 : vector<256x16xf32>
    %c1_187 = arith.constant 1 : index
    %c2_188 = arith.constant 2 : index
    %c0_189 = arith.constant 0 : index
    %166 = vector.load %arg14[%c1_187, %c2_188, %c0_189] : memref<18x18x16xf32, #tpu.memory_space<vmem>>, vector<16x16x16xf32>
    %167 = vector.shape_cast %166 : vector<16x16x16xf32> to vector<256x16xf32>
    %c5_190 = arith.constant 5 : index
    %c0_191 = arith.constant 0 : index
    %c0_192 = arith.constant 0 : index
    %168 = vector.load %arg7[%c5_190, %c0_191, %c0_192] : memref<9x16x16xf32, #tpu.memory_space<vmem>>, vector<1x16x16xf32>
    %169 = vector.shape_cast %168 : vector<1x16x16xf32> to vector<16x16xf32>
    %cst_193 = arith.constant dense<0.000000e+00> : vector<256x16xf32>
    %170 = tpu.matmul %167, %169, %cst_193 {dimension_numbers = #tpu.dot_dimension_numbers<[1], [0], [0], [1], [0, 0, 1, 1], [], []>} : vector<256x16xf32>, vector<16x16xf32>, vector<256x16xf32> -> vector<256x16xf32>
    %171 = arith.addf %165, %170 : vector<256x16xf32>
    %c2_194 = arith.constant 2 : index
    %c0_195 = arith.constant 0 : index
    %c0_196 = arith.constant 0 : index
    %172 = vector.load %arg14[%c2_194, %c0_195, %c0_196] : memref<18x18x16xf32, #tpu.memory_space<vmem>>, vector<16x16x16xf32>
    %173 = vector.shape_cast %172 : vector<16x16x16xf32> to vector<256x16xf32>
    %c6_197 = arith.constant 6 : index
    %c0_198 = arith.constant 0 : index
    %c0_199 = arith.constant 0 : index
    %174 = vector.load %arg7[%c6_197, %c0_198, %c0_199] : memref<9x16x16xf32, #tpu.memory_space<vmem>>, vector<1x16x16xf32>
    %175 = vector.shape_cast %174 : vector<1x16x16xf32> to vector<16x16xf32>
    %cst_200 = arith.constant dense<0.000000e+00> : vector<256x16xf32>
    %176 = tpu.matmul %173, %175, %cst_200 {dimension_numbers = #tpu.dot_dimension_numbers<[1], [0], [0], [1], [0, 0, 1, 1], [], []>} : vector<256x16xf32>, vector<16x16xf32>, vector<256x16xf32> -> vector<256x16xf32>
    %177 = arith.addf %171, %176 : vector<256x16xf32>
    %c2_201 = arith.constant 2 : index
    %c1_202 = arith.constant 1 : index
    %c0_203 = arith.constant 0 : index
    %178 = vector.load %arg14[%c2_201, %c1_202, %c0_203] : memref<18x18x16xf32, #tpu.memory_space<vmem>>, vector<16x16x16xf32>
    %179 = vector.shape_cast %178 : vector<16x16x16xf32> to vector<256x16xf32>
    %c7_204 = arith.constant 7 : index
    %c0_205 = arith.constant 0 : index
    %c0_206 = arith.constant 0 : index
    %180 = vector.load %arg7[%c7_204, %c0_205, %c0_206] : memref<9x16x16xf32, #tpu.memory_space<vmem>>, vector<1x16x16xf32>
    %181 = vector.shape_cast %180 : vector<1x16x16xf32> to vector<16x16xf32>
    %cst_207 = arith.constant dense<0.000000e+00> : vector<256x16xf32>
    %182 = tpu.matmul %179, %181, %cst_207 {dimension_numbers = #tpu.dot_dimension_numbers<[1], [0], [0], [1], [0, 0, 1, 1], [], []>} : vector<256x16xf32>, vector<16x16xf32>, vector<256x16xf32> -> vector<256x16xf32>
    %183 = arith.addf %177, %182 : vector<256x16xf32>
    %c2_208 = arith.constant 2 : index
    %c2_209 = arith.constant 2 : index
    %c0_210 = arith.constant 0 : index
    %184 = vector.load %arg14[%c2_208, %c2_209, %c0_210] : memref<18x18x16xf32, #tpu.memory_space<vmem>>, vector<16x16x16xf32>
    %185 = vector.shape_cast %184 : vector<16x16x16xf32> to vector<256x16xf32>
    %c8_211 = arith.constant 8 : index
    %c0_212 = arith.constant 0 : index
    %c0_213 = arith.constant 0 : index
    %186 = vector.load %arg7[%c8_211, %c0_212, %c0_213] : memref<9x16x16xf32, #tpu.memory_space<vmem>>, vector<1x16x16xf32>
    %187 = vector.shape_cast %186 : vector<1x16x16xf32> to vector<16x16xf32>
    %cst_214 = arith.constant dense<0.000000e+00> : vector<256x16xf32>
    %188 = tpu.matmul %185, %187, %cst_214 {dimension_numbers = #tpu.dot_dimension_numbers<[1], [0], [0], [1], [0, 0, 1, 1], [], []>} : vector<256x16xf32>, vector<16x16xf32>, vector<256x16xf32> -> vector<256x16xf32>
    %189 = arith.addf %183, %188 : vector<256x16xf32>
    %c0_215 = arith.constant 0 : index
    %c0_216 = arith.constant 0 : index
    %190 = vector.load %arg8[%c0_215, %c0_216] : memref<1x16xf32, #tpu.memory_space<vmem>>, vector<1x16xf32>
    %191 = vector.broadcast %190 : vector<1x16xf32> to vector<256x16xf32>
    %192 = arith.addf %189, %191 : vector<256x16xf32>
    %c1_217 = arith.constant 1 : index
    %c1_218 = arith.constant 1 : index
    %c0_219 = arith.constant 0 : index
    %193 = vector.load %arg13[%c1_217, %c1_218, %c0_219] : memref<18x18x16xf32, #tpu.memory_space<vmem>>, vector<16x16x16xf32>
    %194 = vector.shape_cast %193 : vector<16x16x16xf32> to vector<256x16xf32>
    %195 = arith.addf %192, %194 : vector<256x16xf32>
    %cst_220 = arith.constant 0.000000e+00 : f32
    %196 = vector.broadcast %cst_220 : f32 to vector<256x16xf32>
    %197 = arith.maximumf %195, %196 : vector<256x16xf32>
    %cst_221 = arith.constant dense<0.000000e+00> : vector<16xf32>
    %198 = vector.multi_reduction <add>, %197, %cst_221 [0] : vector<256x16xf32> to vector<16xf32>
    %199 = vector.shape_cast %198 : vector<16xf32> to vector<1x16xf32>
    %cst_222 = arith.constant 3.906250e-03 : f32
    %200 = vector.broadcast %cst_222 : f32 to vector<1x16xf32>
    %201 = arith.mulf %199, %200 : vector<1x16xf32>
    %c0_223 = arith.constant 0 : index
    %c0_224 = arith.constant 0 : index
    %202 = vector.load %arg9[%c0_223, %c0_224] : memref<16x1000xf32, #tpu.memory_space<vmem>>, vector<16x1000xf32>
    %cst_225 = arith.constant dense<0.000000e+00> : vector<1x1000xf32>
    %203 = tpu.matmul %201, %202, %cst_225 {dimension_numbers = #tpu.dot_dimension_numbers<[1], [0], [0], [1], [0, 0, 1, 1], [], []>} : vector<1x16xf32>, vector<16x1000xf32>, vector<1x1000xf32> -> vector<1x1000xf32>
    %c0_226 = arith.constant 0 : index
    %c0_227 = arith.constant 0 : index
    %204 = vector.load %arg10[%c0_226, %c0_227] : memref<1x1000xf32, #tpu.memory_space<vmem>>, vector<1x1000xf32>
    %205 = arith.addf %203, %204 : vector<1x1000xf32>
    %c0_228 = arith.constant 0 : index
    %c0_229 = arith.constant 0 : index
    %c0_230 = arith.constant 0 : index
    %206 = vector.load %arg11[%c0_228, %c0_229, %c0_230] : memref<1x1x1000xf32, #tpu.memory_space<vmem>>, vector<1x1x1000xf32>
    %207 = vector.shape_cast %206 : vector<1x1x1000xf32> to vector<1x1000xf32>
    %208 = vector.shape_cast %205 : vector<1x1000xf32> to vector<1x1x1000xf32>
    tpu.vector_store %arg11[%c0_228, %c0_229, %c0_230], %208 {strides = array<i32>} : memref<1x1x1000xf32, #tpu.memory_space<vmem>>, vector<1x1x1000xf32>,
    return
  }
  func.func @transform_0(%arg0: i32) -> (i32, i32, i32, i32) {
    %c0_i32 = arith.constant 0 : i32
    %c0_i32_0 = arith.constant 0 : i32
    %c0_i32_1 = arith.constant 0 : i32
    %c0_i32_2 = arith.constant 0 : i32
    return %arg0, %c0_i32, %c0_i32_0, %c0_i32_1 : i32, i32, i32, i32
  }
  func.func @transform_1(%arg0: i32) -> (i32, i32, i32) {
    %c0_i32 = arith.constant 0 : i32
    %c0_i32_0 = arith.constant 0 : i32
    %c0_i32_1 = arith.constant 0 : i32
    %c0_i32_2 = arith.constant 0 : i32
    return %c0_i32, %c0_i32_0, %c0_i32_1 : i32, i32, i32
  }
  func.func @transform_2(%arg0: i32) -> (i32, i32, i32) {
    %c0_i32 = arith.constant 0 : i32
    %c0_i32_0 = arith.constant 0 : i32
    %c0_i32_1 = arith.constant 0 : i32
    %c0_i32_2 = arith.constant 0 : i32
    return %c0_i32, %c0_i32_0, %c0_i32_1 : i32, i32, i32
  }
  func.func @transform_3(%arg0: i32) -> (i32, i32) {
    %c0_i32 = arith.constant 0 : i32
    %c0_i32_0 = arith.constant 0 : i32
    %c0_i32_1 = arith.constant 0 : i32
    return %c0_i32, %c0_i32_0 : i32, i32
  }
  func.func @transform_4(%arg0: i32) -> (i32, i32, i32) {
    %c0_i32 = arith.constant 0 : i32
    %c0_i32_0 = arith.constant 0 : i32
    %c0_i32_1 = arith.constant 0 : i32
    %c0_i32_2 = arith.constant 0 : i32
    return %c0_i32, %c0_i32_0, %c0_i32_1 : i32, i32, i32
  }
  func.func @transform_5(%arg0: i32) -> (i32, i32) {
    %c0_i32 = arith.constant 0 : i32
    %c0_i32_0 = arith.constant 0 : i32
    %c0_i32_1 = arith.constant 0 : i32
    return %c0_i32, %c0_i32_0 : i32, i32
  }
  func.func @transform_6(%arg0: i32) -> (i32, i32, i32) {
    %c0_i32 = arith.constant 0 : i32
    %c0_i32_0 = arith.constant 0 : i32
    %c0_i32_1 = arith.constant 0 : i32
    %c0_i32_2 = arith.constant 0 : i32
    return %c0_i32, %c0_i32_0, %c0_i32_1 : i32, i32, i32
  }
  func.func @transform_7(%arg0: i32) -> (i32, i32) {
    %c0_i32 = arith.constant 0 : i32
    %c0_i32_0 = arith.constant 0 : i32
    %c0_i32_1 = arith.constant 0 : i32
    return %c0_i32, %c0_i32_0 : i32, i32
  }
  func.func @transform_8(%arg0: i32) -> (i32, i32) {
    %c0_i32 = arith.constant 0 : i32
    %c0_i32_0 = arith.constant 0 : i32
    %c0_i32_1 = arith.constant 0 : i32
    return %c0_i32, %c0_i32_0 : i32, i32
  }
  func.func @transform_9(%arg0: i32) -> (i32, i32) {
    %c0_i32 = arith.constant 0 : i32
    %c0_i32_0 = arith.constant 0 : i32
    %c0_i32_1 = arith.constant 0 : i32
    return %c0_i32, %c0_i32_0 : i32, i32
  }
  func.func @transform_10(%arg0: i32) -> (i32, i32, i32) {
    %c0_i32 = arith.constant 0 : i32
    %c0_i32_0 = arith.constant 0 : i32
    %c0_i32_1 = arith.constant 0 : i32
    return %arg0, %c0_i32, %c0_i32_0 : i32, i32, i32
  }
}

</mosaic_0001>

<llo_original>
// kernel: tsipras_cnn_forward.1
$region0: #{tsipras_cnn_forward.1}
  #allocation0 [shape = 'u32[]', space=smem, size = 0x4, offset = 0x4, fixed_abs, tag = 'smem constant byte address 0x4 - core index']
  #allocation1 [shape = 'u32[144,128]{1,0:T(1,128)}', space=vmem, size = 0x12000, scoped, tag = 'internal scratch']
  #allocation2 [shape = 'f32[18,18,3]{2,1,0:T(8,128)}', space=vmem, size = 0x36000, scoped, tag = 'scratch operand']
  #allocation3 [shape = 'f32[18,18,16]{2,1,0:T(8,128)}', space=vmem, size = 0x36000, scoped, tag = 'scratch operand']
  #allocation4 [shape = 'f32[18,18,16]{2,1,0:T(8,128)}', space=vmem, size = 0x36000, scoped, tag = 'scratch operand']
  %s0 = inlined_call_operand.vmem [shape: f32[2,16,16,3], index: 0, kind: input, shape index: {}]
  %s1 = inlined_call_operand.vmem [shape: f32[1,1,3], index: 1, kind: input, shape index: {}]
  %s2 = inlined_call_operand.vmem [shape: f32[9,3,16], index: 2, kind: input, shape index: {}]
  %s3 = inlined_call_operand.vmem [shape: f32[1,16], index: 3, kind: input, shape index: {}]
  %s4 = inlined_call_operand.vmem [shape: f32[9,16,16], index: 4, kind: input, shape index: {}]
  %s5 = inlined_call_operand.vmem [shape: f32[1,16], index: 5, kind: input, shape index: {}]
  %s6 = inlined_call_operand.vmem [shape: f32[9,16,16], index: 6, kind: input, shape index: {}]
  %s7 = inlined_call_operand.vmem [shape: f32[1,16], index: 7, kind: input, shape index: {}]
  %s8 = inlined_call_operand.vmem [shape: f32[16,1000], index: 8, kind: input, shape index: {}]
  %s9 = inlined_call_operand.vmem [shape: f32[1,1000], index: 9, kind: input, shape index: {}]
  %s10 = inlined_call_operand.vmem [shape: f32[2,1,1000], index: 10, kind: output, shape index: {}]
  %s11 = sld [smem:[#allocation0]]
  $region73: #{tsipras_cnn_forward.1} parent=0
    _
  %s13 = ssub.s32 1, %s11
  %s14 = scalar_select 0, %s13, %s11
  loop: start=0, step=1, limit=4
  $region2: #{tsipras_cnn_forward.1} parent=0 // loop_pre_header
    _
  $region3: #{tsipras_cnn_forward.1} parent=0 // loop_header
    %s16 = sphi 0, %s20
    %p17 = scmp.ge.s32.totalorder %s16, 4
    %s26 = sphi 0, %s28
    %s29 = sphi 0, %s26
    %s30 = sphi 0, %s29
    %s46 = sphi 0, %s30
    %s50 = sphi 0, %s50
    %s52 = sphi 0, %s50
    %s53 = sphi 0, %s52
    %s67 = sphi 0, %s53
    %s71 = sphi 0, %s71
    %s73 = sphi 0, %s71
    %s74 = sphi 0, %s73
    %s88 = sphi 0, %s74
    %s92 = sphi 0, %s92
    %s94 = sphi 0, %s92
    %s95 = sphi 0, %s94
    %s109 = sphi 0, %s95
    %s113 = sphi 0, %s113
    %s115 = sphi 0, %s113
    %s116 = sphi 0, %s115
    %s130 = sphi 0, %s116
    %s134 = sphi 0, %s134
    %s136 = sphi 0, %s134
    %s137 = sphi 0, %s136
    %s151 = sphi 0, %s137
    %s155 = sphi 0, %s155
    %s157 = sphi 0, %s155
    %s158 = sphi 0, %s157
    %s172 = sphi 0, %s158
    %s176 = sphi 0, %s176
    %s178 = sphi 0, %s176
    %s179 = sphi 0, %s178
    %s193 = sphi 0, %s179
    %s197 = sphi 0, %s197
    %s199 = sphi 0, %s197
    %s200 = sphi 0, %s199
    %s214 = sphi 0, %s200
    %s218 = sphi 0, %s218
    %s220 = sphi 0, %s218
    %s221 = sphi 0, %s220
    %s235 = sphi 0, %s221
    %s241 = sphi 0, %s243
    %s244 = sphi 0, %s241
    %s245 = sphi 0, %s244
    %s261 = sphi 0, %s245
  $region4: #{tsipras_cnn_forward.1} parent=0 // loop_header_branch
    %19 = sbr.rel (%p17) target = $region8
  $region5: #{tsipras_cnn_forward.1} parent=0 // loop_body
    %s21 = ssub.s32 %s16, 1
    %s22 = ssub.s32 %s16, 2
    %s23 = sadd.s32 %s16, 1
    %s24 = ssub.s32 %s16, %s23
    %p25 = scmp.eq.s32.totalorder %s24, 0
    %s27 = sadd.s32 %s26, 1
    %s28 = scalar_select %p25, %s26, %s27
    %p31 = pneg %p25
    %p32 = scmp.eq.s32.totalorder %s16, 1
    %p33 = por %p31, %p32
    %p34 = scmp.ne.s32.totalorder %s26, %s29
    %p35 = scmp.eq.s32.totalorder %s16, 0
    %p36 = por %p34, %p35
    %p37 = scmp.ne.s32.totalorder %s26, %s29
    %p38 = scmp.eq.s32.totalorder %s21, 1
    %p39 = por %p37, %p38
    %p40 = scmp.ne.s32.totalorder %s29, %s30
    %p41 = scmp.eq.s32.totalorder %s21, 0
    %p42 = por %p40, %p41
    %p43 = scmp.ne.s32.totalorder %s29, %s30
    %p44 = scmp.eq.s32.totalorder %s22, 1
    %p45 = por %p43, %p44
    %p47 = scmp.ne.s32.totalorder %s30, %s46
    %p48 = scmp.eq.s32.totalorder %s22, 0
    %p49 = por %p47, %p48
    %s51 = sadd.s32 %s50, 1
    %p54 = scmp.eq.s32.totalorder %s16, 1
    %p55 = scmp.ne.s32.totalorder %s50, %s52
    %p56 = scmp.eq.s32.totalorder %s16, 0
    %p57 = por %p55, %p56
    %p58 = scmp.ne.s32.totalorder %s50, %s52
    %p59 = scmp.eq.s32.totalorder %s21, 1
    %p60 = por %p58, %p59
    %p61 = scmp.ne.s32.totalorder %s52, %s53
    %p62 = scmp.eq.s32.totalorder %s21, 0
    %p63 = por %p61, %p62
    %p64 = scmp.ne.s32.totalorder %s52, %s53
    %p65 = scmp.eq.s32.totalorder %s22, 1
    %p66 = por %p64, %p65
    %p68 = scmp.ne.s32.totalorder %s53, %s67
    %p69 = scmp.eq.s32.totalorder %s22, 0
    %p70 = por %p68, %p69
    %s72 = sadd.s32 %s71, 1
    %p75 = scmp.eq.s32.totalorder %s16, 1
    %p76 = scmp.ne.s32.totalorder %s71, %s73
    %p77 = scmp.eq.s32.totalorder %s16, 0
    %p78 = por %p76, %p77
    %p79 = scmp.ne.s32.totalorder %s71, %s73
    %p80 = scmp.eq.s32.totalorder %s21, 1
    %p81 = por %p79, %p80
    %p82 = scmp.ne.s32.totalorder %s73, %s74
    %p83 = scmp.eq.s32.totalorder %s21, 0
    %p84 = por %p82, %p83
    %p85 = scmp.ne.s32.totalorder %s73, %s74
    %p86 = scmp.eq.s32.totalorder %s22, 1
    %p87 = por %p85, %p86
    %p89 = scmp.ne.s32.totalorder %s74, %s88
    %p90 = scmp.eq.s32.totalorder %s22, 0
    %p91 = por %p89, %p90
    %s93 = sadd.s32 %s92, 1
    %p96 = scmp.eq.s32.totalorder %s16, 1
    %p97 = scmp.ne.s32.totalorder %s92, %s94
    %p98 = scmp.eq.s32.totalorder %s16, 0
    %p99 = por %p97, %p98
    %p100 = scmp.ne.s32.totalorder %s92, %s94
    %p101 = scmp.eq.s32.totalorder %s21, 1
    %p102 = por %p100, %p101
    %p103 = scmp.ne.s32.totalorder %s94, %s95
    %p104 = scmp.eq.s32.totalorder %s21, 0
    %p105 = por %p103, %p104
    %p106 = scmp.ne.s32.totalorder %s94, %s95
    %p107 = scmp.eq.s32.totalorder %s22, 1
    %p108 = por %p106, %p107
    %p110 = scmp.ne.s32.totalorder %s95, %s109
    %p111 = scmp.eq.s32.totalorder %s22, 0
    %p112 = por %p110, %p111
    %s114 = sadd.s32 %s113, 1
    %p117 = scmp.eq.s32.totalorder %s16, 1
    %p118 = scmp.ne.s32.totalorder %s113, %s115
    %p119 = scmp.eq.s32.totalorder %s16, 0
    %p120 = por %p118, %p119
    %p121 = scmp.ne.s32.totalorder %s113, %s115
    %p122 = scmp.eq.s32.totalorder %s21, 1
    %p123 = por %p121, %p122
    %p124 = scmp.ne.s32.totalorder %s115, %s116
    %p125 = scmp.eq.s32.totalorder %s21, 0
    %p126 = por %p124, %p125
    %p127 = scmp.ne.s32.totalorder %s115, %s116
    %p128 = scmp.eq.s32.totalorder %s22, 1
    %p129 = por %p127, %p128
    %p131 = scmp.ne.s32.totalorder %s116, %s130
    %p132 = scmp.eq.s32.totalorder %s22, 0
    %p133 = por %p131, %p132
    %s135 = sadd.s32 %s134, 1
    %p138 = scmp.eq.s32.totalorder %s16, 1
    %p139 = scmp.ne.s32.totalorder %s134, %s136
    %p140 = scmp.eq.s32.totalorder %s16, 0
    %p141 = por %p139, %p140
    %p142 = scmp.ne.s32.totalorder %s134, %s136
    %p143 = scmp.eq.s32.totalorder %s21, 1
    %p144 = por %p142, %p143
    %p145 = scmp.ne.s32.totalorder %s136, %s137
    %p146 = scmp.eq.s32.totalorder %s21, 0
    %p147 = por %p145, %p146
    %p148 = scmp.ne.s32.totalorder %s136, %s137
    %p149 = scmp.eq.s32.totalorder %s22, 1
    %p150 = por %p148, %p149
    %p152 = scmp.ne.s32.totalorder %s137, %s151
    %p153 = scmp.eq.s32.totalorder %s22, 0
    %p154 = por %p152, %p153
    %s156 = sadd.s32 %s155, 1
    %p159 = scmp.eq.s32.totalorder %s16, 1
    %p160 = scmp.ne.s32.totalorder %s155, %s157
    %p161 = scmp.eq.s32.totalorder %s16, 0
    %p162 = por %p160, %p161
    %p163 = scmp.ne.s32.totalorder %s155, %s157
    %p164 = scmp.eq.s32.totalorder %s21, 1
    %p165 = por %p163, %p164
    %p166 = scmp.ne.s32.totalorder %s157, %s158
    %p167 = scmp.eq.s32.totalorder %s21, 0
    %p168 = por %p166, %p167
    %p169 = scmp.ne.s32.totalorder %s157, %s158
    %p170 = scmp.eq.s32.totalorder %s22, 1
    %p171 = por %p169, %p170
    %p173 = scmp.ne.s32.totalorder %s158, %s172
    %p174 = scmp.eq.s32.totalorder %s22, 0
    %p175 = por %p173, %p174
    %s177 = sadd.s32 %s176, 1
    %p180 = scmp.eq.s32.totalorder %s16, 1
    %p181 = scmp.ne.s32.totalorder %s176, %s178
    %p182 = scmp.eq.s32.totalorder %s16, 0
    %p183 = por %p181, %p182
    %p184 = scmp.ne.s32.totalorder %s176, %s178
    %p185 = scmp.eq.s32.totalorder %s21, 1
    %p186 = por %p184, %p185
    %p187 = scmp.ne.s32.totalorder %s178, %s179
    %p188 = scmp.eq.s32.totalorder %s21, 0
    %p189 = por %p187, %p188
    %p190 = scmp.ne.s32.totalorder %s178, %s179
    %p191 = scmp.eq.s32.totalorder %s22, 1
    %p192 = por %p190, %p191
    %p194 = scmp.ne.s32.totalorder %s179, %s193
    %p195 = scmp.eq.s32.totalorder %s22, 0
    %p196 = por %p194, %p195
    %s198 = sadd.s32 %s197, 1
    %p201 = scmp.eq.s32.totalorder %s16, 1
    %p202 = scmp.ne.s32.totalorder %s197, %s199
    %p203 = scmp.eq.s32.totalorder %s16, 0
    %p204 = por %p202, %p203
    %p205 = scmp.ne.s32.totalorder %s197, %s199
    %p206 = scmp.eq.s32.totalorder %s21, 1
    %p207 = por %p205, %p206
    %p208 = scmp.ne.s32.totalorder %s199, %s200
    %p209 = scmp.eq.s32.totalorder %s21, 0
    %p210 = por %p208, %p209
    %p211 = scmp.ne.s32.totalorder %s199, %s200
    %p212 = scmp.eq.s32.totalorder %s22, 1
    %p213 = por %p211, %p212
    %p215 = scmp.ne.s32.totalorder %s200, %s214
    %p216 = scmp.eq.s32.totalorder %s22, 0
    %p217 = por %p215, %p216
    %s219 = sadd.s32 %s218, 1
    %p222 = scmp.eq.s32.totalorder %s16, 1
    %p223 = scmp.ne.s32.totalorder %s218, %s220
    %p224 = scmp.eq.s32.totalorder %s16, 0
    %p225 = por %p223, %p224
    %p226 = scmp.ne.s32.totalorder %s218, %s220
    %p227 = scmp.eq.s32.totalorder %s21, 1
    %p228 = por %p226, %p227
    %p229 = scmp.ne.s32.totalorder %s220, %s221
    %p230 = scmp.eq.s32.totalorder %s21, 0
    %p231 = por %p229, %p230
    %p232 = scmp.ne.s32.totalorder %s220, %s221
    %p233 = scmp.eq.s32.totalorder %s22, 1
    %p234 = por %p232, %p233
    %p236 = scmp.ne.s32.totalorder %s221, %s235
    %p237 = scmp.eq.s32.totalorder %s22, 0
    %p238 = por %p236, %p237
    %s239 = ssub.s32 %s16, %s23
    %p240 = scmp.eq.s32.totalorder %s239, 0
    %s242 = sadd.s32 %s241, 1
    %s243 = scalar_select %p240, %s241, %s242
    %p246 = pneg %p240
    %p247 = scmp.eq.s32.totalorder %s16, 1
    %p248 = por %p246, %p247
    %p249 = scmp.ne.s32.totalorder %s241, %s244
    %p250 = scmp.eq.s32.totalorder %s16, 0
    %p251 = por %p249, %p250
    %p252 = scmp.ne.s32.totalorder %s241, %s244
    %p253 = scmp.eq.s32.totalorder %s21, 1
    %p254 = por %p252, %p253
    %p255 = scmp.ne.s32.totalorder %s244, %s245
    %p256 = scmp.eq.s32.totalorder %s21, 0
    %p257 = por %p255, %p256
    %p258 = scmp.ne.s32.totalorder %s244, %s245
    %p259 = scmp.eq.s32.totalorder %s22, 1
    %p260 = por %p258, %p259
    %p262 = scmp.ne.s32.totalorder %s245, %s261
    %p263 = scmp.eq.s32.totalorder %s22, 0
    %p264 = por %p262, %p263
    %p265 = scmp.le.s32.totalorder 1, %s16
    %p266 = scmp.lt.s32.totalorder %s16, 3
    %p267 = pnand %p265, %p266
    %p268 = pneg %p267
    // Predicated region
    $region9: #{tsipras_cnn_forward.1} parent=5 // pred_check
      _
    $region10: #{tsipras_cnn_forward.1} parent=5 // pred_check_branch
      %270 = sbr.rel (%p267) target = $region12
    $region11: #{tsipras_cnn_forward.1} parent=5 // pred_region
      %s271 = ssub.s32 %s16, 1
      // Predicated region
      $region13: #{tsipras_cnn_forward.1} parent=11 // pred_check
        %p272 = pneg %p63
      $region14: #{tsipras_cnn_forward.1} parent=11 // pred_check_branch
        %274 = sbr.rel (%p272) target = $region16
      $region15: #{tsipras_cnn_forward.1} parent=11 // pred_region
        _
      $region16: #{tsipras_cnn_forward.1} parent=11 // pred_fallthru
        _
      // Predicated region
      $region17: #{tsipras_cnn_forward.1} parent=11 // pred_check
        %p275 = pneg %p84
      $region18: #{tsipras_cnn_forward.1} parent=11 // pred_check_branch
        %277 = sbr.rel (%p275) target = $region20
      $region19: #{tsipras_cnn_forward.1} parent=11 // pred_region
        _
      $region20: #{tsipras_cnn_forward.1} parent=11 // pred_fallthru
        _
      // Predicated region
      $region21: #{tsipras_cnn_forward.1} parent=11 // pred_check
        %p278 = pneg %p105
      $region22: #{tsipras_cnn_forward.1} parent=11 // pred_check_branch
        %280 = sbr.rel (%p278) target = $region24
      $region23: #{tsipras_cnn_forward.1} parent=11 // pred_region
        _
      $region24: #{tsipras_cnn_forward.1} parent=11 // pred_fallthru
        _
      // Predicated region
      $region25: #{tsipras_cnn_forward.1} parent=11 // pred_check
        %p281 = pneg %p126
      $region26: #{tsipras_cnn_forward.1} parent=11 // pred_check_branch
        %283 = sbr.rel (%p281) target = $region28
      $region27: #{tsipras_cnn_forward.1} parent=11 // pred_region
        _
      $region28: #{tsipras_cnn_forward.1} parent=11 // pred_fallthru
        _
      // Predicated region
      $region29: #{tsipras_cnn_forward.1} parent=11 // pred_check
        %p284 = pneg %p147
      $region30: #{tsipras_cnn_forward.1} parent=11 // pred_check_branch
        %286 = sbr.rel (%p284) target = $region32
      $region31: #{tsipras_cnn_forward.1} parent=11 // pred_region
        _
      $region32: #{tsipras_cnn_forward.1} parent=11 // pred_fallthru
        _
      // Predicated region
      $region33: #{tsipras_cnn_forward.1} parent=11 // pred_check
        %p287 = pneg %p168
      $region34: #{tsipras_cnn_forward.1} parent=11 // pred_check_branch
        %289 = sbr.rel (%p287) target = $region36
      $region35: #{tsipras_cnn_forward.1} parent=11 // pred_region
        _
      $region36: #{tsipras_cnn_forward.1} parent=11 // pred_fallthru
        _
      // Predicated region
      $region37: #{tsipras_cnn_forward.1} parent=11 // pred_check
        %p290 = pneg %p189
      $region38: #{tsipras_cnn_forward.1} parent=11 // pred_check_branch
        %292 = sbr.rel (%p290) target = $region40
      $region39: #{tsipras_cnn_forward.1} parent=11 // pred_region
        _
      $region40: #{tsipras_cnn_forward.1} parent=11 // pred_fallthru
        _
      // Predicated region
      $region41: #{tsipras_cnn_forward.1} parent=11 // pred_check
        %p293 = pneg %p210
      $region42: #{tsipras_cnn_forward.1} parent=11 // pred_check_branch
        %295 = sbr.rel (%p293) target = $region44
      $region43: #{tsipras_cnn_forward.1} parent=11 // pred_region
        _
      $region44: #{tsipras_cnn_forward.1} parent=11 // pred_fallthru
        _
      // Predicated region
      $region45: #{tsipras_cnn_forward.1} parent=11 // pred_check
        %p296 = pneg %p231
      $region46: #{tsipras_cnn_forward.1} parent=11 // pred_check_branch
        %298 = sbr.rel (%p296) target = $region48
      $region47: #{tsipras_cnn_forward.1} parent=11 // pred_region
        _
      $region48: #{tsipras_cnn_forward.1} parent=11 // pred_fallthru
        _
    $region12: #{tsipras_cnn_forward.1} parent=5 // pred_fallthru
      _
    %p299 = scmp.lt.s32.totalorder %s16, 2
    // Predicated region
    $region49: #{tsipras_cnn_forward.1} parent=5 // pred_check
      %p300 = pneg %p299
    $region50: #{tsipras_cnn_forward.1} parent=5 // pred_check_branch
      %302 = sbr.rel (%p300) target = $region52
    $region51: #{tsipras_cnn_forward.1} parent=5 // pred_region
      // Predicated region
      $region53: #{tsipras_cnn_forward.1} parent=51 // pred_check
        %p303 = pneg %p36
      $region54: #{tsipras_cnn_forward.1} parent=51 // pred_check_branch
        %305 = sbr.rel (%p303) target = $region56
      $region55: #{tsipras_cnn_forward.1} parent=51 // pred_region
        %p306 = scmp.lt.s32.totalorder %s16, 1
        %s307 = scalar_select %p306, %s16, 1
        %s308 = smul.addr %s307, 32
        %s309 = smul.addr %s308, 8
        %s310 = scalar_lea.vmem %s0, %s309
      $region56: #{tsipras_cnn_forward.1} parent=51 // pred_fallthru
        _
    $region52: #{tsipras_cnn_forward.1} parent=5 // pred_fallthru
      _
    %p311 = scmp.le.s32.totalorder 1, %s16
    %p312 = scmp.lt.s32.totalorder %s16, 3
    %p313 = pnand %p311, %p312
    %p314 = pneg %p313
    // Predicated region
    $region57: #{tsipras_cnn_forward.1} parent=5 // pred_check
      _
    $region58: #{tsipras_cnn_forward.1} parent=5 // pred_check_branch
      %316 = sbr.rel (%p313) target = $region60
    $region59: #{tsipras_cnn_forward.1} parent=5 // pred_region
      %s317 = ssub.s32 %s16, 1
      %p318 = scmp.lt.s32.totalorder %s21, 1
      %s319 = scalar_select %p318, %s21, 1
      %s320 = smul.addr %s319, 32
      %s321 = smul.addr %s320, 8
      %s322 = scalar_lea.vmem %s0, %s321
      %p323 = pneg %p42
      %p324 = pneg %p39
      %p325 = pneg %p63
      %p326 = pneg %p60
      %p327 = pneg %p84
      %p328 = pneg %p81
      %p329 = pneg %p105
      %p330 = pneg %p102
      %p331 = pneg %p126
      %p332 = pneg %p123
      %p333 = pneg %p147
      %p334 = pneg %p144
      %p335 = pneg %p168
      %p336 = pneg %p165
      %p337 = pneg %p189
      %p338 = pneg %p186
      %p339 = pneg %p210
      %p340 = pneg %p207
      %p341 = pneg %p231
      %p342 = pneg %p228
      %p343 = pneg %p257
      %p344 = pneg %p254
      %p345 = scmp.lt.s32.totalorder %s21, 1
      %s346 = scalar_select %p345, %s21, 1
      %s347 = smul.addr %s346, 8
      %s348 = scalar_lea.vmem %s10, %s347
      %p349 = scmp.lt.s32.totalorder %s21, 1
      %s350 = scalar_select %p349, %s21, 1
      %s351 = smul.addr %s350, 32
      %s352 = smul.addr %s351, 8
      %s353 = scalar_lea.vmem %s0, %s352
      %p354 = scmp.lt.s32.totalorder %s21, 1
      %s355 = scalar_select %p354, %s21, 1
      %s356 = smul.addr %s355, 8
      %s357 = scalar_lea.vmem %s10, %s356
      %v358 = vld [vmem:[%s1] sm:$0x1]
      %v360 = vlaneseq
      %v361 = vshrl.u32 %v360, 7
      %v362 = vsub.s32 0, %v361
      %v363 = vrot.slane %v358, %v362
      %vm365 = vcmask 23552
      %366 = vst.msk [vmem:[#allocation2] sm:$0xff] %vm365, %v363
      %367 = vst.msk [vmem:[#allocation2 + $0x8] sm:$0xff] %vm365, %v363
      %vm368 = vcmask 17408
      %369 = vst.msk [vmem:[#allocation2 + $0x10] sm:$0x3] %vm368, %v363
      %370 = vst.msk [vmem:[#allocation2 + $0x18] sm:$0xff] %vm365, %v363
      %371 = vst.msk [vmem:[#allocation2 + $0x20] sm:$0xff] %vm365, %v363
      %372 = vst.msk [vmem:[#allocation2 + $0x28] sm:$0x3] %vm368, %v363
      %373 = vst.msk [vmem:[#allocation2 + $0x30] sm:$0xff] %vm365, %v363
      %374 = vst.msk [vmem:[#allocation2 + $0x38] sm:$0xff] %vm365, %v363
      %375 = vst.msk [vmem:[#allocation2 + $0x40] sm:$0x3] %vm368, %v363
      %376 = vst.msk [vmem:[#allocation2 + $0x48] sm:$0xff] %vm365, %v363
      %377 = vst.msk [vmem:[#allocation2 + $0x50] sm:$0xff] %vm365, %v363
      %378 = vst.msk [vmem:[#allocation2 + $0x58] sm:$0x3] %vm368, %v363
      %379 = vst.msk [vmem:[#allocation2 + $0x60] sm:$0xff] %vm365, %v363
      %380 = vst.msk [vmem:[#allocation2 + $0x68] sm:$0xff] %vm365, %v363
      %381 = vst.msk [vmem:[#allocation2 + $0x70] sm:$0x3] %vm368, %v363
      %382 = vst.msk [vmem:[#allocation2 + $0x78] sm:$0xff] %vm365, %v363
      %383 = vst.msk [vmem:[#allocation2 + $0x80] sm:$0xff] %vm365, %v363
      %384 = vst.msk [vmem:[#allocation2 + $0x88] sm:$0x3] %vm368, %v363
      %385 = vst.msk [vmem:[#allocation2 + $0x90] sm:$0xff] %vm365, %v363
      %386 = vst.msk [vmem:[#allocation2 + $0x98] sm:$0xff] %vm365, %v363
      %387 = vst.msk [vmem:[#allocation2 + $0xa0] sm:$0x3] %vm368, %v363
      %388 = vst.msk [vmem:[#allocation2 + $0xa8] sm:$0xff] %vm365, %v363
      %389 = vst.msk [vmem:[#allocation2 + $0xb0] sm:$0xff] %vm365, %v363
      %390 = vst.msk [vmem:[#allocation2 + $0xb8] sm:$0x3] %vm368, %v363
      %391 = vst.msk [vmem:[#allocation2 + $0xc0] sm:$0xff] %vm365, %v363
      %392 = vst.msk [vmem:[#allocation2 + $0xc8] sm:$0xff] %vm365, %v363
      %393 = vst.msk [vmem:[#allocation2 + $0xd0] sm:$0x3] %vm368, %v363
      %394 = vst.msk [vmem:[#allocation2 + $0xd8] sm:$0xff] %vm365, %v363
      %395 = vst.msk [vmem:[#allocation2 + $0xe0] sm:$0xff] %vm365, %v363
      %396 = vst.msk [vmem:[#allocation2 + $0xe8] sm:$0x3] %vm368, %v363
      %397 = vst.msk [vmem:[#allocation2 + $0xf0] sm:$0xff] %vm365, %v363
      %398 = vst.msk [vmem:[#allocation2 + $0xf8] sm:$0xff] %vm365, %v363
      %399 = vst.msk [vmem:[#allocation2 + $0x100] sm:$0x3] %vm368, %v363
      %400 = vst.msk [vmem:[#allocation2 + $0x108] sm:$0xff] %vm365, %v363
      %401 = vst.msk [vmem:[#allocation2 + $0x110] sm:$0xff] %vm365, %v363
      %402 = vst.msk [vmem:[#allocation2 + $0x118] sm:$0x3] %vm368, %v363
      %403 = vst.msk [vmem:[#allocation2 + $0x120] sm:$0xff] %vm365, %v363
      %404 = vst.msk [vmem:[#allocation2 + $0x128] sm:$0xff] %vm365, %v363
      %405 = vst.msk [vmem:[#allocation2 + $0x130] sm:$0x3] %vm368, %v363
      %406 = vst.msk [vmem:[#allocation2 + $0x138] sm:$0xff] %vm365, %v363
      %407 = vst.msk [vmem:[#allocation2 + $0x140] sm:$0xff] %vm365, %v363
      %408 = vst.msk [vmem:[#allocation2 + $0x148] sm:$0x3] %vm368, %v363
      %409 = vst.msk [vmem:[#allocation2 + $0x150] sm:$0xff] %vm365, %v363
      %410 = vst.msk [vmem:[#allocation2 + $0x158] sm:$0xff] %vm365, %v363
      %411 = vst.msk [vmem:[#allocation2 + $0x160] sm:$0x3] %vm368, %v363
      %412 = vst.msk [vmem:[#allocation2 + $0x168] sm:$0xff] %vm365, %v363
      %413 = vst.msk [vmem:[#allocation2 + $0x170] sm:$0xff] %vm365, %v363
      %414 = vst.msk [vmem:[#allocation2 + $0x178] sm:$0x3] %vm368, %v363
      %415 = vst.msk [vmem:[#allocation2 + $0x180] sm:$0xff] %vm365, %v363
      %416 = vst.msk [vmem:[#allocation2 + $0x188] sm:$0xff] %vm365, %v363
      %417 = vst.msk [vmem:[#allocation2 + $0x190] sm:$0x3] %vm368, %v363
      %418 = vst.msk [vmem:[#allocation2 + $0x198] sm:$0xff] %vm365, %v363
      %419 = vst.msk [vmem:[#allocation2 + $0x1a0] sm:$0xff] %vm365, %v363
      %420 = vst.msk [vmem:[#allocation2 + $0x1a8] sm:$0x3] %vm368, %v363
      %v421 = vld [vmem:[%s353] sm:$0xff]
      %v422 = vld [vmem:[%s353 + $0x8] sm:$0xff]
      %v423 = vld [vmem:[%s353 + $0x10] sm:$0xff]
      %v424 = vld [vmem:[%s353 + $0x18] sm:$0xff]
      %v425 = vld [vmem:[%s353 + $0x20] sm:$0xff]
      %v426 = vld [vmem:[%s353 + $0x28] sm:$0xff]
      %v427 = vld [vmem:[%s353 + $0x30] sm:$0xff]
      %v428 = vld [vmem:[%s353 + $0x38] sm:$0xff]
      %v429 = vld [vmem:[%s353 + $0x40] sm:$0xff]
      %v430 = vld [vmem:[%s353 + $0x48] sm:$0xff]
      %v431 = vld [vmem:[%s353 + $0x50] sm:$0xff]
      %v432 = vld [vmem:[%s353 + $0x58] sm:$0xff]
      %v433 = vld [vmem:[%s353 + $0x60] sm:$0xff]
      %v434 = vld [vmem:[%s353 + $0x68] sm:$0xff]
      %v435 = vld [vmem:[%s353 + $0x70] sm:$0xff]
      %v436 = vld [vmem:[%s353 + $0x78] sm:$0xff]
      %v437 = vld [vmem:[%s353 + $0x80] sm:$0xff]
      %v438 = vld [vmem:[%s353 + $0x88] sm:$0xff]
      %v439 = vld [vmem:[%s353 + $0x90] sm:$0xff]
      %v440 = vld [vmem:[%s353 + $0x98] sm:$0xff]
      %v441 = vld [vmem:[%s353 + $0xa0] sm:$0xff]
      %v442 = vld [vmem:[%s353 + $0xa8] sm:$0xff]
      %v443 = vld [vmem:[%s353 + $0xb0] sm:$0xff]
      %v444 = vld [vmem:[%s353 + $0xb8] sm:$0xff]
      %v445 = vld [vmem:[%s353 + $0xc0] sm:$0xff]
      %v446 = vld [vmem:[%s353 + $0xc8] sm:$0xff]
      %v447 = vld [vmem:[%s353 + $0xd0] sm:$0xff]
      %v448 = vld [vmem:[%s353 + $0xd8] sm:$0xff]
      %v449 = vld [vmem:[%s353 + $0xe0] sm:$0xff]
      %v450 = vld [vmem:[%s353 + $0xe8] sm:$0xff]
      %v451 = vld [vmem:[%s353 + $0xf0] sm:$0xff]
      %v452 = vld [vmem:[%s353 + $0xf8] sm:$0xff]
      %s453 = scalar_lea.vmem [#allocation2], 24
      %454 = vst.msk [vmem:[%s453 + $0x1] sm:$0xff] %vm365, %v421
      %455 = vst.msk [vmem:[%s453 + $0x9] sm:$0xff] %vm365, %v422
      %456 = vst.msk [vmem:[%s453 + $0x19] sm:$0xff] %vm365, %v423
      %457 = vst.msk [vmem:[%s453 + $0x21] sm:$0xff] %vm365, %v424
      %458 = vst.msk [vmem:[%s453 + $0x31] sm:$0xff] %vm365, %v425
      %459 = vst.msk [vmem:[%s453 + $0x39] sm:$0xff] %vm365, %v426
      %460 = vst.msk [vmem:[%s453 + $0x49] sm:$0xff] %vm365, %v427
      %461 = vst.msk [vmem:[%s453 + $0x51] sm:$0xff] %vm365, %v428
      %462 = vst.msk [vmem:[%s453 + $0x61] sm:$0xff] %vm365, %v429
      %463 = vst.msk [vmem:[%s453 + $0x69] sm:$0xff] %vm365, %v430
      %464 = vst.msk [vmem:[%s453 + $0x79] sm:$0xff] %vm365, %v431
      %465 = vst.msk [vmem:[%s453 + $0x81] sm:$0xff] %vm365, %v432
      %466 = vst.msk [vmem:[%s453 + $0x91] sm:$0xff] %vm365, %v433
      %467 = vst.msk [vmem:[%s453 + $0x99] sm:$0xff] %vm365, %v434
      %468 = vst.msk [vmem:[%s453 + $0xa9] sm:$0xff] %vm365, %v435
      %469 = vst.msk [vmem:[%s453 + $0xb1] sm:$0xff] %vm365, %v436
      %470 = vst.msk [vmem:[%s453 + $0xc1] sm:$0xff] %vm365, %v437
      %471 = vst.msk [vmem:[%s453 + $0xc9] sm:$0xff] %vm365, %v438
      %472 = vst.msk [vmem:[%s453 + $0xd9] sm:$0xff] %vm365, %v439
      %473 = vst.msk [vmem:[%s453 + $0xe1] sm:$0xff] %vm365, %v440
      %474 = vst.msk [vmem:[%s453 + $0xf1] sm:$0xff] %vm365, %v441
      %475 = vst.msk [vmem:[%s453 + $0xf9] sm:$0xff] %vm365, %v442
      %476 = vst.msk [vmem:[%s453 + $0x109] sm:$0xff] %vm365, %v443
      %477 = vst.msk [vmem:[%s453 + $0x111] sm:$0xff] %vm365, %v444
      %478 = vst.msk [vmem:[%s453 + $0x121] sm:$0xff] %vm365, %v445
      %479 = vst.msk [vmem:[%s453 + $0x129] sm:$0xff] %vm365, %v446
      %480 = vst.msk [vmem:[%s453 + $0x139] sm:$0xff] %vm365, %v447
      %481 = vst.msk [vmem:[%s453 + $0x141] sm:$0xff] %vm365, %v448
      %482 = vst.msk [vmem:[%s453 + $0x151] sm:$0xff] %vm365, %v449
      %483 = vst.msk [vmem:[%s453 + $0x159] sm:$0xff] %vm365, %v450
      %484 = vst.msk [vmem:[%s453 + $0x169] sm:$0xff] %vm365, %v451
      %485 = vst.msk [vmem:[%s453 + $0x171] sm:$0xff] %vm365, %v452
      %v486 = vld [vmem:[#allocation2] sm:$0xff]
      %v487 = vld [vmem:[#allocation2 + $0x8] sm:$0xff]
      %v488 = vld [vmem:[#allocation2 + $0x18] sm:$0xff]
      %v489 = vld [vmem:[#allocation2 + $0x20] sm:$0xff]
      %v490 = vld [vmem:[#allocation2 + $0x30] sm:$0xff]
      %v491 = vld [vmem:[#allocation2 + $0x38] sm:$0xff]
      %v492 = vld [vmem:[#allocation2 + $0x48] sm:$0xff]
      %v493 = vld [vmem:[#allocation2 + $0x50] sm:$0xff]
      %v494 = vld [vmem:[#allocation2 + $0x60] sm:$0xff]
      %v495 = vld [vmem:[#allocation2 + $0x68] sm:$0xff]
      %v496 = vld [vmem:[#allocation2 + $0x78] sm:$0xff]
      %v497 = vld [vmem:[#allocation2 + $0x80] sm:$0xff]
      %v498 = vld [vmem:[#allocation2 + $0x90] sm:$0xff]
      %v499 = vld [vmem:[#allocation2 + $0x98] sm:$0xff]
      %v500 = vld [vmem:[#allocation2 + $0xa8] sm:$0xff]
      %v501 = vld [vmem:[#allocation2 + $0xb0] sm:$0xff]
      %v502 = vld [vmem:[#allocation2 + $0xc0] sm:$0xff]
      %v503 = vld [vmem:[#allocation2 + $0xc8] sm:$0xff]
      %v504 = vld [vmem:[#allocation2 + $0xd8] sm:$0xff]
      %v505 = vld [vmem:[#allocation2 + $0xe0] sm:$0xff]
      %v506 = vld [vmem:[#allocation2 + $0xf0] sm:$0xff]
      %v507 = vld [vmem:[#allocation2 + $0xf8] sm:$0xff]
      %v508 = vld [vmem:[#allocation2 + $0x108] sm:$0xff]
      %v509 = vld [vmem:[#allocation2 + $0x110] sm:$0xff]
      %v510 = vld [vmem:[#allocation2 + $0x120] sm:$0xff]
      %v511 = vld [vmem:[#allocation2 + $0x128] sm:$0xff]
      %v512 = vld [vmem:[#allocation2 + $0x138] sm:$0xff]
      %v513 = vld [vmem:[#allocation2 + $0x140] sm:$0xff]
      %v514 = vld [vmem:[#allocation2 + $0x150] sm:$0xff]
      %v515 = vld [vmem:[#allocation2 + $0x158] sm:$0xff]
      %v516 = vld [vmem:[#allocation2 + $0x168] sm:$0xff]
      %v517 = vld [vmem:[#allocation2 + $0x170] sm:$0xff]
      %v518 = vld [vmem:[%s2] sm:$0x7]
      %v519 = vld [vmem:[#allocation2 + $0x1] sm:$0xff]
      %v520 = vld [vmem:[#allocation2 + $0x9] sm:$0xff]
      %v521 = vld [vmem:[#allocation2 + $0x19] sm:$0xff]
      %v522 = vld [vmem:[#allocation2 + $0x21] sm:$0xff]
      %v523 = vld [vmem:[#allocation2 + $0x31] sm:$0xff]
      %v524 = vld [vmem:[#allocation2 + $0x39] sm:$0xff]
      %v525 = vld [vmem:[#allocation2 + $0x49] sm:$0xff]
      %v526 = vld [vmem:[#allocation2 + $0x51] sm:$0xff]
      %v527 = vld [vmem:[#allocation2 + $0x61] sm:$0xff]
      %v528 = vld [vmem:[#allocation2 + $0x69] sm:$0xff]
      %v529 = vld [vmem:[#allocation2 + $0x79] sm:$0xff]
      %v530 = vld [vmem:[#allocation2 + $0x81] sm:$0xff]
      %v531 = vld [vmem:[#allocation2 + $0x91] sm:$0xff]
      %v532 = vld [vmem:[#allocation2 + $0x99] sm:$0xff]
      %v533 = vld [vmem:[#allocation2 + $0xa9] sm:$0xff]
      %v534 = vld [vmem:[#allocation2 + $0xb1] sm:$0xff]
      %v535 = vld [vmem:[#allocation2 + $0xc1] sm:$0xff]
      %v536 = vld [vmem:[#allocation2 + $0xc9] sm:$0xff]
      %v537 = vld [vmem:[#allocation2 + $0xd9] sm:$0xff]
      %v538 = vld [vmem:[#allocation2 + $0xe1] sm:$0xff]
      %v539 = vld [vmem:[#allocation2 + $0xf1] sm:$0xff]
      %v540 = vld [vmem:[#allocation2 + $0xf9] sm:$0xff]
      %v541 = vld [vmem:[#allocation2 + $0x109] sm:$0xff]
      %v542 = vld [vmem:[#allocation2 + $0x111] sm:$0xff]
      %v543 = vld [vmem:[#allocation2 + $0x121] sm:$0xff]
      %v544 = vld [vmem:[#allocation2 + $0x129] sm:$0xff]
      %v545 = vld [vmem:[#allocation2 + $0x139] sm:$0xff]
      %v546 = vld [vmem:[#allocation2 + $0x141] sm:$0xff]
      %v547 = vld [vmem:[#allocation2 + $0x151] sm:$0xff]
      %v548 = vld [vmem:[#allocation2 + $0x159] sm:$0xff]
      %v549 = vld [vmem:[#allocation2 + $0x169] sm:$0xff]
      %v550 = vld [vmem:[#allocation2 + $0x171] sm:$0xff]
      %s551 = scalar_lea.vmem %s2, 4
      %v552 = vld [vmem:[%s551] sm:$0x7]
      %v554 = vsel %vm365, %v519, 0
      %v557 = vsel %vm365, %v520, 0
      %v560 = vsel %vm365, %v521, 0
      %v563 = vsel %vm365, %v522, 0
      %v566 = vsel %vm365, %v523, 0
      %v569 = vsel %vm365, %v524, 0
      %v572 = vsel %vm365, %v525, 0
      %v575 = vsel %vm365, %v526, 0
      %v578 = vsel %vm365, %v527, 0
      %v581 = vsel %vm365, %v528, 0
      %v584 = vsel %vm365, %v529, 0
      %v587 = vsel %vm365, %v530, 0
      %v590 = vsel %vm365, %v531, 0
      %v593 = vsel %vm365, %v532, 0
      %v596 = vsel %vm365, %v533, 0
      %v599 = vsel %vm365, %v534, 0
      %v602 = vsel %vm365, %v535, 0
      %v605 = vsel %vm365, %v536, 0
      %v608 = vsel %vm365, %v537, 0
      %v611 = vsel %vm365, %v538, 0
      %v614 = vsel %vm365, %v539, 0
      %v617 = vsel %vm365, %v540, 0
      %v620 = vsel %vm365, %v541, 0
      %v623 = vsel %vm365, %v542, 0
      %v626 = vsel %vm365, %v543, 0
      %v629 = vsel %vm365, %v544, 0
      %v632 = vsel %vm365, %v545, 0
      %v635 = vsel %vm365, %v546, 0
      %v638 = vsel %vm365, %v547, 0
      %v641 = vsel %vm365, %v548, 0
      %v644 = vsel %vm365, %v549, 0
      %v647 = vsel %vm365, %v550, 0
      %vm649 = vcmask 1042432
      %v651 = vsel %vm649, %v552, 0
      %653 = vmatprep.subr.mxu0 0.0
      %654 = vmatpush1.msra.mxu0 %v651
      %655 = vmatprep.subr.mxu0 0.0
      %656 = vmatpush1.msra.mxu0 0.0
      %657 = vmatprep.subr.mxu0 0.0
      %658 = vmatpush1.msra.mxu0 0.0
      %659 = vmatprep.subr.mxu0 0.0
      %660 = vmatpush1.msra.mxu0 0.0
      %661 = vmatprep.subr.mxu0 0.0
      %662 = vmatpush1.msra.mxu0 0.0
      %663 = vmatprep.subr.mxu0 0.0
      %664 = vmatpush1.msra.mxu0 0.0
      %665 = vmatprep.subr.mxu0 0.0
      %666 = vmatpush1.msra.mxu0 0.0
      %667 = vmatprep.subr.mxu0 0.0
      %668 = vmatpush1.msra.mxu0 0.0
      %669 = vmatprep.subr.mxu0 0.0
      %670 = vmatpush1.msra.mxu0 0.0
      %671 = vmatprep.subr.mxu0 0.0
      %672 = vmatpush1.msra.mxu0 0.0
      %673 = vmatprep.subr.mxu0 0.0
      %674 = vmatpush1.msra.mxu0 0.0
      %675 = vmatprep.subr.mxu0 0.0
      %676 = vmatpush1.msra.mxu0 0.0
      %677 = vmatprep.subr.mxu0 0.0
      %678 = vmatpush1.msra.mxu0 0.0
      %679 = vmatprep.subr.mxu0 0.0
      %680 = vmatpush1.msra.mxu0 0.0
      %681 = vmatprep.subr.mxu0 0.0
      %682 = vmatpush1.msra.mxu0 0.0
      %683 = vmatprep.subr.mxu0 0.0
      %684 = vmatpush1.msra.mxu0 0.0
      %685 = vmatprep.subr.mxu0 0.0
      %686 = vmatpush1.msra.mxu0 0.0
      %687 = vmatprep.subr.mxu0 0.0
      %688 = vmatpush1.msra.mxu0 0.0
      %689 = vmatprep.subr.mxu0 0.0
      %690 = vmatpush1.msra.mxu0 0.0
      %691 = vmatprep.subr.mxu0 0.0
      %692 = vmatpush1.msra.mxu0 0.0
      %693 = vmatprep.subr.mxu0 0.0
      %694 = vmatpush1.msra.mxu0 0.0
      %695 = vmatprep.subr.mxu0 0.0
      %696 = vmatpush1.msra.mxu0 0.0
      %697 = vmatprep.subr.mxu0 0.0
      %698 = vmatpush1.msra.mxu0 0.0
      %699 = vmatprep.subr.mxu0 0.0
      %700 = vmatpush1.msra.mxu0 0.0
      %701 = vmatprep.subr.mxu0 0.0
      %702 = vmatpush1.msra.mxu0 0.0
      %703 = vmatprep.subr.mxu0 0.0
      %704 = vmatpush1.msra.mxu0 0.0
      %705 = vmatprep.subr.mxu0 0.0
      %706 = vmatpush1.msra.mxu0 0.0
      %707 = vmatprep.subr.mxu0 0.0
      %708 = vmatpush1.msra.mxu0 0.0
      %709 = vmatprep.subr.mxu0 0.0
      %710 = vmatpush1.msra.mxu0 0.0
      %711 = vmatprep.subr.mxu0 0.0
      %712 = vmatpush1.msra.mxu0 0.0
      %713 = vmatprep.subr.mxu0 0.0
      %714 = vmatpush1.msra.mxu0 0.0
      %715 = vmatprep.subr.mxu0 0.0
      %716 = vmatpush1.msra.mxu0 0.0
      %717 = vmatprep.mubr.f32.mxu0 0.0
      %718 = vmatmul.mubr.f32.gmra.mrb[0].mxu0 %v554
      %v719 = vpop.f32.mrb[0].mxu0
      %v720 = vadd.f32 0.0, %v719
      %v721 = vpop.f32.mrb[0].mxu0
      %722 = vmatprep.mubr.f32.mxu0 0.0
      %723 = vmatmul.mubr.f32.gmra.mrb[0].mxu0 %v557
      %v724 = vpop.f32.mrb[0].mxu0
      %v725 = vadd.f32 0.0, %v724
      %v726 = vpop.f32.mrb[0].mxu0
      %727 = vmatprep.mubr.f32.mxu0 0.0
      %728 = vmatmul.mubr.f32.gmra.mrb[0].mxu0 %v560
      %v729 = vpop.f32.mrb[0].mxu0
      %v730 = vadd.f32 0.0, %v729
      %v731 = vpop.f32.mrb[0].mxu0
      %732 = vmatprep.mubr.f32.mxu0 0.0
      %733 = vmatmul.mubr.f32.gmra.mrb[0].mxu0 %v563
      %v734 = vpop.f32.mrb[0].mxu0
      %v735 = vadd.f32 0.0, %v734
      %v736 = vpop.f32.mrb[0].mxu0
      %737 = vmatprep.mubr.f32.mxu0 0.0
      %738 = vmatmul.mubr.f32.gmra.mrb[0].mxu0 %v566
      %v739 = vpop.f32.mrb[0].mxu0
      %v740 = vadd.f32 0.0, %v739
      %v741 = vpop.f32.mrb[0].mxu0
      %742 = vmatprep.mubr.f32.mxu0 0.0
      %743 = vmatmul.mubr.f32.gmra.mrb[0].mxu0 %v569
      %v744 = vpop.f32.mrb[0].mxu0
      %v745 = vadd.f32 0.0, %v744
      %v746 = vpop.f32.mrb[0].mxu0
      %747 = vmatprep.mubr.f32.mxu0 0.0
      %748 = vmatmul.mubr.f32.gmra.mrb[0].mxu0 %v572
      %v749 = vpop.f32.mrb[0].mxu0
      %v750 = vadd.f32 0.0, %v749
      %v751 = vpop.f32.mrb[0].mxu0
      %752 = vmatprep.mubr.f32.mxu0 0.0
      %753 = vmatmul.mubr.f32.gmra.mrb[0].mxu0 %v575
      %v754 = vpop.f32.mrb[0].mxu0
      %v755 = vadd.f32 0.0, %v754
      %v756 = vpop.f32.mrb[0].mxu0
      %757 = vmatprep.mubr.f32.mxu0 0.0
      %758 = vmatmul.mubr.f32.gmra.mrb[0].mxu0 %v578
      %v759 = vpop.f32.mrb[0].mxu0
      %v760 = vadd.f32 0.0, %v759
      %v761 = vpop.f32.mrb[0].mxu0
      %762 = vmatprep.mubr.f32.mxu0 0.0
      %763 = vmatmul.mubr.f32.gmra.mrb[0].mxu0 %v581
      %v764 = vpop.f32.mrb[0].mxu0
      %v765 = vadd.f32 0.0, %v764
      %v766 = vpop.f32.mrb[0].mxu0
      %767 = vmatprep.mubr.f32.mxu0 0.0
      %768 = vmatmul.mubr.f32.gmra.mrb[0].mxu0 %v584
      %v769 = vpop.f32.mrb[0].mxu0
      %v770 = vadd.f32 0.0, %v769
      %v771 = vpop.f32.mrb[0].mxu0
      %772 = vmatprep.mubr.f32.mxu0 0.0
      %773 = vmatmul.mubr.f32.gmra.mrb[0].mxu0 %v587
      %v774 = vpop.f32.mrb[0].mxu0
      %v775 = vadd.f32 0.0, %v774
      %v776 = vpop.f32.mrb[0].mxu0
      %777 = vmatprep.mubr.f32.mxu0 0.0
      %778 = vmatmul.mubr.f32.gmra.mrb[0].mxu0 %v590
      %v779 = vpop.f32.mrb[0].mxu0
      %v780 = vadd.f32 0.0, %v779
      %v781 = vpop.f32.mrb[0].mxu0
      %782 = vmatprep.mubr.f32.mxu0 0.0
      %783 = vmatmul.mubr.f32.gmra.mrb[0].mxu0 %v593
      %v784 = vpop.f32.mrb[0].mxu0
      %v785 = vadd.f32 0.0, %v784
      %v786 = vpop.f32.mrb[0].mxu0
      %787 = vmatprep.mubr.f32.mxu0 0.0
      %788 = vmatmul.mubr.f32.gmra.mrb[0].mxu0 %v596
      %v789 = vpop.f32.mrb[0].mxu0
      %v790 = vadd.f32 0.0, %v789
      %v791 = vpop.f32.mrb[0].mxu0
      %792 = vmatprep.mubr.f32.mxu0 0.0
      %793 = vmatmul.mubr.f32.gmra.mrb[0].mxu0 %v599
      %v794 = vpop.f32.mrb[0].mxu0
      %v795 = vadd.f32 0.0, %v794
      %v796 = vpop.f32.mrb[0].mxu0
      %797 = vmatprep.mubr.f32.mxu0 0.0
      %798 = vmatmul.mubr.f32.gmra.mrb[0].mxu0 %v602
      %v799 = vpop.f32.mrb[0].mxu0
      %v800 = vadd.f32 0.0, %v799
      %v801 = vpop.f32.mrb[0].mxu0
      %802 = vmatprep.mubr.f32.mxu0 0.0
      %803 = vmatmul.mubr.f32.gmra.mrb[0].mxu0 %v605
      %v804 = vpop.f32.mrb[0].mxu0
      %v805 = vadd.f32 0.0, %v804
      %v806 = vpop.f32.mrb[0].mxu0
      %807 = vmatprep.mubr.f32.mxu0 0.0
      %808 = vmatmul.mubr.f32.gmra.mrb[0].mxu0 %v608
      %v809 = vpop.f32.mrb[0].mxu0
      %v810 = vadd.f32 0.0, %v809
      %v811 = vpop.f32.mrb[0].mxu0
      %812 = vmatprep.mubr.f32.mxu0 0.0
      %813 = vmatmul.mubr.f32.gmra.mrb[0].mxu0 %v611
      %v814 = vpop.f32.mrb[0].mxu0
      %v815 = vadd.f32 0.0, %v814
      %v816 = vpop.f32.mrb[0].mxu0
      %817 = vmatprep.mubr.f32.mxu0 0.0
      %818 = vmatmul.mubr.f32.gmra.mrb[0].mxu0 %v614
      %v819 = vpop.f32.mrb[0].mxu0
      %v820 = vadd.f32 0.0, %v819
      %v821 = vpop.f32.mrb[0].mxu0
      %822 = vmatprep.mubr.f32.mxu0 0.0
      %823 = vmatmul.mubr.f32.gmra.mrb[0].mxu0 %v617
      %v824 = vpop.f32.mrb[0].mxu0
      %v825 = vadd.f32 0.0, %v824
      %v826 = vpop.f32.mrb[0].mxu0
      %827 = vmatprep.mubr.f32.mxu0 0.0
      %828 = vmatmul.mubr.f32.gmra.mrb[0].mxu0 %v620
      %v829 = vpop.f32.mrb[0].mxu0
      %v830 = vadd.f32 0.0, %v829
      %v831 = vpop.f32.mrb[0].mxu0
      %832 = vmatprep.mubr.f32.mxu0 0.0
      %833 = vmatmul.mubr.f32.gmra.mrb[0].mxu0 %v623
      %v834 = vpop.f32.mrb[0].mxu0
      %v835 = vadd.f32 0.0, %v834
      %v836 = vpop.f32.mrb[0].mxu0
      %837 = vmatprep.mubr.f32.mxu0 0.0
      %838 = vmatmul.mubr.f32.gmra.mrb[0].mxu0 %v626
      %v839 = vpop.f32.mrb[0].mxu0
      %v840 = vadd.f32 0.0, %v839
      %v841 = vpop.f32.mrb[0].mxu0
      %842 = vmatprep.mubr.f32.mxu0 0.0
      %843 = vmatmul.mubr.f32.gmra.mrb[0].mxu0 %v629
      %v844 = vpop.f32.mrb[0].mxu0
      %v845 = vadd.f32 0.0, %v844
      %v846 = vpop.f32.mrb[0].mxu0
      %847 = vmatprep.mubr.f32.mxu0 0.0
      %848 = vmatmul.mubr.f32.gmra.mrb[0].mxu0 %v632
      %v849 = vpop.f32.mrb[0].mxu0
      %v850 = vadd.f32 0.0, %v849
      %v851 = vpop.f32.mrb[0].mxu0
      %852 = vmatprep.mubr.f32.mxu0 0.0
      %853 = vmatmul.mubr.f32.gmra.mrb[0].mxu0 %v635
      %v854 = vpop.f32.mrb[0].mxu0
      %v855 = vadd.f32 0.0, %v854
      %v856 = vpop.f32.mrb[0].mxu0
      %857 = vmatprep.mubr.f32.mxu0 0.0
      %858 = vmatmul.mubr.f32.gmra.mrb[0].mxu0 %v638
      %v859 = vpop.f32.mrb[0].mxu0
      %v860 = vadd.f32 0.0, %v859
      %v861 = vpop.f32.mrb[0].mxu0
      %862 = vmatprep.mubr.f32.mxu0 0.0
      %863 = vmatmul.mubr.f32.gmra.mrb[0].mxu0 %v641
      %v864 = vpop.f32.mrb[0].mxu0
      %v865 = vadd.f32 0.0, %v864
      %v866 = vpop.f32.mrb[0].mxu0
      %867 = vmatprep.mubr.f32.mxu0 0.0
      %868 = vmatmul.mubr.f32.gmra.mrb[0].mxu0 %v644
      %v869 = vpop.f32.mrb[0].mxu0
      %v870 = vadd.f32 0.0, %v869
      %v871 = vpop.f32.mrb[0].mxu0
      %872 = vmatprep.mubr.f32.mxu0 0.0
      %873 = vmatmul.mubr.f32.gmra.mrb[0].mxu0 %v647
      %v874 = vpop.f32.mrb[0].mxu0
      %v875 = vadd.f32 0.0, %v874
      %v876 = vpop.f32.mrb[0].mxu0
      %877 = vdwg.mxu0
      %v879 = vsel %vm365, %v486, 0
      %v882 = vsel %vm365, %v487, 0
      %v885 = vsel %vm365, %v488, 0
      %v888 = vsel %vm365, %v489, 0
      %v891 = vsel %vm365, %v490, 0
      %v894 = vsel %vm365, %v491, 0
      %v897 = vsel %vm365, %v492, 0
      %v900 = vsel %vm365, %v493, 0
      %v903 = vsel %vm365, %v494, 0
      %v906 = vsel %vm365, %v495, 0
      %v909 = vsel %vm365, %v496, 0
      %v912 = vsel %vm365, %v497, 0
      %v915 = vsel %vm365, %v498, 0
      %v918 = vsel %vm365, %v499, 0
      %v921 = vsel %vm365, %v500, 0
      %v924 = vsel %vm365, %v501, 0
      %v927 = vsel %vm365, %v502, 0
      %v930 = vsel %vm365, %v503, 0
      %v933 = vsel %vm365, %v504, 0
      %v936 = vsel %vm365, %v505, 0
      %v939 = vsel %vm365, %v506, 0
      %v942 = vsel %vm365, %v507, 0
      %v945 = vsel %vm365, %v508, 0
      %v948 = vsel %vm365, %v509, 0
      %v951 = vsel %vm365, %v510, 0
      %v954 = vsel %vm365, %v511, 0
      %v957 = vsel %vm365, %v512, 0
      %v960 = vsel %vm365, %v513, 0
      %v963 = vsel %vm365, %v514, 0
      %v966 = vsel %vm365, %v515, 0
      %v969 = vsel %vm365, %v516, 0
      %v972 = vsel %vm365, %v517, 0
      %v975 = vsel %vm649, %v518, 0
      %977 = vmatprep.subr.mxu0 0.0
      %978 = vmatpush1.msra.mxu0 %v975
      %979 = vmatprep.subr.mxu0 0.0
      %980 = vmatpush1.msra.mxu0 0.0
      %981 = vmatprep.subr.mxu0 0.0
      %982 = vmatpush1.msra.mxu0 0.0
      %983 = vmatprep.subr.mxu0 0.0
      %984 = vmatpush1.msra.mxu0 0.0
      %985 = vmatprep.subr.mxu0 0.0
      %986 = vmatpush1.msra.mxu0 0.0
      %987 = vmatprep.subr.mxu0 0.0
      %988 = vmatpush1.msra.mxu0 0.0
      %989 = vmatprep.subr.mxu0 0.0
      %990 = vmatpush1.msra.mxu0 0.0
      %991 = vmatprep.subr.mxu0 0.0
      %992 = vmatpush1.msra.mxu0 0.0
      %993 = vmatprep.subr.mxu0 0.0
      %994 = vmatpush1.msra.mxu0 0.0
      %995 = vmatprep.subr.mxu0 0.0
      %996 = vmatpush1.msra.mxu0 0.0
      %997 = vmatprep.subr.mxu0 0.0
      %998 = vmatpush1.msra.mxu0 0.0
      %999 = vmatprep.subr.mxu0 0.0
      %1000 = vmatpush1.msra.mxu0 0.0
      %1001 = vmatprep.subr.mxu0 0.0
      %1002 = vmatpush1.msra.mxu0 0.0
      %1003 = vmatprep.subr.mxu0 0.0
      %1004 = vmatpush1.msra.mxu0 0.0
      %1005 = vmatprep.subr.mxu0 0.0
      %1006 = vmatpush1.msra.mxu0 0.0
      %1007 = vmatprep.subr.mxu0 0.0
      %1008 = vmatpush1.msra.mxu0 0.0
      %1009 = vmatprep.subr.mxu0 0.0
      %1010 = vmatpush1.msra.mxu0 0.0
      %1011 = vmatprep.subr.mxu0 0.0
      %1012 = vmatpush1.msra.mxu0 0.0
      %1013 = vmatprep.subr.mxu0 0.0
      %1014 = vmatpush1.msra.mxu0 0.0
      %1015 = vmatprep.subr.mxu0 0.0
      %1016 = vmatpush1.msra.mxu0 0.0
      %1017 = vmatprep.subr.mxu0 0.0
      %1018 = vmatpush1.msra.mxu0 0.0
      %1019 = vmatprep.subr.mxu0 0.0
      %1020 = vmatpush1.msra.mxu0 0.0
      %1021 = vmatprep.subr.mxu0 0.0
      %1022 = vmatpush1.msra.mxu0 0.0
      %1023 = vmatprep.subr.mxu0 0.0
      %1024 = vmatpush1.msra.mxu0 0.0
      %1025 = vmatprep.subr.mxu0 0.0
      %1026 = vmatpush1.msra.mxu0 0.0
      %1027 = vmatprep.subr.mxu0 0.0
      %1028 = vmatpush1.msra.mxu0 0.0
      %1029 = vmatprep.subr.mxu0 0.0
      %1030 = vmatpush1.msra.mxu0 0.0
      %1031 = vmatprep.subr.mxu0 0.0
      %1032 = vmatpush1.msra.mxu0 0.0
      %1033 = vmatprep.subr.mxu0 0.0
      %1034 = vmatpush1.msra.mxu0 0.0
      %1035 = vmatprep.subr.mxu0 0.0
      %1036 = vmatpush1.msra.mxu0 0.0
      %1037 = vmatprep.subr.mxu0 0.0
      %1038 = vmatpush1.msra.mxu0 0.0
      %1039 = vmatprep.subr.mxu0 0.0
      %1040 = vmatpush1.msra.mxu0 0.0
      %1041 = vmatprep.mubr.f32.mxu0 0.0
      %1042 = vmatmul.mubr.f32.gmra.mrb[0].mxu0 %v879
      %v1043 = vpop.f32.mrb[0].mxu0
      %v1044 = vadd.f32 %v720, %v1043
      %v1045 = vpop.f32.mrb[0].mxu0
      %1046 = vmatprep.mubr.f32.mxu0 0.0
      %1047 = vmatmul.mubr.f32.gmra.mrb[0].mxu0 %v882
      %v1048 = vpop.f32.mrb[0].mxu0
      %v1049 = vadd.f32 %v725, %v1048
      %v1050 = vpop.f32.mrb[0].mxu0
      %1051 = vmatprep.mubr.f32.mxu0 0.0
      %1052 = vmatmul.mubr.f32.gmra.mrb[0].mxu0 %v885
      %v1053 = vpop.f32.mrb[0].mxu0
      %v1054 = vadd.f32 %v730, %v1053
      %v1055 = vpop.f32.mrb[0].mxu0
      %1056 = vmatprep.mubr.f32.mxu0 0.0
      %1057 = vmatmul.mubr.f32.gmra.mrb[0].mxu0 %v888
      %v1058 = vpop.f32.mrb[0].mxu0
      %v1059 = vadd.f32 %v735, %v1058
      %v1060 = vpop.f32.mrb[0].mxu0
      %1061 = vmatprep.mubr.f32.mxu0 0.0
      %1062 = vmatmul.mubr.f32.gmra.mrb[0].mxu0 %v891
      %v1063 = vpop.f32.mrb[0].mxu0
      %v1064 = vadd.f32 %v740, %v1063
      %v1065 = vpop.f32.mrb[0].mxu0
      %1066 = vmatprep.mubr.f32.mxu0 0.0
      %1067 = vmatmul.mubr.f32.gmra.mrb[0].mxu0 %v894
      %v1068 = vpop.f32.mrb[0].mxu0
      %v1069 = vadd.f32 %v745, %v1068
      %v1070 = vpop.f32.mrb[0].mxu0
      %1071 = vmatprep.mubr.f32.mxu0 0.0
      %1072 = vmatmul.mubr.f32.gmra.mrb[0].mxu0 %v897
      %v1073 = vpop.f32.mrb[0].mxu0
      %v1074 = vadd.f32 %v750, %v1073
      %v1075 = vpop.f32.mrb[0].mxu0
      %1076 = vmatprep.mubr.f32.mxu0 0.0
      %1077 = vmatmul.mubr.f32.gmra.mrb[0].mxu0 %v900
      %v1078 = vpop.f32.mrb[0].mxu0
      %v1079 = vadd.f32 %v755, %v1078
      %v1080 = vpop.f32.mrb[0].mxu0
      %1081 = vmatprep.mubr.f32.mxu0 0.0
      %1082 = vmatmul.mubr.f32.gmra.mrb[0].mxu0 %v903
      %v1083 = vpop.f32.mrb[0].mxu0
      %v1084 = vadd.f32 %v760, %v1083
      %v1085 = vpop.f32.mrb[0].mxu0
      %1086 = vmatprep.mubr.f32.mxu0 0.0
      %1087 = vmatmul.mubr.f32.gmra.mrb[0].mxu0 %v906
      %v1088 = vpop.f32.mrb[0].mxu0
      %v1089 = vadd.f32 %v765, %v1088
      %v1090 = vpop.f32.mrb[0].mxu0
      %1091 = vmatprep.mubr.f32.mxu0 0.0
      %1092 = vmatmul.mubr.f32.gmra.mrb[0].mxu0 %v909
      %v1093 = vpop.f32.mrb[0].mxu0
      %v1094 = vadd.f32 %v770, %v1093
      %v1095 = vpop.f32.mrb[0].mxu0
      %1096 = vmatprep.mubr.f32.mxu0 0.0
      %1097 = vmatmul.mubr.f32.gmra.mrb[0].mxu0 %v912
      %v1098 = vpop.f32.mrb[0].mxu0
      %v1099 = vadd.f32 %v775, %v1098
      %v1100 = vpop.f32.mrb[0].mxu0
      %1101 = vmatprep.mubr.f32.mxu0 0.0
      %1102 = vmatmul.mubr.f32.gmra.mrb[0].mxu0 %v915
      %v1103 = vpop.f32.mrb[0].mxu0
      %v1104 = vadd.f32 %v780, %v1103
      %v1105 = vpop.f32.mrb[0].mxu0
      %1106 = vmatprep.mubr.f32.mxu0 0.0
      %1107 = vmatmul.mubr.f32.gmra.mrb[0].mxu0 %v918
      %v1108 = vpop.f32.mrb[0].mxu0
      %v1109 = vadd.f32 %v785, %v1108
      %v1110 = vpop.f32.mrb[0].mxu0
      %1111 = vmatprep.mubr.f32.mxu0 0.0
      %1112 = vmatmul.mubr.f32.gmra.mrb[0].mxu0 %v921
      %v1113 = vpop.f32.mrb[0].mxu0
      %v1114 = vadd.f32 %v790, %v1113
      %v1115 = vpop.f32.mrb[0].mxu0
      %1116 = vmatprep.mubr.f32.mxu0 0.0
      %1117 = vmatmul.mubr.f32.gmra.mrb[0].mxu0 %v924
      %v1118 = vpop.f32.mrb[0].mxu0
      %v1119 = vadd.f32 %v795, %v1118
      %v1120 = vpop.f32.mrb[0].mxu0
      %1121 = vmatprep.mubr.f32.mxu0 0.0
      %1122 = vmatmul.mubr.f32.gmra.mrb[0].mxu0 %v927
      %v1123 = vpop.f32.mrb[0].mxu0
      %v1124 = vadd.f32 %v800, %v1123
      %v1125 = vpop.f32.mrb[0].mxu0
      %1126 = vmatprep.mubr.f32.mxu0 0.0
      %1127 = vmatmul.mubr.f32.gmra.mrb[0].mxu0 %v930
      %v1128 = vpop.f32.mrb[0].mxu0
      %v1129 = vadd.f32 %v805, %v1128
      %v1130 = vpop.f32.mrb[0].mxu0
      %1131 = vmatprep.mubr.f32.mxu0 0.0
      %1132 = vmatmul.mubr.f32.gmra.mrb[0].mxu0 %v933
      %v1133 = vpop.f32.mrb[0].mxu0
      %v1134 = vadd.f32 %v810, %v1133
      %v1135 = vpop.f32.mrb[0].mxu0
      %1136 = vmatprep.mubr.f32.mxu0 0.0
      %1137 = vmatmul.mubr.f32.gmra.mrb[0].mxu0 %v936
      %v1138 = vpop.f32.mrb[0].mxu0
      %v1139 = vadd.f32 %v815, %v1138
      %v1140 = vpop.f32.mrb[0].mxu0
      %1141 = vmatprep.mubr.f32.mxu0 0.0
      %1142 = vmatmul.mubr.f32.gmra.mrb[0].mxu0 %v939
      %v1143 = vpop.f32.mrb[0].mxu0
      %v1144 = vadd.f32 %v820, %v1143
      %v1145 = vpop.f32.mrb[0].mxu0
      %1146 = vmatprep.mubr.f32.mxu0 0.0
      %1147 = vmatmul.mubr.f32.gmra.mrb[0].mxu0 %v942
      %v1148 = vpop.f32.mrb[0].mxu0
      %v1149 = vadd.f32 %v825, %v1148
      %v1150 = vpop.f32.mrb[0].mxu0
      %1151 = vmatprep.mubr.f32.mxu0 0.0
      %1152 = vmatmul.mubr.f32.gmra.mrb[0].mxu0 %v945
      %v1153 = vpop.f32.mrb[0].mxu0
      %v1154 = vadd.f32 %v830, %v1153
      %v1155 = vpop.f32.mrb[0].mxu0
      %1156 = vmatprep.mubr.f32.mxu0 0.0
      %1157 = vmatmul.mubr.f32.gmra.mrb[0].mxu0 %v948
      %v1158 = vpop.f32.mrb[0].mxu0
      %v1159 = vadd.f32 %v835, %v1158
      %v1160 = vpop.f32.mrb[0].mxu0
      %1161 = vmatprep.mubr.f32.mxu0 0.0
      %1162 = vmatmul.mubr.f32.gmra.mrb[0].mxu0 %v951
      %v1163 = vpop.f32.mrb[0].mxu0
      %v1164 = vadd.f32 %v840, %v1163
      %v1165 = vpop.f32.mrb[0].mxu0
      %1166 = vmatprep.mubr.f32.mxu0 0.0
      %1167 = vmatmul.mubr.f32.gmra.mrb[0].mxu0 %v954
      %v1168 = vpop.f32.mrb[0].mxu0
      %v1169 = vadd.f32 %v845, %v1168
      %v1170 = vpop.f32.mrb[0].mxu0
      %1171 = vmatprep.mubr.f32.mxu0 0.0
      %1172 = vmatmul.mubr.f32.gmra.mrb[0].mxu0 %v957
      %v1173 = vpop.f32.mrb[0].mxu0
      %v1174 = vadd.f32 %v850, %v1173
      %v1175 = vpop.f32.mrb[0].mxu0
      %1176 = vmatprep.mubr.f32.mxu0 0.0
      %1177 = vmatmul.mubr.f32.gmra.mrb[0].mxu0 %v960
      %v1178 = vpop.f32.mrb[0].mxu0
      %v1179 = vadd.f32 %v855, %v1178
      %v1180 = vpop.f32.mrb[0].mxu0
      %1181 = vmatprep.mubr.f32.mxu0 0.0
      %1182 = vmatmul.mubr.f32.gmra.mrb[0].mxu0 %v963
      %v1183 = vpop.f32.mrb[0].mxu0
      %v1184 = vadd.f32 %v860, %v1183
      %v1185 = vpop.f32.mrb[0].mxu0
      %1186 = vmatprep.mubr.f32.mxu0 0.0
      %1187 = vmatmul.mubr.f32.gmra.mrb[0].mxu0 %v966
      %v1188 = vpop.f32.mrb[0].mxu0
      %v1189 = vadd.f32 %v865, %v1188
      %v1190 = vpop.f32.mrb[0].mxu0
      %1191 = vmatprep.mubr.f32.mxu0 0.0
      %1192 = vmatmul.mubr.f32.gmra.mrb[0].mxu0 %v969
      %v1193 = vpop.f32.mrb[0].mxu0
      %v1194 = vadd.f32 %v870, %v1193
      %v1195 = vpop.f32.mrb[0].mxu0
      %1196 = vmatprep.mubr.f32.mxu0 0.0
      %1197 = vmatmul.mubr.f32.gmra.mrb[0].mxu0 %v972
      %v1198 = vpop.f32.mrb[0].mxu0
      %v1199 = vadd.f32 %v875, %v1198
      %v1200 = vpop.f32.mrb[0].mxu0
      %1201 = vdwg.mxu0
      %v1202 = vld [vmem:[#allocation2 + $0x2] sm:$0xff]
      %v1203 = vld [vmem:[#allocation2 + $0xa] sm:$0xff]
      %v1204 = vld [vmem:[#allocation2 + $0x1a] sm:$0xff]
      %v1205 = vld [vmem:[#allocation2 + $0x22] sm:$0xff]
      %v1206 = vld [vmem:[#allocation2 + $0x32] sm:$0xff]
      %v1207 = vld [vmem:[#allocation2 + $0x3a] sm:$0xff]
      %v1208 = vld [vmem:[#allocation2 + $0x4a] sm:$0xff]
      %v1209 = vld [vmem:[#allocation2 + $0x52] sm:$0xff]
      %v1210 = vld [vmem:[#allocation2 + $0x62] sm:$0xff]
      %v1211 = vld [vmem:[#allocation2 + $0x6a] sm:$0xff]
      %v1212 = vld [vmem:[#allocation2 + $0x7a] sm:$0xff]
      %v1213 = vld [vmem:[#allocation2 + $0x82] sm:$0xff]
      %v1214 = vld [vmem:[#allocation2 + $0x92] sm:$0xff]
      %v1215 = vld [vmem:[#allocation2 + $0x9a] sm:$0xff]
      %v1216 = vld [vmem:[#allocation2 + $0xaa] sm:$0xff]
      %v1217 = vld [vmem:[#allocation2 + $0xb2] sm:$0xff]
      %v1218 = vld [vmem:[#allocation2 + $0xc2] sm:$0xff]
      %v1219 = vld [vmem:[#allocation2 + $0xca] sm:$0xff]
      %v1220 = vld [vmem:[#allocation2 + $0xda] sm:$0xff]
      %v1221 = vld [vmem:[#allocation2 + $0xe2] sm:$0xff]
      %v1222 = vld [vmem:[#allocation2 + $0xf2] sm:$0xff]
      %v1223 = vld [vmem:[#allocation2 + $0xfa] sm:$0xff]
      %v1224 = vld [vmem:[#allocation2 + $0x10a] sm:$0xff]
      %v1225 = vld [vmem:[#allocation2 + $0x112] sm:$0xff]
      %v1226 = vld [vmem:[#allocation2 + $0x122] sm:$0xff]
      %v1227 = vld [vmem:[#allocation2 + $0x12a] sm:$0xff]
      %v1228 = vld [vmem:[#allocation2 + $0x13a] sm:$0xff]
      %v1229 = vld [vmem:[#allocation2 + $0x142] sm:$0xff]
      %v1230 = vld [vmem:[#allocation2 + $0x152] sm:$0xff]
      %v1231 = vld [vmem:[#allocation2 + $0x15a] sm:$0xff]
      %v1232 = vld [vmem:[#allocation2 + $0x16a] sm:$0xff]
      %v1233 = vld [vmem:[#allocation2 + $0x172] sm:$0xff]
      %s1234 = scalar_lea.vmem %s2, 8
      %v1235 = vld [vmem:[%s1234] sm:$0x7]
      %v1237 = vsel %vm365, %v1202, 0
      %v1240 = vsel %vm365, %v1203, 0
      %v1243 = vsel %vm365, %v1204, 0
      %v1246 = vsel %vm365, %v1205, 0
      %v1249 = vsel %vm365, %v1206, 0
      %v1252 = vsel %vm365, %v1207, 0
      %v1255 = vsel %vm365, %v1208, 0
      %v1258 = vsel %vm365, %v1209, 0
      %v1261 = vsel %vm365, %v1210, 0
      %v1264 = vsel %vm365, %v1211, 0
      %v1267 = vsel %vm365, %v1212, 0
      %v1270 = vsel %vm365, %v1213, 0
      %v1273 = vsel %vm365, %v1214, 0
      %v1276 = vsel %vm365, %v1215, 0
      %v1279 = vsel %vm365, %v1216, 0
      %v1282 = vsel %vm365, %v1217, 0
      %v1285 = vsel %vm365, %v1218, 0
      %v1288 = vsel %vm365, %v1219, 0
      %v1291 = vsel %vm365, %v1220, 0
      %v1294 = vsel %vm365, %v1221, 0
      %v1297 = vsel %vm365, %v1222, 0
      %v1300 = vsel %vm365, %v1223, 0
      %v1303 = vsel %vm365, %v1224, 0
      %v1306 = vsel %vm365, %v1225, 0
      %v1309 = vsel %vm365, %v1226, 0
      %v1312 = vsel %vm365, %v1227, 0
      %v1315 = vsel %vm365, %v1228, 0
      %v1318 = vsel %vm365, %v1229, 0
      %v1321 = vsel %vm365, %v1230, 0
      %v1324 = vsel %vm365, %v1231, 0
      %v1327 = vsel %vm365, %v1232, 0
      %v1330 = vsel %vm365, %v1233, 0
      %v1333 = vsel %vm649, %v1235, 0
      %1335 = vmatprep.subr.mxu0 0.0
      %1336 = vmatpush1.msra.mxu0 %v1333
      %1337 = vmatprep.subr.mxu0 0.0
      %1338 = vmatpush1.msra.mxu0 0.0
      %1339 = vmatprep.subr.mxu0 0.0
      %1340 = vmatpush1.msra.mxu0 0.0
      %1341 = vmatprep.subr.mxu0 0.0
      %1342 = vmatpush1.msra.mxu0 0.0
      %1343 = vmatprep.subr.mxu0 0.0
      %1344 = vmatpush1.msra.mxu0 0.0
      %1345 = vmatprep.subr.mxu0 0.0
      %1346 = vmatpush1.msra.mxu0 0.0
      %1347 = vmatprep.subr.mxu0 0.0
      %1348 = vmatpush1.msra.mxu0 0.0
      %1349 = vmatprep.subr.mxu0 0.0
      %1350 = vmatpush1.msra.mxu0 0.0
      %1351 = vmatprep.subr.mxu0 0.0
      %1352 = vmatpush1.msra.mxu0 0.0
      %1353 = vmatprep.subr.mxu0 0.0
      %1354 = vmatpush1.msra.mxu0 0.0
      %1355 = vmatprep.subr.mxu0 0.0
      %1356 = vmatpush1.msra.mxu0 0.0
      %1357 = vmatprep.subr.mxu0 0.0
      %1358 = vmatpush1.msra.mxu0 0.0
      %1359 = vmatprep.subr.mxu0 0.0
      %1360 = vmatpush1.msra.mxu0 0.0
      %1361 = vmatprep.subr.mxu0 0.0
      %1362 = vmatpush1.msra.mxu0 0.0
      %1363 = vmatprep.subr.mxu0 0.0
      %1364 = vmatpush1.msra.mxu0 0.0
      %1365 = vmatprep.subr.mxu0 0.0
      %1366 = vmatpush1.msra.mxu0 0.0
      %1367 = vmatprep.subr.mxu0 0.0
      %1368 = vmatpush1.msra.mxu0 0.0
      %1369 = vmatprep.subr.mxu0 0.0
      %1370 = vmatpush1.msra.mxu0 0.0
      %1371 = vmatprep.subr.mxu0 0.0
      %1372 = vmatpush1.msra.mxu0 0.0
      %1373 = vmatprep.subr.mxu0 0.0
      %1374 = vmatpush1.msra.mxu0 0.0
      %1375 = vmatprep.subr.mxu0 0.0
      %1376 = vmatpush1.msra.mxu0 0.0
      %1377 = vmatprep.subr.mxu0 0.0
      %1378 = vmatpush1.msra.mxu0 0.0
      %1379 = vmatprep.subr.mxu0 0.0
      %1380 = vmatpush1.msra.mxu0 0.0
      %1381 = vmatprep.subr.mxu0 0.0
      %1382 = vmatpush1.msra.mxu0 0.0
      %1383 = vmatprep.subr.mxu0 0.0
      %1384 = vmatpush1.msra.mxu0 0.0
      %1385 = vmatprep.subr.mxu0 0.0
      %1386 = vmatpush1.msra.mxu0 0.0
      %1387 = vmatprep.subr.mxu0 0.0
      %1388 = vmatpush1.msra.mxu0 0.0
      %1389 = vmatprep.subr.mxu0 0.0
      %1390 = vmatpush1.msra.mxu0 0.0
      %1391 = vmatprep.subr.mxu0 0.0
      %1392 = vmatpush1.msra.mxu0 0.0
      %1393 = vmatprep.subr.mxu0 0.0
      %1394 = vmatpush1.msra.mxu0 0.0
      %1395 = vmatprep.subr.mxu0 0.0
      %1396 = vmatpush1.msra.mxu0 0.0
      %1397 = vmatprep.subr.mxu0 0.0
      %1398 = vmatpush1.msra.mxu0 0.0
      %1399 = vmatprep.mubr.f32.mxu0 0.0
      %1400 = vmatmul.mubr.f32.gmra.mrb[0].mxu0 %v1237
      %v1401 = vpop.f32.mrb[0].mxu0
      %v1402 = vadd.f32 0.0, %v1401
      %v1403 = vpop.f32.mrb[0].mxu0
      %1404 = vmatprep.mubr.f32.mxu0 0.0
      %1405 = vmatmul.mubr.f32.gmra.mrb[0].mxu0 %v1240
      %v1406 = vpop.f32.mrb[0].mxu0
      %v1407 = vadd.f32 0.0, %v1406
      %v1408 = vpop.f32.mrb[0].mxu0
      %1409 = vmatprep.mubr.f32.mxu0 0.0
      %1410 = vmatmul.mubr.f32.gmra.mrb[0].mxu0 %v1243
      %v1411 = vpop.f32.mrb[0].mxu0
      %v1412 = vadd.f32 0.0, %v1411
      %v1413 = vpop.f32.mrb[0].mxu0
      %1414 = vmatprep.mubr.f32.mxu0 0.0
      %1415 = vmatmul.mubr.f32.gmra.mrb[0].mxu0 %v1246
      %v1416 = vpop.f32.mrb[0].mxu0
      %v1417 = vadd.f32 0.0, %v1416
      %v1418 = vpop.f32.mrb[0].mxu0
      %1419 = vmatprep.mubr.f32.mxu0 0.0
      %1420 = vmatmul.mubr.f32.gmra.mrb[0].mxu0 %v1249
      %v1421 = vpop.f32.mrb[0].mxu0
      %v1422 = vadd.f32 0.0, %v1421
      %v1423 = vpop.f32.mrb[0].mxu0
      %1424 = vmatprep.mubr.f32.mxu0 0.0
      %1425 = vmatmul.mubr.f32.gmra.mrb[0].mxu0 %v1252
      %v1426 = vpop.f32.mrb[0].mxu0
      %v1427 = vadd.f32 0.0, %v1426
      %v1428 = vpop.f32.mrb[0].mxu0
      %1429 = vmatprep.mubr.f32.mxu0 0.0
      %1430 = vmatmul.mubr.f32.gmra.mrb[0].mxu0 %v1255
      %v1431 = vpop.f32.mrb[0].mxu0
      %v1432 = vadd.f32 0.0, %v1431
      %v1433 = vpop.f32.mrb[0].mxu0
      %1434 = vmatprep.mubr.f32.mxu0 0.0
      %1435 = vmatmul.mubr.f32.gmra.mrb[0].mxu0 %v1258
      %v1436 = vpop.f32.mrb[0].mxu0
      %v1437 = vadd.f32 0.0, %v1436
      %v1438 = vpop.f32.mrb[0].mxu0
      %1439 = vmatprep.mubr.f32.mxu0 0.0
      %1440 = vmatmul.mubr.f32.gmra.mrb[0].mxu0 %v1261
      %v1441 = vpop.f32.mrb[0].mxu0
      %v1442 = vadd.f32 0.0, %v1441
      %v1443 = vpop.f32.mrb[0].mxu0
      %1444 = vmatprep.mubr.f32.mxu0 0.0
      %1445 = vmatmul.mubr.f32.gmra.mrb[0].mxu0 %v1264
      %v1446 = vpop.f32.mrb[0].mxu0
      %v1447 = vadd.f32 0.0, %v1446
      %v1448 = vpop.f32.mrb[0].mxu0
      %1449 = vmatprep.mubr.f32.mxu0 0.0
      %1450 = vmatmul.mubr.f32.gmra.mrb[0].mxu0 %v1267
      %v1451 = vpop.f32.mrb[0].mxu0
      %v1452 = vadd.f32 0.0, %v1451
      %v1453 = vpop.f32.mrb[0].mxu0
      %1454 = vmatprep.mubr.f32.mxu0 0.0
      %1455 = vmatmul.mubr.f32.gmra.mrb[0].mxu0 %v1270
      %v1456 = vpop.f32.mrb[0].mxu0
      %v1457 = vadd.f32 0.0, %v1456
      %v1458 = vpop.f32.mrb[0].mxu0
      %1459 = vmatprep.mubr.f32.mxu0 0.0
      %1460 = vmatmul.mubr.f32.gmra.mrb[0].mxu0 %v1273
      %v1461 = vpop.f32.mrb[0].mxu0
      %v1462 = vadd.f32 0.0, %v1461
      %v1463 = vpop.f32.mrb[0].mxu0
      %1464 = vmatprep.mubr.f32.mxu0 0.0
      %1465 = vmatmul.mubr.f32.gmra.mrb[0].mxu0 %v1276
      %v1466 = vpop.f32.mrb[0].mxu0
      %v1467 = vadd.f32 0.0, %v1466
      %v1468 = vpop.f32.mrb[0].mxu0
      %1469 = vmatprep.mubr.f32.mxu0 0.0
      %1470 = vmatmul.mubr.f32.gmra.mrb[0].mxu0 %v1279
      %v1471 = vpop.f32.mrb[0].mxu0
      %v1472 = vadd.f32 0.0, %v1471
      %v1473 = vpop.f32.mrb[0].mxu0
      %1474 = vmatprep.mubr.f32.mxu0 0.0
      %1475 = vmatmul.mubr.f32.gmra.mrb[0].mxu0 %v1282
      %v1476 = vpop.f32.mrb[0].mxu0
      %v1477 = vadd.f32 0.0, %v1476
      %v1478 = vpop.f32.mrb[0].mxu0
      %1479 = vmatprep.mubr.f32.mxu0 0.0
      %1480 = vmatmul.mubr.f32.gmra.mrb[0].mxu0 %v1285
      %v1481 = vpop.f32.mrb[0].mxu0
      %v1482 = vadd.f32 0.0, %v1481
      %v1483 = vpop.f32.mrb[0].mxu0
      %1484 = vmatprep.mubr.f32.mxu0 0.0
      %1485 = vmatmul.mubr.f32.gmra.mrb[0].mxu0 %v1288
      %v1486 = vpop.f32.mrb[0].mxu0
      %v1487 = vadd.f32 0.0, %v1486
      %v1488 = vpop.f32.mrb[0].mxu0
      %1489 = vmatprep.mubr.f32.mxu0 0.0
      %1490 = vmatmul.mubr.f32.gmra.mrb[0].mxu0 %v1291
      %v1491 = vpop.f32.mrb[0].mxu0
      %v1492 = vadd.f32 0.0, %v1491
      %v1493 = vpop.f32.mrb[0].mxu0
      %1494 = vmatprep.mubr.f32.mxu0 0.0
      %1495 = vmatmul.mubr.f32.gmra.mrb[0].mxu0 %v1294
      %v1496 = vpop.f32.mrb[0].mxu0
      %v1497 = vadd.f32 0.0, %v1496
      %v1498 = vpop.f32.mrb[0].mxu0
      %1499 = vmatprep.mubr.f32.mxu0 0.0
      %1500 = vmatmul.mubr.f32.gmra.mrb[0].mxu0 %v1297
      %v1501 = vpop.f32.mrb[0].mxu0
      %v1502 = vadd.f32 0.0, %v1501
      %v1503 = vpop.f32.mrb[0].mxu0
      %1504 = vmatprep.mubr.f32.mxu0 0.0
      %1505 = vmatmul.mubr.f32.gmra.mrb[0].mxu0 %v1300
      %v1506 = vpop.f32.mrb[0].mxu0
      %v1507 = vadd.f32 0.0, %v1506
      %v1508 = vpop.f32.mrb[0].mxu0
      %1509 = vmatprep.mubr.f32.mxu0 0.0
      %1510 = vmatmul.mubr.f32.gmra.mrb[0].mxu0 %v1303
      %v1511 = vpop.f32.mrb[0].mxu0
      %v1512 = vadd.f32 0.0, %v1511
      %v1513 = vpop.f32.mrb[0].mxu0
      %1514 = vmatprep.mubr.f32.mxu0 0.0
      %1515 = vmatmul.mubr.f32.gmra.mrb[0].mxu0 %v1306
      %v1516 = vpop.f32.mrb[0].mxu0
      %v1517 = vadd.f32 0.0, %v1516
      %v1518 = vpop.f32.mrb[0].mxu0
      %1519 = vmatprep.mubr.f32.mxu0 0.0
      %1520 = vmatmul.mubr.f32.gmra.mrb[0].mxu0 %v1309
      %v1521 = vpop.f32.mrb[0].mxu0
      %v1522 = vadd.f32 0.0, %v1521
      %v1523 = vpop.f32.mrb[0].mxu0
      %1524 = vmatprep.mubr.f32.mxu0 0.0
      %1525 = vmatmul.mubr.f32.gmra.mrb[0].mxu0 %v1312
      %v1526 = vpop.f32.mrb[0].mxu0
      %v1527 = vadd.f32 0.0, %v1526
      %v1528 = vpop.f32.mrb[0].mxu0
      %1529 = vmatprep.mubr.f32.mxu0 0.0
      %1530 = vmatmul.mubr.f32.gmra.mrb[0].mxu0 %v1315
      %v1531 = vpop.f32.mrb[0].mxu0
      %v1532 = vadd.f32 0.0, %v1531
      %v1533 = vpop.f32.mrb[0].mxu0
      %1534 = vmatprep.mubr.f32.mxu0 0.0
      %1535 = vmatmul.mubr.f32.gmra.mrb[0].mxu0 %v1318
      %v1536 = vpop.f32.mrb[0].mxu0
      %v1537 = vadd.f32 0.0, %v1536
      %v1538 = vpop.f32.mrb[0].mxu0
      %1539 = vmatprep.mubr.f32.mxu0 0.0
      %1540 = vmatmul.mubr.f32.gmra.mrb[0].mxu0 %v1321
      %v1541 = vpop.f32.mrb[0].mxu0
      %v1542 = vadd.f32 0.0, %v1541
      %v1543 = vpop.f32.mrb[0].mxu0
      %1544 = vmatprep.mubr.f32.mxu0 0.0
      %1545 = vmatmul.mubr.f32.gmra.mrb[0].mxu0 %v1324
      %v1546 = vpop.f32.mrb[0].mxu0
      %v1547 = vadd.f32 0.0, %v1546
      %v1548 = vpop.f32.mrb[0].mxu0
      %1549 = vmatprep.mubr.f32.mxu0 0.0
      %1550 = vmatmul.mubr.f32.gmra.mrb[0].mxu0 %v1327
      %v1551 = vpop.f32.mrb[0].mxu0
      %v1552 = vadd.f32 0.0, %v1551
      %v1553 = vpop.f32.mrb[0].mxu0
      %1554 = vmatprep.mubr.f32.mxu0 0.0
      %1555 = vmatmul.mubr.f32.gmra.mrb[0].mxu0 %v1330
      %v1556 = vpop.f32.mrb[0].mxu0
      %v1557 = vadd.f32 0.0, %v1556
      %v1558 = vpop.f32.mrb[0].mxu0
      %1559 = vdwg.mxu0
      %v1560 = vadd.f32 %v1044, %v1402
      %v1561 = vadd.f32 %v1049, %v1407
      %v1562 = vadd.f32 %v1054, %v1412
      %v1563 = vadd.f32 %v1059, %v1417
      %v1564 = vadd.f32 %v1064, %v1422
      %v1565 = vadd.f32 %v1069, %v1427
      %v1566 = vadd.f32 %v1074, %v1432
      %v1567 = vadd.f32 %v1079, %v1437
      %v1568 = vadd.f32 %v1084, %v1442
      %v1569 = vadd.f32 %v1089, %v1447
      %v1570 = vadd.f32 %v1094, %v1452
      %v1571 = vadd.f32 %v1099, %v1457
      %v1572 = vadd.f32 %v1104, %v1462
      %v1573 = vadd.f32 %v1109, %v1467
      %v1574 = vadd.f32 %v1114, %v1472
      %v1575 = vadd.f32 %v1119, %v1477
      %v1576 = vadd.f32 %v1124, %v1482
      %v1577 = vadd.f32 %v1129, %v1487
      %v1578 = vadd.f32 %v1134, %v1492
      %v1579 = vadd.f32 %v1139, %v1497
      %v1580 = vadd.f32 %v1144, %v1502
      %v1581 = vadd.f32 %v1149, %v1507
      %v1582 = vadd.f32 %v1154, %v1512
      %v1583 = vadd.f32 %v1159, %v1517
      %v1584 = vadd.f32 %v1164, %v1522
      %v1585 = vadd.f32 %v1169, %v1527
      %v1586 = vadd.f32 %v1174, %v1532
      %v1587 = vadd.f32 %v1179, %v1537
      %v1588 = vadd.f32 %v1184, %v1542
      %v1589 = vadd.f32 %v1189, %v1547
      %v1590 = vadd.f32 %v1194, %v1552
      %v1591 = vadd.f32 %v1199, %v1557
      %v1592 = vld [vmem:[%s453] sm:$0xff]
      %v1593 = vld [vmem:[%s453 + $0x8] sm:$0xff]
      %v1594 = vld [vmem:[%s453 + $0x18] sm:$0xff]
      %v1595 = vld [vmem:[%s453 + $0x20] sm:$0xff]
      %v1596 = vld [vmem:[%s453 + $0x30] sm:$0xff]
      %v1597 = vld [vmem:[%s453 + $0x38] sm:$0xff]
      %v1598 = vld [vmem:[%s453 + $0x48] sm:$0xff]
      %v1599 = vld [vmem:[%s453 + $0x50] sm:$0xff]
      %v1600 = vld [vmem:[%s453 + $0x60] sm:$0xff]
      %v1601 = vld [vmem:[%s453 + $0x68] sm:$0xff]
      %v1602 = vld [vmem:[%s453 + $0x78] sm:$0xff]
      %v1603 = vld [vmem:[%s453 + $0x80] sm:$0xff]
      %v1604 = vld [vmem:[%s453 + $0x90] sm:$0xff]
      %v1605 = vld [vmem:[%s453 + $0x98] sm:$0xff]
      %v1606 = vld [vmem:[%s453 + $0xa8] sm:$0xff]
      %v1607 = vld [vmem:[%s453 + $0xb0] sm:$0xff]
      %v1608 = vld [vmem:[%s453 + $0xc0] sm:$0xff]
      %v1609 = vld [vmem:[%s453 + $0xc8] sm:$0xff]
      %v1610 = vld [vmem:[%s453 + $0xd8] sm:$0xff]
      %v1611 = vld [vmem:[%s453 + $0xe0] sm:$0xff]
      %v1612 = vld [vmem:[%s453 + $0xf0] sm:$0xff]
      %v1613 = vld [vmem:[%s453 + $0xf8] sm:$0xff]
      %v1614 = vld [vmem:[%s453 + $0x108] sm:$0xff]
      %v1615 = vld [vmem:[%s453 + $0x110] sm:$0xff]
      %v1616 = vld [vmem:[%s453 + $0x120] sm:$0xff]
      %v1617 = vld [vmem:[%s453 + $0x128] sm:$0xff]
      %v1618 = vld [vmem:[%s453 + $0x138] sm:$0xff]
      %v1619 = vld [vmem:[%s453 + $0x140] sm:$0xff]
      %v1620 = vld [vmem:[%s453 + $0x150] sm:$0xff]
      %v1621 = vld [vmem:[%s453 + $0x158] sm:$0xff]
      %v1622 = vld [vmem:[%s453 + $0x168] sm:$0xff]
      %v1623 = vld [vmem:[%s453 + $0x170] sm:$0xff]
      %s1624 = scalar_lea.vmem %s2, 12
      %v1625 = vld [vmem:[%s1624] sm:$0x7]
      %v1627 = vsel %vm365, %v1592, 0
      %v1630 = vsel %vm365, %v1593, 0
      %v1633 = vsel %vm365, %v1594, 0
      %v1636 = vsel %vm365, %v1595, 0
      %v1639 = vsel %vm365, %v1596, 0
      %v1642 = vsel %vm365, %v1597, 0
      %v1645 = vsel %vm365, %v1598, 0
      %v1648 = vsel %vm365, %v1599, 0
      %v1651 = vsel %vm365, %v1600, 0
      %v1654 = vsel %vm365, %v1601, 0
      %v1657 = vsel %vm365, %v1602, 0
      %v1660 = vsel %vm365, %v1603, 0
      %v1663 = vsel %vm365, %v1604, 0
      %v1666 = vsel %vm365, %v1605, 0
      %v1669 = vsel %vm365, %v1606, 0
      %v1672 = vsel %vm365, %v1607, 0
      %v1675 = vsel %vm365, %v1608, 0
      %v1678 = vsel %vm365, %v1609, 0
      %v1681 = vsel %vm365, %v1610, 0
      %v1684 = vsel %vm365, %v1611, 0
      %v1687 = vsel %vm365, %v1612, 0
      %v1690 = vsel %vm365, %v1613, 0
      %v1693 = vsel %vm365, %v1614, 0
      %v1696 = vsel %vm365, %v1615, 0
      %v1699 = vsel %vm365, %v1616, 0
      %v1702 = vsel %vm365, %v1617, 0
      %v1705 = vsel %vm365, %v1618, 0
      %v1708 = vsel %vm365, %v1619, 0
      %v1711 = vsel %vm365, %v1620, 0
      %v1714 = vsel %vm365, %v1621, 0
      %v1717 = vsel %vm365, %v1622, 0
      %v1720 = vsel %vm365, %v1623, 0
      %v1723 = vsel %vm649, %v1625, 0
      %1725 = vmatprep.subr.mxu0 0.0
      %1726 = vmatpush1.msra.mxu0 %v1723
      %1727 = vmatprep.subr.mxu0 0.0
      %1728 = vmatpush1.msra.mxu0 0.0
      %1729 = vmatprep.subr.mxu0 0.0
      %1730 = vmatpush1.msra.mxu0 0.0
      %1731 = vmatprep.subr.mxu0 0.0
      %1732 = vmatpush1.msra.mxu0 0.0
      %1733 = vmatprep.subr.mxu0 0.0
      %1734 = vmatpush1.msra.mxu0 0.0
      %1735 = vmatprep.subr.mxu0 0.0
      %1736 = vmatpush1.msra.mxu0 0.0
      %1737 = vmatprep.subr.mxu0 0.0
      %1738 = vmatpush1.msra.mxu0 0.0
      %1739 = vmatprep.subr.mxu0 0.0
      %1740 = vmatpush1.msra.mxu0 0.0
      %1741 = vmatprep.subr.mxu0 0.0
      %1742 = vmatpush1.msra.mxu0 0.0
      %1743 = vmatprep.subr.mxu0 0.0
      %1744 = vmatpush1.msra.mxu0 0.0
      %1745 = vmatprep.subr.mxu0 0.0
      %1746 = vmatpush1.msra.mxu0 0.0
      %1747 = vmatprep.subr.mxu0 0.0
      %1748 = vmatpush1.msra.mxu0 0.0
      %1749 = vmatprep.subr.mxu0 0.0
      %1750 = vmatpush1.msra.mxu0 0.0
      %1751 = vmatprep.subr.mxu0 0.0
      %1752 = vmatpush1.msra.mxu0 0.0
      %1753 = vmatprep.subr.mxu0 0.0
      %1754 = vmatpush1.msra.mxu0 0.0
      %1755 = vmatprep.subr.mxu0 0.0
      %1756 = vmatpush1.msra.mxu0 0.0
      %1757 = vmatprep.subr.mxu0 0.0
      %1758 = vmatpush1.msra.mxu0 0.0
      %1759 = vmatprep.subr.mxu0 0.0
      %1760 = vmatpush1.msra.mxu0 0.0
      %1761 = vmatprep.subr.mxu0 0.0
      %1762 = vmatpush1.msra.mxu0 0.0
      %1763 = vmatprep.subr.mxu0 0.0
      %1764 = vmatpush1.msra.mxu0 0.0
      %1765 = vmatprep.subr.mxu0 0.0
      %1766 = vmatpush1.msra.mxu0 0.0
      %1767 = vmatprep.subr.mxu0 0.0
      %1768 = vmatpush1.msra.mxu0 0.0
      %1769 = vmatprep.subr.mxu0 0.0
      %1770 = vmatpush1.msra.mxu0 0.0
      %1771 = vmatprep.subr.mxu0 0.0
      %1772 = vmatpush1.msra.mxu0 0.0
      %1773 = vmatprep.subr.mxu0 0.0
      %1774 = vmatpush1.msra.mxu0 0.0
      %1775 = vmatprep.subr.mxu0 0.0
      %1776 = vmatpush1.msra.mxu0 0.0
      %1777 = vmatprep.subr.mxu0 0.0
      %1778 = vmatpush1.msra.mxu0 0.0
      %1779 = vmatprep.subr.mxu0 0.0
      %1780 = vmatpush1.msra.mxu0 0.0
      %1781 = vmatprep.subr.mxu0 0.0
      %1782 = vmatpush1.msra.mxu0 0.0
      %1783 = vmatprep.subr.mxu0 0.0
      %1784 = vmatpush1.msra.mxu0 0.0
      %1785 = vmatprep.subr.mxu0 0.0
      %1786 = vmatpush1.msra.mxu0 0.0
      %1787 = vmatprep.subr.mxu0 0.0
      %1788 = vmatpush1.msra.mxu0 0.0
      %1789 = vmatprep.mubr.f32.mxu0 0.0
      %1790 = vmatmul.mubr.f32.gmra.mrb[0].mxu0 %v1627
      %v1791 = vpop.f32.mrb[0].mxu0
      %v1792 = vadd.f32 0.0, %v1791
      %v1793 = vpop.f32.mrb[0].mxu0
      %1794 = vmatprep.mubr.f32.mxu0 0.0
      %1795 = vmatmul.mubr.f32.gmra.mrb[0].mxu0 %v1630
      %v1796 = vpop.f32.mrb[0].mxu0
      %v1797 = vadd.f32 0.0, %v1796
      %v1798 = vpop.f32.mrb[0].mxu0
      %1799 = vmatprep.mubr.f32.mxu0 0.0
      %1800 = vmatmul.mubr.f32.gmra.mrb[0].mxu0 %v1633
      %v1801 = vpop.f32.mrb[0].mxu0
      %v1802 = vadd.f32 0.0, %v1801
      %v1803 = vpop.f32.mrb[0].mxu0
      %1804 = vmatprep.mubr.f32.mxu0 0.0
      %1805 = vmatmul.mubr.f32.gmra.mrb[0].mxu0 %v1636
      %v1806 = vpop.f32.mrb[0].mxu0
      %v1807 = vadd.f32 0.0, %v1806
      %v1808 = vpop.f32.mrb[0].mxu0
      %1809 = vmatprep.mubr.f32.mxu0 0.0
      %1810 = vmatmul.mubr.f32.gmra.mrb[0].mxu0 %v1639
      %v1811 = vpop.f32.mrb[0].mxu0
      %v1812 = vadd.f32 0.0, %v1811
      %v1813 = vpop.f32.mrb[0].mxu0
      %1814 = vmatprep.mubr.f32.mxu0 0.0
      %1815 = vmatmul.mubr.f32.gmra.mrb[0].mxu0 %v1642
      %v1816 = vpop.f32.mrb[0].mxu0
      %v1817 = vadd.f32 0.0, %v1816
      %v1818 = vpop.f32.mrb[0].mxu0
      %1819 = vmatprep.mubr.f32.mxu0 0.0
      %1820 = vmatmul.mubr.f32.gmra.mrb[0].mxu0 %v1645
      %v1821 = vpop.f32.mrb[0].mxu0
      %v1822 = vadd.f32 0.0, %v1821
      %v1823 = vpop.f32.mrb[0].mxu0
      %1824 = vmatprep.mubr.f32.mxu0 0.0
      %1825 = vmatmul.mubr.f32.gmra.mrb[0].mxu0 %v1648
      %v1826 = vpop.f32.mrb[0].mxu0
      %v1827 = vadd.f32 0.0, %v1826
      %v1828 = vpop.f32.mrb[0].mxu0
      %1829 = vmatprep.mubr.f32.mxu0 0.0
      %1830 = vmatmul.mubr.f32.gmra.mrb[0].mxu0 %v1651
      %v1831 = vpop.f32.mrb[0].mxu0
      %v1832 = vadd.f32 0.0, %v1831
      %v1833 = vpop.f32.mrb[0].mxu0
      %1834 = vmatprep.mubr.f32.mxu0 0.0
      %1835 = vmatmul.mubr.f32.gmra.mrb[0].mxu0 %v1654
      %v1836 = vpop.f32.mrb[0].mxu0
      %v1837 = vadd.f32 0.0, %v1836
      %v1838 = vpop.f32.mrb[0].mxu0
      %1839 = vmatprep.mubr.f32.mxu0 0.0
      %1840 = vmatmul.mubr.f32.gmra.mrb[0].mxu0 %v1657
      %v1841 = vpop.f32.mrb[0].mxu0
      %v1842 = vadd.f32 0.0, %v1841
      %v1843 = vpop.f32.mrb[0].mxu0
      %1844 = vmatprep.mubr.f32.mxu0 0.0
      %1845 = vmatmul.mubr.f32.gmra.mrb[0].mxu0 %v1660
      %v1846 = vpop.f32.mrb[0].mxu0
      %v1847 = vadd.f32 0.0, %v1846
      %v1848 = vpop.f32.mrb[0].mxu0
      %1849 = vmatprep.mubr.f32.mxu0 0.0
      %1850 = vmatmul.mubr.f32.gmra.mrb[0].mxu0 %v1663
      %v1851 = vpop.f32.mrb[0].mxu0
      %v1852 = vadd.f32 0.0, %v1851
      %v1853 = vpop.f32.mrb[0].mxu0
      %1854 = vmatprep.mubr.f32.mxu0 0.0
      %1855 = vmatmul.mubr.f32.gmra.mrb[0].mxu0 %v1666
      %v1856 = vpop.f32.mrb[0].mxu0
      %v1857 = vadd.f32 0.0, %v1856
      %v1858 = vpop.f32.mrb[0].mxu0
      %1859 = vmatprep.mubr.f32.mxu0 0.0
      %1860 = vmatmul.mubr.f32.gmra.mrb[0].mxu0 %v1669
      %v1861 = vpop.f32.mrb[0].mxu0
      %v1862 = vadd.f32 0.0, %v1861
      %v1863 = vpop.f32.mrb[0].mxu0
      %1864 = vmatprep.mubr.f32.mxu0 0.0
      %1865 = vmatmul.mubr.f32.gmra.mrb[0].mxu0 %v1672
      %v1866 = vpop.f32.mrb[0].mxu0
      %v1867 = vadd.f32 0.0, %v1866
      %v1868 = vpop.f32.mrb[0].mxu0
      %1869 = vmatprep.mubr.f32.mxu0 0.0
      %1870 = vmatmul.mubr.f32.gmra.mrb[0].mxu0 %v1675
      %v1871 = vpop.f32.mrb[0].mxu0
      %v1872 = vadd.f32 0.0, %v1871
      %v1873 = vpop.f32.mrb[0].mxu0
      %1874 = vmatprep.mubr.f32.mxu0 0.0
      %1875 = vmatmul.mubr.f32.gmra.mrb[0].mxu0 %v1678
      %v1876 = vpop.f32.mrb[0].mxu0
      %v1877 = vadd.f32 0.0, %v1876
      %v1878 = vpop.f32.mrb[0].mxu0
      %1879 = vmatprep.mubr.f32.mxu0 0.0
      %1880 = vmatmul.mubr.f32.gmra.mrb[0].mxu0 %v1681
      %v1881 = vpop.f32.mrb[0].mxu0
      %v1882 = vadd.f32 0.0, %v1881
      %v1883 = vpop.f32.mrb[0].mxu0
      %1884 = vmatprep.mubr.f32.mxu0 0.0
      %1885 = vmatmul.mubr.f32.gmra.mrb[0].mxu0 %v1684
      %v1886 = vpop.f32.mrb[0].mxu0
      %v1887 = vadd.f32 0.0, %v1886
      %v1888 = vpop.f32.mrb[0].mxu0
      %1889 = vmatprep.mubr.f32.mxu0 0.0
      %1890 = vmatmul.mubr.f32.gmra.mrb[0].mxu0 %v1687
      %v1891 = vpop.f32.mrb[0].mxu0
      %v1892 = vadd.f32 0.0, %v1891
      %v1893 = vpop.f32.mrb[0].mxu0
      %1894 = vmatprep.mubr.f32.mxu0 0.0
      %1895 = vmatmul.mubr.f32.gmra.mrb[0].mxu0 %v1690
      %v1896 = vpop.f32.mrb[0].mxu0
      %v1897 = vadd.f32 0.0, %v1896
      %v1898 = vpop.f32.mrb[0].mxu0
      %1899 = vmatprep.mubr.f32.mxu0 0.0
      %1900 = vmatmul.mubr.f32.gmra.mrb[0].mxu0 %v1693
      %v1901 = vpop.f32.mrb[0].mxu0
      %v1902 = vadd.f32 0.0, %v1901
      %v1903 = vpop.f32.mrb[0].mxu0
      %1904 = vmatprep.mubr.f32.mxu0 0.0
      %1905 = vmatmul.mubr.f32.gmra.mrb[0].mxu0 %v1696
      %v1906 = vpop.f32.mrb[0].mxu0
      %v1907 = vadd.f32 0.0, %v1906
      %v1908 = vpop.f32.mrb[0].mxu0
      %1909 = vmatprep.mubr.f32.mxu0 0.0
      %1910 = vmatmul.mubr.f32.gmra.mrb[0].mxu0 %v1699
      %v1911 = vpop.f32.mrb[0].mxu0
      %v1912 = vadd.f32 0.0, %v1911
      %v1913 = vpop.f32.mrb[0].mxu0
      %1914 = vmatprep.mubr.f32.mxu0 0.0
      %1915 = vmatmul.mubr.f32.gmra.mrb[0].mxu0 %v1702
      %v1916 = vpop.f32.mrb[0].mxu0
      %v1917 = vadd.f32 0.0, %v1916
      %v1918 = vpop.f32.mrb[0].mxu0
      %1919 = vmatprep.mubr.f32.mxu0 0.0
      %1920 = vmatmul.mubr.f32.gmra.mrb[0].mxu0 %v1705
      %v1921 = vpop.f32.mrb[0].mxu0
      %v1922 = vadd.f32 0.0, %v1921
      %v1923 = vpop.f32.mrb[0].mxu0
      %1924 = vmatprep.mubr.f32.mxu0 0.0
      %1925 = vmatmul.mubr.f32.gmra.mrb[0].mxu0 %v1708
      %v1926 = vpop.f32.mrb[0].mxu0
      %v1927 = vadd.f32 0.0, %v1926
      %v1928 = vpop.f32.mrb[0].mxu0
      %1929 = vmatprep.mubr.f32.mxu0 0.0
      %1930 = vmatmul.mubr.f32.gmra.mrb[0].mxu0 %v1711
      %v1931 = vpop.f32.mrb[0].mxu0
      %v1932 = vadd.f32 0.0, %v1931
      %v1933 = vpop.f32.mrb[0].mxu0
      %1934 = vmatprep.mubr.f32.mxu0 0.0
      %1935 = vmatmul.mubr.f32.gmra.mrb[0].mxu0 %v1714
      %v1936 = vpop.f32.mrb[0].mxu0
      %v1937 = vadd.f32 0.0, %v1936
      %v1938 = vpop.f32.mrb[0].mxu0
      %1939 = vmatprep.mubr.f32.mxu0 0.0
      %1940 = vmatmul.mubr.f32.gmra.mrb[0].mxu0 %v1717
      %v1941 = vpop.f32.mrb[0].mxu0
      %v1942 = vadd.f32 0.0, %v1941
      %v1943 = vpop.f32.mrb[0].mxu0
      %1944 = vmatprep.mubr.f32.mxu0 0.0
      %1945 = vmatmul.mubr.f32.gmra.mrb[0].mxu0 %v1720
      %v1946 = vpop.f32.mrb[0].mxu0
      %v1947 = vadd.f32 0.0, %v1946
      %v1948 = vpop.f32.mrb[0].mxu0
      %1949 = vdwg.mxu0
      %v1950 = vadd.f32 %v1560, %v1792
      %v1951 = vadd.f32 %v1561, %v1797
      %v1952 = vadd.f32 %v1562, %v1802
      %v1953 = vadd.f32 %v1563, %v1807
      %v1954 = vadd.f32 %v1564, %v1812
      %v1955 = vadd.f32 %v1565, %v1817
      %v1956 = vadd.f32 %v1566, %v1822
      %v1957 = vadd.f32 %v1567, %v1827
      %v1958 = vadd.f32 %v1568, %v1832
      %v1959 = vadd.f32 %v1569, %v1837
      %v1960 = vadd.f32 %v1570, %v1842
      %v1961 = vadd.f32 %v1571, %v1847
      %v1962 = vadd.f32 %v1572, %v1852
      %v1963 = vadd.f32 %v1573, %v1857
      %v1964 = vadd.f32 %v1574, %v1862
      %v1965 = vadd.f32 %v1575, %v1867
      %v1966 = vadd.f32 %v1576, %v1872
      %v1967 = vadd.f32 %v1577, %v1877
      %v1968 = vadd.f32 %v1578, %v1882
      %v1969 = vadd.f32 %v1579, %v1887
      %v1970 = vadd.f32 %v1580, %v1892
      %v1971 = vadd.f32 %v1581, %v1897
      %v1972 = vadd.f32 %v1582, %v1902
      %v1973 = vadd.f32 %v1583, %v1907
      %v1974 = vadd.f32 %v1584, %v1912
      %v1975 = vadd.f32 %v1585, %v1917
      %v1976 = vadd.f32 %v1586, %v1922
      %v1977 = vadd.f32 %v1587, %v1927
      %v1978 = vadd.f32 %v1588, %v1932
      %v1979 = vadd.f32 %v1589, %v1937
      %v1980 = vadd.f32 %v1590, %v1942
      %v1981 = vadd.f32 %v1591, %v1947
      %v1982 = vld [vmem:[%s453 + $0x1] sm:$0xff]
      %v1983 = vld [vmem:[%s453 + $0x9] sm:$0xff]
      %v1984 = vld [vmem:[%s453 + $0x19] sm:$0xff]
      %v1985 = vld [vmem:[%s453 + $0x21] sm:$0xff]
      %v1986 = vld [vmem:[%s453 + $0x31] sm:$0xff]
      %v1987 = vld [vmem:[%s453 + $0x39] sm:$0xff]
      %v1988 = vld [vmem:[%s453 + $0x49] sm:$0xff]
      %v1989 = vld [vmem:[%s453 + $0x51] sm:$0xff]
      %v1990 = vld [vmem:[%s453 + $0x61] sm:$0xff]
      %v1991 = vld [vmem:[%s453 + $0x69] sm:$0xff]
      %v1992 = vld [vmem:[%s453 + $0x79] sm:$0xff]
      %v1993 = vld [vmem:[%s453 + $0x81] sm:$0xff]
      %v1994 = vld [vmem:[%s453 + $0x91] sm:$0xff]
      %v1995 = vld [vmem:[%s453 + $0x99] sm:$0xff]
      %v1996 = vld [vmem:[%s453 + $0xa9] sm:$0xff]
      %v1997 = vld [vmem:[%s453 + $0xb1] sm:$0xff]
      %v1998 = vld [vmem:[%s453 + $0xc1] sm:$0xff]
      %v1999 = vld [vmem:[%s453 + $0xc9] sm:$0xff]
      %v2000 = vld [vmem:[%s453 + $0xd9] sm:$0xff]
      %v2001 = vld [vmem:[%s453 + $0xe1] sm:$0xff]
      %v2002 = vld [vmem:[%s453 + $0xf1] sm:$0xff]
      %v2003 = vld [vmem:[%s453 + $0xf9] sm:$0xff]
      %v2004 = vld [vmem:[%s453 + $0x109] sm:$0xff]
      %v2005 = vld [vmem:[%s453 + $0x111] sm:$0xff]
      %v2006 = vld [vmem:[%s453 + $0x121] sm:$0xff]
      %v2007 = vld [vmem:[%s453 + $0x129] sm:$0xff]
      %v2008 = vld [vmem:[%s453 + $0x139] sm:$0xff]
      %v2009 = vld [vmem:[%s453 + $0x141] sm:$0xff]
      %v2010 = vld [vmem:[%s453 + $0x151] sm:$0xff]
      %v2011 = vld [vmem:[%s453 + $0x159] sm:$0xff]
      %v2012 = vld [vmem:[%s453 + $0x169] sm:$0xff]
      %v2013 = vld [vmem:[%s453 + $0x171] sm:$0xff]
      %s2014 = scalar_lea.vmem %s2, 16
      %v2015 = vld [vmem:[%s2014] sm:$0x7]
      %v2017 = vsel %vm365, %v1982, 0
      %v2020 = vsel %vm365, %v1983, 0
      %v2023 = vsel %vm365, %v1984, 0
      %v2026 = vsel %vm365, %v1985, 0
      %v2029 = vsel %vm365, %v1986, 0
      %v2032 = vsel %vm365, %v1987, 0
      %v2035 = vsel %vm365, %v1988, 0
      %v2038 = vsel %vm365, %v1989, 0
      %v2041 = vsel %vm365, %v1990, 0
      %v2044 = vsel %vm365, %v1991, 0
      %v2047 = vsel %vm365, %v1992, 0
      %v2050 = vsel %vm365, %v1993, 0
      %v2053 = vsel %vm365, %v1994, 0
      %v2056 = vsel %vm365, %v1995, 0
      %v2059 = vsel %vm365, %v1996, 0
      %v2062 = vsel %vm365, %v1997, 0
      %v2065 = vsel %vm365, %v1998, 0
      %v2068 = vsel %vm365, %v1999, 0
      %v2071 = vsel %vm365, %v2000, 0
      %v2074 = vsel %vm365, %v2001, 0
      %v2077 = vsel %vm365, %v2002, 0
      %v2080 = vsel %vm365, %v2003, 0
      %v2083 = vsel %vm365, %v2004, 0
      %v2086 = vsel %vm365, %v2005, 0
      %v2089 = vsel %vm365, %v2006, 0
      %v2092 = vsel %vm365, %v2007, 0
      %v2095 = vsel %vm365, %v2008, 0
      %v2098 = vsel %vm365, %v2009, 0
      %v2101 = vsel %vm365, %v2010, 0
      %v2104 = vsel %vm365, %v2011, 0
      %v2107 = vsel %vm365, %v2012, 0
      %v2110 = vsel %vm365, %v2013, 0
      %v2113 = vsel %vm649, %v2015, 0
      %2115 = vmatprep.subr.mxu0 0.0
      %2116 = vmatpush1.msra.mxu0 %v2113
      %2117 = vmatprep.subr.mxu0 0.0
      %2118 = vmatpush1.msra.mxu0 0.0
      %2119 = vmatprep.subr.mxu0 0.0
      %2120 = vmatpush1.msra.mxu0 0.0
      %2121 = vmatprep.subr.mxu0 0.0
      %2122 = vmatpush1.msra.mxu0 0.0
      %2123 = vmatprep.subr.mxu0 0.0
      %2124 = vmatpush1.msra.mxu0 0.0
      %2125 = vmatprep.subr.mxu0 0.0
      %2126 = vmatpush1.msra.mxu0 0.0
      %2127 = vmatprep.subr.mxu0 0.0
      %2128 = vmatpush1.msra.mxu0 0.0
      %2129 = vmatprep.subr.mxu0 0.0
      %2130 = vmatpush1.msra.mxu0 0.0
      %2131 = vmatprep.subr.mxu0 0.0
      %2132 = vmatpush1.msra.mxu0 0.0
      %2133 = vmatprep.subr.mxu0 0.0
      %2134 = vmatpush1.msra.mxu0 0.0
      %2135 = vmatprep.subr.mxu0 0.0
      %2136 = vmatpush1.msra.mxu0 0.0
      %2137 = vmatprep.subr.mxu0 0.0
      %2138 = vmatpush1.msra.mxu0 0.0
      %2139 = vmatprep.subr.mxu0 0.0
      %2140 = vmatpush1.msra.mxu0 0.0
      %2141 = vmatprep.subr.mxu0 0.0
      %2142 = vmatpush1.msra.mxu0 0.0
      %2143 = vmatprep.subr.mxu0 0.0
      %2144 = vmatpush1.msra.mxu0 0.0
      %2145 = vmatprep.subr.mxu0 0.0
      %2146 = vmatpush1.msra.mxu0 0.0
      %2147 = vmatprep.subr.mxu0 0.0
      %2148 = vmatpush1.msra.mxu0 0.0
      %2149 = vmatprep.subr.mxu0 0.0
      %2150 = vmatpush1.msra.mxu0 0.0
      %2151 = vmatprep.subr.mxu0 0.0
      %2152 = vmatpush1.msra.mxu0 0.0
      %2153 = vmatprep.subr.mxu0 0.0
      %2154 = vmatpush1.msra.mxu0 0.0
      %2155 = vmatprep.subr.mxu0 0.0
      %2156 = vmatpush1.msra.mxu0 0.0
      %2157 = vmatprep.subr.mxu0 0.0
      %2158 = vmatpush1.msra.mxu0 0.0
      %2159 = vmatprep.subr.mxu0 0.0
      %2160 = vmatpush1.msra.mxu0 0.0
      %2161 = vmatprep.subr.mxu0 0.0
      %2162 = vmatpush1.msra.mxu0 0.0
      %2163 = vmatprep.subr.mxu0 0.0
      %2164 = vmatpush1.msra.mxu0 0.0
      %2165 = vmatprep.subr.mxu0 0.0
      %2166 = vmatpush1.msra.mxu0 0.0
      %2167 = vmatprep.subr.mxu0 0.0
      %2168 = vmatpush1.msra.mxu0 0.0
      %2169 = vmatprep.subr.mxu0 0.0
      %2170 = vmatpush1.msra.mxu0 0.0
      %2171 = vmatprep.subr.mxu0 0.0
      %2172 = vmatpush1.msra.mxu0 0.0
      %2173 = vmatprep.subr.mxu0 0.0
      %2174 = vmatpush1.msra.mxu0 0.0
      %2175 = vmatprep.subr.mxu0 0.0
      %2176 = vmatpush1.msra.mxu0 0.0
      %2177 = vmatprep.subr.mxu0 0.0
      %2178 = vmatpush1.msra.mxu0 0.0
      %2179 = vmatprep.mubr.f32.mxu0 0.0
      %2180 = vmatmul.mubr.f32.gmra.mrb[0].mxu0 %v2017
      %v2181 = vpop.f32.mrb[0].mxu0
      %v2182 = vadd.f32 0.0, %v2181
      %v2183 = vpop.f32.mrb[0].mxu0
      %2184 = vmatprep.mubr.f32.mxu0 0.0
      %2185 = vmatmul.mubr.f32.gmra.mrb[0].mxu0 %v2020
      %v2186 = vpop.f32.mrb[0].mxu0
      %v2187 = vadd.f32 0.0, %v2186
      %v2188 = vpop.f32.mrb[0].mxu0
      %2189 = vmatprep.mubr.f32.mxu0 0.0
      %2190 = vmatmul.mubr.f32.gmra.mrb[0].mxu0 %v2023
      %v2191 = vpop.f32.mrb[0].mxu0
      %v2192 = vadd.f32 0.0, %v2191
      %v2193 = vpop.f32.mrb[0].mxu0
      %2194 = vmatprep.mubr.f32.mxu0 0.0
      %2195 = vmatmul.mubr.f32.gmra.mrb[0].mxu0 %v2026
      %v2196 = vpop.f32.mrb[0].mxu0
      %v2197 = vadd.f32 0.0, %v2196
      %v2198 = vpop.f32.mrb[0].mxu0
      %2199 = vmatprep.mubr.f32.mxu0 0.0
      %2200 = vmatmul.mubr.f32.gmra.mrb[0].mxu0 %v2029
      %v2201 = vpop.f32.mrb[0].mxu0
      %v2202 = vadd.f32 0.0, %v2201
      %v2203 = vpop.f32.mrb[0].mxu0
      %2204 = vmatprep.mubr.f32.mxu0 0.0
      %2205 = vmatmul.mubr.f32.gmra.mrb[0].mxu0 %v2032
      %v2206 = vpop.f32.mrb[0].mxu0
      %v2207 = vadd.f32 0.0, %v2206
      %v2208 = vpop.f32.mrb[0].mxu0
      %2209 = vmatprep.mubr.f32.mxu0 0.0
      %2210 = vmatmul.mubr.f32.gmra.mrb[0].mxu0 %v2035
      %v2211 = vpop.f32.mrb[0].mxu0
      %v2212 = vadd.f32 0.0, %v2211
      %v2213 = vpop.f32.mrb[0].mxu0
      %2214 = vmatprep.mubr.f32.mxu0 0.0
      %2215 = vmatmul.mubr.f32.gmra.mrb[0].mxu0 %v2038
      %v2216 = vpop.f32.mrb[0].mxu0
      %v2217 = vadd.f32 0.0, %v2216
      %v2218 = vpop.f32.mrb[0].mxu0
      %2219 = vmatprep.mubr.f32.mxu0 0.0
      %2220 = vmatmul.mubr.f32.gmra.mrb[0].mxu0 %v2041
      %v2221 = vpop.f32.mrb[0].mxu0
      %v2222 = vadd.f32 0.0, %v2221
      %v2223 = vpop.f32.mrb[0].mxu0
      %2224 = vmatprep.mubr.f32.mxu0 0.0
      %2225 = vmatmul.mubr.f32.gmra.mrb[0].mxu0 %v2044
      %v2226 = vpop.f32.mrb[0].mxu0
      %v2227 = vadd.f32 0.0, %v2226
      %v2228 = vpop.f32.mrb[0].mxu0
      %2229 = vmatprep.mubr.f32.mxu0 0.0
      %2230 = vmatmul.mubr.f32.gmra.mrb[0].mxu0 %v2047
      %v2231 = vpop.f32.mrb[0].mxu0
      %v2232 = vadd.f32 0.0, %v2231
      %v2233 = vpop.f32.mrb[0].mxu0
      %2234 = vmatprep.mubr.f32.mxu0 0.0
      %2235 = vmatmul.mubr.f32.gmra.mrb[0].mxu0 %v2050
      %v2236 = vpop.f32.mrb[0].mxu0
      %v2237 = vadd.f32 0.0, %v2236
      %v2238 = vpop.f32.mrb[0].mxu0
      %2239 = vmatprep.mubr.f32.mxu0 0.0
      %2240 = vmatmul.mubr.f32.gmra.mrb[0].mxu0 %v2053
      %v2241 = vpop.f32.mrb[0].mxu0
      %v2242 = vadd.f32 0.0, %v2241
      %v2243 = vpop.f32.mrb[0].mxu0
      %2244 = vmatprep.mubr.f32.mxu0 0.0
      %2245 = vmatmul.mubr.f32.gmra.mrb[0].mxu0 %v2056
      %v2246 = vpop.f32.mrb[0].mxu0
      %v2247 = vadd.f32 0.0, %v2246
      %v2248 = vpop.f32.mrb[0].mxu0
      %2249 = vmatprep.mubr.f32.mxu0 0.0
      %2250 = vmatmul.mubr.f32.gmra.mrb[0].mxu0 %v2059
      %v2251 = vpop.f32.mrb[0].mxu0
      %v2252 = vadd.f32 0.0, %v2251
      %v2253 = vpop.f32.mrb[0].mxu0
      %2254 = vmatprep.mubr.f32.mxu0 0.0
      %2255 = vmatmul.mubr.f32.gmra.mrb[0].mxu0 %v2062
      %v2256 = vpop.f32.mrb[0].mxu0
      %v2257 = vadd.f32 0.0, %v2256
      %v2258 = vpop.f32.mrb[0].mxu0
      %2259 = vmatprep.mubr.f32.mxu0 0.0
      %2260 = vmatmul.mubr.f32.gmra.mrb[0].mxu0 %v2065
      %v2261 = vpop.f32.mrb[0].mxu0
      %v2262 = vadd.f32 0.0, %v2261
      %v2263 = vpop.f32.mrb[0].mxu0
      %2264 = vmatprep.mubr.f32.mxu0 0.0
      %2265 = vmatmul.mubr.f32.gmra.mrb[0].mxu0 %v2068
      %v2266 = vpop.f32.mrb[0].mxu0
      %v2267 = vadd.f32 0.0, %v2266
      %v2268 = vpop.f32.mrb[0].mxu0
      %2269 = vmatprep.mubr.f32.mxu0 0.0
      %2270 = vmatmul.mubr.f32.gmra.mrb[0].mxu0 %v2071
      %v2271 = vpop.f32.mrb[0].mxu0
      %v2272 = vadd.f32 0.0, %v2271
      %v2273 = vpop.f32.mrb[0].mxu0
      %2274 = vmatprep.mubr.f32.mxu0 0.0
      %2275 = vmatmul.mubr.f32.gmra.mrb[0].mxu0 %v2074
      %v2276 = vpop.f32.mrb[0].mxu0
      %v2277 = vadd.f32 0.0, %v2276
      %v2278 = vpop.f32.mrb[0].mxu0
      %2279 = vmatprep.mubr.f32.mxu0 0.0
      %2280 = vmatmul.mubr.f32.gmra.mrb[0].mxu0 %v2077
      %v2281 = vpop.f32.mrb[0].mxu0
      %v2282 = vadd.f32 0.0, %v2281
      %v2283 = vpop.f32.mrb[0].mxu0
      %2284 = vmatprep.mubr.f32.mxu0 0.0
      %2285 = vmatmul.mubr.f32.gmra.mrb[0].mxu0 %v2080
      %v2286 = vpop.f32.mrb[0].mxu0
      %v2287 = vadd.f32 0.0, %v2286
      %v2288 = vpop.f32.mrb[0].mxu0
      %2289 = vmatprep.mubr.f32.mxu0 0.0
      %2290 = vmatmul.mubr.f32.gmra.mrb[0].mxu0 %v2083
      %v2291 = vpop.f32.mrb[0].mxu0
      %v2292 = vadd.f32 0.0, %v2291
      %v2293 = vpop.f32.mrb[0].mxu0
      %2294 = vmatprep.mubr.f32.mxu0 0.0
      %2295 = vmatmul.mubr.f32.gmra.mrb[0].mxu0 %v2086
      %v2296 = vpop.f32.mrb[0].mxu0
      %v2297 = vadd.f32 0.0, %v2296
      %v2298 = vpop.f32.mrb[0].mxu0
      %2299 = vmatprep.mubr.f32.mxu0 0.0
      %2300 = vmatmul.mubr.f32.gmra.mrb[0].mxu0 %v2089
      %v2301 = vpop.f32.mrb[0].mxu0
      %v2302 = vadd.f32 0.0, %v2301
      %v2303 = vpop.f32.mrb[0].mxu0
      %2304 = vmatprep.mubr.f32.mxu0 0.0
      %2305 = vmatmul.mubr.f32.gmra.mrb[0].mxu0 %v2092
      %v2306 = vpop.f32.mrb[0].mxu0
      %v2307 = vadd.f32 0.0, %v2306
      %v2308 = vpop.f32.mrb[0].mxu0
      %2309 = vmatprep.mubr.f32.mxu0 0.0
      %2310 = vmatmul.mubr.f32.gmra.mrb[0].mxu0 %v2095
      %v2311 = vpop.f32.mrb[0].mxu0
      %v2312 = vadd.f32 0.0, %v2311
      %v2313 = vpop.f32.mrb[0].mxu0
      %2314 = vmatprep.mubr.f32.mxu0 0.0
      %2315 = vmatmul.mubr.f32.gmra.mrb[0].mxu0 %v2098
      %v2316 = vpop.f32.mrb[0].mxu0
      %v2317 = vadd.f32 0.0, %v2316
      %v2318 = vpop.f32.mrb[0].mxu0
      %2319 = vmatprep.mubr.f32.mxu0 0.0
      %2320 = vmatmul.mubr.f32.gmra.mrb[0].mxu0 %v2101
      %v2321 = vpop.f32.mrb[0].mxu0
      %v2322 = vadd.f32 0.0, %v2321
      %v2323 = vpop.f32.mrb[0].mxu0
      %2324 = vmatprep.mubr.f32.mxu0 0.0
      %2325 = vmatmul.mubr.f32.gmra.mrb[0].mxu0 %v2104
      %v2326 = vpop.f32.mrb[0].mxu0
      %v2327 = vadd.f32 0.0, %v2326
      %v2328 = vpop.f32.mrb[0].mxu0
      %2329 = vmatprep.mubr.f32.mxu0 0.0
      %2330 = vmatmul.mubr.f32.gmra.mrb[0].mxu0 %v2107
      %v2331 = vpop.f32.mrb[0].mxu0
      %v2332 = vadd.f32 0.0, %v2331
      %v2333 = vpop.f32.mrb[0].mxu0
      %2334 = vmatprep.mubr.f32.mxu0 0.0
      %2335 = vmatmul.mubr.f32.gmra.mrb[0].mxu0 %v2110
      %v2336 = vpop.f32.mrb[0].mxu0
      %v2337 = vadd.f32 0.0, %v2336
      %v2338 = vpop.f32.mrb[0].mxu0
      %2339 = vdwg.mxu0
      %v2340 = vadd.f32 %v1950, %v2182
      %v2341 = vadd.f32 %v1951, %v2187
      %v2342 = vadd.f32 %v1952, %v2192
      %v2343 = vadd.f32 %v1953, %v2197
      %v2344 = vadd.f32 %v1954, %v2202
      %v2345 = vadd.f32 %v1955, %v2207
      %v2346 = vadd.f32 %v1956, %v2212
      %v2347 = vadd.f32 %v1957, %v2217
      %v2348 = vadd.f32 %v1958, %v2222
      %v2349 = vadd.f32 %v1959, %v2227
      %v2350 = vadd.f32 %v1960, %v2232
      %v2351 = vadd.f32 %v1961, %v2237
      %v2352 = vadd.f32 %v1962, %v2242
      %v2353 = vadd.f32 %v1963, %v2247
      %v2354 = vadd.f32 %v1964, %v2252
      %v2355 = vadd.f32 %v1965, %v2257
      %v2356 = vadd.f32 %v1966, %v2262
      %v2357 = vadd.f32 %v1967, %v2267
      %v2358 = vadd.f32 %v1968, %v2272
      %v2359 = vadd.f32 %v1969, %v2277
      %v2360 = vadd.f32 %v1970, %v2282
      %v2361 = vadd.f32 %v1971, %v2287
      %v2362 = vadd.f32 %v1972, %v2292
      %v2363 = vadd.f32 %v1973, %v2297
      %v2364 = vadd.f32 %v1974, %v2302
      %v2365 = vadd.f32 %v1975, %v2307
      %v2366 = vadd.f32 %v1976, %v2312
      %v2367 = vadd.f32 %v1977, %v2317
      %v2368 = vadd.f32 %v1978, %v2322
      %v2369 = vadd.f32 %v1979, %v2327
      %v2370 = vadd.f32 %v1980, %v2332
      %v2371 = vadd.f32 %v1981, %v2337
      %v2372 = vld [vmem:[%s453 + $0x2] sm:$0xff]
      %v2373 = vld [vmem:[%s453 + $0xa] sm:$0xff]
      %v2374 = vld [vmem:[%s453 + $0x1a] sm:$0xff]
      %v2375 = vld [vmem:[%s453 + $0x22] sm:$0xff]
      %v2376 = vld [vmem:[%s453 + $0x32] sm:$0xff]
      %v2377 = vld [vmem:[%s453 + $0x3a] sm:$0xff]
      %v2378 = vld [vmem:[%s453 + $0x4a] sm:$0xff]
      %v2379 = vld [vmem:[%s453 + $0x52] sm:$0xff]
      %v2380 = vld [vmem:[%s453 + $0x62] sm:$0xff]
      %v2381 = vld [vmem:[%s453 + $0x6a] sm:$0xff]
      %v2382 = vld [vmem:[%s453 + $0x7a] sm:$0xff]
      %v2383 = vld [vmem:[%s453 + $0x82] sm:$0xff]
      %v2384 = vld [vmem:[%s453 + $0x92] sm:$0xff]
      %v2385 = vld [vmem:[%s453 + $0x9a] sm:$0xff]
      %v2386 = vld [vmem:[%s453 + $0xaa] sm:$0xff]
      %v2387 = vld [vmem:[%s453 + $0xb2] sm:$0xff]
      %v2388 = vld [vmem:[%s453 + $0xc2] sm:$0xff]
      %v2389 = vld [vmem:[%s453 + $0xca] sm:$0xff]
      %v2390 = vld [vmem:[%s453 + $0xda] sm:$0xff]
      %v2391 = vld [vmem:[%s453 + $0xe2] sm:$0xff]
      %v2392 = vld [vmem:[%s453 + $0xf2] sm:$0xff]
      %v2393 = vld [vmem:[%s453 + $0xfa] sm:$0xff]
      %v2394 = vld [vmem:[%s453 + $0x10a] sm:$0xff]
      %v2395 = vld [vmem:[%s453 + $0x112] sm:$0xff]
      %v2396 = vld [vmem:[%s453 + $0x122] sm:$0xff]
      %v2397 = vld [vmem:[%s453 + $0x12a] sm:$0xff]
      %v2398 = vld [vmem:[%s453 + $0x13a] sm:$0xff]
      %v2399 = vld [vmem:[%s453 + $0x142] sm:$0xff]
      %v2400 = vld [vmem:[%s453 + $0x152] sm:$0xff]
      %v2401 = vld [vmem:[%s453 + $0x15a] sm:$0xff]
      %v2402 = vld [vmem:[%s453 + $0x16a] sm:$0xff]
      %v2403 = vld [vmem:[%s453 + $0x172] sm:$0xff]
      %s2404 = scalar_lea.vmem %s2, 20
      %v2405 = vld [vmem:[%s2404] sm:$0x7]
      %v2407 = vsel %vm365, %v2372, 0
      %v2410 = vsel %vm365, %v2373, 0
      %v2413 = vsel %vm365, %v2374, 0
      %v2416 = vsel %vm365, %v2375, 0
      %v2419 = vsel %vm365, %v2376, 0
      %v2422 = vsel %vm365, %v2377, 0
      %v2425 = vsel %vm365, %v2378, 0
      %v2428 = vsel %vm365, %v2379, 0
      %v2431 = vsel %vm365, %v2380, 0
      %v2434 = vsel %vm365, %v2381, 0
      %v2437 = vsel %vm365, %v2382, 0
      %v2440 = vsel %vm365, %v2383, 0
      %v2443 = vsel %vm365, %v2384, 0
      %v2446 = vsel %vm365, %v2385, 0
      %v2449 = vsel %vm365, %v2386, 0
      %v2452 = vsel %vm365, %v2387, 0
      %v2455 = vsel %vm365, %v2388, 0
      %v2458 = vsel %vm365, %v2389, 0
      %v2461 = vsel %vm365, %v2390, 0
      %v2464 = vsel %vm365, %v2391, 0
      %v2467 = vsel %vm365, %v2392, 0
      %v2470 = vsel %vm365, %v2393, 0
      %v2473 = vsel %vm365, %v2394, 0
      %v2476 = vsel %vm365, %v2395, 0
      %v2479 = vsel %vm365, %v2396, 0
      %v2482 = vsel %vm365, %v2397, 0
      %v2485 = vsel %vm365, %v2398, 0
      %v2488 = vsel %vm365, %v2399, 0
      %v2491 = vsel %vm365, %v2400, 0
      %v2494 = vsel %vm365, %v2401, 0
      %v2497 = vsel %vm365, %v2402, 0
      %v2500 = vsel %vm365, %v2403, 0
      %v2503 = vsel %vm649, %v2405, 0
      %2505 = vmatprep.subr.mxu0 0.0
      %2506 = vmatpush1.msra.mxu0 %v2503
      %2507 = vmatprep.subr.mxu0 0.0
      %2508 = vmatpush1.msra.mxu0 0.0
      %2509 = vmatprep.subr.mxu0 0.0
      %2510 = vmatpush1.msra.mxu0 0.0
      %2511 = vmatprep.subr.mxu0 0.0
      %2512 = vmatpush1.msra.mxu0 0.0
      %2513 = vmatprep.subr.mxu0 0.0
      %2514 = vmatpush1.msra.mxu0 0.0
      %2515 = vmatprep.subr.mxu0 0.0
      %2516 = vmatpush1.msra.mxu0 0.0
      %2517 = vmatprep.subr.mxu0 0.0
      %2518 = vmatpush1.msra.mxu0 0.0
      %2519 = vmatprep.subr.mxu0 0.0
      %2520 = vmatpush1.msra.mxu0 0.0
      %2521 = vmatprep.subr.mxu0 0.0
      %2522 = vmatpush1.msra.mxu0 0.0
      %2523 = vmatprep.subr.mxu0 0.0
      %2524 = vmatpush1.msra.mxu0 0.0
      %2525 = vmatprep.subr.mxu0 0.0
      %2526 = vmatpush1.msra.mxu0 0.0
      %2527 = vmatprep.subr.mxu0 0.0
      %2528 = vmatpush1.msra.mxu0 0.0
      %2529 = vmatprep.subr.mxu0 0.0
      %2530 = vmatpush1.msra.mxu0 0.0
      %2531 = vmatprep.subr.mxu0 0.0
      %2532 = vmatpush1.msra.mxu0 0.0
      %2533 = vmatprep.subr.mxu0 0.0
      %2534 = vmatpush1.msra.mxu0 0.0
      %2535 = vmatprep.subr.mxu0 0.0
      %2536 = vmatpush1.msra.mxu0 0.0
      %2537 = vmatprep.subr.mxu0 0.0
      %2538 = vmatpush1.msra.mxu0 0.0
      %2539 = vmatprep.subr.mxu0 0.0
      %2540 = vmatpush1.msra.mxu0 0.0
      %2541 = vmatprep.subr.mxu0 0.0
      %2542 = vmatpush1.msra.mxu0 0.0
      %2543 = vmatprep.subr.mxu0 0.0
      %2544 = vmatpush1.msra.mxu0 0.0
      %2545 = vmatprep.subr.mxu0 0.0
      %2546 = vmatpush1.msra.mxu0 0.0
      %2547 = vmatprep.subr.mxu0 0.0
      %2548 = vmatpush1.msra.mxu0 0.0
      %2549 = vmatprep.subr.mxu0 0.0
      %2550 = vmatpush1.msra.mxu0 0.0
      %2551 = vmatprep.subr.mxu0 0.0
      %2552 = vmatpush1.msra.mxu0 0.0
      %2553 = vmatprep.subr.mxu0 0.0
      %2554 = vmatpush1.msra.mxu0 0.0
      %2555 = vmatprep.subr.mxu0 0.0
      %2556 = vmatpush1.msra.mxu0 0.0
      %2557 = vmatprep.subr.mxu0 0.0
      %2558 = vmatpush1.msra.mxu0 0.0
      %2559 = vmatprep.subr.mxu0 0.0
      %2560 = vmatpush1.msra.mxu0 0.0
      %2561 = vmatprep.subr.mxu0 0.0
      %2562 = vmatpush1.msra.mxu0 0.0
      %2563 = vmatprep.subr.mxu0 0.0
      %2564 = vmatpush1.msra.mxu0 0.0
      %2565 = vmatprep.subr.mxu0 0.0
      %2566 = vmatpush1.msra.mxu0 0.0
      %2567 = vmatprep.subr.mxu0 0.0
      %2568 = vmatpush1.msra.mxu0 0.0
      %2569 = vmatprep.mubr.f32.mxu0 0.0
      %2570 = vmatmul.mubr.f32.gmra.mrb[0].mxu0 %v2407
      %v2571 = vpop.f32.mrb[0].mxu0
      %v2572 = vadd.f32 0.0, %v2571
      %v2573 = vpop.f32.mrb[0].mxu0
      %2574 = vmatprep.mubr.f32.mxu0 0.0
      %2575 = vmatmul.mubr.f32.gmra.mrb[0].mxu0 %v2410
      %v2576 = vpop.f32.mrb[0].mxu0
      %v2577 = vadd.f32 0.0, %v2576
      %v2578 = vpop.f32.mrb[0].mxu0
      %2579 = vmatprep.mubr.f32.mxu0 0.0
      %2580 = vmatmul.mubr.f32.gmra.mrb[0].mxu0 %v2413
      %v2581 = vpop.f32.mrb[0].mxu0
      %v2582 = vadd.f32 0.0, %v2581
      %v2583 = vpop.f32.mrb[0].mxu0
      %2584 = vmatprep.mubr.f32.mxu0 0.0
      %2585 = vmatmul.mubr.f32.gmra.mrb[0].mxu0 %v2416
      %v2586 = vpop.f32.mrb[0].mxu0
      %v2587 = vadd.f32 0.0, %v2586
      %v2588 = vpop.f32.mrb[0].mxu0
      %2589 = vmatprep.mubr.f32.mxu0 0.0
      %2590 = vmatmul.mubr.f32.gmra.mrb[0].mxu0 %v2419
      %v2591 = vpop.f32.mrb[0].mxu0
      %v2592 = vadd.f32 0.0, %v2591
      %v2593 = vpop.f32.mrb[0].mxu0
      %2594 = vmatprep.mubr.f32.mxu0 0.0
      %2595 = vmatmul.mubr.f32.gmra.mrb[0].mxu0 %v2422
      %v2596 = vpop.f32.mrb[0].mxu0
      %v2597 = vadd.f32 0.0, %v2596
      %v2598 = vpop.f32.mrb[0].mxu0
      %2599 = vmatprep.mubr.f32.mxu0 0.0
      %2600 = vmatmul.mubr.f32.gmra.mrb[0].mxu0 %v2425
      %v2601 = vpop.f32.mrb[0].mxu0
      %v2602 = vadd.f32 0.0, %v2601
      %v2603 = vpop.f32.mrb[0].mxu0
      %2604 = vmatprep.mubr.f32.mxu0 0.0
      %2605 = vmatmul.mubr.f32.gmra.mrb[0].mxu0 %v2428
      %v2606 = vpop.f32.mrb[0].mxu0
      %v2607 = vadd.f32 0.0, %v2606
      %v2608 = vpop.f32.mrb[0].mxu0
      %2609 = vmatprep.mubr.f32.mxu0 0.0
      %2610 = vmatmul.mubr.f32.gmra.mrb[0].mxu0 %v2431
      %v2611 = vpop.f32.mrb[0].mxu0
      %v2612 = vadd.f32 0.0, %v2611
      %v2613 = vpop.f32.mrb[0].mxu0
      %2614 = vmatprep.mubr.f32.mxu0 0.0
      %2615 = vmatmul.mubr.f32.gmra.mrb[0].mxu0 %v2434
      %v2616 = vpop.f32.mrb[0].mxu0
      %v2617 = vadd.f32 0.0, %v2616
      %v2618 = vpop.f32.mrb[0].mxu0
      %2619 = vmatprep.mubr.f32.mxu0 0.0
      %2620 = vmatmul.mubr.f32.gmra.mrb[0].mxu0 %v2437
      %v2621 = vpop.f32.mrb[0].mxu0
      %v2622 = vadd.f32 0.0, %v2621
      %v2623 = vpop.f32.mrb[0].mxu0
      %2624 = vmatprep.mubr.f32.mxu0 0.0
      %2625 = vmatmul.mubr.f32.gmra.mrb[0].mxu0 %v2440
      %v2626 = vpop.f32.mrb[0].mxu0
      %v2627 = vadd.f32 0.0, %v2626
      %v2628 = vpop.f32.mrb[0].mxu0
      %2629 = vmatprep.mubr.f32.mxu0 0.0
      %2630 = vmatmul.mubr.f32.gmra.mrb[0].mxu0 %v2443
      %v2631 = vpop.f32.mrb[0].mxu0
      %v2632 = vadd.f32 0.0, %v2631
      %v2633 = vpop.f32.mrb[0].mxu0
      %2634 = vmatprep.mubr.f32.mxu0 0.0
      %2635 = vmatmul.mubr.f32.gmra.mrb[0].mxu0 %v2446
      %v2636 = vpop.f32.mrb[0].mxu0
      %v2637 = vadd.f32 0.0, %v2636
      %v2638 = vpop.f32.mrb[0].mxu0
      %2639 = vmatprep.mubr.f32.mxu0 0.0
      %2640 = vmatmul.mubr.f32.gmra.mrb[0].mxu0 %v2449
      %v2641 = vpop.f32.mrb[0].mxu0
      %v2642 = vadd.f32 0.0, %v2641
      %v2643 = vpop.f32.mrb[0].mxu0
      %2644 = vmatprep.mubr.f32.mxu0 0.0
      %2645 = vmatmul.mubr.f32.gmra.mrb[0].mxu0 %v2452
      %v2646 = vpop.f32.mrb[0].mxu0
      %v2647 = vadd.f32 0.0, %v2646
      %v2648 = vpop.f32.mrb[0].mxu0
      %2649 = vmatprep.mubr.f32.mxu0 0.0
      %2650 = vmatmul.mubr.f32.gmra.mrb[0].mxu0 %v2455
      %v2651 = vpop.f32.mrb[0].mxu0
      %v2652 = vadd.f32 0.0, %v2651
      %v2653 = vpop.f32.mrb[0].mxu0
      %2654 = vmatprep.mubr.f32.mxu0 0.0
      %2655 = vmatmul.mubr.f32.gmra.mrb[0].mxu0 %v2458
      %v2656 = vpop.f32.mrb[0].mxu0
      %v2657 = vadd.f32 0.0, %v2656
      %v2658 = vpop.f32.mrb[0].mxu0
      %2659 = vmatprep.mubr.f32.mxu0 0.0
      %2660 = vmatmul.mubr.f32.gmra.mrb[0].mxu0 %v2461
      %v2661 = vpop.f32.mrb[0].mxu0
      %v2662 = vadd.f32 0.0, %v2661
      %v2663 = vpop.f32.mrb[0].mxu0
      %2664 = vmatprep.mubr.f32.mxu0 0.0
      %2665 = vmatmul.mubr.f32.gmra.mrb[0].mxu0 %v2464
      %v2666 = vpop.f32.mrb[0].mxu0
      %v2667 = vadd.f32 0.0, %v2666
      %v2668 = vpop.f32.mrb[0].mxu0
      %2669 = vmatprep.mubr.f32.mxu0 0.0
      %2670 = vmatmul.mubr.f32.gmra.mrb[0].mxu0 %v2467
      %v2671 = vpop.f32.mrb[0].mxu0
      %v2672 = vadd.f32 0.0, %v2671
      %v2673 = vpop.f32.mrb[0].mxu0
      %2674 = vmatprep.mubr.f32.mxu0 0.0
      %2675 = vmatmul.mubr.f32.gmra.mrb[0].mxu0 %v2470
      %v2676 = vpop.f32.mrb[0].mxu0
      %v2677 = vadd.f32 0.0, %v2676
      %v2678 = vpop.f32.mrb[0].mxu0
      %2679 = vmatprep.mubr.f32.mxu0 0.0
      %2680 = vmatmul.mubr.f32.gmra.mrb[0].mxu0 %v2473
      %v2681 = vpop.f32.mrb[0].mxu0
      %v2682 = vadd.f32 0.0, %v2681
      %v2683 = vpop.f32.mrb[0].mxu0
      %2684 = vmatprep.mubr.f32.mxu0 0.0
      %2685 = vmatmul.mubr.f32.gmra.mrb[0].mxu0 %v2476
      %v2686 = vpop.f32.mrb[0].mxu0
      %v2687 = vadd.f32 0.0, %v2686
      %v2688 = vpop.f32.mrb[0].mxu0
      %2689 = vmatprep.mubr.f32.mxu0 0.0
      %2690 = vmatmul.mubr.f32.gmra.mrb[0].mxu0 %v2479
      %v2691 = vpop.f32.mrb[0].mxu0
      %v2692 = vadd.f32 0.0, %v2691
      %v2693 = vpop.f32.mrb[0].mxu0
      %2694 = vmatprep.mubr.f32.mxu0 0.0
      %2695 = vmatmul.mubr.f32.gmra.mrb[0].mxu0 %v2482
      %v2696 = vpop.f32.mrb[0].mxu0
      %v2697 = vadd.f32 0.0, %v2696
      %v2698 = vpop.f32.mrb[0].mxu0
      %2699 = vmatprep.mubr.f32.mxu0 0.0
      %2700 = vmatmul.mubr.f32.gmra.mrb[0].mxu0 %v2485
      %v2701 = vpop.f32.mrb[0].mxu0
      %v2702 = vadd.f32 0.0, %v2701
      %v2703 = vpop.f32.mrb[0].mxu0
      %2704 = vmatprep.mubr.f32.mxu0 0.0
      %2705 = vmatmul.mubr.f32.gmra.mrb[0].mxu0 %v2488
      %v2706 = vpop.f32.mrb[0].mxu0
      %v2707 = vadd.f32 0.0, %v2706
      %v2708 = vpop.f32.mrb[0].mxu0
      %2709 = vmatprep.mubr.f32.mxu0 0.0
      %2710 = vmatmul.mubr.f32.gmra.mrb[0].mxu0 %v2491
      %v2711 = vpop.f32.mrb[0].mxu0
      %v2712 = vadd.f32 0.0, %v2711
      %v2713 = vpop.f32.mrb[0].mxu0
      %2714 = vmatprep.mubr.f32.mxu0 0.0
      %2715 = vmatmul.mubr.f32.gmra.mrb[0].mxu0 %v2494
      %v2716 = vpop.f32.mrb[0].mxu0
      %v2717 = vadd.f32 0.0, %v2716
      %v2718 = vpop.f32.mrb[0].mxu0
      %2719 = vmatprep.mubr.f32.mxu0 0.0
      %2720 = vmatmul.mubr.f32.gmra.mrb[0].mxu0 %v2497
      %v2721 = vpop.f32.mrb[0].mxu0
      %v2722 = vadd.f32 0.0, %v2721
      %v2723 = vpop.f32.mrb[0].mxu0
      %2724 = vmatprep.mubr.f32.mxu0 0.0
      %2725 = vmatmul.mubr.f32.gmra.mrb[0].mxu0 %v2500
      %v2726 = vpop.f32.mrb[0].mxu0
      %v2727 = vadd.f32 0.0, %v2726
      %v2728 = vpop.f32.mrb[0].mxu0
      %2729 = vdwg.mxu0
      %v2730 = vadd.f32 %v2340, %v2572
      %v2731 = vadd.f32 %v2341, %v2577
      %v2732 = vadd.f32 %v2342, %v2582
      %v2733 = vadd.f32 %v2343, %v2587
      %v2734 = vadd.f32 %v2344, %v2592
      %v2735 = vadd.f32 %v2345, %v2597
      %v2736 = vadd.f32 %v2346, %v2602
      %v2737 = vadd.f32 %v2347, %v2607
      %v2738 = vadd.f32 %v2348, %v2612
      %v2739 = vadd.f32 %v2349, %v2617
      %v2740 = vadd.f32 %v2350, %v2622
      %v2741 = vadd.f32 %v2351, %v2627
      %v2742 = vadd.f32 %v2352, %v2632
      %v2743 = vadd.f32 %v2353, %v2637
      %v2744 = vadd.f32 %v2354, %v2642
      %v2745 = vadd.f32 %v2355, %v2647
      %v2746 = vadd.f32 %v2356, %v2652
      %v2747 = vadd.f32 %v2357, %v2657
      %v2748 = vadd.f32 %v2358, %v2662
      %v2749 = vadd.f32 %v2359, %v2667
      %v2750 = vadd.f32 %v2360, %v2672
      %v2751 = vadd.f32 %v2361, %v2677
      %v2752 = vadd.f32 %v2362, %v2682
      %v2753 = vadd.f32 %v2363, %v2687
      %v2754 = vadd.f32 %v2364, %v2692
      %v2755 = vadd.f32 %v2365, %v2697
      %v2756 = vadd.f32 %v2366, %v2702
      %v2757 = vadd.f32 %v2367, %v2707
      %v2758 = vadd.f32 %v2368, %v2712
      %v2759 = vadd.f32 %v2369, %v2717
      %v2760 = vadd.f32 %v2370, %v2722
      %v2761 = vadd.f32 %v2371, %v2727
      %s2762 = scalar_lea.vmem [#allocation2], 48
      %v2763 = vld [vmem:[%s2762] sm:$0xff]
      %v2764 = vld [vmem:[%s2762 + $0x8] sm:$0xff]
      %v2765 = vld [vmem:[%s2762 + $0x18] sm:$0xff]
      %v2766 = vld [vmem:[%s2762 + $0x20] sm:$0xff]
      %v2767 = vld [vmem:[%s2762 + $0x30] sm:$0xff]
      %v2768 = vld [vmem:[%s2762 + $0x38] sm:$0xff]
      %v2769 = vld [vmem:[%s2762 + $0x48] sm:$0xff]
      %v2770 = vld [vmem:[%s2762 + $0x50] sm:$0xff]
      %v2771 = vld [vmem:[%s2762 + $0x60] sm:$0xff]
      %v2772 = vld [vmem:[%s2762 + $0x68] sm:$0xff]
      %v2773 = vld [vmem:[%s2762 + $0x78] sm:$0xff]
      %v2774 = vld [vmem:[%s2762 + $0x80] sm:$0xff]
      %v2775 = vld [vmem:[%s2762 + $0x90] sm:$0xff]
      %v2776 = vld [vmem:[%s2762 + $0x98] sm:$0xff]
      %v2777 = vld [vmem:[%s2762 + $0xa8] sm:$0xff]
      %v2778 = vld [vmem:[%s2762 + $0xb0] sm:$0xff]
      %v2779 = vld [vmem:[%s2762 + $0xc0] sm:$0xff]
      %v2780 = vld [vmem:[%s2762 + $0xc8] sm:$0xff]
      %v2781 = vld [vmem:[%s2762 + $0xd8] sm:$0xff]
      %v2782 = vld [vmem:[%s2762 + $0xe0] sm:$0xff]
      %v2783 = vld [vmem:[%s2762 + $0xf0] sm:$0xff]
      %v2784 = vld [vmem:[%s2762 + $0xf8] sm:$0xff]
      %v2785 = vld [vmem:[%s2762 + $0x108] sm:$0xff]
      %v2786 = vld [vmem:[%s2762 + $0x110] sm:$0xff]
      %v2787 = vld [vmem:[%s2762 + $0x120] sm:$0xff]
      %v2788 = vld [vmem:[%s2762 + $0x128] sm:$0xff]
      %v2789 = vld [vmem:[%s2762 + $0x138] sm:$0xff]
      %v2790 = vld [vmem:[%s2762 + $0x140] sm:$0xff]
      %v2791 = vld [vmem:[%s2762 + $0x150] sm:$0xff]
      %v2792 = vld [vmem:[%s2762 + $0x158] sm:$0xff]
      %v2793 = vld [vmem:[%s2762 + $0x168] sm:$0xff]
      %v2794 = vld [vmem:[%s2762 + $0x170] sm:$0xff]
      %s2795 = scalar_lea.vmem %s2, 24
      %v2796 = vld [vmem:[%s2795] sm:$0x7]
      %v2798 = vsel %vm365, %v2763, 0
      %v2801 = vsel %vm365, %v2764, 0
      %v2804 = vsel %vm365, %v2765, 0
      %v2807 = vsel %vm365, %v2766, 0
      %v2810 = vsel %vm365, %v2767, 0
      %v2813 = vsel %vm365, %v2768, 0
      %v2816 = vsel %vm365, %v2769, 0
      %v2819 = vsel %vm365, %v2770, 0
      %v2822 = vsel %vm365, %v2771, 0
      %v2825 = vsel %vm365, %v2772, 0
      %v2828 = vsel %vm365, %v2773, 0
      %v2831 = vsel %vm365, %v2774, 0
      %v2834 = vsel %vm365, %v2775, 0
      %v2837 = vsel %vm365, %v2776, 0
      %v2840 = vsel %vm365, %v2777, 0
      %v2843 = vsel %vm365, %v2778, 0
      %v2846 = vsel %vm365, %v2779, 0
      %v2849 = vsel %vm365, %v2780, 0
      %v2852 = vsel %vm365, %v2781, 0
      %v2855 = vsel %vm365, %v2782, 0
      %v2858 = vsel %vm365, %v2783, 0
      %v2861 = vsel %vm365, %v2784, 0
      %v2864 = vsel %vm365, %v2785, 0
      %v2867 = vsel %vm365, %v2786, 0
      %v2870 = vsel %vm365, %v2787, 0
      %v2873 = vsel %vm365, %v2788, 0
      %v2876 = vsel %vm365, %v2789, 0
      %v2879 = vsel %vm365, %v2790, 0
      %v2882 = vsel %vm365, %v2791, 0
      %v2885 = vsel %vm365, %v2792, 0
      %v2888 = vsel %vm365, %v2793, 0
      %v2891 = vsel %vm365, %v2794, 0
      %v2894 = vsel %vm649, %v2796, 0
      %2896 = vmatprep.subr.mxu0 0.0
      %2897 = vmatpush1.msra.mxu0 %v2894
      %2898 = vmatprep.subr.mxu0 0.0
      %2899 = vmatpush1.msra.mxu0 0.0
      %2900 = vmatprep.subr.mxu0 0.0
      %2901 = vmatpush1.msra.mxu0 0.0
      %2902 = vmatprep.subr.mxu0 0.0
      %2903 = vmatpush1.msra.mxu0 0.0
      %2904 = vmatprep.subr.mxu0 0.0
      %2905 = vmatpush1.msra.mxu0 0.0
      %2906 = vmatprep.subr.mxu0 0.0
      %2907 = vmatpush1.msra.mxu0 0.0
      %2908 = vmatprep.subr.mxu0 0.0
      %2909 = vmatpush1.msra.mxu0 0.0
      %2910 = vmatprep.subr.mxu0 0.0
      %2911 = vmatpush1.msra.mxu0 0.0
      %2912 = vmatprep.subr.mxu0 0.0
      %2913 = vmatpush1.msra.mxu0 0.0
      %2914 = vmatprep.subr.mxu0 0.0
      %2915 = vmatpush1.msra.mxu0 0.0
      %2916 = vmatprep.subr.mxu0 0.0
      %2917 = vmatpush1.msra.mxu0 0.0
      %2918 = vmatprep.subr.mxu0 0.0
      %2919 = vmatpush1.msra.mxu0 0.0
      %2920 = vmatprep.subr.mxu0 0.0
      %2921 = vmatpush1.msra.mxu0 0.0
      %2922 = vmatprep.subr.mxu0 0.0
      %2923 = vmatpush1.msra.mxu0 0.0
      %2924 = vmatprep.subr.mxu0 0.0
      %2925 = vmatpush1.msra.mxu0 0.0
      %2926 = vmatprep.subr.mxu0 0.0
      %2927 = vmatpush1.msra.mxu0 0.0
      %2928 = vmatprep.subr.mxu0 0.0
      %2929 = vmatpush1.msra.mxu0 0.0
      %2930 = vmatprep.subr.mxu0 0.0
      %2931 = vmatpush1.msra.mxu0 0.0
      %2932 = vmatprep.subr.mxu0 0.0
      %2933 = vmatpush1.msra.mxu0 0.0
      %2934 = vmatprep.subr.mxu0 0.0
      %2935 = vmatpush1.msra.mxu0 0.0
      %2936 = vmatprep.subr.mxu0 0.0
      %2937 = vmatpush1.msra.mxu0 0.0
      %2938 = vmatprep.subr.mxu0 0.0
      %2939 = vmatpush1.msra.mxu0 0.0
      %2940 = vmatprep.subr.mxu0 0.0
      %2941 = vmatpush1.msra.mxu0 0.0
      %2942 = vmatprep.subr.mxu0 0.0
      %2943 = vmatpush1.msra.mxu0 0.0
      %2944 = vmatprep.subr.mxu0 0.0
      %2945 = vmatpush1.msra.mxu0 0.0
      %2946 = vmatprep.subr.mxu0 0.0
      %2947 = vmatpush1.msra.mxu0 0.0
      %2948 = vmatprep.subr.mxu0 0.0
      %2949 = vmatpush1.msra.mxu0 0.0
      %2950 = vmatprep.subr.mxu0 0.0
      %2951 = vmatpush1.msra.mxu0 0.0
      %2952 = vmatprep.subr.mxu0 0.0
      %2953 = vmatpush1.msra.mxu0 0.0
      %2954 = vmatprep.subr.mxu0 0.0
      %2955 = vmatpush1.msra.mxu0 0.0
      %2956 = vmatprep.subr.mxu0 0.0
      %2957 = vmatpush1.msra.mxu0 0.0
      %2958 = vmatprep.subr.mxu0 0.0
      %2959 = vmatpush1.msra.mxu0 0.0
      %2960 = vmatprep.mubr.f32.mxu0 0.0
      %2961 = vmatmul.mubr.f32.gmra.mrb[0].mxu0 %v2798
      %v2962 = vpop.f32.mrb[0].mxu0
      %v2963 = vadd.f32 0.0, %v2962
      %v2964 = vpop.f32.mrb[0].mxu0
      %2965 = vmatprep.mubr.f32.mxu0 0.0
      %2966 = vmatmul.mubr.f32.gmra.mrb[0].mxu0 %v2801
      %v2967 = vpop.f32.mrb[0].mxu0
      %v2968 = vadd.f32 0.0, %v2967
      %v2969 = vpop.f32.mrb[0].mxu0
      %2970 = vmatprep.mubr.f32.mxu0 0.0
      %2971 = vmatmul.mubr.f32.gmra.mrb[0].mxu0 %v2804
      %v2972 = vpop.f32.mrb[0].mxu0
      %v2973 = vadd.f32 0.0, %v2972
      %v2974 = vpop.f32.mrb[0].mxu0
      %2975 = vmatprep.mubr.f32.mxu0 0.0
      %2976 = vmatmul.mubr.f32.gmra.mrb[0].mxu0 %v2807
      %v2977 = vpop.f32.mrb[0].mxu0
      %v2978 = vadd.f32 0.0, %v2977
      %v2979 = vpop.f32.mrb[0].mxu0
      %2980 = vmatprep.mubr.f32.mxu0 0.0
      %2981 = vmatmul.mubr.f32.gmra.mrb[0].mxu0 %v2810
      %v2982 = vpop.f32.mrb[0].mxu0
      %v2983 = vadd.f32 0.0, %v2982
      %v2984 = vpop.f32.mrb[0].mxu0
      %2985 = vmatprep.mubr.f32.mxu0 0.0
      %2986 = vmatmul.mubr.f32.gmra.mrb[0].mxu0 %v2813
      %v2987 = vpop.f32.mrb[0].mxu0
      %v2988 = vadd.f32 0.0, %v2987
      %v2989 = vpop.f32.mrb[0].mxu0
      %2990 = vmatprep.mubr.f32.mxu0 0.0
      %2991 = vmatmul.mubr.f32.gmra.mrb[0].mxu0 %v2816
      %v2992 = vpop.f32.mrb[0].mxu0
      %v2993 = vadd.f32 0.0, %v2992
      %v2994 = vpop.f32.mrb[0].mxu0
      %2995 = vmatprep.mubr.f32.mxu0 0.0
      %2996 = vmatmul.mubr.f32.gmra.mrb[0].mxu0 %v2819
      %v2997 = vpop.f32.mrb[0].mxu0
      %v2998 = vadd.f32 0.0, %v2997
      %v2999 = vpop.f32.mrb[0].mxu0
      %3000 = vmatprep.mubr.f32.mxu0 0.0
      %3001 = vmatmul.mubr.f32.gmra.mrb[0].mxu0 %v2822
      %v3002 = vpop.f32.mrb[0].mxu0
      %v3003 = vadd.f32 0.0, %v3002
      %v3004 = vpop.f32.mrb[0].mxu0
      %3005 = vmatprep.mubr.f32.mxu0 0.0
      %3006 = vmatmul.mubr.f32.gmra.mrb[0].mxu0 %v2825
      %v3007 = vpop.f32.mrb[0].mxu0
      %v3008 = vadd.f32 0.0, %v3007
      %v3009 = vpop.f32.mrb[0].mxu0
      %3010 = vmatprep.mubr.f32.mxu0 0.0
      %3011 = vmatmul.mubr.f32.gmra.mrb[0].mxu0 %v2828
      %v3012 = vpop.f32.mrb[0].mxu0
      %v3013 = vadd.f32 0.0, %v3012
      %v3014 = vpop.f32.mrb[0].mxu0
      %3015 = vmatprep.mubr.f32.mxu0 0.0
      %3016 = vmatmul.mubr.f32.gmra.mrb[0].mxu0 %v2831
      %v3017 = vpop.f32.mrb[0].mxu0
      %v3018 = vadd.f32 0.0, %v3017
      %v3019 = vpop.f32.mrb[0].mxu0
      %3020 = vmatprep.mubr.f32.mxu0 0.0
      %3021 = vmatmul.mubr.f32.gmra.mrb[0].mxu0 %v2834
      %v3022 = vpop.f32.mrb[0].mxu0
      %v3023 = vadd.f32 0.0, %v3022
      %v3024 = vpop.f32.mrb[0].mxu0
      %3025 = vmatprep.mubr.f32.mxu0 0.0
      %3026 = vmatmul.mubr.f32.gmra.mrb[0].mxu0 %v2837
      %v3027 = vpop.f32.mrb[0].mxu0
      %v3028 = vadd.f32 0.0, %v3027
      %v3029 = vpop.f32.mrb[0].mxu0
      %3030 = vmatprep.mubr.f32.mxu0 0.0
      %3031 = vmatmul.mubr.f32.gmra.mrb[0].mxu0 %v2840
      %v3032 = vpop.f32.mrb[0].mxu0
      %v3033 = vadd.f32 0.0, %v3032
      %v3034 = vpop.f32.mrb[0].mxu0
      %3035 = vmatprep.mubr.f32.mxu0 0.0
      %3036 = vmatmul.mubr.f32.gmra.mrb[0].mxu0 %v2843
      %v3037 = vpop.f32.mrb[0].mxu0
      %v3038 = vadd.f32 0.0, %v3037
      %v3039 = vpop.f32.mrb[0].mxu0
      %3040 = vmatprep.mubr.f32.mxu0 0.0
      %3041 = vmatmul.mubr.f32.gmra.mrb[0].mxu0 %v2846
      %v3042 = vpop.f32.mrb[0].mxu0
      %v3043 = vadd.f32 0.0, %v3042
      %v3044 = vpop.f32.mrb[0].mxu0
      %3045 = vmatprep.mubr.f32.mxu0 0.0
      %3046 = vmatmul.mubr.f32.gmra.mrb[0].mxu0 %v2849
      %v3047 = vpop.f32.mrb[0].mxu0
      %v3048 = vadd.f32 0.0, %v3047
      %v3049 = vpop.f32.mrb[0].mxu0
      %3050 = vmatprep.mubr.f32.mxu0 0.0
      %3051 = vmatmul.mubr.f32.gmra.mrb[0].mxu0 %v2852
      %v3052 = vpop.f32.mrb[0].mxu0
      %v3053 = vadd.f32 0.0, %v3052
      %v3054 = vpop.f32.mrb[0].mxu0
      %3055 = vmatprep.mubr.f32.mxu0 0.0
      %3056 = vmatmul.mubr.f32.gmra.mrb[0].mxu0 %v2855
      %v3057 = vpop.f32.mrb[0].mxu0
      %v3058 = vadd.f32 0.0, %v3057
      %v3059 = vpop.f32.mrb[0].mxu0
      %3060 = vmatprep.mubr.f32.mxu0 0.0
      %3061 = vmatmul.mubr.f32.gmra.mrb[0].mxu0 %v2858
      %v3062 = vpop.f32.mrb[0].mxu0
      %v3063 = vadd.f32 0.0, %v3062
      %v3064 = vpop.f32.mrb[0].mxu0
      %3065 = vmatprep.mubr.f32.mxu0 0.0
      %3066 = vmatmul.mubr.f32.gmra.mrb[0].mxu0 %v2861
      %v3067 = vpop.f32.mrb[0].mxu0
      %v3068 = vadd.f32 0.0, %v3067
      %v3069 = vpop.f32.mrb[0].mxu0
      %3070 = vmatprep.mubr.f32.mxu0 0.0
      %3071 = vmatmul.mubr.f32.gmra.mrb[0].mxu0 %v2864
      %v3072 = vpop.f32.mrb[0].mxu0
      %v3073 = vadd.f32 0.0, %v3072
      %v3074 = vpop.f32.mrb[0].mxu0
      %3075 = vmatprep.mubr.f32.mxu0 0.0
      %3076 = vmatmul.mubr.f32.gmra.mrb[0].mxu0 %v2867
      %v3077 = vpop.f32.mrb[0].mxu0
      %v3078 = vadd.f32 0.0, %v3077
      %v3079 = vpop.f32.mrb[0].mxu0
      %3080 = vmatprep.mubr.f32.mxu0 0.0
      %3081 = vmatmul.mubr.f32.gmra.mrb[0].mxu0 %v2870
      %v3082 = vpop.f32.mrb[0].mxu0
      %v3083 = vadd.f32 0.0, %v3082
      %v3084 = vpop.f32.mrb[0].mxu0
      %3085 = vmatprep.mubr.f32.mxu0 0.0
      %3086 = vmatmul.mubr.f32.gmra.mrb[0].mxu0 %v2873
      %v3087 = vpop.f32.mrb[0].mxu0
      %v3088 = vadd.f32 0.0, %v3087
      %v3089 = vpop.f32.mrb[0].mxu0
      %3090 = vmatprep.mubr.f32.mxu0 0.0
      %3091 = vmatmul.mubr.f32.gmra.mrb[0].mxu0 %v2876
      %v3092 = vpop.f32.mrb[0].mxu0
      %v3093 = vadd.f32 0.0, %v3092
      %v3094 = vpop.f32.mrb[0].mxu0
      %3095 = vmatprep.mubr.f32.mxu0 0.0
      %3096 = vmatmul.mubr.f32.gmra.mrb[0].mxu0 %v2879
      %v3097 = vpop.f32.mrb[0].mxu0
      %v3098 = vadd.f32 0.0, %v3097
      %v3099 = vpop.f32.mrb[0].mxu0
      %3100 = vmatprep.mubr.f32.mxu0 0.0
      %3101 = vmatmul.mubr.f32.gmra.mrb[0].mxu0 %v2882
      %v3102 = vpop.f32.mrb[0].mxu0
      %v3103 = vadd.f32 0.0, %v3102
      %v3104 = vpop.f32.mrb[0].mxu0
      %3105 = vmatprep.mubr.f32.mxu0 0.0
      %3106 = vmatmul.mubr.f32.gmra.mrb[0].mxu0 %v2885
      %v3107 = vpop.f32.mrb[0].mxu0
      %v3108 = vadd.f32 0.0, %v3107
      %v3109 = vpop.f32.mrb[0].mxu0
      %3110 = vmatprep.mubr.f32.mxu0 0.0
      %3111 = vmatmul.mubr.f32.gmra.mrb[0].mxu0 %v2888
      %v3112 = vpop.f32.mrb[0].mxu0
      %v3113 = vadd.f32 0.0, %v3112
      %v3114 = vpop.f32.mrb[0].mxu0
      %3115 = vmatprep.mubr.f32.mxu0 0.0
      %3116 = vmatmul.mubr.f32.gmra.mrb[0].mxu0 %v2891
      %v3117 = vpop.f32.mrb[0].mxu0
      %v3118 = vadd.f32 0.0, %v3117
      %v3119 = vpop.f32.mrb[0].mxu0
      %3120 = vdwg.mxu0
      %v3121 = vadd.f32 %v2730, %v2963
      %v3122 = vadd.f32 %v2731, %v2968
      %v3123 = vadd.f32 %v2732, %v2973
      %v3124 = vadd.f32 %v2733, %v2978
      %v3125 = vadd.f32 %v2734, %v2983
      %v3126 = vadd.f32 %v2735, %v2988
      %v3127 = vadd.f32 %v2736, %v2993
      %v3128 = vadd.f32 %v2737, %v2998
      %v3129 = vadd.f32 %v2738, %v3003
      %v3130 = vadd.f32 %v2739, %v3008
      %v3131 = vadd.f32 %v2740, %v3013
      %v3132 = vadd.f32 %v2741, %v3018
      %v3133 = vadd.f32 %v2742, %v3023
      %v3134 = vadd.f32 %v2743, %v3028
      %v3135 = vadd.f32 %v2744, %v3033
      %v3136 = vadd.f32 %v2745, %v3038
      %v3137 = vadd.f32 %v2746, %v3043
      %v3138 = vadd.f32 %v2747, %v3048
      %v3139 = vadd.f32 %v2748, %v3053
      %v3140 = vadd.f32 %v2749, %v3058
      %v3141 = vadd.f32 %v2750, %v3063
      %v3142 = vadd.f32 %v2751, %v3068
      %v3143 = vadd.f32 %v2752, %v3073
      %v3144 = vadd.f32 %v2753, %v3078
      %v3145 = vadd.f32 %v2754, %v3083
      %v3146 = vadd.f32 %v2755, %v3088
      %v3147 = vadd.f32 %v2756, %v3093
      %v3148 = vadd.f32 %v2757, %v3098
      %v3149 = vadd.f32 %v2758, %v3103
      %v3150 = vadd.f32 %v2759, %v3108
      %v3151 = vadd.f32 %v2760, %v3113
      %v3152 = vadd.f32 %v2761, %v3118
      %v3153 = vld [vmem:[%s2762 + $0x1] sm:$0xff]
      %v3154 = vld [vmem:[%s2762 + $0x9] sm:$0xff]
      %v3155 = vld [vmem:[%s2762 + $0x19] sm:$0xff]
      %v3156 = vld [vmem:[%s2762 + $0x21] sm:$0xff]
      %v3157 = vld [vmem:[%s2762 + $0x31] sm:$0xff]
      %v3158 = vld [vmem:[%s2762 + $0x39] sm:$0xff]
      %v3159 = vld [vmem:[%s2762 + $0x49] sm:$0xff]
      %v3160 = vld [vmem:[%s2762 + $0x51] sm:$0xff]
      %v3161 = vld [vmem:[%s2762 + $0x61] sm:$0xff]
      %v3162 = vld [vmem:[%s2762 + $0x69] sm:$0xff]
      %v3163 = vld [vmem:[%s2762 + $0x79] sm:$0xff]
      %v3164 = vld [vmem:[%s2762 + $0x81] sm:$0xff]
      %v3165 = vld [vmem:[%s2762 + $0x91] sm:$0xff]
      %v3166 = vld [vmem:[%s2762 + $0x99] sm:$0xff]
      %v3167 = vld [vmem:[%s2762 + $0xa9] sm:$0xff]
      %v3168 = vld [vmem:[%s2762 + $0xb1] sm:$0xff]
      %v3169 = vld [vmem:[%s2762 + $0xc1] sm:$0xff]
      %v3170 = vld [vmem:[%s2762 + $0xc9] sm:$0xff]
      %v3171 = vld [vmem:[%s2762 + $0xd9] sm:$0xff]
      %v3172 = vld [vmem:[%s2762 + $0xe1] sm:$0xff]
      %v3173 = vld [vmem:[%s2762 + $0xf1] sm:$0xff]
      %v3174 = vld [vmem:[%s2762 + $0xf9] sm:$0xff]
      %v3175 = vld [vmem:[%s2762 + $0x109] sm:$0xff]
      %v3176 = vld [vmem:[%s2762 + $0x111] sm:$0xff]
      %v3177 = vld [vmem:[%s2762 + $0x121] sm:$0xff]
      %v3178 = vld [vmem:[%s2762 + $0x129] sm:$0xff]
      %v3179 = vld [vmem:[%s2762 + $0x139] sm:$0xff]
      %v3180 = vld [vmem:[%s2762 + $0x141] sm:$0xff]
      %v3181 = vld [vmem:[%s2762 + $0x151] sm:$0xff]
      %v3182 = vld [vmem:[%s2762 + $0x159] sm:$0xff]
      %v3183 = vld [vmem:[%s2762 + $0x169] sm:$0xff]
      %v3184 = vld [vmem:[%s2762 + $0x171] sm:$0xff]
      %s3185 = scalar_lea.vmem %s2, 28
      %v3186 = vld [vmem:[%s3185] sm:$0x7]
      %v3188 = vsel %vm365, %v3153, 0
      %v3191 = vsel %vm365, %v3154, 0
      %v3194 = vsel %vm365, %v3155, 0
      %v3197 = vsel %vm365, %v3156, 0
      %v3200 = vsel %vm365, %v3157, 0
      %v3203 = vsel %vm365, %v3158, 0
      %v3206 = vsel %vm365, %v3159, 0
      %v3209 = vsel %vm365, %v3160, 0
      %v3212 = vsel %vm365, %v3161, 0
      %v3215 = vsel %vm365, %v3162, 0
      %v3218 = vsel %vm365, %v3163, 0
      %v3221 = vsel %vm365, %v3164, 0
      %v3224 = vsel %vm365, %v3165, 0
      %v3227 = vsel %vm365, %v3166, 0
      %v3230 = vsel %vm365, %v3167, 0
      %v3233 = vsel %vm365, %v3168, 0
      %v3236 = vsel %vm365, %v3169, 0
      %v3239 = vsel %vm365, %v3170, 0
      %v3242 = vsel %vm365, %v3171, 0
      %v3245 = vsel %vm365, %v3172, 0
      %v3248 = vsel %vm365, %v3173, 0
      %v3251 = vsel %vm365, %v3174, 0
      %v3254 = vsel %vm365, %v3175, 0
      %v3257 = vsel %vm365, %v3176, 0
      %v3260 = vsel %vm365, %v3177, 0
      %v3263 = vsel %vm365, %v3178, 0
      %v3266 = vsel %vm365, %v3179, 0
      %v3269 = vsel %vm365, %v3180, 0
      %v3272 = vsel %vm365, %v3181, 0
      %v3275 = vsel %vm365, %v3182, 0
      %v3278 = vsel %vm365, %v3183, 0
      %v3281 = vsel %vm365, %v3184, 0
      %v3284 = vsel %vm649, %v3186, 0
      %3286 = vmatprep.subr.mxu0 0.0
      %3287 = vmatpush1.msra.mxu0 %v3284
      %3288 = vmatprep.subr.mxu0 0.0
      %3289 = vmatpush1.msra.mxu0 0.0
      %3290 = vmatprep.subr.mxu0 0.0
      %3291 = vmatpush1.msra.mxu0 0.0
      %3292 = vmatprep.subr.mxu0 0.0
      %3293 = vmatpush1.msra.mxu0 0.0
      %3294 = vmatprep.subr.mxu0 0.0
      %3295 = vmatpush1.msra.mxu0 0.0
      %3296 = vmatprep.subr.mxu0 0.0
      %3297 = vmatpush1.msra.mxu0 0.0
      %3298 = vmatprep.subr.mxu0 0.0
      %3299 = vmatpush1.msra.mxu0 0.0
      %3300 = vmatprep.subr.mxu0 0.0
      %3301 = vmatpush1.msra.mxu0 0.0
      %3302 = vmatprep.subr.mxu0 0.0
      %3303 = vmatpush1.msra.mxu0 0.0
      %3304 = vmatprep.subr.mxu0 0.0
      %3305 = vmatpush1.msra.mxu0 0.0
      %3306 = vmatprep.subr.mxu0 0.0
      %3307 = vmatpush1.msra.mxu0 0.0
      %3308 = vmatprep.subr.mxu0 0.0
      %3309 = vmatpush1.msra.mxu0 0.0
      %3310 = vmatprep.subr.mxu0 0.0
      %3311 = vmatpush1.msra.mxu0 0.0
      %3312 = vmatprep.subr.mxu0 0.0
      %3313 = vmatpush1.msra.mxu0 0.0
      %3314 = vmatprep.subr.mxu0 0.0
      %3315 = vmatpush1.msra.mxu0 0.0
      %3316 = vmatprep.subr.mxu0 0.0
      %3317 = vmatpush1.msra.mxu0 0.0
      %3318 = vmatprep.subr.mxu0 0.0
      %3319 = vmatpush1.msra.mxu0 0.0
      %3320 = vmatprep.subr.mxu0 0.0
      %3321 = vmatpush1.msra.mxu0 0.0
      %3322 = vmatprep.subr.mxu0 0.0
      %3323 = vmatpush1.msra.mxu0 0.0
      %3324 = vmatprep.subr.mxu0 0.0
      %3325 = vmatpush1.msra.mxu0 0.0
      %3326 = vmatprep.subr.mxu0 0.0
      %3327 = vmatpush1.msra.mxu0 0.0
      %3328 = vmatprep.subr.mxu0 0.0
      %3329 = vmatpush1.msra.mxu0 0.0
      %3330 = vmatprep.subr.mxu0 0.0
      %3331 = vmatpush1.msra.mxu0 0.0
      %3332 = vmatprep.subr.mxu0 0.0
      %3333 = vmatpush1.msra.mxu0 0.0
      %3334 = vmatprep.subr.mxu0 0.0
      %3335 = vmatpush1.msra.mxu0 0.0
      %3336 = vmatprep.subr.mxu0 0.0
      %3337 = vmatpush1.msra.mxu0 0.0
      %3338 = vmatprep.subr.mxu0 0.0
      %3339 = vmatpush1.msra.mxu0 0.0
      %3340 = vmatprep.subr.mxu0 0.0
      %3341 = vmatpush1.msra.mxu0 0.0
      %3342 = vmatprep.subr.mxu0 0.0
      %3343 = vmatpush1.msra.mxu0 0.0
      %3344 = vmatprep.subr.mxu0 0.0
      %3345 = vmatpush1.msra.mxu0 0.0
      %3346 = vmatprep.subr.mxu0 0.0
      %3347 = vmatpush1.msra.mxu0 0.0
      %3348 = vmatprep.subr.mxu0 0.0
      %3349 = vmatpush1.msra.mxu0 0.0
      %3350 = vmatprep.mubr.f32.mxu0 0.0
      %3351 = vmatmul.mubr.f32.gmra.mrb[0].mxu0 %v3188
      %v3352 = vpop.f32.mrb[0].mxu0
      %v3353 = vadd.f32 0.0, %v3352
      %v3354 = vpop.f32.mrb[0].mxu0
      %3355 = vmatprep.mubr.f32.mxu0 0.0
      %3356 = vmatmul.mubr.f32.gmra.mrb[0].mxu0 %v3191
      %v3357 = vpop.f32.mrb[0].mxu0
      %v3358 = vadd.f32 0.0, %v3357
      %v3359 = vpop.f32.mrb[0].mxu0
      %3360 = vmatprep.mubr.f32.mxu0 0.0
      %3361 = vmatmul.mubr.f32.gmra.mrb[0].mxu0 %v3194
      %v3362 = vpop.f32.mrb[0].mxu0
      %v3363 = vadd.f32 0.0, %v3362
      %v3364 = vpop.f32.mrb[0].mxu0
      %3365 = vmatprep.mubr.f32.mxu0 0.0
      %3366 = vmatmul.mubr.f32.gmra.mrb[0].mxu0 %v3197
      %v3367 = vpop.f32.mrb[0].mxu0
      %v3368 = vadd.f32 0.0, %v3367
      %v3369 = vpop.f32.mrb[0].mxu0
      %3370 = vmatprep.mubr.f32.mxu0 0.0
      %3371 = vmatmul.mubr.f32.gmra.mrb[0].mxu0 %v3200
      %v3372 = vpop.f32.mrb[0].mxu0
      %v3373 = vadd.f32 0.0, %v3372
      %v3374 = vpop.f32.mrb[0].mxu0
      %3375 = vmatprep.mubr.f32.mxu0 0.0
      %3376 = vmatmul.mubr.f32.gmra.mrb[0].mxu0 %v3203
      %v3377 = vpop.f32.mrb[0].mxu0
      %v3378 = vadd.f32 0.0, %v3377
      %v3379 = vpop.f32.mrb[0].mxu0
      %3380 = vmatprep.mubr.f32.mxu0 0.0
      %3381 = vmatmul.mubr.f32.gmra.mrb[0].mxu0 %v3206
      %v3382 = vpop.f32.mrb[0].mxu0
      %v3383 = vadd.f32 0.0, %v3382
      %v3384 = vpop.f32.mrb[0].mxu0
      %3385 = vmatprep.mubr.f32.mxu0 0.0
      %3386 = vmatmul.mubr.f32.gmra.mrb[0].mxu0 %v3209
      %v3387 = vpop.f32.mrb[0].mxu0
      %v3388 = vadd.f32 0.0, %v3387
      %v3389 = vpop.f32.mrb[0].mxu0
      %3390 = vmatprep.mubr.f32.mxu0 0.0
      %3391 = vmatmul.mubr.f32.gmra.mrb[0].mxu0 %v3212
      %v3392 = vpop.f32.mrb[0].mxu0
      %v3393 = vadd.f32 0.0, %v3392
      %v3394 = vpop.f32.mrb[0].mxu0
      %3395 = vmatprep.mubr.f32.mxu0 0.0
      %3396 = vmatmul.mubr.f32.gmra.mrb[0].mxu0 %v3215
      %v3397 = vpop.f32.mrb[0].mxu0
      %v3398 = vadd.f32 0.0, %v3397
      %v3399 = vpop.f32.mrb[0].mxu0
      %3400 = vmatprep.mubr.f32.mxu0 0.0
      %3401 = vmatmul.mubr.f32.gmra.mrb[0].mxu0 %v3218
      %v3402 = vpop.f32.mrb[0].mxu0
      %v3403 = vadd.f32 0.0, %v3402
      %v3404 = vpop.f32.mrb[0].mxu0
      %3405 = vmatprep.mubr.f32.mxu0 0.0
      %3406 = vmatmul.mubr.f32.gmra.mrb[0].mxu0 %v3221
      %v3407 = vpop.f32.mrb[0].mxu0
      %v3408 = vadd.f32 0.0, %v3407
      %v3409 = vpop.f32.mrb[0].mxu0
      %3410 = vmatprep.mubr.f32.mxu0 0.0
      %3411 = vmatmul.mubr.f32.gmra.mrb[0].mxu0 %v3224
      %v3412 = vpop.f32.mrb[0].mxu0
      %v3413 = vadd.f32 0.0, %v3412
      %v3414 = vpop.f32.mrb[0].mxu0
      %3415 = vmatprep.mubr.f32.mxu0 0.0
      %3416 = vmatmul.mubr.f32.gmra.mrb[0].mxu0 %v3227
      %v3417 = vpop.f32.mrb[0].mxu0
      %v3418 = vadd.f32 0.0, %v3417
      %v3419 = vpop.f32.mrb[0].mxu0
      %3420 = vmatprep.mubr.f32.mxu0 0.0
      %3421 = vmatmul.mubr.f32.gmra.mrb[0].mxu0 %v3230
      %v3422 = vpop.f32.mrb[0].mxu0
      %v3423 = vadd.f32 0.0, %v3422
      %v3424 = vpop.f32.mrb[0].mxu0
      %3425 = vmatprep.mubr.f32.mxu0 0.0
      %3426 = vmatmul.mubr.f32.gmra.mrb[0].mxu0 %v3233
      %v3427 = vpop.f32.mrb[0].mxu0
      %v3428 = vadd.f32 0.0, %v3427
      %v3429 = vpop.f32.mrb[0].mxu0
      %3430 = vmatprep.mubr.f32.mxu0 0.0
      %3431 = vmatmul.mubr.f32.gmra.mrb[0].mxu0 %v3236
      %v3432 = vpop.f32.mrb[0].mxu0
      %v3433 = vadd.f32 0.0, %v3432
      %v3434 = vpop.f32.mrb[0].mxu0
      %3435 = vmatprep.mubr.f32.mxu0 0.0
      %3436 = vmatmul.mubr.f32.gmra.mrb[0].mxu0 %v3239
      %v3437 = vpop.f32.mrb[0].mxu0
      %v3438 = vadd.f32 0.0, %v3437
      %v3439 = vpop.f32.mrb[0].mxu0
      %3440 = vmatprep.mubr.f32.mxu0 0.0
      %3441 = vmatmul.mubr.f32.gmra.mrb[0].mxu0 %v3242
      %v3442 = vpop.f32.mrb[0].mxu0
      %v3443 = vadd.f32 0.0, %v3442
      %v3444 = vpop.f32.mrb[0].mxu0
      %3445 = vmatprep.mubr.f32.mxu0 0.0
      %3446 = vmatmul.mubr.f32.gmra.mrb[0].mxu0 %v3245
      %v3447 = vpop.f32.mrb[0].mxu0
      %v3448 = vadd.f32 0.0, %v3447
      %v3449 = vpop.f32.mrb[0].mxu0
      %3450 = vmatprep.mubr.f32.mxu0 0.0
      %3451 = vmatmul.mubr.f32.gmra.mrb[0].mxu0 %v3248
      %v3452 = vpop.f32.mrb[0].mxu0
      %v3453 = vadd.f32 0.0, %v3452
      %v3454 = vpop.f32.mrb[0].mxu0
      %3455 = vmatprep.mubr.f32.mxu0 0.0
      %3456 = vmatmul.mubr.f32.gmra.mrb[0].mxu0 %v3251
      %v3457 = vpop.f32.mrb[0].mxu0
      %v3458 = vadd.f32 0.0, %v3457
      %v3459 = vpop.f32.mrb[0].mxu0
      %3460 = vmatprep.mubr.f32.mxu0 0.0
      %3461 = vmatmul.mubr.f32.gmra.mrb[0].mxu0 %v3254
      %v3462 = vpop.f32.mrb[0].mxu0
      %v3463 = vadd.f32 0.0, %v3462
      %v3464 = vpop.f32.mrb[0].mxu0
      %3465 = vmatprep.mubr.f32.mxu0 0.0
      %3466 = vmatmul.mubr.f32.gmra.mrb[0].mxu0 %v3257
      %v3467 = vpop.f32.mrb[0].mxu0
      %v3468 = vadd.f32 0.0, %v3467
      %v3469 = vpop.f32.mrb[0].mxu0
      %3470 = vmatprep.mubr.f32.mxu0 0.0
      %3471 = vmatmul.mubr.f32.gmra.mrb[0].mxu0 %v3260
      %v3472 = vpop.f32.mrb[0].mxu0
      %v3473 = vadd.f32 0.0, %v3472
      %v3474 = vpop.f32.mrb[0].mxu0
      %3475 = vmatprep.mubr.f32.mxu0 0.0
      %3476 = vmatmul.mubr.f32.gmra.mrb[0].mxu0 %v3263
      %v3477 = vpop.f32.mrb[0].mxu0
      %v3478 = vadd.f32 0.0, %v3477
      %v3479 = vpop.f32.mrb[0].mxu0
      %3480 = vmatprep.mubr.f32.mxu0 0.0
      %3481 = vmatmul.mubr.f32.gmra.mrb[0].mxu0 %v3266
      %v3482 = vpop.f32.mrb[0].mxu0
      %v3483 = vadd.f32 0.0, %v3482
      %v3484 = vpop.f32.mrb[0].mxu0
      %3485 = vmatprep.mubr.f32.mxu0 0.0
      %3486 = vmatmul.mubr.f32.gmra.mrb[0].mxu0 %v3269
      %v3487 = vpop.f32.mrb[0].mxu0
      %v3488 = vadd.f32 0.0, %v3487
      %v3489 = vpop.f32.mrb[0].mxu0
      %3490 = vmatprep.mubr.f32.mxu0 0.0
      %3491 = vmatmul.mubr.f32.gmra.mrb[0].mxu0 %v3272
      %v3492 = vpop.f32.mrb[0].mxu0
      %v3493 = vadd.f32 0.0, %v3492
      %v3494 = vpop.f32.mrb[0].mxu0
      %3495 = vmatprep.mubr.f32.mxu0 0.0
      %3496 = vmatmul.mubr.f32.gmra.mrb[0].mxu0 %v3275
      %v3497 = vpop.f32.mrb[0].mxu0
      %v3498 = vadd.f32 0.0, %v3497
      %v3499 = vpop.f32.mrb[0].mxu0
      %3500 = vmatprep.mubr.f32.mxu0 0.0
      %3501 = vmatmul.mubr.f32.gmra.mrb[0].mxu0 %v3278
      %v3502 = vpop.f32.mrb[0].mxu0
      %v3503 = vadd.f32 0.0, %v3502
      %v3504 = vpop.f32.mrb[0].mxu0
      %3505 = vmatprep.mubr.f32.mxu0 0.0
      %3506 = vmatmul.mubr.f32.gmra.mrb[0].mxu0 %v3281
      %v3507 = vpop.f32.mrb[0].mxu0
      %v3508 = vadd.f32 0.0, %v3507
      %v3509 = vpop.f32.mrb[0].mxu0
      %3510 = vdwg.mxu0
      %v3511 = vadd.f32 %v3121, %v3353
      %v3512 = vadd.f32 %v3122, %v3358
      %v3513 = vadd.f32 %v3123, %v3363
      %v3514 = vadd.f32 %v3124, %v3368
      %v3515 = vadd.f32 %v3125, %v3373
      %v3516 = vadd.f32 %v3126, %v3378
      %v3517 = vadd.f32 %v3127, %v3383
      %v3518 = vadd.f32 %v3128, %v3388
      %v3519 = vadd.f32 %v3129, %v3393
      %v3520 = vadd.f32 %v3130, %v3398
      %v3521 = vadd.f32 %v3131, %v3403
      %v3522 = vadd.f32 %v3132, %v3408
      %v3523 = vadd.f32 %v3133, %v3413
      %v3524 = vadd.f32 %v3134, %v3418
      %v3525 = vadd.f32 %v3135, %v3423
      %v3526 = vadd.f32 %v3136, %v3428
      %v3527 = vadd.f32 %v3137, %v3433
      %v3528 = vadd.f32 %v3138, %v3438
      %v3529 = vadd.f32 %v3139, %v3443
      %v3530 = vadd.f32 %v3140, %v3448
      %v3531 = vadd.f32 %v3141, %v3453
      %v3532 = vadd.f32 %v3142, %v3458
      %v3533 = vadd.f32 %v3143, %v3463
      %v3534 = vadd.f32 %v3144, %v3468
      %v3535 = vadd.f32 %v3145, %v3473
      %v3536 = vadd.f32 %v3146, %v3478
      %v3537 = vadd.f32 %v3147, %v3483
      %v3538 = vadd.f32 %v3148, %v3488
      %v3539 = vadd.f32 %v3149, %v3493
      %v3540 = vadd.f32 %v3150, %v3498
      %v3541 = vadd.f32 %v3151, %v3503
      %v3542 = vadd.f32 %v3152, %v3508
      %v3543 = vld [vmem:[%s2762 + $0x2] sm:$0xff]
      %v3544 = vld [vmem:[%s2762 + $0xa] sm:$0xff]
      %v3545 = vld [vmem:[%s2762 + $0x1a] sm:$0xff]
      %v3546 = vld [vmem:[%s2762 + $0x22] sm:$0xff]
      %v3547 = vld [vmem:[%s2762 + $0x32] sm:$0xff]
      %v3548 = vld [vmem:[%s2762 + $0x3a] sm:$0xff]
      %v3549 = vld [vmem:[%s2762 + $0x4a] sm:$0xff]
      %v3550 = vld [vmem:[%s2762 + $0x52] sm:$0xff]
      %v3551 = vld [vmem:[%s2762 + $0x62] sm:$0xff]
      %v3552 = vld [vmem:[%s2762 + $0x6a] sm:$0xff]
      %v3553 = vld [vmem:[%s2762 + $0x7a] sm:$0xff]
      %v3554 = vld [vmem:[%s2762 + $0x82] sm:$0xff]
      %v3555 = vld [vmem:[%s2762 + $0x92] sm:$0xff]
      %v3556 = vld [vmem:[%s2762 + $0x9a] sm:$0xff]
      %v3557 = vld [vmem:[%s2762 + $0xaa] sm:$0xff]
      %v3558 = vld [vmem:[%s2762 + $0xb2] sm:$0xff]
      %v3559 = vld [vmem:[%s2762 + $0xc2] sm:$0xff]
      %v3560 = vld [vmem:[%s2762 + $0xca] sm:$0xff]
      %v3561 = vld [vmem:[%s2762 + $0xda] sm:$0xff]
      %v3562 = vld [vmem:[%s2762 + $0xe2] sm:$0xff]
      %v3563 = vld [vmem:[%s2762 + $0xf2] sm:$0xff]
      %v3564 = vld [vmem:[%s2762 + $0xfa] sm:$0xff]
      %v3565 = vld [vmem:[%s2762 + $0x10a] sm:$0xff]
      %v3566 = vld [vmem:[%s2762 + $0x112] sm:$0xff]
      %v3567 = vld [vmem:[%s2762 + $0x122] sm:$0xff]
      %v3568 = vld [vmem:[%s2762 + $0x12a] sm:$0xff]
      %v3569 = vld [vmem:[%s2762 + $0x13a] sm:$0xff]
      %v3570 = vld [vmem:[%s2762 + $0x142] sm:$0xff]
      %v3571 = vld [vmem:[%s2762 + $0x152] sm:$0xff]
      %v3572 = vld [vmem:[%s2762 + $0x15a] sm:$0xff]
      %v3573 = vld [vmem:[%s2762 + $0x16a] sm:$0xff]
      %v3574 = vld [vmem:[%s2762 + $0x172] sm:$0xff]
      %s3575 = scalar_lea.vmem %s2, 32
      %v3576 = vld [vmem:[%s3575] sm:$0x7]
      %v3578 = vsel %vm365, %v3543, 0
      %v3581 = vsel %vm365, %v3544, 0
      %v3584 = vsel %vm365, %v3545, 0
      %v3587 = vsel %vm365, %v3546, 0
      %v3590 = vsel %vm365, %v3547, 0
      %v3593 = vsel %vm365, %v3548, 0
      %v3596 = vsel %vm365, %v3549, 0
      %v3599 = vsel %vm365, %v3550, 0
      %v3602 = vsel %vm365, %v3551, 0
      %v3605 = vsel %vm365, %v3552, 0
      %v3608 = vsel %vm365, %v3553, 0
      %v3611 = vsel %vm365, %v3554, 0
      %v3614 = vsel %vm365, %v3555, 0
      %v3617 = vsel %vm365, %v3556, 0
      %v3620 = vsel %vm365, %v3557, 0
      %v3623 = vsel %vm365, %v3558, 0
      %v3626 = vsel %vm365, %v3559, 0
      %v3629 = vsel %vm365, %v3560, 0
      %v3632 = vsel %vm365, %v3561, 0
      %v3635 = vsel %vm365, %v3562, 0
      %v3638 = vsel %vm365, %v3563, 0
      %v3641 = vsel %vm365, %v3564, 0
      %v3644 = vsel %vm365, %v3565, 0
      %v3647 = vsel %vm365, %v3566, 0
      %v3650 = vsel %vm365, %v3567, 0
      %v3653 = vsel %vm365, %v3568, 0
      %v3656 = vsel %vm365, %v3569, 0
      %v3659 = vsel %vm365, %v3570, 0
      %v3662 = vsel %vm365, %v3571, 0
      %v3665 = vsel %vm365, %v3572, 0
      %v3668 = vsel %vm365, %v3573, 0
      %v3671 = vsel %vm365, %v3574, 0
      %v3674 = vsel %vm649, %v3576, 0
      %3676 = vmatprep.subr.mxu0 0.0
      %3677 = vmatpush1.msra.mxu0 %v3674
      %3678 = vmatprep.subr.mxu0 0.0
      %3679 = vmatpush1.msra.mxu0 0.0
      %3680 = vmatprep.subr.mxu0 0.0
      %3681 = vmatpush1.msra.mxu0 0.0
      %3682 = vmatprep.subr.mxu0 0.0
      %3683 = vmatpush1.msra.mxu0 0.0
      %3684 = vmatprep.subr.mxu0 0.0
      %3685 = vmatpush1.msra.mxu0 0.0
      %3686 = vmatprep.subr.mxu0 0.0
      %3687 = vmatpush1.msra.mxu0 0.0
      %3688 = vmatprep.subr.mxu0 0.0
      %3689 = vmatpush1.msra.mxu0 0.0
      %3690 = vmatprep.subr.mxu0 0.0
      %3691 = vmatpush1.msra.mxu0 0.0
      %3692 = vmatprep.subr.mxu0 0.0
      %3693 = vmatpush1.msra.mxu0 0.0
      %3694 = vmatprep.subr.mxu0 0.0
      %3695 = vmatpush1.msra.mxu0 0.0
      %3696 = vmatprep.subr.mxu0 0.0
      %3697 = vmatpush1.msra.mxu0 0.0
      %3698 = vmatprep.subr.mxu0 0.0
      %3699 = vmatpush1.msra.mxu0 0.0
      %3700 = vmatprep.subr.mxu0 0.0
      %3701 = vmatpush1.msra.mxu0 0.0
      %3702 = vmatprep.subr.mxu0 0.0
      %3703 = vmatpush1.msra.mxu0 0.0
      %3704 = vmatprep.subr.mxu0 0.0
      %3705 = vmatpush1.msra.mxu0 0.0
      %3706 = vmatprep.subr.mxu0 0.0
      %3707 = vmatpush1.msra.mxu0 0.0
      %3708 = vmatprep.subr.mxu0 0.0
      %3709 = vmatpush1.msra.mxu0 0.0
      %3710 = vmatprep.subr.mxu0 0.0
      %3711 = vmatpush1.msra.mxu0 0.0
      %3712 = vmatprep.subr.mxu0 0.0
      %3713 = vmatpush1.msra.mxu0 0.0
      %3714 = vmatprep.subr.mxu0 0.0
      %3715 = vmatpush1.msra.mxu0 0.0
      %3716 = vmatprep.subr.mxu0 0.0
      %3717 = vmatpush1.msra.mxu0 0.0
      %3718 = vmatprep.subr.mxu0 0.0
      %3719 = vmatpush1.msra.mxu0 0.0
      %3720 = vmatprep.subr.mxu0 0.0
      %3721 = vmatpush1.msra.mxu0 0.0
      %3722 = vmatprep.subr.mxu0 0.0
      %3723 = vmatpush1.msra.mxu0 0.0
      %3724 = vmatprep.subr.mxu0 0.0
      %3725 = vmatpush1.msra.mxu0 0.0
      %3726 = vmatprep.subr.mxu0 0.0
      %3727 = vmatpush1.msra.mxu0 0.0
      %3728 = vmatprep.subr.mxu0 0.0
      %3729 = vmatpush1.msra.mxu0 0.0
      %3730 = vmatprep.subr.mxu0 0.0
      %3731 = vmatpush1.msra.mxu0 0.0
      %3732 = vmatprep.subr.mxu0 0.0
      %3733 = vmatpush1.msra.mxu0 0.0
      %3734 = vmatprep.subr.mxu0 0.0
      %3735 = vmatpush1.msra.mxu0 0.0
      %3736 = vmatprep.subr.mxu0 0.0
      %3737 = vmatpush1.msra.mxu0 0.0
      %3738 = vmatprep.subr.mxu0 0.0
      %3739 = vmatpush1.msra.mxu0 0.0
      %3740 = vmatprep.mubr.f32.mxu0 0.0
      %3741 = vmatmul.mubr.f32.gmra.mrb[0].mxu0 %v3578
      %v3742 = vpop.f32.mrb[0].mxu0
      %v3743 = vadd.f32 0.0, %v3742
      %v3744 = vpop.f32.mrb[0].mxu0
      %3745 = vmatprep.mubr.f32.mxu0 0.0
      %3746 = vmatmul.mubr.f32.gmra.mrb[0].mxu0 %v3581
      %v3747 = vpop.f32.mrb[0].mxu0
      %v3748 = vadd.f32 0.0, %v3747
      %v3749 = vpop.f32.mrb[0].mxu0
      %3750 = vmatprep.mubr.f32.mxu0 0.0
      %3751 = vmatmul.mubr.f32.gmra.mrb[0].mxu0 %v3584
      %v3752 = vpop.f32.mrb[0].mxu0
      %v3753 = vadd.f32 0.0, %v3752
      %v3754 = vpop.f32.mrb[0].mxu0
      %3755 = vmatprep.mubr.f32.mxu0 0.0
      %3756 = vmatmul.mubr.f32.gmra.mrb[0].mxu0 %v3587
      %v3757 = vpop.f32.mrb[0].mxu0
      %v3758 = vadd.f32 0.0, %v3757
      %v3759 = vpop.f32.mrb[0].mxu0
      %3760 = vmatprep.mubr.f32.mxu0 0.0
      %3761 = vmatmul.mubr.f32.gmra.mrb[0].mxu0 %v3590
      %v3762 = vpop.f32.mrb[0].mxu0
      %v3763 = vadd.f32 0.0, %v3762
      %v3764 = vpop.f32.mrb[0].mxu0
      %3765 = vmatprep.mubr.f32.mxu0 0.0
      %3766 = vmatmul.mubr.f32.gmra.mrb[0].mxu0 %v3593
      %v3767 = vpop.f32.mrb[0].mxu0
      %v3768 = vadd.f32 0.0, %v3767
      %v3769 = vpop.f32.mrb[0].mxu0
      %3770 = vmatprep.mubr.f32.mxu0 0.0
      %3771 = vmatmul.mubr.f32.gmra.mrb[0].mxu0 %v3596
      %v3772 = vpop.f32.mrb[0].mxu0
      %v3773 = vadd.f32 0.0, %v3772
      %v3774 = vpop.f32.mrb[0].mxu0
      %3775 = vmatprep.mubr.f32.mxu0 0.0
      %3776 = vmatmul.mubr.f32.gmra.mrb[0].mxu0 %v3599
      %v3777 = vpop.f32.mrb[0].mxu0
      %v3778 = vadd.f32 0.0, %v3777
      %v3779 = vpop.f32.mrb[0].mxu0
      %3780 = vmatprep.mubr.f32.mxu0 0.0
      %3781 = vmatmul.mubr.f32.gmra.mrb[0].mxu0 %v3602
      %v3782 = vpop.f32.mrb[0].mxu0
      %v3783 = vadd.f32 0.0, %v3782
      %v3784 = vpop.f32.mrb[0].mxu0
      %3785 = vmatprep.mubr.f32.mxu0 0.0
      %3786 = vmatmul.mubr.f32.gmra.mrb[0].mxu0 %v3605
      %v3787 = vpop.f32.mrb[0].mxu0
      %v3788 = vadd.f32 0.0, %v3787
      %v3789 = vpop.f32.mrb[0].mxu0
      %3790 = vmatprep.mubr.f32.mxu0 0.0
      %3791 = vmatmul.mubr.f32.gmra.mrb[0].mxu0 %v3608
      %v3792 = vpop.f32.mrb[0].mxu0
      %v3793 = vadd.f32 0.0, %v3792
      %v3794 = vpop.f32.mrb[0].mxu0
      %3795 = vmatprep.mubr.f32.mxu0 0.0
      %3796 = vmatmul.mubr.f32.gmra.mrb[0].mxu0 %v3611
      %v3797 = vpop.f32.mrb[0].mxu0
      %v3798 = vadd.f32 0.0, %v3797
      %v3799 = vpop.f32.mrb[0].mxu0
      %3800 = vmatprep.mubr.f32.mxu0 0.0
      %3801 = vmatmul.mubr.f32.gmra.mrb[0].mxu0 %v3614
      %v3802 = vpop.f32.mrb[0].mxu0
      %v3803 = vadd.f32 0.0, %v3802
      %v3804 = vpop.f32.mrb[0].mxu0
      %3805 = vmatprep.mubr.f32.mxu0 0.0
      %3806 = vmatmul.mubr.f32.gmra.mrb[0].mxu0 %v3617
      %v3807 = vpop.f32.mrb[0].mxu0
      %v3808 = vadd.f32 0.0, %v3807
      %v3809 = vpop.f32.mrb[0].mxu0
      %3810 = vmatprep.mubr.f32.mxu0 0.0
      %3811 = vmatmul.mubr.f32.gmra.mrb[0].mxu0 %v3620
      %v3812 = vpop.f32.mrb[0].mxu0
      %v3813 = vadd.f32 0.0, %v3812
      %v3814 = vpop.f32.mrb[0].mxu0
      %3815 = vmatprep.mubr.f32.mxu0 0.0
      %3816 = vmatmul.mubr.f32.gmra.mrb[0].mxu0 %v3623
      %v3817 = vpop.f32.mrb[0].mxu0
      %v3818 = vadd.f32 0.0, %v3817
      %v3819 = vpop.f32.mrb[0].mxu0
      %3820 = vmatprep.mubr.f32.mxu0 0.0
      %3821 = vmatmul.mubr.f32.gmra.mrb[0].mxu0 %v3626
      %v3822 = vpop.f32.mrb[0].mxu0
      %v3823 = vadd.f32 0.0, %v3822
      %v3824 = vpop.f32.mrb[0].mxu0
      %3825 = vmatprep.mubr.f32.mxu0 0.0
      %3826 = vmatmul.mubr.f32.gmra.mrb[0].mxu0 %v3629
      %v3827 = vpop.f32.mrb[0].mxu0
      %v3828 = vadd.f32 0.0, %v3827
      %v3829 = vpop.f32.mrb[0].mxu0
      %3830 = vmatprep.mubr.f32.mxu0 0.0
      %3831 = vmatmul.mubr.f32.gmra.mrb[0].mxu0 %v3632
      %v3832 = vpop.f32.mrb[0].mxu0
      %v3833 = vadd.f32 0.0, %v3832
      %v3834 = vpop.f32.mrb[0].mxu0
      %3835 = vmatprep.mubr.f32.mxu0 0.0
      %3836 = vmatmul.mubr.f32.gmra.mrb[0].mxu0 %v3635
      %v3837 = vpop.f32.mrb[0].mxu0
      %v3838 = vadd.f32 0.0, %v3837
      %v3839 = vpop.f32.mrb[0].mxu0
      %3840 = vmatprep.mubr.f32.mxu0 0.0
      %3841 = vmatmul.mubr.f32.gmra.mrb[0].mxu0 %v3638
      %v3842 = vpop.f32.mrb[0].mxu0
      %v3843 = vadd.f32 0.0, %v3842
      %v3844 = vpop.f32.mrb[0].mxu0
      %3845 = vmatprep.mubr.f32.mxu0 0.0
      %3846 = vmatmul.mubr.f32.gmra.mrb[0].mxu0 %v3641
      %v3847 = vpop.f32.mrb[0].mxu0
      %v3848 = vadd.f32 0.0, %v3847
      %v3849 = vpop.f32.mrb[0].mxu0
      %3850 = vmatprep.mubr.f32.mxu0 0.0
      %3851 = vmatmul.mubr.f32.gmra.mrb[0].mxu0 %v3644
      %v3852 = vpop.f32.mrb[0].mxu0
      %v3853 = vadd.f32 0.0, %v3852
      %v3854 = vpop.f32.mrb[0].mxu0
      %3855 = vmatprep.mubr.f32.mxu0 0.0
      %3856 = vmatmul.mubr.f32.gmra.mrb[0].mxu0 %v3647
      %v3857 = vpop.f32.mrb[0].mxu0
      %v3858 = vadd.f32 0.0, %v3857
      %v3859 = vpop.f32.mrb[0].mxu0
      %3860 = vmatprep.mubr.f32.mxu0 0.0
      %3861 = vmatmul.mubr.f32.gmra.mrb[0].mxu0 %v3650
      %v3862 = vpop.f32.mrb[0].mxu0
      %v3863 = vadd.f32 0.0, %v3862
      %v3864 = vpop.f32.mrb[0].mxu0
      %3865 = vmatprep.mubr.f32.mxu0 0.0
      %3866 = vmatmul.mubr.f32.gmra.mrb[0].mxu0 %v3653
      %v3867 = vpop.f32.mrb[0].mxu0
      %v3868 = vadd.f32 0.0, %v3867
      %v3869 = vpop.f32.mrb[0].mxu0
      %3870 = vmatprep.mubr.f32.mxu0 0.0
      %3871 = vmatmul.mubr.f32.gmra.mrb[0].mxu0 %v3656
      %v3872 = vpop.f32.mrb[0].mxu0
      %v3873 = vadd.f32 0.0, %v3872
      %v3874 = vpop.f32.mrb[0].mxu0
      %3875 = vmatprep.mubr.f32.mxu0 0.0
      %3876 = vmatmul.mubr.f32.gmra.mrb[0].mxu0 %v3659
      %v3877 = vpop.f32.mrb[0].mxu0
      %v3878 = vadd.f32 0.0, %v3877
      %v3879 = vpop.f32.mrb[0].mxu0
      %3880 = vmatprep.mubr.f32.mxu0 0.0
      %3881 = vmatmul.mubr.f32.gmra.mrb[0].mxu0 %v3662
      %v3882 = vpop.f32.mrb[0].mxu0
      %v3883 = vadd.f32 0.0, %v3882
      %v3884 = vpop.f32.mrb[0].mxu0
      %3885 = vmatprep.mubr.f32.mxu0 0.0
      %3886 = vmatmul.mubr.f32.gmra.mrb[0].mxu0 %v3665
      %v3887 = vpop.f32.mrb[0].mxu0
      %v3888 = vadd.f32 0.0, %v3887
      %v3889 = vpop.f32.mrb[0].mxu0
      %3890 = vmatprep.mubr.f32.mxu0 0.0
      %3891 = vmatmul.mubr.f32.gmra.mrb[0].mxu0 %v3668
      %v3892 = vpop.f32.mrb[0].mxu0
      %v3893 = vadd.f32 0.0, %v3892
      %v3894 = vpop.f32.mrb[0].mxu0
      %3895 = vmatprep.mubr.f32.mxu0 0.0
      %3896 = vmatmul.mubr.f32.gmra.mrb[0].mxu0 %v3671
      %v3897 = vpop.f32.mrb[0].mxu0
      %v3898 = vadd.f32 0.0, %v3897
      %v3899 = vpop.f32.mrb[0].mxu0
      %3900 = vdwg.mxu0
      %v3901 = vadd.f32 %v3511, %v3743
      %v3902 = vadd.f32 %v3512, %v3748
      %v3903 = vadd.f32 %v3513, %v3753
      %v3904 = vadd.f32 %v3514, %v3758
      %v3905 = vadd.f32 %v3515, %v3763
      %v3906 = vadd.f32 %v3516, %v3768
      %v3907 = vadd.f32 %v3517, %v3773
      %v3908 = vadd.f32 %v3518, %v3778
      %v3909 = vadd.f32 %v3519, %v3783
      %v3910 = vadd.f32 %v3520, %v3788
      %v3911 = vadd.f32 %v3521, %v3793
      %v3912 = vadd.f32 %v3522, %v3798
      %v3913 = vadd.f32 %v3523, %v3803
      %v3914 = vadd.f32 %v3524, %v3808
      %v3915 = vadd.f32 %v3525, %v3813
      %v3916 = vadd.f32 %v3526, %v3818
      %v3917 = vadd.f32 %v3527, %v3823
      %v3918 = vadd.f32 %v3528, %v3828
      %v3919 = vadd.f32 %v3529, %v3833
      %v3920 = vadd.f32 %v3530, %v3838
      %v3921 = vadd.f32 %v3531, %v3843
      %v3922 = vadd.f32 %v3532, %v3848
      %v3923 = vadd.f32 %v3533, %v3853
      %v3924 = vadd.f32 %v3534, %v3858
      %v3925 = vadd.f32 %v3535, %v3863
      %v3926 = vadd.f32 %v3536, %v3868
      %v3927 = vadd.f32 %v3537, %v3873
      %v3928 = vadd.f32 %v3538, %v3878
      %v3929 = vadd.f32 %v3539, %v3883
      %v3930 = vadd.f32 %v3540, %v3888
      %v3931 = vadd.f32 %v3541, %v3893
      %v3932 = vadd.f32 %v3542, %v3898
      %v3933 = vld [vmem:[%s3] sm:$0x1]
      %v3935 = vlaneseq
      %v3936 = vshrl.u32 %v3935, 7
      %v3937 = vsub.s32 0, %v3936
      %v3938 = vrot.slane %v3933, %v3937
      %v3940 = vadd.f32 %v3901, %v3938
      %v3941 = vadd.f32 %v3902, %v3938
      %v3942 = vadd.f32 %v3903, %v3938
      %v3943 = vadd.f32 %v3904, %v3938
      %v3944 = vadd.f32 %v3905, %v3938
      %v3945 = vadd.f32 %v3906, %v3938
      %v3946 = vadd.f32 %v3907, %v3938
      %v3947 = vadd.f32 %v3908, %v3938
      %v3948 = vadd.f32 %v3909, %v3938
      %v3949 = vadd.f32 %v3910, %v3938
      %v3950 = vadd.f32 %v3911, %v3938
      %v3951 = vadd.f32 %v3912, %v3938
      %v3952 = vadd.f32 %v3913, %v3938
      %v3953 = vadd.f32 %v3914, %v3938
      %v3954 = vadd.f32 %v3915, %v3938
      %v3955 = vadd.f32 %v3916, %v3938
      %v3956 = vadd.f32 %v3917, %v3938
      %v3957 = vadd.f32 %v3918, %v3938
      %v3958 = vadd.f32 %v3919, %v3938
      %v3959 = vadd.f32 %v3920, %v3938
      %v3960 = vadd.f32 %v3921, %v3938
      %v3961 = vadd.f32 %v3922, %v3938
      %v3962 = vadd.f32 %v3923, %v3938
      %v3963 = vadd.f32 %v3924, %v3938
      %v3964 = vadd.f32 %v3925, %v3938
      %v3965 = vadd.f32 %v3926, %v3938
      %v3966 = vadd.f32 %v3927, %v3938
      %v3967 = vadd.f32 %v3928, %v3938
      %v3968 = vadd.f32 %v3929, %v3938
      %v3969 = vadd.f32 %v3930, %v3938
      %v3970 = vadd.f32 %v3931, %v3938
      %v3971 = vadd.f32 %v3932, %v3938
      %v3972 = vmax.f32 %v3940, 0.0
      %v3973 = vmax.f32 %v3941, 0.0
      %v3974 = vmax.f32 %v3942, 0.0
      %v3975 = vmax.f32 %v3943, 0.0
      %v3976 = vmax.f32 %v3944, 0.0
      %v3977 = vmax.f32 %v3945, 0.0
      %v3978 = vmax.f32 %v3946, 0.0
      %v3979 = vmax.f32 %v3947, 0.0
      %v3980 = vmax.f32 %v3948, 0.0
      %v3981 = vmax.f32 %v3949, 0.0
      %v3982 = vmax.f32 %v3950, 0.0
      %v3983 = vmax.f32 %v3951, 0.0
      %v3984 = vmax.f32 %v3952, 0.0
      %v3985 = vmax.f32 %v3953, 0.0
      %v3986 = vmax.f32 %v3954, 0.0
      %v3987 = vmax.f32 %v3955, 0.0
      %v3988 = vmax.f32 %v3956, 0.0
      %v3989 = vmax.f32 %v3957, 0.0
      %v3990 = vmax.f32 %v3958, 0.0
      %v3991 = vmax.f32 %v3959, 0.0
      %v3992 = vmax.f32 %v3960, 0.0
      %v3993 = vmax.f32 %v3961, 0.0
      %v3994 = vmax.f32 %v3962, 0.0
      %v3995 = vmax.f32 %v3963, 0.0
      %v3996 = vmax.f32 %v3964, 0.0
      %v3997 = vmax.f32 %v3965, 0.0
      %v3998 = vmax.f32 %v3966, 0.0
      %v3999 = vmax.f32 %v3967, 0.0
      %v4000 = vmax.f32 %v3968, 0.0
      %v4001 = vmax.f32 %v3969, 0.0
      %v4002 = vmax.f32 %v3970, 0.0
      %v4003 = vmax.f32 %v3971, 0.0
      %vm4004 = vcmask 130048
      %4005 = vst.msk [vmem:[#allocation3] sm:$0xff] %vm4004, 0.0
      %4006 = vst.msk [vmem:[#allocation3 + $0x8] sm:$0xff] %vm4004, 0.0
      %vm4007 = vcmask 123904
      %4008 = vst.msk [vmem:[#allocation3 + $0x10] sm:$0x3] %vm4007, 0.0
      %4009 = vst.msk [vmem:[#allocation3 + $0x18] sm:$0xff] %vm4004, 0.0
      %4010 = vst.msk [vmem:[#allocation3 + $0x20] sm:$0xff] %vm4004, 0.0
      %4011 = vst.msk [vmem:[#allocation3 + $0x28] sm:$0x3] %vm4007, 0.0
      %4012 = vst.msk [vmem:[#allocation3 + $0x30] sm:$0xff] %vm4004, 0.0
      %4013 = vst.msk [vmem:[#allocation3 + $0x38] sm:$0xff] %vm4004, 0.0
      %4014 = vst.msk [vmem:[#allocation3 + $0x40] sm:$0x3] %vm4007, 0.0
      %4015 = vst.msk [vmem:[#allocation3 + $0x48] sm:$0xff] %vm4004, 0.0
      %4016 = vst.msk [vmem:[#allocation3 + $0x50] sm:$0xff] %vm4004, 0.0
      %4017 = vst.msk [vmem:[#allocation3 + $0x58] sm:$0x3] %vm4007, 0.0
      %4018 = vst.msk [vmem:[#allocation3 + $0x60] sm:$0xff] %vm4004, 0.0
      %4019 = vst.msk [vmem:[#allocation3 + $0x68] sm:$0xff] %vm4004, 0.0
      %4020 = vst.msk [vmem:[#allocation3 + $0x70] sm:$0x3] %vm4007, 0.0
      %4021 = vst.msk [vmem:[#allocation3 + $0x78] sm:$0xff] %vm4004, 0.0
      %4022 = vst.msk [vmem:[#allocation3 + $0x80] sm:$0xff] %vm4004, 0.0
      %4023 = vst.msk [vmem:[#allocation3 + $0x88] sm:$0x3] %vm4007, 0.0
      %4024 = vst.msk [vmem:[#allocation3 + $0x90] sm:$0xff] %vm4004, 0.0
      %4025 = vst.msk [vmem:[#allocation3 + $0x98] sm:$0xff] %vm4004, 0.0
      %4026 = vst.msk [vmem:[#allocation3 + $0xa0] sm:$0x3] %vm4007, 0.0
      %4027 = vst.msk [vmem:[#allocation3 + $0xa8] sm:$0xff] %vm4004, 0.0
      %4028 = vst.msk [vmem:[#allocation3 + $0xb0] sm:$0xff] %vm4004, 0.0
      %4029 = vst.msk [vmem:[#allocation3 + $0xb8] sm:$0x3] %vm4007, 0.0
      %4030 = vst.msk [vmem:[#allocation3 + $0xc0] sm:$0xff] %vm4004, 0.0
      %4031 = vst.msk [vmem:[#allocation3 + $0xc8] sm:$0xff] %vm4004, 0.0
      %4032 = vst.msk [vmem:[#allocation3 + $0xd0] sm:$0x3] %vm4007, 0.0
      %4033 = vst.msk [vmem:[#allocation3 + $0xd8] sm:$0xff] %vm4004, 0.0
      %4034 = vst.msk [vmem:[#allocation3 + $0xe0] sm:$0xff] %vm4004, 0.0
      %4035 = vst.msk [vmem:[#allocation3 + $0xe8] sm:$0x3] %vm4007, 0.0
      %4036 = vst.msk [vmem:[#allocation3 + $0xf0] sm:$0xff] %vm4004, 0.0
      %4037 = vst.msk [vmem:[#allocation3 + $0xf8] sm:$0xff] %vm4004, 0.0
      %4038 = vst.msk [vmem:[#allocation3 + $0x100] sm:$0x3] %vm4007, 0.0
      %4039 = vst.msk [vmem:[#allocation3 + $0x108] sm:$0xff] %vm4004, 0.0
      %4040 = vst.msk [vmem:[#allocation3 + $0x110] sm:$0xff] %vm4004, 0.0
      %4041 = vst.msk [vmem:[#allocation3 + $0x118] sm:$0x3] %vm4007, 0.0
      %4042 = vst.msk [vmem:[#allocation3 + $0x120] sm:$0xff] %vm4004, 0.0
      %4043 = vst.msk [vmem:[#allocation3 + $0x128] sm:$0xff] %vm4004, 0.0
      %4044 = vst.msk [vmem:[#allocation3 + $0x130] sm:$0x3] %vm4007, 0.0
      %4045 = vst.msk [vmem:[#allocation3 + $0x138] sm:$0xff] %vm4004, 0.0
      %4046 = vst.msk [vmem:[#allocation3 + $0x140] sm:$0xff] %vm4004, 0.0
      %4047 = vst.msk [vmem:[#allocation3 + $0x148] sm:$0x3] %vm4007, 0.0
      %4048 = vst.msk [vmem:[#allocation3 + $0x150] sm:$0xff] %vm4004, 0.0
      %4049 = vst.msk [vmem:[#allocation3 + $0x158] sm:$0xff] %vm4004, 0.0
      %4050 = vst.msk [vmem:[#allocation3 + $0x160] sm:$0x3] %vm4007, 0.0
      %4051 = vst.msk [vmem:[#allocation3 + $0x168] sm:$0xff] %vm4004, 0.0
      %4052 = vst.msk [vmem:[#allocation3 + $0x170] sm:$0xff] %vm4004, 0.0
      %4053 = vst.msk [vmem:[#allocation3 + $0x178] sm:$0x3] %vm4007, 0.0
      %4054 = vst.msk [vmem:[#allocation3 + $0x180] sm:$0xff] %vm4004, 0.0
      %4055 = vst.msk [vmem:[#allocation3 + $0x188] sm:$0xff] %vm4004, 0.0
      %4056 = vst.msk [vmem:[#allocation3 + $0x190] sm:$0x3] %vm4007, 0.0
      %4057 = vst.msk [vmem:[#allocation3 + $0x198] sm:$0xff] %vm4004, 0.0
      %4058 = vst.msk [vmem:[#allocation3 + $0x1a0] sm:$0xff] %vm4004, 0.0
      %4059 = vst.msk [vmem:[#allocation3 + $0x1a8] sm:$0x3] %vm4007, 0.0
      %s4060 = scalar_lea.vmem [#allocation3], 24
      %4061 = vst.msk [vmem:[%s4060 + $0x1] sm:$0xff] %vm4004, %v3972
      %4062 = vst.msk [vmem:[%s4060 + $0x9] sm:$0xff] %vm4004, %v3973
      %4063 = vst.msk [vmem:[%s4060 + $0x19] sm:$0xff] %vm4004, %v3974
      %4064 = vst.msk [vmem:[%s4060 + $0x21] sm:$0xff] %vm4004, %v3975
      %4065 = vst.msk [vmem:[%s4060 + $0x31] sm:$0xff] %vm4004, %v3976
      %4066 = vst.msk [vmem:[%s4060 + $0x39] sm:$0xff] %vm4004, %v3977
      %4067 = vst.msk [vmem:[%s4060 + $0x49] sm:$0xff] %vm4004, %v3978
      %4068 = vst.msk [vmem:[%s4060 + $0x51] sm:$0xff] %vm4004, %v3979
      %4069 = vst.msk [vmem:[%s4060 + $0x61] sm:$0xff] %vm4004, %v3980
      %4070 = vst.msk [vmem:[%s4060 + $0x69] sm:$0xff] %vm4004, %v3981
      %4071 = vst.msk [vmem:[%s4060 + $0x79] sm:$0xff] %vm4004, %v3982
      %4072 = vst.msk [vmem:[%s4060 + $0x81] sm:$0xff] %vm4004, %v3983
      %4073 = vst.msk [vmem:[%s4060 + $0x91] sm:$0xff] %vm4004, %v3984
      %4074 = vst.msk [vmem:[%s4060 + $0x99] sm:$0xff] %vm4004, %v3985
      %4075 = vst.msk [vmem:[%s4060 + $0xa9] sm:$0xff] %vm4004, %v3986
      %4076 = vst.msk [vmem:[%s4060 + $0xb1] sm:$0xff] %vm4004, %v3987
      %4077 = vst.msk [vmem:[%s4060 + $0xc1] sm:$0xff] %vm4004, %v3988
      %4078 = vst.msk [vmem:[%s4060 + $0xc9] sm:$0xff] %vm4004, %v3989
      %4079 = vst.msk [vmem:[%s4060 + $0xd9] sm:$0xff] %vm4004, %v3990
      %4080 = vst.msk [vmem:[%s4060 + $0xe1] sm:$0xff] %vm4004, %v3991
      %4081 = vst.msk [vmem:[%s4060 + $0xf1] sm:$0xff] %vm4004, %v3992
      %4082 = vst.msk [vmem:[%s4060 + $0xf9] sm:$0xff] %vm4004, %v3993
      %4083 = vst.msk [vmem:[%s4060 + $0x109] sm:$0xff] %vm4004, %v3994
      %4084 = vst.msk [vmem:[%s4060 + $0x111] sm:$0xff] %vm4004, %v3995
      %4085 = vst.msk [vmem:[%s4060 + $0x121] sm:$0xff] %vm4004, %v3996
      %4086 = vst.msk [vmem:[%s4060 + $0x129] sm:$0xff] %vm4004, %v3997
      %4087 = vst.msk [vmem:[%s4060 + $0x139] sm:$0xff] %vm4004, %v3998
      %4088 = vst.msk [vmem:[%s4060 + $0x141] sm:$0xff] %vm4004, %v3999
      %4089 = vst.msk [vmem:[%s4060 + $0x151] sm:$0xff] %vm4004, %v4000
      %4090 = vst.msk [vmem:[%s4060 + $0x159] sm:$0xff] %vm4004, %v4001
      %4091 = vst.msk [vmem:[%s4060 + $0x169] sm:$0xff] %vm4004, %v4002
      %4092 = vst.msk [vmem:[%s4060 + $0x171] sm:$0xff] %vm4004, %v4003
      %v4093 = vld [vmem:[#allocation3] sm:$0xff]
      %v4094 = vld [vmem:[#allocation3 + $0x8] sm:$0xff]
      %v4095 = vld [vmem:[#allocation3 + $0x18] sm:$0xff]
      %v4096 = vld [vmem:[#allocation3 + $0x20] sm:$0xff]
      %v4097 = vld [vmem:[#allocation3 + $0x30] sm:$0xff]
      %v4098 = vld [vmem:[#allocation3 + $0x38] sm:$0xff]
      %v4099 = vld [vmem:[#allocation3 + $0x48] sm:$0xff]
      %v4100 = vld [vmem:[#allocation3 + $0x50] sm:$0xff]
      %v4101 = vld [vmem:[#allocation3 + $0x60] sm:$0xff]
      %v4102 = vld [vmem:[#allocation3 + $0x68] sm:$0xff]
      %v4103 = vld [vmem:[#allocation3 + $0x78] sm:$0xff]
      %v4104 = vld [vmem:[#allocation3 + $0x80] sm:$0xff]
      %v4105 = vld [vmem:[#allocation3 + $0x90] sm:$0xff]
      %v4106 = vld [vmem:[#allocation3 + $0x98] sm:$0xff]
      %v4107 = vld [vmem:[#allocation3 + $0xa8] sm:$0xff]
      %v4108 = vld [vmem:[#allocation3 + $0xb0] sm:$0xff]
      %v4109 = vld [vmem:[#allocation3 + $0xc0] sm:$0xff]
      %v4110 = vld [vmem:[#allocation3 + $0xc8] sm:$0xff]
      %v4111 = vld [vmem:[#allocation3 + $0xd8] sm:$0xff]
      %v4112 = vld [vmem:[#allocation3 + $0xe0] sm:$0xff]
      %v4113 = vld [vmem:[#allocation3 + $0xf0] sm:$0xff]
      %v4114 = vld [vmem:[#allocation3 + $0xf8] sm:$0xff]
      %v4115 = vld [vmem:[#allocation3 + $0x108] sm:$0xff]
      %v4116 = vld [vmem:[#allocation3 + $0x110] sm:$0xff]
      %v4117 = vld [vmem:[#allocation3 + $0x120] sm:$0xff]
      %v4118 = vld [vmem:[#allocation3 + $0x128] sm:$0xff]
      %v4119 = vld [vmem:[#allocation3 + $0x138] sm:$0xff]
      %v4120 = vld [vmem:[#allocation3 + $0x140] sm:$0xff]
      %v4121 = vld [vmem:[#allocation3 + $0x150] sm:$0xff]
      %v4122 = vld [vmem:[#allocation3 + $0x158] sm:$0xff]
      %v4123 = vld [vmem:[#allocation3 + $0x168] sm:$0xff]
      %v4124 = vld [vmem:[#allocation3 + $0x170] sm:$0xff]
      %v4125 = vld [vmem:[%s4] sm:$0xff]
      %v4126 = vld [vmem:[%s4 + $0x8] sm:$0xff]
      %v4127 = vld [vmem:[#allocation3 + $0x1] sm:$0xff]
      %v4128 = vld [vmem:[#allocation3 + $0x9] sm:$0xff]
      %v4129 = vld [vmem:[#allocation3 + $0x19] sm:$0xff]
      %v4130 = vld [vmem:[#allocation3 + $0x21] sm:$0xff]
      %v4131 = vld [vmem:[#allocation3 + $0x31] sm:$0xff]
      %v4132 = vld [vmem:[#allocation3 + $0x39] sm:$0xff]
      %v4133 = vld [vmem:[#allocation3 + $0x49] sm:$0xff]
      %v4134 = vld [vmem:[#allocation3 + $0x51] sm:$0xff]
      %v4135 = vld [vmem:[#allocation3 + $0x61] sm:$0xff]
      %v4136 = vld [vmem:[#allocation3 + $0x69] sm:$0xff]
      %v4137 = vld [vmem:[#allocation3 + $0x79] sm:$0xff]
      %v4138 = vld [vmem:[#allocation3 + $0x81] sm:$0xff]
      %v4139 = vld [vmem:[#allocation3 + $0x91] sm:$0xff]
      %v4140 = vld [vmem:[#allocation3 + $0x99] sm:$0xff]
      %v4141 = vld [vmem:[#allocation3 + $0xa9] sm:$0xff]
      %v4142 = vld [vmem:[#allocation3 + $0xb1] sm:$0xff]
      %v4143 = vld [vmem:[#allocation3 + $0xc1] sm:$0xff]
      %v4144 = vld [vmem:[#allocation3 + $0xc9] sm:$0xff]
      %v4145 = vld [vmem:[#allocation3 + $0xd9] sm:$0xff]
      %v4146 = vld [vmem:[#allocation3 + $0xe1] sm:$0xff]
      %v4147 = vld [vmem:[#allocation3 + $0xf1] sm:$0xff]
      %v4148 = vld [vmem:[#allocation3 + $0xf9] sm:$0xff]
      %v4149 = vld [vmem:[#allocation3 + $0x109] sm:$0xff]
      %v4150 = vld [vmem:[#allocation3 + $0x111] sm:$0xff]
      %v4151 = vld [vmem:[#allocation3 + $0x121] sm:$0xff]
      %v4152 = vld [vmem:[#allocation3 + $0x129] sm:$0xff]
      %v4153 = vld [vmem:[#allocation3 + $0x139] sm:$0xff]
      %v4154 = vld [vmem:[#allocation3 + $0x141] sm:$0xff]
      %v4155 = vld [vmem:[#allocation3 + $0x151] sm:$0xff]
      %v4156 = vld [vmem:[#allocation3 + $0x159] sm:$0xff]
      %v4157 = vld [vmem:[#allocation3 + $0x169] sm:$0xff]
      %v4158 = vld [vmem:[#allocation3 + $0x171] sm:$0xff]
      %s4159 = scalar_lea.vmem %s4, 16
      %v4160 = vld [vmem:[%s4159] sm:$0xff]
      %v4161 = vld [vmem:[%s4159 + $0x8] sm:$0xff]
      %v4163 = vsel %vm4004, %v4127, 0
      %v4166 = vsel %vm4004, %v4128, 0
      %v4169 = vsel %vm4004, %v4129, 0
      %v4172 = vsel %vm4004, %v4130, 0
      %v4175 = vsel %vm4004, %v4131, 0
      %v4178 = vsel %vm4004, %v4132, 0
      %v4181 = vsel %vm4004, %v4133, 0
      %v4184 = vsel %vm4004, %v4134, 0
      %v4187 = vsel %vm4004, %v4135, 0
      %v4190 = vsel %vm4004, %v4136, 0
      %v4193 = vsel %vm4004, %v4137, 0
      %v4196 = vsel %vm4004, %v4138, 0
      %v4199 = vsel %vm4004, %v4139, 0
      %v4202 = vsel %vm4004, %v4140, 0
      %v4205 = vsel %vm4004, %v4141, 0
      %v4208 = vsel %vm4004, %v4142, 0
      %v4211 = vsel %vm4004, %v4143, 0
      %v4214 = vsel %vm4004, %v4144, 0
      %v4217 = vsel %vm4004, %v4145, 0
      %v4220 = vsel %vm4004, %v4146, 0
      %v4223 = vsel %vm4004, %v4147, 0
      %v4226 = vsel %vm4004, %v4148, 0
      %v4229 = vsel %vm4004, %v4149, 0
      %v4232 = vsel %vm4004, %v4150, 0
      %v4235 = vsel %vm4004, %v4151, 0
      %v4238 = vsel %vm4004, %v4152, 0
      %v4241 = vsel %vm4004, %v4153, 0
      %v4244 = vsel %vm4004, %v4154, 0
      %v4247 = vsel %vm4004, %v4155, 0
      %v4250 = vsel %vm4004, %v4156, 0
      %v4253 = vsel %vm4004, %v4157, 0
      %v4256 = vsel %vm4004, %v4158, 0
      %4258 = vmatprep.subr.mxu0 0.0
      %4259 = vmatpush1.msra.mxu0 %v4160
      %4260 = vmatprep.subr.mxu0 0.0
      %4261 = vmatpush1.msra.mxu0 %v4161
      %4262 = vmatprep.subr.mxu0 0.0
      %4263 = vmatpush1.msra.mxu0 0.0
      %4264 = vmatprep.subr.mxu0 0.0
      %4265 = vmatpush1.msra.mxu0 0.0
      %4266 = vmatprep.subr.mxu0 0.0
      %4267 = vmatpush1.msra.mxu0 0.0
      %4268 = vmatprep.subr.mxu0 0.0
      %4269 = vmatpush1.msra.mxu0 0.0
      %4270 = vmatprep.subr.mxu0 0.0
      %4271 = vmatpush1.msra.mxu0 0.0
      %4272 = vmatprep.subr.mxu0 0.0
      %4273 = vmatpush1.msra.mxu0 0.0
      %4274 = vmatprep.subr.mxu0 0.0
      %4275 = vmatpush1.msra.mxu0 0.0
      %4276 = vmatprep.subr.mxu0 0.0
      %4277 = vmatpush1.msra.mxu0 0.0
      %4278 = vmatprep.subr.mxu0 0.0
      %4279 = vmatpush1.msra.mxu0 0.0
      %4280 = vmatprep.subr.mxu0 0.0
      %4281 = vmatpush1.msra.mxu0 0.0
      %4282 = vmatprep.subr.mxu0 0.0
      %4283 = vmatpush1.msra.mxu0 0.0
      %4284 = vmatprep.subr.mxu0 0.0
      %4285 = vmatpush1.msra.mxu0 0.0
      %4286 = vmatprep.subr.mxu0 0.0
      %4287 = vmatpush1.msra.mxu0 0.0
      %4288 = vmatprep.subr.mxu0 0.0
      %4289 = vmatpush1.msra.mxu0 0.0
      %4290 = vmatprep.subr.mxu0 0.0
      %4291 = vmatpush1.msra.mxu0 0.0
      %4292 = vmatprep.subr.mxu0 0.0
      %4293 = vmatpush1.msra.mxu0 0.0
      %4294 = vmatprep.subr.mxu0 0.0
      %4295 = vmatpush1.msra.mxu0 0.0
      %4296 = vmatprep.subr.mxu0 0.0
      %4297 = vmatpush1.msra.mxu0 0.0
      %4298 = vmatprep.subr.mxu0 0.0
      %4299 = vmatpush1.msra.mxu0 0.0
      %4300 = vmatprep.subr.mxu0 0.0
      %4301 = vmatpush1.msra.mxu0 0.0
      %4302 = vmatprep.subr.mxu0 0.0
      %4303 = vmatpush1.msra.mxu0 0.0
      %4304 = vmatprep.subr.mxu0 0.0
      %4305 = vmatpush1.msra.mxu0 0.0
      %4306 = vmatprep.subr.mxu0 0.0
      %4307 = vmatpush1.msra.mxu0 0.0
      %4308 = vmatprep.subr.mxu0 0.0
      %4309 = vmatpush1.msra.mxu0 0.0
      %4310 = vmatprep.subr.mxu0 0.0
      %4311 = vmatpush1.msra.mxu0 0.0
      %4312 = vmatprep.subr.mxu0 0.0
      %4313 = vmatpush1.msra.mxu0 0.0
      %4314 = vmatprep.subr.mxu0 0.0
      %4315 = vmatpush1.msra.mxu0 0.0
      %4316 = vmatprep.subr.mxu0 0.0
      %4317 = vmatpush1.msra.mxu0 0.0
      %4318 = vmatprep.subr.mxu0 0.0
      %4319 = vmatpush1.msra.mxu0 0.0
      %4320 = vmatprep.subr.mxu0 0.0
      %4321 = vmatpush1.msra.mxu0 0.0
      %4322 = vmatprep.mubr.f32.mxu0 0.0
      %4323 = vmatmul.mubr.f32.gmra.mrb[0].mxu0 %v4163
      %v4324 = vpop.f32.mrb[0].mxu0
      %v4325 = vadd.f32 0.0, %v4324
      %v4326 = vpop.f32.mrb[0].mxu0
      %4327 = vmatprep.mubr.f32.mxu0 0.0
      %4328 = vmatmul.mubr.f32.gmra.mrb[0].mxu0 %v4166
      %v4329 = vpop.f32.mrb[0].mxu0
      %v4330 = vadd.f32 0.0, %v4329
      %v4331 = vpop.f32.mrb[0].mxu0
      %4332 = vmatprep.mubr.f32.mxu0 0.0
      %4333 = vmatmul.mubr.f32.gmra.mrb[0].mxu0 %v4169
      %v4334 = vpop.f32.mrb[0].mxu0
      %v4335 = vadd.f32 0.0, %v4334
      %v4336 = vpop.f32.mrb[0].mxu0
      %4337 = vmatprep.mubr.f32.mxu0 0.0
      %4338 = vmatmul.mubr.f32.gmra.mrb[0].mxu0 %v4172
      %v4339 = vpop.f32.mrb[0].mxu0
      %v4340 = vadd.f32 0.0, %v4339
      %v4341 = vpop.f32.mrb[0].mxu0
      %4342 = vmatprep.mubr.f32.mxu0 0.0
      %4343 = vmatmul.mubr.f32.gmra.mrb[0].mxu0 %v4175
      %v4344 = vpop.f32.mrb[0].mxu0
      %v4345 = vadd.f32 0.0, %v4344
      %v4346 = vpop.f32.mrb[0].mxu0
      %4347 = vmatprep.mubr.f32.mxu0 0.0
      %4348 = vmatmul.mubr.f32.gmra.mrb[0].mxu0 %v4178
      %v4349 = vpop.f32.mrb[0].mxu0
      %v4350 = vadd.f32 0.0, %v4349
      %v4351 = vpop.f32.mrb[0].mxu0
      %4352 = vmatprep.mubr.f32.mxu0 0.0
      %4353 = vmatmul.mubr.f32.gmra.mrb[0].mxu0 %v4181
      %v4354 = vpop.f32.mrb[0].mxu0
      %v4355 = vadd.f32 0.0, %v4354
      %v4356 = vpop.f32.mrb[0].mxu0
      %4357 = vmatprep.mubr.f32.mxu0 0.0
      %4358 = vmatmul.mubr.f32.gmra.mrb[0].mxu0 %v4184
      %v4359 = vpop.f32.mrb[0].mxu0
      %v4360 = vadd.f32 0.0, %v4359
      %v4361 = vpop.f32.mrb[0].mxu0
      %4362 = vmatprep.mubr.f32.mxu0 0.0
      %4363 = vmatmul.mubr.f32.gmra.mrb[0].mxu0 %v4187
      %v4364 = vpop.f32.mrb[0].mxu0
      %v4365 = vadd.f32 0.0, %v4364
      %v4366 = vpop.f32.mrb[0].mxu0
      %4367 = vmatprep.mubr.f32.mxu0 0.0
      %4368 = vmatmul.mubr.f32.gmra.mrb[0].mxu0 %v4190
      %v4369 = vpop.f32.mrb[0].mxu0
      %v4370 = vadd.f32 0.0, %v4369
      %v4371 = vpop.f32.mrb[0].mxu0
      %4372 = vmatprep.mubr.f32.mxu0 0.0
      %4373 = vmatmul.mubr.f32.gmra.mrb[0].mxu0 %v4193
      %v4374 = vpop.f32.mrb[0].mxu0
      %v4375 = vadd.f32 0.0, %v4374
      %v4376 = vpop.f32.mrb[0].mxu0
      %4377 = vmatprep.mubr.f32.mxu0 0.0
      %4378 = vmatmul.mubr.f32.gmra.mrb[0].mxu0 %v4196
      %v4379 = vpop.f32.mrb[0].mxu0
      %v4380 = vadd.f32 0.0, %v4379
      %v4381 = vpop.f32.mrb[0].mxu0
      %4382 = vmatprep.mubr.f32.mxu0 0.0
      %4383 = vmatmul.mubr.f32.gmra.mrb[0].mxu0 %v4199
      %v4384 = vpop.f32.mrb[0].mxu0
      %v4385 = vadd.f32 0.0, %v4384
      %v4386 = vpop.f32.mrb[0].mxu0
      %4387 = vmatprep.mubr.f32.mxu0 0.0
      %4388 = vmatmul.mubr.f32.gmra.mrb[0].mxu0 %v4202
      %v4389 = vpop.f32.mrb[0].mxu0
      %v4390 = vadd.f32 0.0, %v4389
      %v4391 = vpop.f32.mrb[0].mxu0
      %4392 = vmatprep.mubr.f32.mxu0 0.0
      %4393 = vmatmul.mubr.f32.gmra.mrb[0].mxu0 %v4205
      %v4394 = vpop.f32.mrb[0].mxu0
      %v4395 = vadd.f32 0.0, %v4394
      %v4396 = vpop.f32.mrb[0].mxu0
      %4397 = vmatprep.mubr.f32.mxu0 0.0
      %4398 = vmatmul.mubr.f32.gmra.mrb[0].mxu0 %v4208
      %v4399 = vpop.f32.mrb[0].mxu0
      %v4400 = vadd.f32 0.0, %v4399
      %v4401 = vpop.f32.mrb[0].mxu0
      %4402 = vmatprep.mubr.f32.mxu0 0.0
      %4403 = vmatmul.mubr.f32.gmra.mrb[0].mxu0 %v4211
      %v4404 = vpop.f32.mrb[0].mxu0
      %v4405 = vadd.f32 0.0, %v4404
      %v4406 = vpop.f32.mrb[0].mxu0
      %4407 = vmatprep.mubr.f32.mxu0 0.0
      %4408 = vmatmul.mubr.f32.gmra.mrb[0].mxu0 %v4214
      %v4409 = vpop.f32.mrb[0].mxu0
      %v4410 = vadd.f32 0.0, %v4409
      %v4411 = vpop.f32.mrb[0].mxu0
      %4412 = vmatprep.mubr.f32.mxu0 0.0
      %4413 = vmatmul.mubr.f32.gmra.mrb[0].mxu0 %v4217
      %v4414 = vpop.f32.mrb[0].mxu0
      %v4415 = vadd.f32 0.0, %v4414
      %v4416 = vpop.f32.mrb[0].mxu0
      %4417 = vmatprep.mubr.f32.mxu0 0.0
      %4418 = vmatmul.mubr.f32.gmra.mrb[0].mxu0 %v4220
      %v4419 = vpop.f32.mrb[0].mxu0
      %v4420 = vadd.f32 0.0, %v4419
      %v4421 = vpop.f32.mrb[0].mxu0
      %4422 = vmatprep.mubr.f32.mxu0 0.0
      %4423 = vmatmul.mubr.f32.gmra.mrb[0].mxu0 %v4223
      %v4424 = vpop.f32.mrb[0].mxu0
      %v4425 = vadd.f32 0.0, %v4424
      %v4426 = vpop.f32.mrb[0].mxu0
      %4427 = vmatprep.mubr.f32.mxu0 0.0
      %4428 = vmatmul.mubr.f32.gmra.mrb[0].mxu0 %v4226
      %v4429 = vpop.f32.mrb[0].mxu0
      %v4430 = vadd.f32 0.0, %v4429
      %v4431 = vpop.f32.mrb[0].mxu0
      %4432 = vmatprep.mubr.f32.mxu0 0.0
      %4433 = vmatmul.mubr.f32.gmra.mrb[0].mxu0 %v4229
      %v4434 = vpop.f32.mrb[0].mxu0
      %v4435 = vadd.f32 0.0, %v4434
      %v4436 = vpop.f32.mrb[0].mxu0
      %4437 = vmatprep.mubr.f32.mxu0 0.0
      %4438 = vmatmul.mubr.f32.gmra.mrb[0].mxu0 %v4232
      %v4439 = vpop.f32.mrb[0].mxu0
      %v4440 = vadd.f32 0.0, %v4439
      %v4441 = vpop.f32.mrb[0].mxu0
      %4442 = vmatprep.mubr.f32.mxu0 0.0
      %4443 = vmatmul.mubr.f32.gmra.mrb[0].mxu0 %v4235
      %v4444 = vpop.f32.mrb[0].mxu0
      %v4445 = vadd.f32 0.0, %v4444
      %v4446 = vpop.f32.mrb[0].mxu0
      %4447 = vmatprep.mubr.f32.mxu0 0.0
      %4448 = vmatmul.mubr.f32.gmra.mrb[0].mxu0 %v4238
      %v4449 = vpop.f32.mrb[0].mxu0
      %v4450 = vadd.f32 0.0, %v4449
      %v4451 = vpop.f32.mrb[0].mxu0
      %4452 = vmatprep.mubr.f32.mxu0 0.0
      %4453 = vmatmul.mubr.f32.gmra.mrb[0].mxu0 %v4241
      %v4454 = vpop.f32.mrb[0].mxu0
      %v4455 = vadd.f32 0.0, %v4454
      %v4456 = vpop.f32.mrb[0].mxu0
      %4457 = vmatprep.mubr.f32.mxu0 0.0
      %4458 = vmatmul.mubr.f32.gmra.mrb[0].mxu0 %v4244
      %v4459 = vpop.f32.mrb[0].mxu0
      %v4460 = vadd.f32 0.0, %v4459
      %v4461 = vpop.f32.mrb[0].mxu0
      %4462 = vmatprep.mubr.f32.mxu0 0.0
      %4463 = vmatmul.mubr.f32.gmra.mrb[0].mxu0 %v4247
      %v4464 = vpop.f32.mrb[0].mxu0
      %v4465 = vadd.f32 0.0, %v4464
      %v4466 = vpop.f32.mrb[0].mxu0
      %4467 = vmatprep.mubr.f32.mxu0 0.0
      %4468 = vmatmul.mubr.f32.gmra.mrb[0].mxu0 %v4250
      %v4469 = vpop.f32.mrb[0].mxu0
      %v4470 = vadd.f32 0.0, %v4469
      %v4471 = vpop.f32.mrb[0].mxu0
      %4472 = vmatprep.mubr.f32.mxu0 0.0
      %4473 = vmatmul.mubr.f32.gmra.mrb[0].mxu0 %v4253
      %v4474 = vpop.f32.mrb[0].mxu0
      %v4475 = vadd.f32 0.0, %v4474
      %v4476 = vpop.f32.mrb[0].mxu0
      %4477 = vmatprep.mubr.f32.mxu0 0.0
      %4478 = vmatmul.mubr.f32.gmra.mrb[0].mxu0 %v4256
      %v4479 = vpop.f32.mrb[0].mxu0
      %v4480 = vadd.f32 0.0, %v4479
      %v4481 = vpop.f32.mrb[0].mxu0
      %4482 = vdwg.mxu0
      %v4484 = vsel %vm4004, %v4093, 0
      %v4487 = vsel %vm4004, %v4094, 0
      %v4490 = vsel %vm4004, %v4095, 0
      %v4493 = vsel %vm4004, %v4096, 0
      %v4496 = vsel %vm4004, %v4097, 0
      %v4499 = vsel %vm4004, %v4098, 0
      %v4502 = vsel %vm4004, %v4099, 0
      %v4505 = vsel %vm4004, %v4100, 0
      %v4508 = vsel %vm4004, %v4101, 0
      %v4511 = vsel %vm4004, %v4102, 0
      %v4514 = vsel %vm4004, %v4103, 0
      %v4517 = vsel %vm4004, %v4104, 0
      %v4520 = vsel %vm4004, %v4105, 0
      %v4523 = vsel %vm4004, %v4106, 0
      %v4526 = vsel %vm4004, %v4107, 0
      %v4529 = vsel %vm4004, %v4108, 0
      %v4532 = vsel %vm4004, %v4109, 0
      %v4535 = vsel %vm4004, %v4110, 0
      %v4538 = vsel %vm4004, %v4111, 0
      %v4541 = vsel %vm4004, %v4112, 0
      %v4544 = vsel %vm4004, %v4113, 0
      %v4547 = vsel %vm4004, %v4114, 0
      %v4550 = vsel %vm4004, %v4115, 0
      %v4553 = vsel %vm4004, %v4116, 0
      %v4556 = vsel %vm4004, %v4117, 0
      %v4559 = vsel %vm4004, %v4118, 0
      %v4562 = vsel %vm4004, %v4119, 0
      %v4565 = vsel %vm4004, %v4120, 0
      %v4568 = vsel %vm4004, %v4121, 0
      %v4571 = vsel %vm4004, %v4122, 0
      %v4574 = vsel %vm4004, %v4123, 0
      %v4577 = vsel %vm4004, %v4124, 0
      %4579 = vmatprep.subr.mxu0 0.0
      %4580 = vmatpush1.msra.mxu0 %v4125
      %4581 = vmatprep.subr.mxu0 0.0
      %4582 = vmatpush1.msra.mxu0 %v4126
      %4583 = vmatprep.subr.mxu0 0.0
      %4584 = vmatpush1.msra.mxu0 0.0
      %4585 = vmatprep.subr.mxu0 0.0
      %4586 = vmatpush1.msra.mxu0 0.0
      %4587 = vmatprep.subr.mxu0 0.0
      %4588 = vmatpush1.msra.mxu0 0.0
      %4589 = vmatprep.subr.mxu0 0.0
      %4590 = vmatpush1.msra.mxu0 0.0
      %4591 = vmatprep.subr.mxu0 0.0
      %4592 = vmatpush1.msra.mxu0 0.0
      %4593 = vmatprep.subr.mxu0 0.0
      %4594 = vmatpush1.msra.mxu0 0.0
      %4595 = vmatprep.subr.mxu0 0.0
      %4596 = vmatpush1.msra.mxu0 0.0
      %4597 = vmatprep.subr.mxu0 0.0
      %4598 = vmatpush1.msra.mxu0 0.0
      %4599 = vmatprep.subr.mxu0 0.0
      %4600 = vmatpush1.msra.mxu0 0.0
      %4601 = vmatprep.subr.mxu0 0.0
      %4602 = vmatpush1.msra.mxu0 0.0
      %4603 = vmatprep.subr.mxu0 0.0
      %4604 = vmatpush1.msra.mxu0 0.0
      %4605 = vmatprep.subr.mxu0 0.0
      %4606 = vmatpush1.msra.mxu0 0.0
      %4607 = vmatprep.subr.mxu0 0.0
      %4608 = vmatpush1.msra.mxu0 0.0
      %4609 = vmatprep.subr.mxu0 0.0
      %4610 = vmatpush1.msra.mxu0 0.0
      %4611 = vmatprep.subr.mxu0 0.0
      %4612 = vmatpush1.msra.mxu0 0.0
      %4613 = vmatprep.subr.mxu0 0.0
      %4614 = vmatpush1.msra.mxu0 0.0
      %4615 = vmatprep.subr.mxu0 0.0
      %4616 = vmatpush1.msra.mxu0 0.0
      %4617 = vmatprep.subr.mxu0 0.0
      %4618 = vmatpush1.msra.mxu0 0.0
      %4619 = vmatprep.subr.mxu0 0.0
      %4620 = vmatpush1.msra.mxu0 0.0
      %4621 = vmatprep.subr.mxu0 0.0
      %4622 = vmatpush1.msra.mxu0 0.0
      %4623 = vmatprep.subr.mxu0 0.0
      %4624 = vmatpush1.msra.mxu0 0.0
      %4625 = vmatprep.subr.mxu0 0.0
      %4626 = vmatpush1.msra.mxu0 0.0
      %4627 = vmatprep.subr.mxu0 0.0
      %4628 = vmatpush1.msra.mxu0 0.0
      %4629 = vmatprep.subr.mxu0 0.0
      %4630 = vmatpush1.msra.mxu0 0.0
      %4631 = vmatprep.subr.mxu0 0.0
      %4632 = vmatpush1.msra.mxu0 0.0
      %4633 = vmatprep.subr.mxu0 0.0
      %4634 = vmatpush1.msra.mxu0 0.0
      %4635 = vmatprep.subr.mxu0 0.0
      %4636 = vmatpush1.msra.mxu0 0.0
      %4637 = vmatprep.subr.mxu0 0.0
      %4638 = vmatpush1.msra.mxu0 0.0
      %4639 = vmatprep.subr.mxu0 0.0
      %4640 = vmatpush1.msra.mxu0 0.0
      %4641 = vmatprep.subr.mxu0 0.0
      %4642 = vmatpush1.msra.mxu0 0.0
      %4643 = vmatprep.mubr.f32.mxu0 0.0
      %4644 = vmatmul.mubr.f32.gmra.mrb[0].mxu0 %v4484
      %v4645 = vpop.f32.mrb[0].mxu0
      %v4646 = vadd.f32 %v4325, %v4645
      %v4647 = vpop.f32.mrb[0].mxu0
      %4648 = vmatprep.mubr.f32.mxu0 0.0
      %4649 = vmatmul.mubr.f32.gmra.mrb[0].mxu0 %v4487
      %v4650 = vpop.f32.mrb[0].mxu0
      %v4651 = vadd.f32 %v4330, %v4650
      %v4652 = vpop.f32.mrb[0].mxu0
      %4653 = vmatprep.mubr.f32.mxu0 0.0
      %4654 = vmatmul.mubr.f32.gmra.mrb[0].mxu0 %v4490
      %v4655 = vpop.f32.mrb[0].mxu0
      %v4656 = vadd.f32 %v4335, %v4655
      %v4657 = vpop.f32.mrb[0].mxu0
      %4658 = vmatprep.mubr.f32.mxu0 0.0
      %4659 = vmatmul.mubr.f32.gmra.mrb[0].mxu0 %v4493
      %v4660 = vpop.f32.mrb[0].mxu0
      %v4661 = vadd.f32 %v4340, %v4660
      %v4662 = vpop.f32.mrb[0].mxu0
      %4663 = vmatprep.mubr.f32.mxu0 0.0
      %4664 = vmatmul.mubr.f32.gmra.mrb[0].mxu0 %v4496
      %v4665 = vpop.f32.mrb[0].mxu0
      %v4666 = vadd.f32 %v4345, %v4665
      %v4667 = vpop.f32.mrb[0].mxu0
      %4668 = vmatprep.mubr.f32.mxu0 0.0
      %4669 = vmatmul.mubr.f32.gmra.mrb[0].mxu0 %v4499
      %v4670 = vpop.f32.mrb[0].mxu0
      %v4671 = vadd.f32 %v4350, %v4670
      %v4672 = vpop.f32.mrb[0].mxu0
      %4673 = vmatprep.mubr.f32.mxu0 0.0
      %4674 = vmatmul.mubr.f32.gmra.mrb[0].mxu0 %v4502
      %v4675 = vpop.f32.mrb[0].mxu0
      %v4676 = vadd.f32 %v4355, %v4675
      %v4677 = vpop.f32.mrb[0].mxu0
      %4678 = vmatprep.mubr.f32.mxu0 0.0
      %4679 = vmatmul.mubr.f32.gmra.mrb[0].mxu0 %v4505
      %v4680 = vpop.f32.mrb[0].mxu0
      %v4681 = vadd.f32 %v4360, %v4680
      %v4682 = vpop.f32.mrb[0].mxu0
      %4683 = vmatprep.mubr.f32.mxu0 0.0
      %4684 = vmatmul.mubr.f32.gmra.mrb[0].mxu0 %v4508
      %v4685 = vpop.f32.mrb[0].mxu0
      %v4686 = vadd.f32 %v4365, %v4685
      %v4687 = vpop.f32.mrb[0].mxu0
      %4688 = vmatprep.mubr.f32.mxu0 0.0
      %4689 = vmatmul.mubr.f32.gmra.mrb[0].mxu0 %v4511
      %v4690 = vpop.f32.mrb[0].mxu0
      %v4691 = vadd.f32 %v4370, %v4690
      %v4692 = vpop.f32.mrb[0].mxu0
      %4693 = vmatprep.mubr.f32.mxu0 0.0
      %4694 = vmatmul.mubr.f32.gmra.mrb[0].mxu0 %v4514
      %v4695 = vpop.f32.mrb[0].mxu0
      %v4696 = vadd.f32 %v4375, %v4695
      %v4697 = vpop.f32.mrb[0].mxu0
      %4698 = vmatprep.mubr.f32.mxu0 0.0
      %4699 = vmatmul.mubr.f32.gmra.mrb[0].mxu0 %v4517
      %v4700 = vpop.f32.mrb[0].mxu0
      %v4701 = vadd.f32 %v4380, %v4700
      %v4702 = vpop.f32.mrb[0].mxu0
      %4703 = vmatprep.mubr.f32.mxu0 0.0
      %4704 = vmatmul.mubr.f32.gmra.mrb[0].mxu0 %v4520
      %v4705 = vpop.f32.mrb[0].mxu0
      %v4706 = vadd.f32 %v4385, %v4705
      %v4707 = vpop.f32.mrb[0].mxu0
      %4708 = vmatprep.mubr.f32.mxu0 0.0
      %4709 = vmatmul.mubr.f32.gmra.mrb[0].mxu0 %v4523
      %v4710 = vpop.f32.mrb[0].mxu0
      %v4711 = vadd.f32 %v4390, %v4710
      %v4712 = vpop.f32.mrb[0].mxu0
      %4713 = vmatprep.mubr.f32.mxu0 0.0
      %4714 = vmatmul.mubr.f32.gmra.mrb[0].mxu0 %v4526
      %v4715 = vpop.f32.mrb[0].mxu0
      %v4716 = vadd.f32 %v4395, %v4715
      %v4717 = vpop.f32.mrb[0].mxu0
      %4718 = vmatprep.mubr.f32.mxu0 0.0
      %4719 = vmatmul.mubr.f32.gmra.mrb[0].mxu0 %v4529
      %v4720 = vpop.f32.mrb[0].mxu0
      %v4721 = vadd.f32 %v4400, %v4720
      %v4722 = vpop.f32.mrb[0].mxu0
      %4723 = vmatprep.mubr.f32.mxu0 0.0
      %4724 = vmatmul.mubr.f32.gmra.mrb[0].mxu0 %v4532
      %v4725 = vpop.f32.mrb[0].mxu0
      %v4726 = vadd.f32 %v4405, %v4725
      %v4727 = vpop.f32.mrb[0].mxu0
      %4728 = vmatprep.mubr.f32.mxu0 0.0
      %4729 = vmatmul.mubr.f32.gmra.mrb[0].mxu0 %v4535
      %v4730 = vpop.f32.mrb[0].mxu0
      %v4731 = vadd.f32 %v4410, %v4730
      %v4732 = vpop.f32.mrb[0].mxu0
      %4733 = vmatprep.mubr.f32.mxu0 0.0
      %4734 = vmatmul.mubr.f32.gmra.mrb[0].mxu0 %v4538
      %v4735 = vpop.f32.mrb[0].mxu0
      %v4736 = vadd.f32 %v4415, %v4735
      %v4737 = vpop.f32.mrb[0].mxu0
      %4738 = vmatprep.mubr.f32.mxu0 0.0
      %4739 = vmatmul.mubr.f32.gmra.mrb[0].mxu0 %v4541
      %v4740 = vpop.f32.mrb[0].mxu0
      %v4741 = vadd.f32 %v4420, %v4740
      %v4742 = vpop.f32.mrb[0].mxu0
      %4743 = vmatprep.mubr.f32.mxu0 0.0
      %4744 = vmatmul.mubr.f32.gmra.mrb[0].mxu0 %v4544
      %v4745 = vpop.f32.mrb[0].mxu0
      %v4746 = vadd.f32 %v4425, %v4745
      %v4747 = vpop.f32.mrb[0].mxu0
      %4748 = vmatprep.mubr.f32.mxu0 0.0
      %4749 = vmatmul.mubr.f32.gmra.mrb[0].mxu0 %v4547
      %v4750 = vpop.f32.mrb[0].mxu0
      %v4751 = vadd.f32 %v4430, %v4750
      %v4752 = vpop.f32.mrb[0].mxu0
      %4753 = vmatprep.mubr.f32.mxu0 0.0
      %4754 = vmatmul.mubr.f32.gmra.mrb[0].mxu0 %v4550
      %v4755 = vpop.f32.mrb[0].mxu0
      %v4756 = vadd.f32 %v4435, %v4755
      %v4757 = vpop.f32.mrb[0].mxu0
      %4758 = vmatprep.mubr.f32.mxu0 0.0
      %4759 = vmatmul.mubr.f32.gmra.mrb[0].mxu0 %v4553
      %v4760 = vpop.f32.mrb[0].mxu0
      %v4761 = vadd.f32 %v4440, %v4760
      %v4762 = vpop.f32.mrb[0].mxu0
      %4763 = vmatprep.mubr.f32.mxu0 0.0
      %4764 = vmatmul.mubr.f32.gmra.mrb[0].mxu0 %v4556
      %v4765 = vpop.f32.mrb[0].mxu0
      %v4766 = vadd.f32 %v4445, %v4765
      %v4767 = vpop.f32.mrb[0].mxu0
      %4768 = vmatprep.mubr.f32.mxu0 0.0
      %4769 = vmatmul.mubr.f32.gmra.mrb[0].mxu0 %v4559
      %v4770 = vpop.f32.mrb[0].mxu0
      %v4771 = vadd.f32 %v4450, %v4770
      %v4772 = vpop.f32.mrb[0].mxu0
      %4773 = vmatprep.mubr.f32.mxu0 0.0
      %4774 = vmatmul.mubr.f32.gmra.mrb[0].mxu0 %v4562
      %v4775 = vpop.f32.mrb[0].mxu0
      %v4776 = vadd.f32 %v4455, %v4775
      %v4777 = vpop.f32.mrb[0].mxu0
      %4778 = vmatprep.mubr.f32.mxu0 0.0
      %4779 = vmatmul.mubr.f32.gmra.mrb[0].mxu0 %v4565
      %v4780 = vpop.f32.mrb[0].mxu0
      %v4781 = vadd.f32 %v4460, %v4780
      %v4782 = vpop.f32.mrb[0].mxu0
      %4783 = vmatprep.mubr.f32.mxu0 0.0
      %4784 = vmatmul.mubr.f32.gmra.mrb[0].mxu0 %v4568
      %v4785 = vpop.f32.mrb[0].mxu0
      %v4786 = vadd.f32 %v4465, %v4785
      %v4787 = vpop.f32.mrb[0].mxu0
      %4788 = vmatprep.mubr.f32.mxu0 0.0
      %4789 = vmatmul.mubr.f32.gmra.mrb[0].mxu0 %v4571
      %v4790 = vpop.f32.mrb[0].mxu0
      %v4791 = vadd.f32 %v4470, %v4790
      %v4792 = vpop.f32.mrb[0].mxu0
      %4793 = vmatprep.mubr.f32.mxu0 0.0
      %4794 = vmatmul.mubr.f32.gmra.mrb[0].mxu0 %v4574
      %v4795 = vpop.f32.mrb[0].mxu0
      %v4796 = vadd.f32 %v4475, %v4795
      %v4797 = vpop.f32.mrb[0].mxu0
      %4798 = vmatprep.mubr.f32.mxu0 0.0
      %4799 = vmatmul.mubr.f32.gmra.mrb[0].mxu0 %v4577
      %v4800 = vpop.f32.mrb[0].mxu0
      %v4801 = vadd.f32 %v4480, %v4800
      %v4802 = vpop.f32.mrb[0].mxu0
      %4803 = vdwg.mxu0
      %v4804 = vld [vmem:[#allocation3 + $0x2] sm:$0xff]
      %v4805 = vld [vmem:[#allocation3 + $0xa] sm:$0xff]
      %v4806 = vld [vmem:[#allocation3 + $0x1a] sm:$0xff]
      %v4807 = vld [vmem:[#allocation3 + $0x22] sm:$0xff]
      %v4808 = vld [vmem:[#allocation3 + $0x32] sm:$0xff]
      %v4809 = vld [vmem:[#allocation3 + $0x3a] sm:$0xff]
      %v4810 = vld [vmem:[#allocation3 + $0x4a] sm:$0xff]
      %v4811 = vld [vmem:[#allocation3 + $0x52] sm:$0xff]
      %v4812 = vld [vmem:[#allocation3 + $0x62] sm:$0xff]
      %v4813 = vld [vmem:[#allocation3 + $0x6a] sm:$0xff]
      %v4814 = vld [vmem:[#allocation3 + $0x7a] sm:$0xff]
      %v4815 = vld [vmem:[#allocation3 + $0x82] sm:$0xff]
      %v4816 = vld [vmem:[#allocation3 + $0x92] sm:$0xff]
      %v4817 = vld [vmem:[#allocation3 + $0x9a] sm:$0xff]
      %v4818 = vld [vmem:[#allocation3 + $0xaa] sm:$0xff]
      %v4819 = vld [vmem:[#allocation3 + $0xb2] sm:$0xff]
      %v4820 = vld [vmem:[#allocation3 + $0xc2] sm:$0xff]
      %v4821 = vld [vmem:[#allocation3 + $0xca] sm:$0xff]
      %v4822 = vld [vmem:[#allocation3 + $0xda] sm:$0xff]
      %v4823 = vld [vmem:[#allocation3 + $0xe2] sm:$0xff]
      %v4824 = vld [vmem:[#allocation3 + $0xf2] sm:$0xff]
      %v4825 = vld [vmem:[#allocation3 + $0xfa] sm:$0xff]
      %v4826 = vld [vmem:[#allocation3 + $0x10a] sm:$0xff]
      %v4827 = vld [vmem:[#allocation3 + $0x112] sm:$0xff]
      %v4828 = vld [vmem:[#allocation3 + $0x122] sm:$0xff]
      %v4829 = vld [vmem:[#allocation3 + $0x12a] sm:$0xff]
      %v4830 = vld [vmem:[#allocation3 + $0x13a] sm:$0xff]
      %v4831 = vld [vmem:[#allocation3 + $0x142] sm:$0xff]
      %v4832 = vld [vmem:[#allocation3 + $0x152] sm:$0xff]
      %v4833 = vld [vmem:[#allocation3 + $0x15a] sm:$0xff]
      %v4834 = vld [vmem:[#allocation3 + $0x16a] sm:$0xff]
      %v4835 = vld [vmem:[#allocation3 + $0x172] sm:$0xff]
      %s4836 = scalar_lea.vmem %s4, 32
      %v4837 = vld [vmem:[%s4836] sm:$0xff]
      %v4838 = vld [vmem:[%s4836 + $0x8] sm:$0xff]
      %v4840 = vsel %vm4004, %v4804, 0
      %v4843 = vsel %vm4004, %v4805, 0
      %v4846 = vsel %vm4004, %v4806, 0
      %v4849 = vsel %vm4004, %v4807, 0
      %v4852 = vsel %vm4004, %v4808, 0
      %v4855 = vsel %vm4004, %v4809, 0
      %v4858 = vsel %vm4004, %v4810, 0
      %v4861 = vsel %vm4004, %v4811, 0
      %v4864 = vsel %vm4004, %v4812, 0
      %v4867 = vsel %vm4004, %v4813, 0
      %v4870 = vsel %vm4004, %v4814, 0
      %v4873 = vsel %vm4004, %v4815, 0
      %v4876 = vsel %vm4004, %v4816, 0
      %v4879 = vsel %vm4004, %v4817, 0
      %v4882 = vsel %vm4004, %v4818, 0
      %v4885 = vsel %vm4004, %v4819, 0
      %v4888 = vsel %vm4004, %v4820, 0
      %v4891 = vsel %vm4004, %v4821, 0
      %v4894 = vsel %vm4004, %v4822, 0
      %v4897 = vsel %vm4004, %v4823, 0
      %v4900 = vsel %vm4004, %v4824, 0
      %v4903 = vsel %vm4004, %v4825, 0
      %v4906 = vsel %vm4004, %v4826, 0
      %v4909 = vsel %vm4004, %v4827, 0
      %v4912 = vsel %vm4004, %v4828, 0
      %v4915 = vsel %vm4004, %v4829, 0
      %v4918 = vsel %vm4004, %v4830, 0
      %v4921 = vsel %vm4004, %v4831, 0
      %v4924 = vsel %vm4004, %v4832, 0
      %v4927 = vsel %vm4004, %v4833, 0
      %v4930 = vsel %vm4004, %v4834, 0
      %v4933 = vsel %vm4004, %v4835, 0
      %4935 = vmatprep.subr.mxu0 0.0
      %4936 = vmatpush1.msra.mxu0 %v4837
      %4937 = vmatprep.subr.mxu0 0.0
      %4938 = vmatpush1.msra.mxu0 %v4838
      %4939 = vmatprep.subr.mxu0 0.0
      %4940 = vmatpush1.msra.mxu0 0.0
      %4941 = vmatprep.subr.mxu0 0.0
      %4942 = vmatpush1.msra.mxu0 0.0
      %4943 = vmatprep.subr.mxu0 0.0
      %4944 = vmatpush1.msra.mxu0 0.0
      %4945 = vmatprep.subr.mxu0 0.0
      %4946 = vmatpush1.msra.mxu0 0.0
      %4947 = vmatprep.subr.mxu0 0.0
      %4948 = vmatpush1.msra.mxu0 0.0
      %4949 = vmatprep.subr.mxu0 0.0
      %4950 = vmatpush1.msra.mxu0 0.0
      %4951 = vmatprep.subr.mxu0 0.0
      %4952 = vmatpush1.msra.mxu0 0.0
      %4953 = vmatprep.subr.mxu0 0.0
      %4954 = vmatpush1.msra.mxu0 0.0
      %4955 = vmatprep.subr.mxu0 0.0
      %4956 = vmatpush1.msra.mxu0 0.0
      %4957 = vmatprep.subr.mxu0 0.0
      %4958 = vmatpush1.msra.mxu0 0.0
      %4959 = vmatprep.subr.mxu0 0.0
      %4960 = vmatpush1.msra.mxu0 0.0
      %4961 = vmatprep.subr.mxu0 0.0
      %4962 = vmatpush1.msra.mxu0 0.0
      %4963 = vmatprep.subr.mxu0 0.0
      %4964 = vmatpush1.msra.mxu0 0.0
      %4965 = vmatprep.subr.mxu0 0.0
      %4966 = vmatpush1.msra.mxu0 0.0
      %4967 = vmatprep.subr.mxu0 0.0
      %4968 = vmatpush1.msra.mxu0 0.0
      %4969 = vmatprep.subr.mxu0 0.0
      %4970 = vmatpush1.msra.mxu0 0.0
      %4971 = vmatprep.subr.mxu0 0.0
      %4972 = vmatpush1.msra.mxu0 0.0
      %4973 = vmatprep.subr.mxu0 0.0
      %4974 = vmatpush1.msra.mxu0 0.0
      %4975 = vmatprep.subr.mxu0 0.0
      %4976 = vmatpush1.msra.mxu0 0.0
      %4977 = vmatprep.subr.mxu0 0.0
      %4978 = vmatpush1.msra.mxu0 0.0
      %4979 = vmatprep.subr.mxu0 0.0
      %4980 = vmatpush1.msra.mxu0 0.0
      %4981 = vmatprep.subr.mxu0 0.0
      %4982 = vmatpush1.msra.mxu0 0.0
      %4983 = vmatprep.subr.mxu0 0.0
      %4984 = vmatpush1.msra.mxu0 0.0
      %4985 = vmatprep.subr.mxu0 0.0
      %4986 = vmatpush1.msra.mxu0 0.0
      %4987 = vmatprep.subr.mxu0 0.0
      %4988 = vmatpush1.msra.mxu0 0.0
      %4989 = vmatprep.subr.mxu0 0.0
      %4990 = vmatpush1.msra.mxu0 0.0
      %4991 = vmatprep.subr.mxu0 0.0
      %4992 = vmatpush1.msra.mxu0 0.0
      %4993 = vmatprep.subr.mxu0 0.0
      %4994 = vmatpush1.msra.mxu0 0.0
      %4995 = vmatprep.subr.mxu0 0.0
      %4996 = vmatpush1.msra.mxu0 0.0
      %4997 = vmatprep.subr.mxu0 0.0
      %4998 = vmatpush1.msra.mxu0 0.0
      %4999 = vmatprep.mubr.f32.mxu0 0.0
      %5000 = vmatmul.mubr.f32.gmra.mrb[0].mxu0 %v4840
      %v5001 = vpop.f32.mrb[0].mxu0
      %v5002 = vadd.f32 0.0, %v5001
      %v5003 = vpop.f32.mrb[0].mxu0
      %5004 = vmatprep.mubr.f32.mxu0 0.0
      %5005 = vmatmul.mubr.f32.gmra.mrb[0].mxu0 %v4843
      %v5006 = vpop.f32.mrb[0].mxu0
      %v5007 = vadd.f32 0.0, %v5006
      %v5008 = vpop.f32.mrb[0].mxu0
      %5009 = vmatprep.mubr.f32.mxu0 0.0
      %5010 = vmatmul.mubr.f32.gmra.mrb[0].mxu0 %v4846
      %v5011 = vpop.f32.mrb[0].mxu0
      %v5012 = vadd.f32 0.0, %v5011
      %v5013 = vpop.f32.mrb[0].mxu0
      %5014 = vmatprep.mubr.f32.mxu0 0.0
      %5015 = vmatmul.mubr.f32.gmra.mrb[0].mxu0 %v4849
      %v5016 = vpop.f32.mrb[0].mxu0
      %v5017 = vadd.f32 0.0, %v5016
      %v5018 = vpop.f32.mrb[0].mxu0
      %5019 = vmatprep.mubr.f32.mxu0 0.0
      %5020 = vmatmul.mubr.f32.gmra.mrb[0].mxu0 %v4852
      %v5021 = vpop.f32.mrb[0].mxu0
      %v5022 = vadd.f32 0.0, %v5021
      %v5023 = vpop.f32.mrb[0].mxu0
      %5024 = vmatprep.mubr.f32.mxu0 0.0
      %5025 = vmatmul.mubr.f32.gmra.mrb[0].mxu0 %v4855
      %v5026 = vpop.f32.mrb[0].mxu0
      %v5027 = vadd.f32 0.0, %v5026
      %v5028 = vpop.f32.mrb[0].mxu0
      %5029 = vmatprep.mubr.f32.mxu0 0.0
      %5030 = vmatmul.mubr.f32.gmra.mrb[0].mxu0 %v4858
      %v5031 = vpop.f32.mrb[0].mxu0
      %v5032 = vadd.f32 0.0, %v5031
      %v5033 = vpop.f32.mrb[0].mxu0
      %5034 = vmatprep.mubr.f32.mxu0 0.0
      %5035 = vmatmul.mubr.f32.gmra.mrb[0].mxu0 %v4861
      %v5036 = vpop.f32.mrb[0].mxu0
      %v5037 = vadd.f32 0.0, %v5036
      %v5038 = vpop.f32.mrb[0].mxu0
      %5039 = vmatprep.mubr.f32.mxu0 0.0
      %5040 = vmatmul.mubr.f32.gmra.mrb[0].mxu0 %v4864
      %v5041 = vpop.f32.mrb[0].mxu0
      %v5042 = vadd.f32 0.0, %v5041
      %v5043 = vpop.f32.mrb[0].mxu0
      %5044 = vmatprep.mubr.f32.mxu0 0.0
      %5045 = vmatmul.mubr.f32.gmra.mrb[0].mxu0 %v4867
      %v5046 = vpop.f32.mrb[0].mxu0
      %v5047 = vadd.f32 0.0, %v5046
      %v5048 = vpop.f32.mrb[0].mxu0
      %5049 = vmatprep.mubr.f32.mxu0 0.0
      %5050 = vmatmul.mubr.f32.gmra.mrb[0].mxu0 %v4870
      %v5051 = vpop.f32.mrb[0].mxu0
      %v5052 = vadd.f32 0.0, %v5051
      %v5053 = vpop.f32.mrb[0].mxu0
      %5054 = vmatprep.mubr.f32.mxu0 0.0
      %5055 = vmatmul.mubr.f32.gmra.mrb[0].mxu0 %v4873
      %v5056 = vpop.f32.mrb[0].mxu0
      %v5057 = vadd.f32 0.0, %v5056
      %v5058 = vpop.f32.mrb[0].mxu0
      %5059 = vmatprep.mubr.f32.mxu0 0.0
      %5060 = vmatmul.mubr.f32.gmra.mrb[0].mxu0 %v4876
      %v5061 = vpop.f32.mrb[0].mxu0
      %v5062 = vadd.f32 0.0, %v5061
      %v5063 = vpop.f32.mrb[0].mxu0
      %5064 = vmatprep.mubr.f32.mxu0 0.0
      %5065 = vmatmul.mubr.f32.gmra.mrb[0].mxu0 %v4879
      %v5066 = vpop.f32.mrb[0].mxu0
      %v5067 = vadd.f32 0.0, %v5066
      %v5068 = vpop.f32.mrb[0].mxu0
      %5069 = vmatprep.mubr.f32.mxu0 0.0
      %5070 = vmatmul.mubr.f32.gmra.mrb[0].mxu0 %v4882
      %v5071 = vpop.f32.mrb[0].mxu0
      %v5072 = vadd.f32 0.0, %v5071
      %v5073 = vpop.f32.mrb[0].mxu0
      %5074 = vmatprep.mubr.f32.mxu0 0.0
      %5075 = vmatmul.mubr.f32.gmra.mrb[0].mxu0 %v4885
      %v5076 = vpop.f32.mrb[0].mxu0
      %v5077 = vadd.f32 0.0, %v5076
      %v5078 = vpop.f32.mrb[0].mxu0
      %5079 = vmatprep.mubr.f32.mxu0 0.0
      %5080 = vmatmul.mubr.f32.gmra.mrb[0].mxu0 %v4888
      %v5081 = vpop.f32.mrb[0].mxu0
      %v5082 = vadd.f32 0.0, %v5081
      %v5083 = vpop.f32.mrb[0].mxu0
      %5084 = vmatprep.mubr.f32.mxu0 0.0
      %5085 = vmatmul.mubr.f32.gmra.mrb[0].mxu0 %v4891
      %v5086 = vpop.f32.mrb[0].mxu0
      %v5087 = vadd.f32 0.0, %v5086
      %v5088 = vpop.f32.mrb[0].mxu0
      %5089 = vmatprep.mubr.f32.mxu0 0.0
      %5090 = vmatmul.mubr.f32.gmra.mrb[0].mxu0 %v4894
      %v5091 = vpop.f32.mrb[0].mxu0
      %v5092 = vadd.f32 0.0, %v5091
      %v5093 = vpop.f32.mrb[0].mxu0
      %5094 = vmatprep.mubr.f32.mxu0 0.0
      %5095 = vmatmul.mubr.f32.gmra.mrb[0].mxu0 %v4897
      %v5096 = vpop.f32.mrb[0].mxu0
      %v5097 = vadd.f32 0.0, %v5096
      %v5098 = vpop.f32.mrb[0].mxu0
      %5099 = vmatprep.mubr.f32.mxu0 0.0
      %5100 = vmatmul.mubr.f32.gmra.mrb[0].mxu0 %v4900
      %v5101 = vpop.f32.mrb[0].mxu0
      %v5102 = vadd.f32 0.0, %v5101
      %v5103 = vpop.f32.mrb[0].mxu0
      %5104 = vmatprep.mubr.f32.mxu0 0.0
      %5105 = vmatmul.mubr.f32.gmra.mrb[0].mxu0 %v4903
      %v5106 = vpop.f32.mrb[0].mxu0
      %v5107 = vadd.f32 0.0, %v5106
      %v5108 = vpop.f32.mrb[0].mxu0
      %5109 = vmatprep.mubr.f32.mxu0 0.0
      %5110 = vmatmul.mubr.f32.gmra.mrb[0].mxu0 %v4906
      %v5111 = vpop.f32.mrb[0].mxu0
      %v5112 = vadd.f32 0.0, %v5111
      %v5113 = vpop.f32.mrb[0].mxu0
      %5114 = vmatprep.mubr.f32.mxu0 0.0
      %5115 = vmatmul.mubr.f32.gmra.mrb[0].mxu0 %v4909
      %v5116 = vpop.f32.mrb[0].mxu0
      %v5117 = vadd.f32 0.0, %v5116
      %v5118 = vpop.f32.mrb[0].mxu0
      %5119 = vmatprep.mubr.f32.mxu0 0.0
      %5120 = vmatmul.mubr.f32.gmra.mrb[0].mxu0 %v4912
      %v5121 = vpop.f32.mrb[0].mxu0
      %v5122 = vadd.f32 0.0, %v5121
      %v5123 = vpop.f32.mrb[0].mxu0
      %5124 = vmatprep.mubr.f32.mxu0 0.0
      %5125 = vmatmul.mubr.f32.gmra.mrb[0].mxu0 %v4915
      %v5126 = vpop.f32.mrb[0].mxu0
      %v5127 = vadd.f32 0.0, %v5126
      %v5128 = vpop.f32.mrb[0].mxu0
      %5129 = vmatprep.mubr.f32.mxu0 0.0
      %5130 = vmatmul.mubr.f32.gmra.mrb[0].mxu0 %v4918
      %v5131 = vpop.f32.mrb[0].mxu0
      %v5132 = vadd.f32 0.0, %v5131
      %v5133 = vpop.f32.mrb[0].mxu0
      %5134 = vmatprep.mubr.f32.mxu0 0.0
      %5135 = vmatmul.mubr.f32.gmra.mrb[0].mxu0 %v4921
      %v5136 = vpop.f32.mrb[0].mxu0
      %v5137 = vadd.f32 0.0, %v5136
      %v5138 = vpop.f32.mrb[0].mxu0
      %5139 = vmatprep.mubr.f32.mxu0 0.0
      %5140 = vmatmul.mubr.f32.gmra.mrb[0].mxu0 %v4924
      %v5141 = vpop.f32.mrb[0].mxu0
      %v5142 = vadd.f32 0.0, %v5141
      %v5143 = vpop.f32.mrb[0].mxu0
      %5144 = vmatprep.mubr.f32.mxu0 0.0
      %5145 = vmatmul.mubr.f32.gmra.mrb[0].mxu0 %v4927
      %v5146 = vpop.f32.mrb[0].mxu0
      %v5147 = vadd.f32 0.0, %v5146
      %v5148 = vpop.f32.mrb[0].mxu0
      %5149 = vmatprep.mubr.f32.mxu0 0.0
      %5150 = vmatmul.mubr.f32.gmra.mrb[0].mxu0 %v4930
      %v5151 = vpop.f32.mrb[0].mxu0
      %v5152 = vadd.f32 0.0, %v5151
      %v5153 = vpop.f32.mrb[0].mxu0
      %5154 = vmatprep.mubr.f32.mxu0 0.0
      %5155 = vmatmul.mubr.f32.gmra.mrb[0].mxu0 %v4933
      %v5156 = vpop.f32.mrb[0].mxu0
      %v5157 = vadd.f32 0.0, %v5156
      %v5158 = vpop.f32.mrb[0].mxu0
      %5159 = vdwg.mxu0
      %v5160 = vadd.f32 %v4646, %v5002
      %v5161 = vadd.f32 %v4651, %v5007
      %v5162 = vadd.f32 %v4656, %v5012
      %v5163 = vadd.f32 %v4661, %v5017
      %v5164 = vadd.f32 %v4666, %v5022
      %v5165 = vadd.f32 %v4671, %v5027
      %v5166 = vadd.f32 %v4676, %v5032
      %v5167 = vadd.f32 %v4681, %v5037
      %v5168 = vadd.f32 %v4686, %v5042
      %v5169 = vadd.f32 %v4691, %v5047
      %v5170 = vadd.f32 %v4696, %v5052
      %v5171 = vadd.f32 %v4701, %v5057
      %v5172 = vadd.f32 %v4706, %v5062
      %v5173 = vadd.f32 %v4711, %v5067
      %v5174 = vadd.f32 %v4716, %v5072
      %v5175 = vadd.f32 %v4721, %v5077
      %v5176 = vadd.f32 %v4726, %v5082
      %v5177 = vadd.f32 %v4731, %v5087
      %v5178 = vadd.f32 %v4736, %v5092
      %v5179 = vadd.f32 %v4741, %v5097
      %v5180 = vadd.f32 %v4746, %v5102
      %v5181 = vadd.f32 %v4751, %v5107
      %v5182 = vadd.f32 %v4756, %v5112
      %v5183 = vadd.f32 %v4761, %v5117
      %v5184 = vadd.f32 %v4766, %v5122
      %v5185 = vadd.f32 %v4771, %v5127
      %v5186 = vadd.f32 %v4776, %v5132
      %v5187 = vadd.f32 %v4781, %v5137
      %v5188 = vadd.f32 %v4786, %v5142
      %v5189 = vadd.f32 %v4791, %v5147
      %v5190 = vadd.f32 %v4796, %v5152
      %v5191 = vadd.f32 %v4801, %v5157
      %v5192 = vld [vmem:[%s4060] sm:$0xff]
      %v5193 = vld [vmem:[%s4060 + $0x8] sm:$0xff]
      %v5194 = vld [vmem:[%s4060 + $0x18] sm:$0xff]
      %v5195 = vld [vmem:[%s4060 + $0x20] sm:$0xff]
      %v5196 = vld [vmem:[%s4060 + $0x30] sm:$0xff]
      %v5197 = vld [vmem:[%s4060 + $0x38] sm:$0xff]
      %v5198 = vld [vmem:[%s4060 + $0x48] sm:$0xff]
      %v5199 = vld [vmem:[%s4060 + $0x50] sm:$0xff]
      %v5200 = vld [vmem:[%s4060 + $0x60] sm:$0xff]
      %v5201 = vld [vmem:[%s4060 + $0x68] sm:$0xff]
      %v5202 = vld [vmem:[%s4060 + $0x78] sm:$0xff]
      %v5203 = vld [vmem:[%s4060 + $0x80] sm:$0xff]
      %v5204 = vld [vmem:[%s4060 + $0x90] sm:$0xff]
      %v5205 = vld [vmem:[%s4060 + $0x98] sm:$0xff]
      %v5206 = vld [vmem:[%s4060 + $0xa8] sm:$0xff]
      %v5207 = vld [vmem:[%s4060 + $0xb0] sm:$0xff]
      %v5208 = vld [vmem:[%s4060 + $0xc0] sm:$0xff]
      %v5209 = vld [vmem:[%s4060 + $0xc8] sm:$0xff]
      %v5210 = vld [vmem:[%s4060 + $0xd8] sm:$0xff]
      %v5211 = vld [vmem:[%s4060 + $0xe0] sm:$0xff]
      %v5212 = vld [vmem:[%s4060 + $0xf0] sm:$0xff]
      %v5213 = vld [vmem:[%s4060 + $0xf8] sm:$0xff]
      %v5214 = vld [vmem:[%s4060 + $0x108] sm:$0xff]
      %v5215 = vld [vmem:[%s4060 + $0x110] sm:$0xff]
      %v5216 = vld [vmem:[%s4060 + $0x120] sm:$0xff]
      %v5217 = vld [vmem:[%s4060 + $0x128] sm:$0xff]
      %v5218 = vld [vmem:[%s4060 + $0x138] sm:$0xff]
      %v5219 = vld [vmem:[%s4060 + $0x140] sm:$0xff]
      %v5220 = vld [vmem:[%s4060 + $0x150] sm:$0xff]
      %v5221 = vld [vmem:[%s4060 + $0x158] sm:$0xff]
      %v5222 = vld [vmem:[%s4060 + $0x168] sm:$0xff]
      %v5223 = vld [vmem:[%s4060 + $0x170] sm:$0xff]
      %s5224 = scalar_lea.vmem %s4, 48
      %v5225 = vld [vmem:[%s5224] sm:$0xff]
      %v5226 = vld [vmem:[%s5224 + $0x8] sm:$0xff]
      %v5228 = vsel %vm4004, %v5192, 0
      %v5231 = vsel %vm4004, %v5193, 0
      %v5234 = vsel %vm4004, %v5194, 0
      %v5237 = vsel %vm4004, %v5195, 0
      %v5240 = vsel %vm4004, %v5196, 0
      %v5243 = vsel %vm4004, %v5197, 0
      %v5246 = vsel %vm4004, %v5198, 0
      %v5249 = vsel %vm4004, %v5199, 0
      %v5252 = vsel %vm4004, %v5200, 0
      %v5255 = vsel %vm4004, %v5201, 0
      %v5258 = vsel %vm4004, %v5202, 0
      %v5261 = vsel %vm4004, %v5203, 0
      %v5264 = vsel %vm4004, %v5204, 0
      %v5267 = vsel %vm4004, %v5205, 0
      %v5270 = vsel %vm4004, %v5206, 0
      %v5273 = vsel %vm4004, %v5207, 0
      %v5276 = vsel %vm4004, %v5208, 0
      %v5279 = vsel %vm4004, %v5209, 0
      %v5282 = vsel %vm4004, %v5210, 0
      %v5285 = vsel %vm4004, %v5211, 0
      %v5288 = vsel %vm4004, %v5212, 0
      %v5291 = vsel %vm4004, %v5213, 0
      %v5294 = vsel %vm4004, %v5214, 0
      %v5297 = vsel %vm4004, %v5215, 0
      %v5300 = vsel %vm4004, %v5216, 0
      %v5303 = vsel %vm4004, %v5217, 0
      %v5306 = vsel %vm4004, %v5218, 0
      %v5309 = vsel %vm4004, %v5219, 0
      %v5312 = vsel %vm4004, %v5220, 0
      %v5315 = vsel %vm4004, %v5221, 0
      %v5318 = vsel %vm4004, %v5222, 0
      %v5321 = vsel %vm4004, %v5223, 0
      %5323 = vmatprep.subr.mxu0 0.0
      %5324 = vmatpush1.msra.mxu0 %v5225
      %5325 = vmatprep.subr.mxu0 0.0
      %5326 = vmatpush1.msra.mxu0 %v5226
      %5327 = vmatprep.subr.mxu0 0.0
      %5328 = vmatpush1.msra.mxu0 0.0
      %5329 = vmatprep.subr.mxu0 0.0
      %5330 = vmatpush1.msra.mxu0 0.0
      %5331 = vmatprep.subr.mxu0 0.0
      %5332 = vmatpush1.msra.mxu0 0.0
      %5333 = vmatprep.subr.mxu0 0.0
      %5334 = vmatpush1.msra.mxu0 0.0
      %5335 = vmatprep.subr.mxu0 0.0
      %5336 = vmatpush1.msra.mxu0 0.0
      %5337 = vmatprep.subr.mxu0 0.0
      %5338 = vmatpush1.msra.mxu0 0.0
      %5339 = vmatprep.subr.mxu0 0.0
      %5340 = vmatpush1.msra.mxu0 0.0
      %5341 = vmatprep.subr.mxu0 0.0
      %5342 = vmatpush1.msra.mxu0 0.0
      %5343 = vmatprep.subr.mxu0 0.0
      %5344 = vmatpush1.msra.mxu0 0.0
      %5345 = vmatprep.subr.mxu0 0.0
      %5346 = vmatpush1.msra.mxu0 0.0
      %5347 = vmatprep.subr.mxu0 0.0
      %5348 = vmatpush1.msra.mxu0 0.0
      %5349 = vmatprep.subr.mxu0 0.0
      %5350 = vmatpush1.msra.mxu0 0.0
      %5351 = vmatprep.subr.mxu0 0.0
      %5352 = vmatpush1.msra.mxu0 0.0
      %5353 = vmatprep.subr.mxu0 0.0
      %5354 = vmatpush1.msra.mxu0 0.0
      %5355 = vmatprep.subr.mxu0 0.0
      %5356 = vmatpush1.msra.mxu0 0.0
      %5357 = vmatprep.subr.mxu0 0.0
      %5358 = vmatpush1.msra.mxu0 0.0
      %5359 = vmatprep.subr.mxu0 0.0
      %5360 = vmatpush1.msra.mxu0 0.0
      %5361 = vmatprep.subr.mxu0 0.0
      %5362 = vmatpush1.msra.mxu0 0.0
      %5363 = vmatprep.subr.mxu0 0.0
      %5364 = vmatpush1.msra.mxu0 0.0
      %5365 = vmatprep.subr.mxu0 0.0
      %5366 = vmatpush1.msra.mxu0 0.0
      %5367 = vmatprep.subr.mxu0 0.0
      %5368 = vmatpush1.msra.mxu0 0.0
      %5369 = vmatprep.subr.mxu0 0.0
      %5370 = vmatpush1.msra.mxu0 0.0
      %5371 = vmatprep.subr.mxu0 0.0
      %5372 = vmatpush1.msra.mxu0 0.0
      %5373 = vmatprep.subr.mxu0 0.0
      %5374 = vmatpush1.msra.mxu0 0.0
      %5375 = vmatprep.subr.mxu0 0.0
      %5376 = vmatpush1.msra.mxu0 0.0
      %5377 = vmatprep.subr.mxu0 0.0
      %5378 = vmatpush1.msra.mxu0 0.0
      %5379 = vmatprep.subr.mxu0 0.0
      %5380 = vmatpush1.msra.mxu0 0.0
      %5381 = vmatprep.subr.mxu0 0.0
      %5382 = vmatpush1.msra.mxu0 0.0
      %5383 = vmatprep.subr.mxu0 0.0
      %5384 = vmatpush1.msra.mxu0 0.0
      %5385 = vmatprep.subr.mxu0 0.0
      %5386 = vmatpush1.msra.mxu0 0.0
      %5387 = vmatprep.mubr.f32.mxu0 0.0
      %5388 = vmatmul.mubr.f32.gmra.mrb[0].mxu0 %v5228
      %v5389 = vpop.f32.mrb[0].mxu0
      %v5390 = vadd.f32 0.0, %v5389
      %v5391 = vpop.f32.mrb[0].mxu0
      %5392 = vmatprep.mubr.f32.mxu0 0.0
      %5393 = vmatmul.mubr.f32.gmra.mrb[0].mxu0 %v5231
      %v5394 = vpop.f32.mrb[0].mxu0
      %v5395 = vadd.f32 0.0, %v5394
      %v5396 = vpop.f32.mrb[0].mxu0
      %5397 = vmatprep.mubr.f32.mxu0 0.0
      %5398 = vmatmul.mubr.f32.gmra.mrb[0].mxu0 %v5234
      %v5399 = vpop.f32.mrb[0].mxu0
      %v5400 = vadd.f32 0.0, %v5399
      %v5401 = vpop.f32.mrb[0].mxu0
      %5402 = vmatprep.mubr.f32.mxu0 0.0
      %5403 = vmatmul.mubr.f32.gmra.mrb[0].mxu0 %v5237
      %v5404 = vpop.f32.mrb[0].mxu0
      %v5405 = vadd.f32 0.0, %v5404
      %v5406 = vpop.f32.mrb[0].mxu0
      %5407 = vmatprep.mubr.f32.mxu0 0.0
      %5408 = vmatmul.mubr.f32.gmra.mrb[0].mxu0 %v5240
      %v5409 = vpop.f32.mrb[0].mxu0
      %v5410 = vadd.f32 0.0, %v5409
      %v5411 = vpop.f32.mrb[0].mxu0
      %5412 = vmatprep.mubr.f32.mxu0 0.0
      %5413 = vmatmul.mubr.f32.gmra.mrb[0].mxu0 %v5243
      %v5414 = vpop.f32.mrb[0].mxu0
      %v5415 = vadd.f32 0.0, %v5414
      %v5416 = vpop.f32.mrb[0].mxu0
      %5417 = vmatprep.mubr.f32.mxu0 0.0
      %5418 = vmatmul.mubr.f32.gmra.mrb[0].mxu0 %v5246
      %v5419 = vpop.f32.mrb[0].mxu0
      %v5420 = vadd.f32 0.0, %v5419
      %v5421 = vpop.f32.mrb[0].mxu0
      %5422 = vmatprep.mubr.f32.mxu0 0.0
      %5423 = vmatmul.mubr.f32.gmra.mrb[0].mxu0 %v5249
      %v5424 = vpop.f32.mrb[0].mxu0
      %v5425 = vadd.f32 0.0, %v5424
      %v5426 = vpop.f32.mrb[0].mxu0
      %5427 = vmatprep.mubr.f32.mxu0 0.0
      %5428 = vmatmul.mubr.f32.gmra.mrb[0].mxu0 %v5252
      %v5429 = vpop.f32.mrb[0].mxu0
      %v5430 = vadd.f32 0.0, %v5429
      %v5431 = vpop.f32.mrb[0].mxu0
      %5432 = vmatprep.mubr.f32.mxu0 0.0
      %5433 = vmatmul.mubr.f32.gmra.mrb[0].mxu0 %v5255
      %v5434 = vpop.f32.mrb[0].mxu0
      %v5435 = vadd.f32 0.0, %v5434
      %v5436 = vpop.f32.mrb[0].mxu0
      %5437 = vmatprep.mubr.f32.mxu0 0.0
      %5438 = vmatmul.mubr.f32.gmra.mrb[0].mxu0 %v5258
      %v5439 = vpop.f32.mrb[0].mxu0
      %v5440 = vadd.f32 0.0, %v5439
      %v5441 = vpop.f32.mrb[0].mxu0
      %5442 = vmatprep.mubr.f32.mxu0 0.0
      %5443 = vmatmul.mubr.f32.gmra.mrb[0].mxu0 %v5261
      %v5444 = vpop.f32.mrb[0].mxu0
      %v5445 = vadd.f32 0.0, %v5444
      %v5446 = vpop.f32.mrb[0].mxu0
      %5447 = vmatprep.mubr.f32.mxu0 0.0
      %5448 = vmatmul.mubr.f32.gmra.mrb[0].mxu0 %v5264
      %v5449 = vpop.f32.mrb[0].mxu0
      %v5450 = vadd.f32 0.0, %v5449
      %v5451 = vpop.f32.mrb[0].mxu0
      %5452 = vmatprep.mubr.f32.mxu0 0.0
      %5453 = vmatmul.mubr.f32.gmra.mrb[0].mxu0 %v5267
      %v5454 = vpop.f32.mrb[0].mxu0
      %v5455 = vadd.f32 0.0, %v5454
      %v5456 = vpop.f32.mrb[0].mxu0
      %5457 = vmatprep.mubr.f32.mxu0 0.0
      %5458 = vmatmul.mubr.f32.gmra.mrb[0].mxu0 %v5270
      %v5459 = vpop.f32.mrb[0].mxu0
      %v5460 = vadd.f32 0.0, %v5459
      %v5461 = vpop.f32.mrb[0].mxu0
      %5462 = vmatprep.mubr.f32.mxu0 0.0
      %5463 = vmatmul.mubr.f32.gmra.mrb[0].mxu0 %v5273
      %v5464 = vpop.f32.mrb[0].mxu0
      %v5465 = vadd.f32 0.0, %v5464
      %v5466 = vpop.f32.mrb[0].mxu0
      %5467 = vmatprep.mubr.f32.mxu0 0.0
      %5468 = vmatmul.mubr.f32.gmra.mrb[0].mxu0 %v5276
      %v5469 = vpop.f32.mrb[0].mxu0
      %v5470 = vadd.f32 0.0, %v5469
      %v5471 = vpop.f32.mrb[0].mxu0
      %5472 = vmatprep.mubr.f32.mxu0 0.0
      %5473 = vmatmul.mubr.f32.gmra.mrb[0].mxu0 %v5279
      %v5474 = vpop.f32.mrb[0].mxu0
      %v5475 = vadd.f32 0.0, %v5474
      %v5476 = vpop.f32.mrb[0].mxu0
      %5477 = vmatprep.mubr.f32.mxu0 0.0
      %5478 = vmatmul.mubr.f32.gmra.mrb[0].mxu0 %v5282
      %v5479 = vpop.f32.mrb[0].mxu0
      %v5480 = vadd.f32 0.0, %v5479
      %v5481 = vpop.f32.mrb[0].mxu0
      %5482 = vmatprep.mubr.f32.mxu0 0.0
      %5483 = vmatmul.mubr.f32.gmra.mrb[0].mxu0 %v5285
      %v5484 = vpop.f32.mrb[0].mxu0
      %v5485 = vadd.f32 0.0, %v5484
      %v5486 = vpop.f32.mrb[0].mxu0
      %5487 = vmatprep.mubr.f32.mxu0 0.0
      %5488 = vmatmul.mubr.f32.gmra.mrb[0].mxu0 %v5288
      %v5489 = vpop.f32.mrb[0].mxu0
      %v5490 = vadd.f32 0.0, %v5489
      %v5491 = vpop.f32.mrb[0].mxu0
      %5492 = vmatprep.mubr.f32.mxu0 0.0
      %5493 = vmatmul.mubr.f32.gmra.mrb[0].mxu0 %v5291
      %v5494 = vpop.f32.mrb[0].mxu0
      %v5495 = vadd.f32 0.0, %v5494
      %v5496 = vpop.f32.mrb[0].mxu0
      %5497 = vmatprep.mubr.f32.mxu0 0.0
      %5498 = vmatmul.mubr.f32.gmra.mrb[0].mxu0 %v5294
      %v5499 = vpop.f32.mrb[0].mxu0
      %v5500 = vadd.f32 0.0, %v5499
      %v5501 = vpop.f32.mrb[0].mxu0
      %5502 = vmatprep.mubr.f32.mxu0 0.0
      %5503 = vmatmul.mubr.f32.gmra.mrb[0].mxu0 %v5297
      %v5504 = vpop.f32.mrb[0].mxu0
      %v5505 = vadd.f32 0.0, %v5504
      %v5506 = vpop.f32.mrb[0].mxu0
      %5507 = vmatprep.mubr.f32.mxu0 0.0
      %5508 = vmatmul.mubr.f32.gmra.mrb[0].mxu0 %v5300
      %v5509 = vpop.f32.mrb[0].mxu0
      %v5510 = vadd.f32 0.0, %v5509
      %v5511 = vpop.f32.mrb[0].mxu0
      %5512 = vmatprep.mubr.f32.mxu0 0.0
      %5513 = vmatmul.mubr.f32.gmra.mrb[0].mxu0 %v5303
      %v5514 = vpop.f32.mrb[0].mxu0
      %v5515 = vadd.f32 0.0, %v5514
      %v5516 = vpop.f32.mrb[0].mxu0
      %5517 = vmatprep.mubr.f32.mxu0 0.0
      %5518 = vmatmul.mubr.f32.gmra.mrb[0].mxu0 %v5306
      %v5519 = vpop.f32.mrb[0].mxu0
      %v5520 = vadd.f32 0.0, %v5519
      %v5521 = vpop.f32.mrb[0].mxu0
      %5522 = vmatprep.mubr.f32.mxu0 0.0
      %5523 = vmatmul.mubr.f32.gmra.mrb[0].mxu0 %v5309
      %v5524 = vpop.f32.mrb[0].mxu0
      %v5525 = vadd.f32 0.0, %v5524
      %v5526 = vpop.f32.mrb[0].mxu0
      %5527 = vmatprep.mubr.f32.mxu0 0.0
      %5528 = vmatmul.mubr.f32.gmra.mrb[0].mxu0 %v5312
      %v5529 = vpop.f32.mrb[0].mxu0
      %v5530 = vadd.f32 0.0, %v5529
      %v5531 = vpop.f32.mrb[0].mxu0
      %5532 = vmatprep.mubr.f32.mxu0 0.0
      %5533 = vmatmul.mubr.f32.gmra.mrb[0].mxu0 %v5315
      %v5534 = vpop.f32.mrb[0].mxu0
      %v5535 = vadd.f32 0.0, %v5534
      %v5536 = vpop.f32.mrb[0].mxu0
      %5537 = vmatprep.mubr.f32.mxu0 0.0
      %5538 = vmatmul.mubr.f32.gmra.mrb[0].mxu0 %v5318
      %v5539 = vpop.f32.mrb[0].mxu0
      %v5540 = vadd.f32 0.0, %v5539
      %v5541 = vpop.f32.mrb[0].mxu0
      %5542 = vmatprep.mubr.f32.mxu0 0.0
      %5543 = vmatmul.mubr.f32.gmra.mrb[0].mxu0 %v5321
      %v5544 = vpop.f32.mrb[0].mxu0
      %v5545 = vadd.f32 0.0, %v5544
      %v5546 = vpop.f32.mrb[0].mxu0
      %5547 = vdwg.mxu0
      %v5548 = vadd.f32 %v5160, %v5390
      %v5549 = vadd.f32 %v5161, %v5395
      %v5550 = vadd.f32 %v5162, %v5400
      %v5551 = vadd.f32 %v5163, %v5405
      %v5552 = vadd.f32 %v5164, %v5410
      %v5553 = vadd.f32 %v5165, %v5415
      %v5554 = vadd.f32 %v5166, %v5420
      %v5555 = vadd.f32 %v5167, %v5425
      %v5556 = vadd.f32 %v5168, %v5430
      %v5557 = vadd.f32 %v5169, %v5435
      %v5558 = vadd.f32 %v5170, %v5440
      %v5559 = vadd.f32 %v5171, %v5445
      %v5560 = vadd.f32 %v5172, %v5450
      %v5561 = vadd.f32 %v5173, %v5455
      %v5562 = vadd.f32 %v5174, %v5460
      %v5563 = vadd.f32 %v5175, %v5465
      %v5564 = vadd.f32 %v5176, %v5470
      %v5565 = vadd.f32 %v5177, %v5475
      %v5566 = vadd.f32 %v5178, %v5480
      %v5567 = vadd.f32 %v5179, %v5485
      %v5568 = vadd.f32 %v5180, %v5490
      %v5569 = vadd.f32 %v5181, %v5495
      %v5570 = vadd.f32 %v5182, %v5500
      %v5571 = vadd.f32 %v5183, %v5505
      %v5572 = vadd.f32 %v5184, %v5510
      %v5573 = vadd.f32 %v5185, %v5515
      %v5574 = vadd.f32 %v5186, %v5520
      %v5575 = vadd.f32 %v5187, %v5525
      %v5576 = vadd.f32 %v5188, %v5530
      %v5577 = vadd.f32 %v5189, %v5535
      %v5578 = vadd.f32 %v5190, %v5540
      %v5579 = vadd.f32 %v5191, %v5545
      %v5580 = vld [vmem:[%s4060 + $0x1] sm:$0xff]
      %v5581 = vld [vmem:[%s4060 + $0x9] sm:$0xff]
      %v5582 = vld [vmem:[%s4060 + $0x19] sm:$0xff]
      %v5583 = vld [vmem:[%s4060 + $0x21] sm:$0xff]
      %v5584 = vld [vmem:[%s4060 + $0x31] sm:$0xff]
      %v5585 = vld [vmem:[%s4060 + $0x39] sm:$0xff]
      %v5586 = vld [vmem:[%s4060 + $0x49] sm:$0xff]
      %v5587 = vld [vmem:[%s4060 + $0x51] sm:$0xff]
      %v5588 = vld [vmem:[%s4060 + $0x61] sm:$0xff]
      %v5589 = vld [vmem:[%s4060 + $0x69] sm:$0xff]
      %v5590 = vld [vmem:[%s4060 + $0x79] sm:$0xff]
      %v5591 = vld [vmem:[%s4060 + $0x81] sm:$0xff]
      %v5592 = vld [vmem:[%s4060 + $0x91] sm:$0xff]
      %v5593 = vld [vmem:[%s4060 + $0x99] sm:$0xff]
      %v5594 = vld [vmem:[%s4060 + $0xa9] sm:$0xff]
      %v5595 = vld [vmem:[%s4060 + $0xb1] sm:$0xff]
      %v5596 = vld [vmem:[%s4060 + $0xc1] sm:$0xff]
      %v5597 = vld [vmem:[%s4060 + $0xc9] sm:$0xff]
      %v5598 = vld [vmem:[%s4060 + $0xd9] sm:$0xff]
      %v5599 = vld [vmem:[%s4060 + $0xe1] sm:$0xff]
      %v5600 = vld [vmem:[%s4060 + $0xf1] sm:$0xff]
      %v5601 = vld [vmem:[%s4060 + $0xf9] sm:$0xff]
      %v5602 = vld [vmem:[%s4060 + $0x109] sm:$0xff]
      %v5603 = vld [vmem:[%s4060 + $0x111] sm:$0xff]
      %v5604 = vld [vmem:[%s4060 + $0x121] sm:$0xff]
      %v5605 = vld [vmem:[%s4060 + $0x129] sm:$0xff]
      %v5606 = vld [vmem:[%s4060 + $0x139] sm:$0xff]
      %v5607 = vld [vmem:[%s4060 + $0x141] sm:$0xff]
      %v5608 = vld [vmem:[%s4060 + $0x151] sm:$0xff]
      %v5609 = vld [vmem:[%s4060 + $0x159] sm:$0xff]
      %v5610 = vld [vmem:[%s4060 + $0x169] sm:$0xff]
      %v5611 = vld [vmem:[%s4060 + $0x171] sm:$0xff]
      %s5612 = scalar_lea.vmem %s4, 64
      %v5613 = vld [vmem:[%s5612] sm:$0xff]
      %v5614 = vld [vmem:[%s5612 + $0x8] sm:$0xff]
      %v5616 = vsel %vm4004, %v5580, 0
      %v5619 = vsel %vm4004, %v5581, 0
      %v5622 = vsel %vm4004, %v5582, 0
      %v5625 = vsel %vm4004, %v5583, 0
      %v5628 = vsel %vm4004, %v5584, 0
      %v5631 = vsel %vm4004, %v5585, 0
      %v5634 = vsel %vm4004, %v5586, 0
      %v5637 = vsel %vm4004, %v5587, 0
      %v5640 = vsel %vm4004, %v5588, 0
      %v5643 = vsel %vm4004, %v5589, 0
      %v5646 = vsel %vm4004, %v5590, 0
      %v5649 = vsel %vm4004, %v5591, 0
      %v5652 = vsel %vm4004, %v5592, 0
      %v5655 = vsel %vm4004, %v5593, 0
      %v5658 = vsel %vm4004, %v5594, 0
      %v5661 = vsel %vm4004, %v5595, 0
      %v5664 = vsel %vm4004, %v5596, 0
      %v5667 = vsel %vm4004, %v5597, 0
      %v5670 = vsel %vm4004, %v5598, 0
      %v5673 = vsel %vm4004, %v5599, 0
      %v5676 = vsel %vm4004, %v5600, 0
      %v5679 = vsel %vm4004, %v5601, 0
      %v5682 = vsel %vm4004, %v5602, 0
      %v5685 = vsel %vm4004, %v5603, 0
      %v5688 = vsel %vm4004, %v5604, 0
      %v5691 = vsel %vm4004, %v5605, 0
      %v5694 = vsel %vm4004, %v5606, 0
      %v5697 = vsel %vm4004, %v5607, 0
      %v5700 = vsel %vm4004, %v5608, 0
      %v5703 = vsel %vm4004, %v5609, 0
      %v5706 = vsel %vm4004, %v5610, 0
      %v5709 = vsel %vm4004, %v5611, 0
      %5711 = vmatprep.subr.mxu0 0.0
      %5712 = vmatpush1.msra.mxu0 %v5613
      %5713 = vmatprep.subr.mxu0 0.0
      %5714 = vmatpush1.msra.mxu0 %v5614
      %5715 = vmatprep.subr.mxu0 0.0
      %5716 = vmatpush1.msra.mxu0 0.0
      %5717 = vmatprep.subr.mxu0 0.0
      %5718 = vmatpush1.msra.mxu0 0.0
      %5719 = vmatprep.subr.mxu0 0.0
      %5720 = vmatpush1.msra.mxu0 0.0
      %5721 = vmatprep.subr.mxu0 0.0
      %5722 = vmatpush1.msra.mxu0 0.0
      %5723 = vmatprep.subr.mxu0 0.0
      %5724 = vmatpush1.msra.mxu0 0.0
      %5725 = vmatprep.subr.mxu0 0.0
      %5726 = vmatpush1.msra.mxu0 0.0
      %5727 = vmatprep.subr.mxu0 0.0
      %5728 = vmatpush1.msra.mxu0 0.0
      %5729 = vmatprep.subr.mxu0 0.0
      %5730 = vmatpush1.msra.mxu0 0.0
      %5731 = vmatprep.subr.mxu0 0.0
      %5732 = vmatpush1.msra.mxu0 0.0
      %5733 = vmatprep.subr.mxu0 0.0
      %5734 = vmatpush1.msra.mxu0 0.0
      %5735 = vmatprep.subr.mxu0 0.0
      %5736 = vmatpush1.msra.mxu0 0.0
      %5737 = vmatprep.subr.mxu0 0.0
      %5738 = vmatpush1.msra.mxu0 0.0
      %5739 = vmatprep.subr.mxu0 0.0
      %5740 = vmatpush1.msra.mxu0 0.0
      %5741 = vmatprep.subr.mxu0 0.0
      %5742 = vmatpush1.msra.mxu0 0.0
      %5743 = vmatprep.subr.mxu0 0.0
      %5744 = vmatpush1.msra.mxu0 0.0
      %5745 = vmatprep.subr.mxu0 0.0
      %5746 = vmatpush1.msra.mxu0 0.0
      %5747 = vmatprep.subr.mxu0 0.0
      %5748 = vmatpush1.msra.mxu0 0.0
      %5749 = vmatprep.subr.mxu0 0.0
      %5750 = vmatpush1.msra.mxu0 0.0
      %5751 = vmatprep.subr.mxu0 0.0
      %5752 = vmatpush1.msra.mxu0 0.0
      %5753 = vmatprep.subr.mxu0 0.0
      %5754 = vmatpush1.msra.mxu0 0.0
      %5755 = vmatprep.subr.mxu0 0.0
      %5756 = vmatpush1.msra.mxu0 0.0
      %5757 = vmatprep.subr.mxu0 0.0
      %5758 = vmatpush1.msra.mxu0 0.0
      %5759 = vmatprep.subr.mxu0 0.0
      %5760 = vmatpush1.msra.mxu0 0.0
      %5761 = vmatprep.subr.mxu0 0.0
      %5762 = vmatpush1.msra.mxu0 0.0
      %5763 = vmatprep.subr.mxu0 0.0
      %5764 = vmatpush1.msra.mxu0 0.0
      %5765 = vmatprep.subr.mxu0 0.0
      %5766 = vmatpush1.msra.mxu0 0.0
      %5767 = vmatprep.subr.mxu0 0.0
      %5768 = vmatpush1.msra.mxu0 0.0
      %5769 = vmatprep.subr.mxu0 0.0
      %5770 = vmatpush1.msra.mxu0 0.0
      %5771 = vmatprep.subr.mxu0 0.0
      %5772 = vmatpush1.msra.mxu0 0.0
      %5773 = vmatprep.subr.mxu0 0.0
      %5774 = vmatpush1.msra.mxu0 0.0
      %5775 = vmatprep.mubr.f32.mxu0 0.0
      %5776 = vmatmul.mubr.f32.gmra.mrb[0].mxu0 %v5616
      %v5777 = vpop.f32.mrb[0].mxu0
      %v5778 = vadd.f32 0.0, %v5777
      %v5779 = vpop.f32.mrb[0].mxu0
      %5780 = vmatprep.mubr.f32.mxu0 0.0
      %5781 = vmatmul.mubr.f32.gmra.mrb[0].mxu0 %v5619
      %v5782 = vpop.f32.mrb[0].mxu0
      %v5783 = vadd.f32 0.0, %v5782
      %v5784 = vpop.f32.mrb[0].mxu0
      %5785 = vmatprep.mubr.f32.mxu0 0.0
      %5786 = vmatmul.mubr.f32.gmra.mrb[0].mxu0 %v5622
      %v5787 = vpop.f32.mrb[0].mxu0
      %v5788 = vadd.f32 0.0, %v5787
      %v5789 = vpop.f32.mrb[0].mxu0
      %5790 = vmatprep.mubr.f32.mxu0 0.0
      %5791 = vmatmul.mubr.f32.gmra.mrb[0].mxu0 %v5625
      %v5792 = vpop.f32.mrb[0].mxu0
      %v5793 = vadd.f32 0.0, %v5792
      %v5794 = vpop.f32.mrb[0].mxu0
      %5795 = vmatprep.mubr.f32.mxu0 0.0
      %5796 = vmatmul.mubr.f32.gmra.mrb[0].mxu0 %v5628
      %v5797 = vpop.f32.mrb[0].mxu0
      %v5798 = vadd.f32 0.0, %v5797
      %v5799 = vpop.f32.mrb[0].mxu0
      %5800 = vmatprep.mubr.f32.mxu0 0.0
      %5801 = vmatmul.mubr.f32.gmra.mrb[0].mxu0 %v5631
      %v5802 = vpop.f32.mrb[0].mxu0
      %v5803 = vadd.f32 0.0, %v5802
      %v5804 = vpop.f32.mrb[0].mxu0
      %5805 = vmatprep.mubr.f32.mxu0 0.0
      %5806 = vmatmul.mubr.f32.gmra.mrb[0].mxu0 %v5634
      %v5807 = vpop.f32.mrb[0].mxu0
      %v5808 = vadd.f32 0.0, %v5807
      %v5809 = vpop.f32.mrb[0].mxu0
      %5810 = vmatprep.mubr.f32.mxu0 0.0
      %5811 = vmatmul.mubr.f32.gmra.mrb[0].mxu0 %v5637
      %v5812 = vpop.f32.mrb[0].mxu0
      %v5813 = vadd.f32 0.0, %v5812
      %v5814 = vpop.f32.mrb[0].mxu0
      %5815 = vmatprep.mubr.f32.mxu0 0.0
      %5816 = vmatmul.mubr.f32.gmra.mrb[0].mxu0 %v5640
      %v5817 = vpop.f32.mrb[0].mxu0
      %v5818 = vadd.f32 0.0, %v5817
      %v5819 = vpop.f32.mrb[0].mxu0
      %5820 = vmatprep.mubr.f32.mxu0 0.0
      %5821 = vmatmul.mubr.f32.gmra.mrb[0].mxu0 %v5643
      %v5822 = vpop.f32.mrb[0].mxu0
      %v5823 = vadd.f32 0.0, %v5822
      %v5824 = vpop.f32.mrb[0].mxu0
      %5825 = vmatprep.mubr.f32.mxu0 0.0
      %5826 = vmatmul.mubr.f32.gmra.mrb[0].mxu0 %v5646
      %v5827 = vpop.f32.mrb[0].mxu0
      %v5828 = vadd.f32 0.0, %v5827
      %v5829 = vpop.f32.mrb[0].mxu0
      %5830 = vmatprep.mubr.f32.mxu0 0.0
      %5831 = vmatmul.mubr.f32.gmra.mrb[0].mxu0 %v5649
      %v5832 = vpop.f32.mrb[0].mxu0
      %v5833 = vadd.f32 0.0, %v5832
      %v5834 = vpop.f32.mrb[0].mxu0
      %5835 = vmatprep.mubr.f32.mxu0 0.0
      %5836 = vmatmul.mubr.f32.gmra.mrb[0].mxu0 %v5652
      %v5837 = vpop.f32.mrb[0].mxu0
      %v5838 = vadd.f32 0.0, %v5837
      %v5839 = vpop.f32.mrb[0].mxu0
      %5840 = vmatprep.mubr.f32.mxu0 0.0
      %5841 = vmatmul.mubr.f32.gmra.mrb[0].mxu0 %v5655
      %v5842 = vpop.f32.mrb[0].mxu0
      %v5843 = vadd.f32 0.0, %v5842
      %v5844 = vpop.f32.mrb[0].mxu0
      %5845 = vmatprep.mubr.f32.mxu0 0.0
      %5846 = vmatmul.mubr.f32.gmra.mrb[0].mxu0 %v5658
      %v5847 = vpop.f32.mrb[0].mxu0
      %v5848 = vadd.f32 0.0, %v5847
      %v5849 = vpop.f32.mrb[0].mxu0
      %5850 = vmatprep.mubr.f32.mxu0 0.0
      %5851 = vmatmul.mubr.f32.gmra.mrb[0].mxu0 %v5661
      %v5852 = vpop.f32.mrb[0].mxu0
      %v5853 = vadd.f32 0.0, %v5852
      %v5854 = vpop.f32.mrb[0].mxu0
      %5855 = vmatprep.mubr.f32.mxu0 0.0
      %5856 = vmatmul.mubr.f32.gmra.mrb[0].mxu0 %v5664
      %v5857 = vpop.f32.mrb[0].mxu0
      %v5858 = vadd.f32 0.0, %v5857
      %v5859 = vpop.f32.mrb[0].mxu0
      %5860 = vmatprep.mubr.f32.mxu0 0.0
      %5861 = vmatmul.mubr.f32.gmra.mrb[0].mxu0 %v5667
      %v5862 = vpop.f32.mrb[0].mxu0
      %v5863 = vadd.f32 0.0, %v5862
      %v5864 = vpop.f32.mrb[0].mxu0
      %5865 = vmatprep.mubr.f32.mxu0 0.0
      %5866 = vmatmul.mubr.f32.gmra.mrb[0].mxu0 %v5670
      %v5867 = vpop.f32.mrb[0].mxu0
      %v5868 = vadd.f32 0.0, %v5867
      %v5869 = vpop.f32.mrb[0].mxu0
      %5870 = vmatprep.mubr.f32.mxu0 0.0
      %5871 = vmatmul.mubr.f32.gmra.mrb[0].mxu0 %v5673
      %v5872 = vpop.f32.mrb[0].mxu0
      %v5873 = vadd.f32 0.0, %v5872
      %v5874 = vpop.f32.mrb[0].mxu0
      %5875 = vmatprep.mubr.f32.mxu0 0.0
      %5876 = vmatmul.mubr.f32.gmra.mrb[0].mxu0 %v5676
      %v5877 = vpop.f32.mrb[0].mxu0
      %v5878 = vadd.f32 0.0, %v5877
      %v5879 = vpop.f32.mrb[0].mxu0
      %5880 = vmatprep.mubr.f32.mxu0 0.0
      %5881 = vmatmul.mubr.f32.gmra.mrb[0].mxu0 %v5679
      %v5882 = vpop.f32.mrb[0].mxu0
      %v5883 = vadd.f32 0.0, %v5882
      %v5884 = vpop.f32.mrb[0].mxu0
      %5885 = vmatprep.mubr.f32.mxu0 0.0
      %5886 = vmatmul.mubr.f32.gmra.mrb[0].mxu0 %v5682
      %v5887 = vpop.f32.mrb[0].mxu0
      %v5888 = vadd.f32 0.0, %v5887
      %v5889 = vpop.f32.mrb[0].mxu0
      %5890 = vmatprep.mubr.f32.mxu0 0.0
      %5891 = vmatmul.mubr.f32.gmra.mrb[0].mxu0 %v5685
      %v5892 = vpop.f32.mrb[0].mxu0
      %v5893 = vadd.f32 0.0, %v5892
      %v5894 = vpop.f32.mrb[0].mxu0
      %5895 = vmatprep.mubr.f32.mxu0 0.0
      %5896 = vmatmul.mubr.f32.gmra.mrb[0].mxu0 %v5688
      %v5897 = vpop.f32.mrb[0].mxu0
      %v5898 = vadd.f32 0.0, %v5897
      %v5899 = vpop.f32.mrb[0].mxu0
      %5900 = vmatprep.mubr.f32.mxu0 0.0
      %5901 = vmatmul.mubr.f32.gmra.mrb[0].mxu0 %v5691
      %v5902 = vpop.f32.mrb[0].mxu0
      %v5903 = vadd.f32 0.0, %v5902
      %v5904 = vpop.f32.mrb[0].mxu0
      %5905 = vmatprep.mubr.f32.mxu0 0.0
      %5906 = vmatmul.mubr.f32.gmra.mrb[0].mxu0 %v5694
      %v5907 = vpop.f32.mrb[0].mxu0
      %v5908 = vadd.f32 0.0, %v5907
      %v5909 = vpop.f32.mrb[0].mxu0
      %5910 = vmatprep.mubr.f32.mxu0 0.0
      %5911 = vmatmul.mubr.f32.gmra.mrb[0].mxu0 %v5697
      %v5912 = vpop.f32.mrb[0].mxu0
      %v5913 = vadd.f32 0.0, %v5912
      %v5914 = vpop.f32.mrb[0].mxu0
      %5915 = vmatprep.mubr.f32.mxu0 0.0
      %5916 = vmatmul.mubr.f32.gmra.mrb[0].mxu0 %v5700
      %v5917 = vpop.f32.mrb[0].mxu0
      %v5918 = vadd.f32 0.0, %v5917
      %v5919 = vpop.f32.mrb[0].mxu0
      %5920 = vmatprep.mubr.f32.mxu0 0.0
      %5921 = vmatmul.mubr.f32.gmra.mrb[0].mxu0 %v5703
      %v5922 = vpop.f32.mrb[0].mxu0
      %v5923 = vadd.f32 0.0, %v5922
      %v5924 = vpop.f32.mrb[0].mxu0
      %5925 = vmatprep.mubr.f32.mxu0 0.0
      %5926 = vmatmul.mubr.f32.gmra.mrb[0].mxu0 %v5706
      %v5927 = vpop.f32.mrb[0].mxu0
      %v5928 = vadd.f32 0.0, %v5927
      %v5929 = vpop.f32.mrb[0].mxu0
      %5930 = vmatprep.mubr.f32.mxu0 0.0
      %5931 = vmatmul.mubr.f32.gmra.mrb[0].mxu0 %v5709
      %v5932 = vpop.f32.mrb[0].mxu0
      %v5933 = vadd.f32 0.0, %v5932
      %v5934 = vpop.f32.mrb[0].mxu0
      %5935 = vdwg.mxu0
      %v5936 = vadd.f32 %v5548, %v5778
      %v5937 = vadd.f32 %v5549, %v5783
      %v5938 = vadd.f32 %v5550, %v5788
      %v5939 = vadd.f32 %v5551, %v5793
      %v5940 = vadd.f32 %v5552, %v5798
      %v5941 = vadd.f32 %v5553, %v5803
      %v5942 = vadd.f32 %v5554, %v5808
      %v5943 = vadd.f32 %v5555, %v5813
      %v5944 = vadd.f32 %v5556, %v5818
      %v5945 = vadd.f32 %v5557, %v5823
      %v5946 = vadd.f32 %v5558, %v5828
      %v5947 = vadd.f32 %v5559, %v5833
      %v5948 = vadd.f32 %v5560, %v5838
      %v5949 = vadd.f32 %v5561, %v5843
      %v5950 = vadd.f32 %v5562, %v5848
      %v5951 = vadd.f32 %v5563, %v5853
      %v5952 = vadd.f32 %v5564, %v5858
      %v5953 = vadd.f32 %v5565, %v5863
      %v5954 = vadd.f32 %v5566, %v5868
      %v5955 = vadd.f32 %v5567, %v5873
      %v5956 = vadd.f32 %v5568, %v5878
      %v5957 = vadd.f32 %v5569, %v5883
      %v5958 = vadd.f32 %v5570, %v5888
      %v5959 = vadd.f32 %v5571, %v5893
      %v5960 = vadd.f32 %v5572, %v5898
      %v5961 = vadd.f32 %v5573, %v5903
      %v5962 = vadd.f32 %v5574, %v5908
      %v5963 = vadd.f32 %v5575, %v5913
      %v5964 = vadd.f32 %v5576, %v5918
      %v5965 = vadd.f32 %v5577, %v5923
      %v5966 = vadd.f32 %v5578, %v5928
      %v5967 = vadd.f32 %v5579, %v5933
      %v5968 = vld [vmem:[%s4060 + $0x2] sm:$0xff]
      %v5969 = vld [vmem:[%s4060 + $0xa] sm:$0xff]
      %v5970 = vld [vmem:[%s4060 + $0x1a] sm:$0xff]
      %v5971 = vld [vmem:[%s4060 + $0x22] sm:$0xff]
      %v5972 = vld [vmem:[%s4060 + $0x32] sm:$0xff]
      %v5973 = vld [vmem:[%s4060 + $0x3a] sm:$0xff]
      %v5974 = vld [vmem:[%s4060 + $0x4a] sm:$0xff]
      %v5975 = vld [vmem:[%s4060 + $0x52] sm:$0xff]
      %v5976 = vld [vmem:[%s4060 + $0x62] sm:$0xff]
      %v5977 = vld [vmem:[%s4060 + $0x6a] sm:$0xff]
      %v5978 = vld [vmem:[%s4060 + $0x7a] sm:$0xff]
      %v5979 = vld [vmem:[%s4060 + $0x82] sm:$0xff]
      %v5980 = vld [vmem:[%s4060 + $0x92] sm:$0xff]
      %v5981 = vld [vmem:[%s4060 + $0x9a] sm:$0xff]
      %v5982 = vld [vmem:[%s4060 + $0xaa] sm:$0xff]
      %v5983 = vld [vmem:[%s4060 + $0xb2] sm:$0xff]
      %v5984 = vld [vmem:[%s4060 + $0xc2] sm:$0xff]
      %v5985 = vld [vmem:[%s4060 + $0xca] sm:$0xff]
      %v5986 = vld [vmem:[%s4060 + $0xda] sm:$0xff]
      %v5987 = vld [vmem:[%s4060 + $0xe2] sm:$0xff]
      %v5988 = vld [vmem:[%s4060 + $0xf2] sm:$0xff]
      %v5989 = vld [vmem:[%s4060 + $0xfa] sm:$0xff]
      %v5990 = vld [vmem:[%s4060 + $0x10a] sm:$0xff]
      %v5991 = vld [vmem:[%s4060 + $0x112] sm:$0xff]
      %v5992 = vld [vmem:[%s4060 + $0x122] sm:$0xff]
      %v5993 = vld [vmem:[%s4060 + $0x12a] sm:$0xff]
      %v5994 = vld [vmem:[%s4060 + $0x13a] sm:$0xff]
      %v5995 = vld [vmem:[%s4060 + $0x142] sm:$0xff]
      %v5996 = vld [vmem:[%s4060 + $0x152] sm:$0xff]
      %v5997 = vld [vmem:[%s4060 + $0x15a] sm:$0xff]
      %v5998 = vld [vmem:[%s4060 + $0x16a] sm:$0xff]
      %v5999 = vld [vmem:[%s4060 + $0x172] sm:$0xff]
      %s6000 = scalar_lea.vmem %s4, 80
      %v6001 = vld [vmem:[%s6000] sm:$0xff]
      %v6002 = vld [vmem:[%s6000 + $0x8] sm:$0xff]
      %v6004 = vsel %vm4004, %v5968, 0
      %v6007 = vsel %vm4004, %v5969, 0
      %v6010 = vsel %vm4004, %v5970, 0
      %v6013 = vsel %vm4004, %v5971, 0
      %v6016 = vsel %vm4004, %v5972, 0
      %v6019 = vsel %vm4004, %v5973, 0
      %v6022 = vsel %vm4004, %v5974, 0
      %v6025 = vsel %vm4004, %v5975, 0
      %v6028 = vsel %vm4004, %v5976, 0
      %v6031 = vsel %vm4004, %v5977, 0
      %v6034 = vsel %vm4004, %v5978, 0
      %v6037 = vsel %vm4004, %v5979, 0
      %v6040 = vsel %vm4004, %v5980, 0
      %v6043 = vsel %vm4004, %v5981, 0
      %v6046 = vsel %vm4004, %v5982, 0
      %v6049 = vsel %vm4004, %v5983, 0
      %v6052 = vsel %vm4004, %v5984, 0
      %v6055 = vsel %vm4004, %v5985, 0
      %v6058 = vsel %vm4004, %v5986, 0
      %v6061 = vsel %vm4004, %v5987, 0
      %v6064 = vsel %vm4004, %v5988, 0
      %v6067 = vsel %vm4004, %v5989, 0
      %v6070 = vsel %vm4004, %v5990, 0
      %v6073 = vsel %vm4004, %v5991, 0
      %v6076 = vsel %vm4004, %v5992, 0
      %v6079 = vsel %vm4004, %v5993, 0
      %v6082 = vsel %vm4004, %v5994, 0
      %v6085 = vsel %vm4004, %v5995, 0
      %v6088 = vsel %vm4004, %v5996, 0
      %v6091 = vsel %vm4004, %v5997, 0
      %v6094 = vsel %vm4004, %v5998, 0
      %v6097 = vsel %vm4004, %v5999, 0
      %6099 = vmatprep.subr.mxu0 0.0
      %6100 = vmatpush1.msra.mxu0 %v6001
      %6101 = vmatprep.subr.mxu0 0.0
      %6102 = vmatpush1.msra.mxu0 %v6002
      %6103 = vmatprep.subr.mxu0 0.0
      %6104 = vmatpush1.msra.mxu0 0.0
      %6105 = vmatprep.subr.mxu0 0.0
      %6106 = vmatpush1.msra.mxu0 0.0
      %6107 = vmatprep.subr.mxu0 0.0
      %6108 = vmatpush1.msra.mxu0 0.0
      %6109 = vmatprep.subr.mxu0 0.0
      %6110 = vmatpush1.msra.mxu0 0.0
      %6111 = vmatprep.subr.mxu0 0.0
      %6112 = vmatpush1.msra.mxu0 0.0
      %6113 = vmatprep.subr.mxu0 0.0
      %6114 = vmatpush1.msra.mxu0 0.0
      %6115 = vmatprep.subr.mxu0 0.0
      %6116 = vmatpush1.msra.mxu0 0.0
      %6117 = vmatprep.subr.mxu0 0.0
      %6118 = vmatpush1.msra.mxu0 0.0
      %6119 = vmatprep.subr.mxu0 0.0
      %6120 = vmatpush1.msra.mxu0 0.0
      %6121 = vmatprep.subr.mxu0 0.0
      %6122 = vmatpush1.msra.mxu0 0.0
      %6123 = vmatprep.subr.mxu0 0.0
      %6124 = vmatpush1.msra.mxu0 0.0
      %6125 = vmatprep.subr.mxu0 0.0
      %6126 = vmatpush1.msra.mxu0 0.0
      %6127 = vmatprep.subr.mxu0 0.0
      %6128 = vmatpush1.msra.mxu0 0.0
      %6129 = vmatprep.subr.mxu0 0.0
      %6130 = vmatpush1.msra.mxu0 0.0
      %6131 = vmatprep.subr.mxu0 0.0
      %6132 = vmatpush1.msra.mxu0 0.0
      %6133 = vmatprep.subr.mxu0 0.0
      %6134 = vmatpush1.msra.mxu0 0.0
      %6135 = vmatprep.subr.mxu0 0.0
      %6136 = vmatpush1.msra.mxu0 0.0
      %6137 = vmatprep.subr.mxu0 0.0
      %6138 = vmatpush1.msra.mxu0 0.0
      %6139 = vmatprep.subr.mxu0 0.0
      %6140 = vmatpush1.msra.mxu0 0.0
      %6141 = vmatprep.subr.mxu0 0.0
      %6142 = vmatpush1.msra.mxu0 0.0
      %6143 = vmatprep.subr.mxu0 0.0
      %6144 = vmatpush1.msra.mxu0 0.0
      %6145 = vmatprep.subr.mxu0 0.0
      %6146 = vmatpush1.msra.mxu0 0.0
      %6147 = vmatprep.subr.mxu0 0.0
      %6148 = vmatpush1.msra.mxu0 0.0
      %6149 = vmatprep.subr.mxu0 0.0
      %6150 = vmatpush1.msra.mxu0 0.0
      %6151 = vmatprep.subr.mxu0 0.0
      %6152 = vmatpush1.msra.mxu0 0.0
      %6153 = vmatprep.subr.mxu0 0.0
      %6154 = vmatpush1.msra.mxu0 0.0
      %6155 = vmatprep.subr.mxu0 0.0
      %6156 = vmatpush1.msra.mxu0 0.0
      %6157 = vmatprep.subr.mxu0 0.0
      %6158 = vmatpush1.msra.mxu0 0.0
      %6159 = vmatprep.subr.mxu0 0.0
      %6160 = vmatpush1.msra.mxu0 0.0
      %6161 = vmatprep.subr.mxu0 0.0
      %6162 = vmatpush1.msra.mxu0 0.0
      %6163 = vmatprep.mubr.f32.mxu0 0.0
      %6164 = vmatmul.mubr.f32.gmra.mrb[0].mxu0 %v6004
      %v6165 = vpop.f32.mrb[0].mxu0
      %v6166 = vadd.f32 0.0, %v6165
      %v6167 = vpop.f32.mrb[0].mxu0
      %6168 = vmatprep.mubr.f32.mxu0 0.0
      %6169 = vmatmul.mubr.f32.gmra.mrb[0].mxu0 %v6007
      %v6170 = vpop.f32.mrb[0].mxu0
      %v6171 = vadd.f32 0.0, %v6170
      %v6172 = vpop.f32.mrb[0].mxu0
      %6173 = vmatprep.mubr.f32.mxu0 0.0
      %6174 = vmatmul.mubr.f32.gmra.mrb[0].mxu0 %v6010
      %v6175 = vpop.f32.mrb[0].mxu0
      %v6176 = vadd.f32 0.0, %v6175
      %v6177 = vpop.f32.mrb[0].mxu0
      %6178 = vmatprep.mubr.f32.mxu0 0.0
      %6179 = vmatmul.mubr.f32.gmra.mrb[0].mxu0 %v6013
      %v6180 = vpop.f32.mrb[0].mxu0
      %v6181 = vadd.f32 0.0, %v6180
      %v6182 = vpop.f32.mrb[0].mxu0
      %6183 = vmatprep.mubr.f32.mxu0 0.0
      %6184 = vmatmul.mubr.f32.gmra.mrb[0].mxu0 %v6016
      %v6185 = vpop.f32.mrb[0].mxu0
      %v6186 = vadd.f32 0.0, %v6185
      %v6187 = vpop.f32.mrb[0].mxu0
      %6188 = vmatprep.mubr.f32.mxu0 0.0
      %6189 = vmatmul.mubr.f32.gmra.mrb[0].mxu0 %v6019
      %v6190 = vpop.f32.mrb[0].mxu0
      %v6191 = vadd.f32 0.0, %v6190
      %v6192 = vpop.f32.mrb[0].mxu0
      %6193 = vmatprep.mubr.f32.mxu0 0.0
      %6194 = vmatmul.mubr.f32.gmra.mrb[0].mxu0 %v6022
      %v6195 = vpop.f32.mrb[0].mxu0
      %v6196 = vadd.f32 0.0, %v6195
      %v6197 = vpop.f32.mrb[0].mxu0
      %6198 = vmatprep.mubr.f32.mxu0 0.0
      %6199 = vmatmul.mubr.f32.gmra.mrb[0].mxu0 %v6025
      %v6200 = vpop.f32.mrb[0].mxu0
      %v6201 = vadd.f32 0.0, %v6200
      %v6202 = vpop.f32.mrb[0].mxu0
      %6203 = vmatprep.mubr.f32.mxu0 0.0
      %6204 = vmatmul.mubr.f32.gmra.mrb[0].mxu0 %v6028
      %v6205 = vpop.f32.mrb[0].mxu0
      %v6206 = vadd.f32 0.0, %v6205
      %v6207 = vpop.f32.mrb[0].mxu0
      %6208 = vmatprep.mubr.f32.mxu0 0.0
      %6209 = vmatmul.mubr.f32.gmra.mrb[0].mxu0 %v6031
      %v6210 = vpop.f32.mrb[0].mxu0
      %v6211 = vadd.f32 0.0, %v6210
      %v6212 = vpop.f32.mrb[0].mxu0
      %6213 = vmatprep.mubr.f32.mxu0 0.0
      %6214 = vmatmul.mubr.f32.gmra.mrb[0].mxu0 %v6034
      %v6215 = vpop.f32.mrb[0].mxu0
      %v6216 = vadd.f32 0.0, %v6215
      %v6217 = vpop.f32.mrb[0].mxu0
      %6218 = vmatprep.mubr.f32.mxu0 0.0
      %6219 = vmatmul.mubr.f32.gmra.mrb[0].mxu0 %v6037
      %v6220 = vpop.f32.mrb[0].mxu0
      %v6221 = vadd.f32 0.0, %v6220
      %v6222 = vpop.f32.mrb[0].mxu0
      %6223 = vmatprep.mubr.f32.mxu0 0.0
      %6224 = vmatmul.mubr.f32.gmra.mrb[0].mxu0 %v6040
      %v6225 = vpop.f32.mrb[0].mxu0
      %v6226 = vadd.f32 0.0, %v6225
      %v6227 = vpop.f32.mrb[0].mxu0
      %6228 = vmatprep.mubr.f32.mxu0 0.0
      %6229 = vmatmul.mubr.f32.gmra.mrb[0].mxu0 %v6043
      %v6230 = vpop.f32.mrb[0].mxu0
      %v6231 = vadd.f32 0.0, %v6230
      %v6232 = vpop.f32.mrb[0].mxu0
      %6233 = vmatprep.mubr.f32.mxu0 0.0
      %6234 = vmatmul.mubr.f32.gmra.mrb[0].mxu0 %v6046
      %v6235 = vpop.f32.mrb[0].mxu0
      %v6236 = vadd.f32 0.0, %v6235
      %v6237 = vpop.f32.mrb[0].mxu0
      %6238 = vmatprep.mubr.f32.mxu0 0.0
      %6239 = vmatmul.mubr.f32.gmra.mrb[0].mxu0 %v6049
      %v6240 = vpop.f32.mrb[0].mxu0
      %v6241 = vadd.f32 0.0, %v6240
      %v6242 = vpop.f32.mrb[0].mxu0
      %6243 = vmatprep.mubr.f32.mxu0 0.0
      %6244 = vmatmul.mubr.f32.gmra.mrb[0].mxu0 %v6052
      %v6245 = vpop.f32.mrb[0].mxu0
      %v6246 = vadd.f32 0.0, %v6245
      %v6247 = vpop.f32.mrb[0].mxu0
      %6248 = vmatprep.mubr.f32.mxu0 0.0
      %6249 = vmatmul.mubr.f32.gmra.mrb[0].mxu0 %v6055
      %v6250 = vpop.f32.mrb[0].mxu0
      %v6251 = vadd.f32 0.0, %v6250
      %v6252 = vpop.f32.mrb[0].mxu0
      %6253 = vmatprep.mubr.f32.mxu0 0.0
      %6254 = vmatmul.mubr.f32.gmra.mrb[0].mxu0 %v6058
      %v6255 = vpop.f32.mrb[0].mxu0
      %v6256 = vadd.f32 0.0, %v6255
      %v6257 = vpop.f32.mrb[0].mxu0
      %6258 = vmatprep.mubr.f32.mxu0 0.0
      %6259 = vmatmul.mubr.f32.gmra.mrb[0].mxu0 %v6061
      %v6260 = vpop.f32.mrb[0].mxu0
      %v6261 = vadd.f32 0.0, %v6260
      %v6262 = vpop.f32.mrb[0].mxu0
      %6263 = vmatprep.mubr.f32.mxu0 0.0
      %6264 = vmatmul.mubr.f32.gmra.mrb[0].mxu0 %v6064
      %v6265 = vpop.f32.mrb[0].mxu0
      %v6266 = vadd.f32 0.0, %v6265
      %v6267 = vpop.f32.mrb[0].mxu0
      %6268 = vmatprep.mubr.f32.mxu0 0.0
      %6269 = vmatmul.mubr.f32.gmra.mrb[0].mxu0 %v6067
      %v6270 = vpop.f32.mrb[0].mxu0
      %v6271 = vadd.f32 0.0, %v6270
      %v6272 = vpop.f32.mrb[0].mxu0
      %6273 = vmatprep.mubr.f32.mxu0 0.0
      %6274 = vmatmul.mubr.f32.gmra.mrb[0].mxu0 %v6070
      %v6275 = vpop.f32.mrb[0].mxu0
      %v6276 = vadd.f32 0.0, %v6275
      %v6277 = vpop.f32.mrb[0].mxu0
      %6278 = vmatprep.mubr.f32.mxu0 0.0
      %6279 = vmatmul.mubr.f32.gmra.mrb[0].mxu0 %v6073
      %v6280 = vpop.f32.mrb[0].mxu0
      %v6281 = vadd.f32 0.0, %v6280
      %v6282 = vpop.f32.mrb[0].mxu0
      %6283 = vmatprep.mubr.f32.mxu0 0.0
      %6284 = vmatmul.mubr.f32.gmra.mrb[0].mxu0 %v6076
      %v6285 = vpop.f32.mrb[0].mxu0
      %v6286 = vadd.f32 0.0, %v6285
      %v6287 = vpop.f32.mrb[0].mxu0
      %6288 = vmatprep.mubr.f32.mxu0 0.0
      %6289 = vmatmul.mubr.f32.gmra.mrb[0].mxu0 %v6079
      %v6290 = vpop.f32.mrb[0].mxu0
      %v6291 = vadd.f32 0.0, %v6290
      %v6292 = vpop.f32.mrb[0].mxu0
      %6293 = vmatprep.mubr.f32.mxu0 0.0
      %6294 = vmatmul.mubr.f32.gmra.mrb[0].mxu0 %v6082
      %v6295 = vpop.f32.mrb[0].mxu0
      %v6296 = vadd.f32 0.0, %v6295
      %v6297 = vpop.f32.mrb[0].mxu0
      %6298 = vmatprep.mubr.f32.mxu0 0.0
      %6299 = vmatmul.mubr.f32.gmra.mrb[0].mxu0 %v6085
      %v6300 = vpop.f32.mrb[0].mxu0
      %v6301 = vadd.f32 0.0, %v6300
      %v6302 = vpop.f32.mrb[0].mxu0
      %6303 = vmatprep.mubr.f32.mxu0 0.0
      %6304 = vmatmul.mubr.f32.gmra.mrb[0].mxu0 %v6088
      %v6305 = vpop.f32.mrb[0].mxu0
      %v6306 = vadd.f32 0.0, %v6305
      %v6307 = vpop.f32.mrb[0].mxu0
      %6308 = vmatprep.mubr.f32.mxu0 0.0
      %6309 = vmatmul.mubr.f32.gmra.mrb[0].mxu0 %v6091
      %v6310 = vpop.f32.mrb[0].mxu0
      %v6311 = vadd.f32 0.0, %v6310
      %v6312 = vpop.f32.mrb[0].mxu0
      %6313 = vmatprep.mubr.f32.mxu0 0.0
      %6314 = vmatmul.mubr.f32.gmra.mrb[0].mxu0 %v6094
      %v6315 = vpop.f32.mrb[0].mxu0
      %v6316 = vadd.f32 0.0, %v6315
      %v6317 = vpop.f32.mrb[0].mxu0
      %6318 = vmatprep.mubr.f32.mxu0 0.0
      %6319 = vmatmul.mubr.f32.gmra.mrb[0].mxu0 %v6097
      %v6320 = vpop.f32.mrb[0].mxu0
      %v6321 = vadd.f32 0.0, %v6320
      %v6322 = vpop.f32.mrb[0].mxu0
      %6323 = vdwg.mxu0
      %v6324 = vadd.f32 %v5936, %v6166
      %v6325 = vadd.f32 %v5937, %v6171
      %v6326 = vadd.f32 %v5938, %v6176
      %v6327 = vadd.f32 %v5939, %v6181
      %v6328 = vadd.f32 %v5940, %v6186
      %v6329 = vadd.f32 %v5941, %v6191
      %v6330 = vadd.f32 %v5942, %v6196
      %v6331 = vadd.f32 %v5943, %v6201
      %v6332 = vadd.f32 %v5944, %v6206
      %v6333 = vadd.f32 %v5945, %v6211
      %v6334 = vadd.f32 %v5946, %v6216
      %v6335 = vadd.f32 %v5947, %v6221
      %v6336 = vadd.f32 %v5948, %v6226
      %v6337 = vadd.f32 %v5949, %v6231
      %v6338 = vadd.f32 %v5950, %v6236
      %v6339 = vadd.f32 %v5951, %v6241
      %v6340 = vadd.f32 %v5952, %v6246
      %v6341 = vadd.f32 %v5953, %v6251
      %v6342 = vadd.f32 %v5954, %v6256
      %v6343 = vadd.f32 %v5955, %v6261
      %v6344 = vadd.f32 %v5956, %v6266
      %v6345 = vadd.f32 %v5957, %v6271
      %v6346 = vadd.f32 %v5958, %v6276
      %v6347 = vadd.f32 %v5959, %v6281
      %v6348 = vadd.f32 %v5960, %v6286
      %v6349 = vadd.f32 %v5961, %v6291
      %v6350 = vadd.f32 %v5962, %v6296
      %v6351 = vadd.f32 %v5963, %v6301
      %v6352 = vadd.f32 %v5964, %v6306
      %v6353 = vadd.f32 %v5965, %v6311
      %v6354 = vadd.f32 %v5966, %v6316
      %v6355 = vadd.f32 %v5967, %v6321
      %s6356 = scalar_lea.vmem [#allocation3], 48
      %v6357 = vld [vmem:[%s6356] sm:$0xff]
      %v6358 = vld [vmem:[%s6356 + $0x8] sm:$0xff]
      %v6359 = vld [vmem:[%s6356 + $0x18] sm:$0xff]
      %v6360 = vld [vmem:[%s6356 + $0x20] sm:$0xff]
      %v6361 = vld [vmem:[%s6356 + $0x30] sm:$0xff]
      %v6362 = vld [vmem:[%s6356 + $0x38] sm:$0xff]
      %v6363 = vld [vmem:[%s6356 + $0x48] sm:$0xff]
      %v6364 = vld [vmem:[%s6356 + $0x50] sm:$0xff]
      %v6365 = vld [vmem:[%s6356 + $0x60] sm:$0xff]
      %v6366 = vld [vmem:[%s6356 + $0x68] sm:$0xff]
      %v6367 = vld [vmem:[%s6356 + $0x78] sm:$0xff]
      %v6368 = vld [vmem:[%s6356 + $0x80] sm:$0xff]
      %v6369 = vld [vmem:[%s6356 + $0x90] sm:$0xff]
      %v6370 = vld [vmem:[%s6356 + $0x98] sm:$0xff]
      %v6371 = vld [vmem:[%s6356 + $0xa8] sm:$0xff]
      %v6372 = vld [vmem:[%s6356 + $0xb0] sm:$0xff]
      %v6373 = vld [vmem:[%s6356 + $0xc0] sm:$0xff]
      %v6374 = vld [vmem:[%s6356 + $0xc8] sm:$0xff]
      %v6375 = vld [vmem:[%s6356 + $0xd8] sm:$0xff]
      %v6376 = vld [vmem:[%s6356 + $0xe0] sm:$0xff]
      %v6377 = vld [vmem:[%s6356 + $0xf0] sm:$0xff]
      %v6378 = vld [vmem:[%s6356 + $0xf8] sm:$0xff]
      %v6379 = vld [vmem:[%s6356 + $0x108] sm:$0xff]
      %v6380 = vld [vmem:[%s6356 + $0x110] sm:$0xff]
      %v6381 = vld [vmem:[%s6356 + $0x120] sm:$0xff]
      %v6382 = vld [vmem:[%s6356 + $0x128] sm:$0xff]
      %v6383 = vld [vmem:[%s6356 + $0x138] sm:$0xff]
      %v6384 = vld [vmem:[%s6356 + $0x140] sm:$0xff]
      %v6385 = vld [vmem:[%s6356 + $0x150] sm:$0xff]
      %v6386 = vld [vmem:[%s6356 + $0x158] sm:$0xff]
      %v6387 = vld [vmem:[%s6356 + $0x168] sm:$0xff]
      %v6388 = vld [vmem:[%s6356 + $0x170] sm:$0xff]
      %s6389 = scalar_lea.vmem %s4, 96
      %v6390 = vld [vmem:[%s6389] sm:$0xff]
      %v6391 = vld [vmem:[%s6389 + $0x8] sm:$0xff]
      %v6393 = vsel %vm4004, %v6357, 0
      %v6396 = vsel %vm4004, %v6358, 0
      %v6399 = vsel %vm4004, %v6359, 0
      %v6402 = vsel %vm4004, %v6360, 0
      %v6405 = vsel %vm4004, %v6361, 0
      %v6408 = vsel %vm4004, %v6362, 0
      %v6411 = vsel %vm4004, %v6363, 0
      %v6414 = vsel %vm4004, %v6364, 0
      %v6417 = vsel %vm4004, %v6365, 0
      %v6420 = vsel %vm4004, %v6366, 0
      %v6423 = vsel %vm4004, %v6367, 0
      %v6426 = vsel %vm4004, %v6368, 0
      %v6429 = vsel %vm4004, %v6369, 0
      %v6432 = vsel %vm4004, %v6370, 0
      %v6435 = vsel %vm4004, %v6371, 0
      %v6438 = vsel %vm4004, %v6372, 0
      %v6441 = vsel %vm4004, %v6373, 0
      %v6444 = vsel %vm4004, %v6374, 0
      %v6447 = vsel %vm4004, %v6375, 0
      %v6450 = vsel %vm4004, %v6376, 0
      %v6453 = vsel %vm4004, %v6377, 0
      %v6456 = vsel %vm4004, %v6378, 0
      %v6459 = vsel %vm4004, %v6379, 0
      %v6462 = vsel %vm4004, %v6380, 0
      %v6465 = vsel %vm4004, %v6381, 0
      %v6468 = vsel %vm4004, %v6382, 0
      %v6471 = vsel %vm4004, %v6383, 0
      %v6474 = vsel %vm4004, %v6384, 0
      %v6477 = vsel %vm4004, %v6385, 0
      %v6480 = vsel %vm4004, %v6386, 0
      %v6483 = vsel %vm4004, %v6387, 0
      %v6486 = vsel %vm4004, %v6388, 0
      %6488 = vmatprep.subr.mxu0 0.0
      %6489 = vmatpush1.msra.mxu0 %v6390
      %6490 = vmatprep.subr.mxu0 0.0
      %6491 = vmatpush1.msra.mxu0 %v6391
      %6492 = vmatprep.subr.mxu0 0.0
      %6493 = vmatpush1.msra.mxu0 0.0
      %6494 = vmatprep.subr.mxu0 0.0
      %6495 = vmatpush1.msra.mxu0 0.0
      %6496 = vmatprep.subr.mxu0 0.0
      %6497 = vmatpush1.msra.mxu0 0.0
      %6498 = vmatprep.subr.mxu0 0.0
      %6499 = vmatpush1.msra.mxu0 0.0
      %6500 = vmatprep.subr.mxu0 0.0
      %6501 = vmatpush1.msra.mxu0 0.0
      %6502 = vmatprep.subr.mxu0 0.0
      %6503 = vmatpush1.msra.mxu0 0.0
      %6504 = vmatprep.subr.mxu0 0.0
      %6505 = vmatpush1.msra.mxu0 0.0
      %6506 = vmatprep.subr.mxu0 0.0
      %6507 = vmatpush1.msra.mxu0 0.0
      %6508 = vmatprep.subr.mxu0 0.0
      %6509 = vmatpush1.msra.mxu0 0.0
      %6510 = vmatprep.subr.mxu0 0.0
      %6511 = vmatpush1.msra.mxu0 0.0
      %6512 = vmatprep.subr.mxu0 0.0
      %6513 = vmatpush1.msra.mxu0 0.0
      %6514 = vmatprep.subr.mxu0 0.0
      %6515 = vmatpush1.msra.mxu0 0.0
      %6516 = vmatprep.subr.mxu0 0.0
      %6517 = vmatpush1.msra.mxu0 0.0
      %6518 = vmatprep.subr.mxu0 0.0
      %6519 = vmatpush1.msra.mxu0 0.0
      %6520 = vmatprep.subr.mxu0 0.0
      %6521 = vmatpush1.msra.mxu0 0.0
      %6522 = vmatprep.subr.mxu0 0.0
      %6523 = vmatpush1.msra.mxu0 0.0
      %6524 = vmatprep.subr.mxu0 0.0
      %6525 = vmatpush1.msra.mxu0 0.0
      %6526 = vmatprep.subr.mxu0 0.0
      %6527 = vmatpush1.msra.mxu0 0.0
      %6528 = vmatprep.subr.mxu0 0.0
      %6529 = vmatpush1.msra.mxu0 0.0
      %6530 = vmatprep.subr.mxu0 0.0
      %6531 = vmatpush1.msra.mxu0 0.0
      %6532 = vmatprep.subr.mxu0 0.0
      %6533 = vmatpush1.msra.mxu0 0.0
      %6534 = vmatprep.subr.mxu0 0.0
      %6535 = vmatpush1.msra.mxu0 0.0
      %6536 = vmatprep.subr.mxu0 0.0
      %6537 = vmatpush1.msra.mxu0 0.0
      %6538 = vmatprep.subr.mxu0 0.0
      %6539 = vmatpush1.msra.mxu0 0.0
      %6540 = vmatprep.subr.mxu0 0.0
      %6541 = vmatpush1.msra.mxu0 0.0
      %6542 = vmatprep.subr.mxu0 0.0
      %6543 = vmatpush1.msra.mxu0 0.0
      %6544 = vmatprep.subr.mxu0 0.0
      %6545 = vmatpush1.msra.mxu0 0.0
      %6546 = vmatprep.subr.mxu0 0.0
      %6547 = vmatpush1.msra.mxu0 0.0
      %6548 = vmatprep.subr.mxu0 0.0
      %6549 = vmatpush1.msra.mxu0 0.0
      %6550 = vmatprep.subr.mxu0 0.0
      %6551 = vmatpush1.msra.mxu0 0.0
      %6552 = vmatprep.mubr.f32.mxu0 0.0
      %6553 = vmatmul.mubr.f32.gmra.mrb[0].mxu0 %v6393
      %v6554 = vpop.f32.mrb[0].mxu0
      %v6555 = vadd.f32 0.0, %v6554
      %v6556 = vpop.f32.mrb[0].mxu0
      %6557 = vmatprep.mubr.f32.mxu0 0.0
      %6558 = vmatmul.mubr.f32.gmra.mrb[0].mxu0 %v6396
      %v6559 = vpop.f32.mrb[0].mxu0
      %v6560 = vadd.f32 0.0, %v6559
      %v6561 = vpop.f32.mrb[0].mxu0
      %6562 = vmatprep.mubr.f32.mxu0 0.0
      %6563 = vmatmul.mubr.f32.gmra.mrb[0].mxu0 %v6399
      %v6564 = vpop.f32.mrb[0].mxu0
      %v6565 = vadd.f32 0.0, %v6564
      %v6566 = vpop.f32.mrb[0].mxu0
      %6567 = vmatprep.mubr.f32.mxu0 0.0
      %6568 = vmatmul.mubr.f32.gmra.mrb[0].mxu0 %v6402
      %v6569 = vpop.f32.mrb[0].mxu0
      %v6570 = vadd.f32 0.0, %v6569
      %v6571 = vpop.f32.mrb[0].mxu0
      %6572 = vmatprep.mubr.f32.mxu0 0.0
      %6573 = vmatmul.mubr.f32.gmra.mrb[0].mxu0 %v6405
      %v6574 = vpop.f32.mrb[0].mxu0
      %v6575 = vadd.f32 0.0, %v6574
      %v6576 = vpop.f32.mrb[0].mxu0
      %6577 = vmatprep.mubr.f32.mxu0 0.0
      %6578 = vmatmul.mubr.f32.gmra.mrb[0].mxu0 %v6408
      %v6579 = vpop.f32.mrb[0].mxu0
      %v6580 = vadd.f32 0.0, %v6579
      %v6581 = vpop.f32.mrb[0].mxu0
      %6582 = vmatprep.mubr.f32.mxu0 0.0
      %6583 = vmatmul.mubr.f32.gmra.mrb[0].mxu0 %v6411
      %v6584 = vpop.f32.mrb[0].mxu0
      %v6585 = vadd.f32 0.0, %v6584
      %v6586 = vpop.f32.mrb[0].mxu0
      %6587 = vmatprep.mubr.f32.mxu0 0.0
      %6588 = vmatmul.mubr.f32.gmra.mrb[0].mxu0 %v6414
      %v6589 = vpop.f32.mrb[0].mxu0
      %v6590 = vadd.f32 0.0, %v6589
      %v6591 = vpop.f32.mrb[0].mxu0
      %6592 = vmatprep.mubr.f32.mxu0 0.0
      %6593 = vmatmul.mubr.f32.gmra.mrb[0].mxu0 %v6417
      %v6594 = vpop.f32.mrb[0].mxu0
      %v6595 = vadd.f32 0.0, %v6594
      %v6596 = vpop.f32.mrb[0].mxu0
      %6597 = vmatprep.mubr.f32.mxu0 0.0
      %6598 = vmatmul.mubr.f32.gmra.mrb[0].mxu0 %v6420
      %v6599 = vpop.f32.mrb[0].mxu0
      %v6600 = vadd.f32 0.0, %v6599
      %v6601 = vpop.f32.mrb[0].mxu0
      %6602 = vmatprep.mubr.f32.mxu0 0.0
      %6603 = vmatmul.mubr.f32.gmra.mrb[0].mxu0 %v6423
      %v6604 = vpop.f32.mrb[0].mxu0
      %v6605 = vadd.f32 0.0, %v6604
      %v6606 = vpop.f32.mrb[0].mxu0
      %6607 = vmatprep.mubr.f32.mxu0 0.0
      %6608 = vmatmul.mubr.f32.gmra.mrb[0].mxu0 %v6426
      %v6609 = vpop.f32.mrb[0].mxu0
      %v6610 = vadd.f32 0.0, %v6609
      %v6611 = vpop.f32.mrb[0].mxu0
      %6612 = vmatprep.mubr.f32.mxu0 0.0
      %6613 = vmatmul.mubr.f32.gmra.mrb[0].mxu0 %v6429
      %v6614 = vpop.f32.mrb[0].mxu0
      %v6615 = vadd.f32 0.0, %v6614
      %v6616 = vpop.f32.mrb[0].mxu0
      %6617 = vmatprep.mubr.f32.mxu0 0.0
      %6618 = vmatmul.mubr.f32.gmra.mrb[0].mxu0 %v6432
      %v6619 = vpop.f32.mrb[0].mxu0
      %v6620 = vadd.f32 0.0, %v6619
      %v6621 = vpop.f32.mrb[0].mxu0
      %6622 = vmatprep.mubr.f32.mxu0 0.0
      %6623 = vmatmul.mubr.f32.gmra.mrb[0].mxu0 %v6435
      %v6624 = vpop.f32.mrb[0].mxu0
      %v6625 = vadd.f32 0.0, %v6624
      %v6626 = vpop.f32.mrb[0].mxu0
      %6627 = vmatprep.mubr.f32.mxu0 0.0
      %6628 = vmatmul.mubr.f32.gmra.mrb[0].mxu0 %v6438
      %v6629 = vpop.f32.mrb[0].mxu0
      %v6630 = vadd.f32 0.0, %v6629
      %v6631 = vpop.f32.mrb[0].mxu0
      %6632 = vmatprep.mubr.f32.mxu0 0.0
      %6633 = vmatmul.mubr.f32.gmra.mrb[0].mxu0 %v6441
      %v6634 = vpop.f32.mrb[0].mxu0
      %v6635 = vadd.f32 0.0, %v6634
      %v6636 = vpop.f32.mrb[0].mxu0
      %6637 = vmatprep.mubr.f32.mxu0 0.0
      %6638 = vmatmul.mubr.f32.gmra.mrb[0].mxu0 %v6444
      %v6639 = vpop.f32.mrb[0].mxu0
      %v6640 = vadd.f32 0.0, %v6639
      %v6641 = vpop.f32.mrb[0].mxu0
      %6642 = vmatprep.mubr.f32.mxu0 0.0
      %6643 = vmatmul.mubr.f32.gmra.mrb[0].mxu0 %v6447
      %v6644 = vpop.f32.mrb[0].mxu0
      %v6645 = vadd.f32 0.0, %v6644
      %v6646 = vpop.f32.mrb[0].mxu0
      %6647 = vmatprep.mubr.f32.mxu0 0.0
      %6648 = vmatmul.mubr.f32.gmra.mrb[0].mxu0 %v6450
      %v6649 = vpop.f32.mrb[0].mxu0
      %v6650 = vadd.f32 0.0, %v6649
      %v6651 = vpop.f32.mrb[0].mxu0
      %6652 = vmatprep.mubr.f32.mxu0 0.0
      %6653 = vmatmul.mubr.f32.gmra.mrb[0].mxu0 %v6453
      %v6654 = vpop.f32.mrb[0].mxu0
      %v6655 = vadd.f32 0.0, %v6654
      %v6656 = vpop.f32.mrb[0].mxu0
      %6657 = vmatprep.mubr.f32.mxu0 0.0
      %6658 = vmatmul.mubr.f32.gmra.mrb[0].mxu0 %v6456
      %v6659 = vpop.f32.mrb[0].mxu0
      %v6660 = vadd.f32 0.0, %v6659
      %v6661 = vpop.f32.mrb[0].mxu0
      %6662 = vmatprep.mubr.f32.mxu0 0.0
      %6663 = vmatmul.mubr.f32.gmra.mrb[0].mxu0 %v6459
      %v6664 = vpop.f32.mrb[0].mxu0
      %v6665 = vadd.f32 0.0, %v6664
      %v6666 = vpop.f32.mrb[0].mxu0
      %6667 = vmatprep.mubr.f32.mxu0 0.0
      %6668 = vmatmul.mubr.f32.gmra.mrb[0].mxu0 %v6462
      %v6669 = vpop.f32.mrb[0].mxu0
      %v6670 = vadd.f32 0.0, %v6669
      %v6671 = vpop.f32.mrb[0].mxu0
      %6672 = vmatprep.mubr.f32.mxu0 0.0
      %6673 = vmatmul.mubr.f32.gmra.mrb[0].mxu0 %v6465
      %v6674 = vpop.f32.mrb[0].mxu0
      %v6675 = vadd.f32 0.0, %v6674
      %v6676 = vpop.f32.mrb[0].mxu0
      %6677 = vmatprep.mubr.f32.mxu0 0.0
      %6678 = vmatmul.mubr.f32.gmra.mrb[0].mxu0 %v6468
      %v6679 = vpop.f32.mrb[0].mxu0
      %v6680 = vadd.f32 0.0, %v6679
      %v6681 = vpop.f32.mrb[0].mxu0
      %6682 = vmatprep.mubr.f32.mxu0 0.0
      %6683 = vmatmul.mubr.f32.gmra.mrb[0].mxu0 %v6471
      %v6684 = vpop.f32.mrb[0].mxu0
      %v6685 = vadd.f32 0.0, %v6684
      %v6686 = vpop.f32.mrb[0].mxu0
      %6687 = vmatprep.mubr.f32.mxu0 0.0
      %6688 = vmatmul.mubr.f32.gmra.mrb[0].mxu0 %v6474
      %v6689 = vpop.f32.mrb[0].mxu0
      %v6690 = vadd.f32 0.0, %v6689
      %v6691 = vpop.f32.mrb[0].mxu0
      %6692 = vmatprep.mubr.f32.mxu0 0.0
      %6693 = vmatmul.mubr.f32.gmra.mrb[0].mxu0 %v6477
      %v6694 = vpop.f32.mrb[0].mxu0
      %v6695 = vadd.f32 0.0, %v6694
      %v6696 = vpop.f32.mrb[0].mxu0
      %6697 = vmatprep.mubr.f32.mxu0 0.0
      %6698 = vmatmul.mubr.f32.gmra.mrb[0].mxu0 %v6480
      %v6699 = vpop.f32.mrb[0].mxu0
      %v6700 = vadd.f32 0.0, %v6699
      %v6701 = vpop.f32.mrb[0].mxu0
      %6702 = vmatprep.mubr.f32.mxu0 0.0
      %6703 = vmatmul.mubr.f32.gmra.mrb[0].mxu0 %v6483
      %v6704 = vpop.f32.mrb[0].mxu0
      %v6705 = vadd.f32 0.0, %v6704
      %v6706 = vpop.f32.mrb[0].mxu0
      %6707 = vmatprep.mubr.f32.mxu0 0.0
      %6708 = vmatmul.mubr.f32.gmra.mrb[0].mxu0 %v6486
      %v6709 = vpop.f32.mrb[0].mxu0
      %v6710 = vadd.f32 0.0, %v6709
      %v6711 = vpop.f32.mrb[0].mxu0
      %6712 = vdwg.mxu0
      %v6713 = vadd.f32 %v6324, %v6555
      %v6714 = vadd.f32 %v6325, %v6560
      %v6715 = vadd.f32 %v6326, %v6565
      %v6716 = vadd.f32 %v6327, %v6570
      %v6717 = vadd.f32 %v6328, %v6575
      %v6718 = vadd.f32 %v6329, %v6580
      %v6719 = vadd.f32 %v6330, %v6585
      %v6720 = vadd.f32 %v6331, %v6590
      %v6721 = vadd.f32 %v6332, %v6595
      %v6722 = vadd.f32 %v6333, %v6600
      %v6723 = vadd.f32 %v6334, %v6605
      %v6724 = vadd.f32 %v6335, %v6610
      %v6725 = vadd.f32 %v6336, %v6615
      %v6726 = vadd.f32 %v6337, %v6620
      %v6727 = vadd.f32 %v6338, %v6625
      %v6728 = vadd.f32 %v6339, %v6630
      %v6729 = vadd.f32 %v6340, %v6635
      %v6730 = vadd.f32 %v6341, %v6640
      %v6731 = vadd.f32 %v6342, %v6645
      %v6732 = vadd.f32 %v6343, %v6650
      %v6733 = vadd.f32 %v6344, %v6655
      %v6734 = vadd.f32 %v6345, %v6660
      %v6735 = vadd.f32 %v6346, %v6665
      %v6736 = vadd.f32 %v6347, %v6670
      %v6737 = vadd.f32 %v6348, %v6675
      %v6738 = vadd.f32 %v6349, %v6680
      %v6739 = vadd.f32 %v6350, %v6685
      %v6740 = vadd.f32 %v6351, %v6690
      %v6741 = vadd.f32 %v6352, %v6695
      %v6742 = vadd.f32 %v6353, %v6700
      %v6743 = vadd.f32 %v6354, %v6705
      %v6744 = vadd.f32 %v6355, %v6710
      %v6745 = vld [vmem:[%s6356 + $0x1] sm:$0xff]
      %v6746 = vld [vmem:[%s6356 + $0x9] sm:$0xff]
      %v6747 = vld [vmem:[%s6356 + $0x19] sm:$0xff]
      %v6748 = vld [vmem:[%s6356 + $0x21] sm:$0xff]
      %v6749 = vld [vmem:[%s6356 + $0x31] sm:$0xff]
      %v6750 = vld [vmem:[%s6356 + $0x39] sm:$0xff]
      %v6751 = vld [vmem:[%s6356 + $0x49] sm:$0xff]
      %v6752 = vld [vmem:[%s6356 + $0x51] sm:$0xff]
      %v6753 = vld [vmem:[%s6356 + $0x61] sm:$0xff]
      %v6754 = vld [vmem:[%s6356 + $0x69] sm:$0xff]
      %v6755 = vld [vmem:[%s6356 + $0x79] sm:$0xff]
      %v6756 = vld [vmem:[%s6356 + $0x81] sm:$0xff]
      %v6757 = vld [vmem:[%s6356 + $0x91] sm:$0xff]
      %v6758 = vld [vmem:[%s6356 + $0x99] sm:$0xff]
      %v6759 = vld [vmem:[%s6356 + $0xa9] sm:$0xff]
      %v6760 = vld [vmem:[%s6356 + $0xb1] sm:$0xff]
      %v6761 = vld [vmem:[%s6356 + $0xc1] sm:$0xff]
      %v6762 = vld [vmem:[%s6356 + $0xc9] sm:$0xff]
      %v6763 = vld [vmem:[%s6356 + $0xd9] sm:$0xff]
      %v6764 = vld [vmem:[%s6356 + $0xe1] sm:$0xff]
      %v6765 = vld [vmem:[%s6356 + $0xf1] sm:$0xff]
      %v6766 = vld [vmem:[%s6356 + $0xf9] sm:$0xff]
      %v6767 = vld [vmem:[%s6356 + $0x109] sm:$0xff]
      %v6768 = vld [vmem:[%s6356 + $0x111] sm:$0xff]
      %v6769 = vld [vmem:[%s6356 + $0x121] sm:$0xff]
      %v6770 = vld [vmem:[%s6356 + $0x129] sm:$0xff]
      %v6771 = vld [vmem:[%s6356 + $0x139] sm:$0xff]
      %v6772 = vld [vmem:[%s6356 + $0x141] sm:$0xff]
      %v6773 = vld [vmem:[%s6356 + $0x151] sm:$0xff]
      %v6774 = vld [vmem:[%s6356 + $0x159] sm:$0xff]
      %v6775 = vld [vmem:[%s6356 + $0x169] sm:$0xff]
      %v6776 = vld [vmem:[%s6356 + $0x171] sm:$0xff]
      %s6777 = scalar_lea.vmem %s4, 112
      %v6778 = vld [vmem:[%s6777] sm:$0xff]
      %v6779 = vld [vmem:[%s6777 + $0x8] sm:$0xff]
      %v6781 = vsel %vm4004, %v6745, 0
      %v6784 = vsel %vm4004, %v6746, 0
      %v6787 = vsel %vm4004, %v6747, 0
      %v6790 = vsel %vm4004, %v6748, 0
      %v6793 = vsel %vm4004, %v6749, 0
      %v6796 = vsel %vm4004, %v6750, 0
      %v6799 = vsel %vm4004, %v6751, 0
      %v6802 = vsel %vm4004, %v6752, 0
      %v6805 = vsel %vm4004, %v6753, 0
      %v6808 = vsel %vm4004, %v6754, 0
      %v6811 = vsel %vm4004, %v6755, 0
      %v6814 = vsel %vm4004, %v6756, 0
      %v6817 = vsel %vm4004, %v6757, 0
      %v6820 = vsel %vm4004, %v6758, 0
      %v6823 = vsel %vm4004, %v6759, 0
      %v6826 = vsel %vm4004, %v6760, 0
      %v6829 = vsel %vm4004, %v6761, 0
      %v6832 = vsel %vm4004, %v6762, 0
      %v6835 = vsel %vm4004, %v6763, 0
      %v6838 = vsel %vm4004, %v6764, 0
      %v6841 = vsel %vm4004, %v6765, 0
      %v6844 = vsel %vm4004, %v6766, 0
      %v6847 = vsel %vm4004, %v6767, 0
      %v6850 = vsel %vm4004, %v6768, 0
      %v6853 = vsel %vm4004, %v6769, 0
      %v6856 = vsel %vm4004, %v6770, 0
      %v6859 = vsel %vm4004, %v6771, 0
      %v6862 = vsel %vm4004, %v6772, 0
      %v6865 = vsel %vm4004, %v6773, 0
      %v6868 = vsel %vm4004, %v6774, 0
      %v6871 = vsel %vm4004, %v6775, 0
      %v6874 = vsel %vm4004, %v6776, 0
      %6876 = vmatprep.subr.mxu0 0.0
      %6877 = vmatpush1.msra.mxu0 %v6778
      %6878 = vmatprep.subr.mxu0 0.0
      %6879 = vmatpush1.msra.mxu0 %v6779
      %6880 = vmatprep.subr.mxu0 0.0
      %6881 = vmatpush1.msra.mxu0 0.0
      %6882 = vmatprep.subr.mxu0 0.0
      %6883 = vmatpush1.msra.mxu0 0.0
      %6884 = vmatprep.subr.mxu0 0.0
      %6885 = vmatpush1.msra.mxu0 0.0
      %6886 = vmatprep.subr.mxu0 0.0
      %6887 = vmatpush1.msra.mxu0 0.0
      %6888 = vmatprep.subr.mxu0 0.0
      %6889 = vmatpush1.msra.mxu0 0.0
      %6890 = vmatprep.subr.mxu0 0.0
      %6891 = vmatpush1.msra.mxu0 0.0
      %6892 = vmatprep.subr.mxu0 0.0
      %6893 = vmatpush1.msra.mxu0 0.0
      %6894 = vmatprep.subr.mxu0 0.0
      %6895 = vmatpush1.msra.mxu0 0.0
      %6896 = vmatprep.subr.mxu0 0.0
      %6897 = vmatpush1.msra.mxu0 0.0
      %6898 = vmatprep.subr.mxu0 0.0
      %6899 = vmatpush1.msra.mxu0 0.0
      %6900 = vmatprep.subr.mxu0 0.0
      %6901 = vmatpush1.msra.mxu0 0.0
      %6902 = vmatprep.subr.mxu0 0.0
      %6903 = vmatpush1.msra.mxu0 0.0
      %6904 = vmatprep.subr.mxu0 0.0
      %6905 = vmatpush1.msra.mxu0 0.0
      %6906 = vmatprep.subr.mxu0 0.0
      %6907 = vmatpush1.msra.mxu0 0.0
      %6908 = vmatprep.subr.mxu0 0.0
      %6909 = vmatpush1.msra.mxu0 0.0
      %6910 = vmatprep.subr.mxu0 0.0
      %6911 = vmatpush1.msra.mxu0 0.0
      %6912 = vmatprep.subr.mxu0 0.0
      %6913 = vmatpush1.msra.mxu0 0.0
      %6914 = vmatprep.subr.mxu0 0.0
      %6915 = vmatpush1.msra.mxu0 0.0
      %6916 = vmatprep.subr.mxu0 0.0
      %6917 = vmatpush1.msra.mxu0 0.0
      %6918 = vmatprep.subr.mxu0 0.0
      %6919 = vmatpush1.msra.mxu0 0.0
      %6920 = vmatprep.subr.mxu0 0.0
      %6921 = vmatpush1.msra.mxu0 0.0
      %6922 = vmatprep.subr.mxu0 0.0
      %6923 = vmatpush1.msra.mxu0 0.0
      %6924 = vmatprep.subr.mxu0 0.0
      %6925 = vmatpush1.msra.mxu0 0.0
      %6926 = vmatprep.subr.mxu0 0.0
      %6927 = vmatpush1.msra.mxu0 0.0
      %6928 = vmatprep.subr.mxu0 0.0
      %6929 = vmatpush1.msra.mxu0 0.0
      %6930 = vmatprep.subr.mxu0 0.0
      %6931 = vmatpush1.msra.mxu0 0.0
      %6932 = vmatprep.subr.mxu0 0.0
      %6933 = vmatpush1.msra.mxu0 0.0
      %6934 = vmatprep.subr.mxu0 0.0
      %6935 = vmatpush1.msra.mxu0 0.0
      %6936 = vmatprep.subr.mxu0 0.0
      %6937 = vmatpush1.msra.mxu0 0.0
      %6938 = vmatprep.subr.mxu0 0.0
      %6939 = vmatpush1.msra.mxu0 0.0
      %6940 = vmatprep.mubr.f32.mxu0 0.0
      %6941 = vmatmul.mubr.f32.gmra.mrb[0].mxu0 %v6781
      %v6942 = vpop.f32.mrb[0].mxu0
      %v6943 = vadd.f32 0.0, %v6942
      %v6944 = vpop.f32.mrb[0].mxu0
      %6945 = vmatprep.mubr.f32.mxu0 0.0
      %6946 = vmatmul.mubr.f32.gmra.mrb[0].mxu0 %v6784
      %v6947 = vpop.f32.mrb[0].mxu0
      %v6948 = vadd.f32 0.0, %v6947
      %v6949 = vpop.f32.mrb[0].mxu0
      %6950 = vmatprep.mubr.f32.mxu0 0.0
      %6951 = vmatmul.mubr.f32.gmra.mrb[0].mxu0 %v6787
      %v6952 = vpop.f32.mrb[0].mxu0
      %v6953 = vadd.f32 0.0, %v6952
      %v6954 = vpop.f32.mrb[0].mxu0
      %6955 = vmatprep.mubr.f32.mxu0 0.0
      %6956 = vmatmul.mubr.f32.gmra.mrb[0].mxu0 %v6790
      %v6957 = vpop.f32.mrb[0].mxu0
      %v6958 = vadd.f32 0.0, %v6957
      %v6959 = vpop.f32.mrb[0].mxu0
      %6960 = vmatprep.mubr.f32.mxu0 0.0
      %6961 = vmatmul.mubr.f32.gmra.mrb[0].mxu0 %v6793
      %v6962 = vpop.f32.mrb[0].mxu0
      %v6963 = vadd.f32 0.0, %v6962
      %v6964 = vpop.f32.mrb[0].mxu0
      %6965 = vmatprep.mubr.f32.mxu0 0.0
      %6966 = vmatmul.mubr.f32.gmra.mrb[0].mxu0 %v6796
      %v6967 = vpop.f32.mrb[0].mxu0
      %v6968 = vadd.f32 0.0, %v6967
      %v6969 = vpop.f32.mrb[0].mxu0
      %6970 = vmatprep.mubr.f32.mxu0 0.0
      %6971 = vmatmul.mubr.f32.gmra.mrb[0].mxu0 %v6799
      %v6972 = vpop.f32.mrb[0].mxu0
      %v6973 = vadd.f32 0.0, %v6972
      %v6974 = vpop.f32.mrb[0].mxu0
      %6975 = vmatprep.mubr.f32.mxu0 0.0
      %6976 = vmatmul.mubr.f32.gmra.mrb[0].mxu0 %v6802
      %v6977 = vpop.f32.mrb[0].mxu0
      %v6978 = vadd.f32 0.0, %v6977
      %v6979 = vpop.f32.mrb[0].mxu0
      %6980 = vmatprep.mubr.f32.mxu0 0.0
      %6981 = vmatmul.mubr.f32.gmra.mrb[0].mxu0 %v6805
      %v6982 = vpop.f32.mrb[0].mxu0
      %v6983 = vadd.f32 0.0, %v6982
      %v6984 = vpop.f32.mrb[0].mxu0
      %6985 = vmatprep.mubr.f32.mxu0 0.0
      %6986 = vmatmul.mubr.f32.gmra.mrb[0].mxu0 %v6808
      %v6987 = vpop.f32.mrb[0].mxu0
      %v6988 = vadd.f32 0.0, %v6987
      %v6989 = vpop.f32.mrb[0].mxu0
      %6990 = vmatprep.mubr.f32.mxu0 0.0
      %6991 = vmatmul.mubr.f32.gmra.mrb[0].mxu0 %v6811
      %v6992 = vpop.f32.mrb[0].mxu0
      %v6993 = vadd.f32 0.0, %v6992
      %v6994 = vpop.f32.mrb[0].mxu0
      %6995 = vmatprep.mubr.f32.mxu0 0.0
      %6996 = vmatmul.mubr.f32.gmra.mrb[0].mxu0 %v6814
      %v6997 = vpop.f32.mrb[0].mxu0
      %v6998 = vadd.f32 0.0, %v6997
      %v6999 = vpop.f32.mrb[0].mxu0
      %7000 = vmatprep.mubr.f32.mxu0 0.0
      %7001 = vmatmul.mubr.f32.gmra.mrb[0].mxu0 %v6817
      %v7002 = vpop.f32.mrb[0].mxu0
      %v7003 = vadd.f32 0.0, %v7002
      %v7004 = vpop.f32.mrb[0].mxu0
      %7005 = vmatprep.mubr.f32.mxu0 0.0
      %7006 = vmatmul.mubr.f32.gmra.mrb[0].mxu0 %v6820
      %v7007 = vpop.f32.mrb[0].mxu0
      %v7008 = vadd.f32 0.0, %v7007
      %v7009 = vpop.f32.mrb[0].mxu0
      %7010 = vmatprep.mubr.f32.mxu0 0.0
      %7011 = vmatmul.mubr.f32.gmra.mrb[0].mxu0 %v6823
      %v7012 = vpop.f32.mrb[0].mxu0
      %v7013 = vadd.f32 0.0, %v7012
      %v7014 = vpop.f32.mrb[0].mxu0
      %7015 = vmatprep.mubr.f32.mxu0 0.0
      %7016 = vmatmul.mubr.f32.gmra.mrb[0].mxu0 %v6826
      %v7017 = vpop.f32.mrb[0].mxu0
      %v7018 = vadd.f32 0.0, %v7017
      %v7019 = vpop.f32.mrb[0].mxu0
      %7020 = vmatprep.mubr.f32.mxu0 0.0
      %7021 = vmatmul.mubr.f32.gmra.mrb[0].mxu0 %v6829
      %v7022 = vpop.f32.mrb[0].mxu0
      %v7023 = vadd.f32 0.0, %v7022
      %v7024 = vpop.f32.mrb[0].mxu0
      %7025 = vmatprep.mubr.f32.mxu0 0.0
      %7026 = vmatmul.mubr.f32.gmra.mrb[0].mxu0 %v6832
      %v7027 = vpop.f32.mrb[0].mxu0
      %v7028 = vadd.f32 0.0, %v7027
      %v7029 = vpop.f32.mrb[0].mxu0
      %7030 = vmatprep.mubr.f32.mxu0 0.0
      %7031 = vmatmul.mubr.f32.gmra.mrb[0].mxu0 %v6835
      %v7032 = vpop.f32.mrb[0].mxu0
      %v7033 = vadd.f32 0.0, %v7032
      %v7034 = vpop.f32.mrb[0].mxu0
      %7035 = vmatprep.mubr.f32.mxu0 0.0
      %7036 = vmatmul.mubr.f32.gmra.mrb[0].mxu0 %v6838
      %v7037 = vpop.f32.mrb[0].mxu0
      %v7038 = vadd.f32 0.0, %v7037
      %v7039 = vpop.f32.mrb[0].mxu0
      %7040 = vmatprep.mubr.f32.mxu0 0.0
      %7041 = vmatmul.mubr.f32.gmra.mrb[0].mxu0 %v6841
      %v7042 = vpop.f32.mrb[0].mxu0
      %v7043 = vadd.f32 0.0, %v7042
      %v7044 = vpop.f32.mrb[0].mxu0
      %7045 = vmatprep.mubr.f32.mxu0 0.0
      %7046 = vmatmul.mubr.f32.gmra.mrb[0].mxu0 %v6844
      %v7047 = vpop.f32.mrb[0].mxu0
      %v7048 = vadd.f32 0.0, %v7047
      %v7049 = vpop.f32.mrb[0].mxu0
      %7050 = vmatprep.mubr.f32.mxu0 0.0
      %7051 = vmatmul.mubr.f32.gmra.mrb[0].mxu0 %v6847
      %v7052 = vpop.f32.mrb[0].mxu0
      %v7053 = vadd.f32 0.0, %v7052
      %v7054 = vpop.f32.mrb[0].mxu0
      %7055 = vmatprep.mubr.f32.mxu0 0.0
      %7056 = vmatmul.mubr.f32.gmra.mrb[0].mxu0 %v6850
      %v7057 = vpop.f32.mrb[0].mxu0
      %v7058 = vadd.f32 0.0, %v7057
      %v7059 = vpop.f32.mrb[0].mxu0
      %7060 = vmatprep.mubr.f32.mxu0 0.0
      %7061 = vmatmul.mubr.f32.gmra.mrb[0].mxu0 %v6853
      %v7062 = vpop.f32.mrb[0].mxu0
      %v7063 = vadd.f32 0.0, %v7062
      %v7064 = vpop.f32.mrb[0].mxu0
      %7065 = vmatprep.mubr.f32.mxu0 0.0
      %7066 = vmatmul.mubr.f32.gmra.mrb[0].mxu0 %v6856
      %v7067 = vpop.f32.mrb[0].mxu0
      %v7068 = vadd.f32 0.0, %v7067
      %v7069 = vpop.f32.mrb[0].mxu0
      %7070 = vmatprep.mubr.f32.mxu0 0.0
      %7071 = vmatmul.mubr.f32.gmra.mrb[0].mxu0 %v6859
      %v7072 = vpop.f32.mrb[0].mxu0
      %v7073 = vadd.f32 0.0, %v7072
      %v7074 = vpop.f32.mrb[0].mxu0
      %7075 = vmatprep.mubr.f32.mxu0 0.0
      %7076 = vmatmul.mubr.f32.gmra.mrb[0].mxu0 %v6862
      %v7077 = vpop.f32.mrb[0].mxu0
      %v7078 = vadd.f32 0.0, %v7077
      %v7079 = vpop.f32.mrb[0].mxu0
      %7080 = vmatprep.mubr.f32.mxu0 0.0
      %7081 = vmatmul.mubr.f32.gmra.mrb[0].mxu0 %v6865
      %v7082 = vpop.f32.mrb[0].mxu0
      %v7083 = vadd.f32 0.0, %v7082
      %v7084 = vpop.f32.mrb[0].mxu0
      %7085 = vmatprep.mubr.f32.mxu0 0.0
      %7086 = vmatmul.mubr.f32.gmra.mrb[0].mxu0 %v6868
      %v7087 = vpop.f32.mrb[0].mxu0
      %v7088 = vadd.f32 0.0, %v7087
      %v7089 = vpop.f32.mrb[0].mxu0
      %7090 = vmatprep.mubr.f32.mxu0 0.0
      %7091 = vmatmul.mubr.f32.gmra.mrb[0].mxu0 %v6871
      %v7092 = vpop.f32.mrb[0].mxu0
      %v7093 = vadd.f32 0.0, %v7092
      %v7094 = vpop.f32.mrb[0].mxu0
      %7095 = vmatprep.mubr.f32.mxu0 0.0
      %7096 = vmatmul.mubr.f32.gmra.mrb[0].mxu0 %v6874
      %v7097 = vpop.f32.mrb[0].mxu0
      %v7098 = vadd.f32 0.0, %v7097
      %v7099 = vpop.f32.mrb[0].mxu0
      %7100 = vdwg.mxu0
      %v7101 = vadd.f32 %v6713, %v6943
      %v7102 = vadd.f32 %v6714, %v6948
      %v7103 = vadd.f32 %v6715, %v6953
      %v7104 = vadd.f32 %v6716, %v6958
      %v7105 = vadd.f32 %v6717, %v6963
      %v7106 = vadd.f32 %v6718, %v6968
      %v7107 = vadd.f32 %v6719, %v6973
      %v7108 = vadd.f32 %v6720, %v6978
      %v7109 = vadd.f32 %v6721, %v6983
      %v7110 = vadd.f32 %v6722, %v6988
      %v7111 = vadd.f32 %v6723, %v6993
      %v7112 = vadd.f32 %v6724, %v6998
      %v7113 = vadd.f32 %v6725, %v7003
      %v7114 = vadd.f32 %v6726, %v7008
      %v7115 = vadd.f32 %v6727, %v7013
      %v7116 = vadd.f32 %v6728, %v7018
      %v7117 = vadd.f32 %v6729, %v7023
      %v7118 = vadd.f32 %v6730, %v7028
      %v7119 = vadd.f32 %v6731, %v7033
      %v7120 = vadd.f32 %v6732, %v7038
      %v7121 = vadd.f32 %v6733, %v7043
      %v7122 = vadd.f32 %v6734, %v7048
      %v7123 = vadd.f32 %v6735, %v7053
      %v7124 = vadd.f32 %v6736, %v7058
      %v7125 = vadd.f32 %v6737, %v7063
      %v7126 = vadd.f32 %v6738, %v7068
      %v7127 = vadd.f32 %v6739, %v7073
      %v7128 = vadd.f32 %v6740, %v7078
      %v7129 = vadd.f32 %v6741, %v7083
      %v7130 = vadd.f32 %v6742, %v7088
      %v7131 = vadd.f32 %v6743, %v7093
      %v7132 = vadd.f32 %v6744, %v7098
      %v7133 = vld [vmem:[%s6356 + $0x2] sm:$0xff]
      %v7134 = vld [vmem:[%s6356 + $0xa] sm:$0xff]
      %v7135 = vld [vmem:[%s6356 + $0x1a] sm:$0xff]
      %v7136 = vld [vmem:[%s6356 + $0x22] sm:$0xff]
      %v7137 = vld [vmem:[%s6356 + $0x32] sm:$0xff]
      %v7138 = vld [vmem:[%s6356 + $0x3a] sm:$0xff]
      %v7139 = vld [vmem:[%s6356 + $0x4a] sm:$0xff]
      %v7140 = vld [vmem:[%s6356 + $0x52] sm:$0xff]
      %v7141 = vld [vmem:[%s6356 + $0x62] sm:$0xff]
      %v7142 = vld [vmem:[%s6356 + $0x6a] sm:$0xff]
      %v7143 = vld [vmem:[%s6356 + $0x7a] sm:$0xff]
      %v7144 = vld [vmem:[%s6356 + $0x82] sm:$0xff]
      %v7145 = vld [vmem:[%s6356 + $0x92] sm:$0xff]
      %v7146 = vld [vmem:[%s6356 + $0x9a] sm:$0xff]
      %v7147 = vld [vmem:[%s6356 + $0xaa] sm:$0xff]
      %v7148 = vld [vmem:[%s6356 + $0xb2] sm:$0xff]
      %v7149 = vld [vmem:[%s6356 + $0xc2] sm:$0xff]
      %v7150 = vld [vmem:[%s6356 + $0xca] sm:$0xff]
      %v7151 = vld [vmem:[%s6356 + $0xda] sm:$0xff]
      %v7152 = vld [vmem:[%s6356 + $0xe2] sm:$0xff]
      %v7153 = vld [vmem:[%s6356 + $0xf2] sm:$0xff]
      %v7154 = vld [vmem:[%s6356 + $0xfa] sm:$0xff]
      %v7155 = vld [vmem:[%s6356 + $0x10a] sm:$0xff]
      %v7156 = vld [vmem:[%s6356 + $0x112] sm:$0xff]
      %v7157 = vld [vmem:[%s6356 + $0x122] sm:$0xff]
      %v7158 = vld [vmem:[%s6356 + $0x12a] sm:$0xff]
      %v7159 = vld [vmem:[%s6356 + $0x13a] sm:$0xff]
      %v7160 = vld [vmem:[%s6356 + $0x142] sm:$0xff]
      %v7161 = vld [vmem:[%s6356 + $0x152] sm:$0xff]
      %v7162 = vld [vmem:[%s6356 + $0x15a] sm:$0xff]
      %v7163 = vld [vmem:[%s6356 + $0x16a] sm:$0xff]
      %v7164 = vld [vmem:[%s6356 + $0x172] sm:$0xff]
      %s7165 = scalar_lea.vmem %s4, 128
      %v7166 = vld [vmem:[%s7165] sm:$0xff]
      %v7167 = vld [vmem:[%s7165 + $0x8] sm:$0xff]
      %v7169 = vsel %vm4004, %v7133, 0
      %v7172 = vsel %vm4004, %v7134, 0
      %v7175 = vsel %vm4004, %v7135, 0
      %v7178 = vsel %vm4004, %v7136, 0
      %v7181 = vsel %vm4004, %v7137, 0
      %v7184 = vsel %vm4004, %v7138, 0
      %v7187 = vsel %vm4004, %v7139, 0
      %v7190 = vsel %vm4004, %v7140, 0
      %v7193 = vsel %vm4004, %v7141, 0
      %v7196 = vsel %vm4004, %v7142, 0
      %v7199 = vsel %vm4004, %v7143, 0
      %v7202 = vsel %vm4004, %v7144, 0
      %v7205 = vsel %vm4004, %v7145, 0
      %v7208 = vsel %vm4004, %v7146, 0
      %v7211 = vsel %vm4004, %v7147, 0
      %v7214 = vsel %vm4004, %v7148, 0
      %v7217 = vsel %vm4004, %v7149, 0
      %v7220 = vsel %vm4004, %v7150, 0
      %v7223 = vsel %vm4004, %v7151, 0
      %v7226 = vsel %vm4004, %v7152, 0
      %v7229 = vsel %vm4004, %v7153, 0
      %v7232 = vsel %vm4004, %v7154, 0
      %v7235 = vsel %vm4004, %v7155, 0
      %v7238 = vsel %vm4004, %v7156, 0
      %v7241 = vsel %vm4004, %v7157, 0
      %v7244 = vsel %vm4004, %v7158, 0
      %v7247 = vsel %vm4004, %v7159, 0
      %v7250 = vsel %vm4004, %v7160, 0
      %v7253 = vsel %vm4004, %v7161, 0
      %v7256 = vsel %vm4004, %v7162, 0
      %v7259 = vsel %vm4004, %v7163, 0
      %v7262 = vsel %vm4004, %v7164, 0
      %7264 = vmatprep.subr.mxu0 0.0
      %7265 = vmatpush1.msra.mxu0 %v7166
      %7266 = vmatprep.subr.mxu0 0.0
      %7267 = vmatpush1.msra.mxu0 %v7167
      %7268 = vmatprep.subr.mxu0 0.0
      %7269 = vmatpush1.msra.mxu0 0.0
      %7270 = vmatprep.subr.mxu0 0.0
      %7271 = vmatpush1.msra.mxu0 0.0
      %7272 = vmatprep.subr.mxu0 0.0
      %7273 = vmatpush1.msra.mxu0 0.0
      %7274 = vmatprep.subr.mxu0 0.0
      %7275 = vmatpush1.msra.mxu0 0.0
      %7276 = vmatprep.subr.mxu0 0.0
      %7277 = vmatpush1.msra.mxu0 0.0
      %7278 = vmatprep.subr.mxu0 0.0
      %7279 = vmatpush1.msra.mxu0 0.0
      %7280 = vmatprep.subr.mxu0 0.0
      %7281 = vmatpush1.msra.mxu0 0.0
      %7282 = vmatprep.subr.mxu0 0.0
      %7283 = vmatpush1.msra.mxu0 0.0
      %7284 = vmatprep.subr.mxu0 0.0
      %7285 = vmatpush1.msra.mxu0 0.0
      %7286 = vmatprep.subr.mxu0 0.0
      %7287 = vmatpush1.msra.mxu0 0.0
      %7288 = vmatprep.subr.mxu0 0.0
      %7289 = vmatpush1.msra.mxu0 0.0
      %7290 = vmatprep.subr.mxu0 0.0
      %7291 = vmatpush1.msra.mxu0 0.0
      %7292 = vmatprep.subr.mxu0 0.0
      %7293 = vmatpush1.msra.mxu0 0.0
      %7294 = vmatprep.subr.mxu0 0.0
      %7295 = vmatpush1.msra.mxu0 0.0
      %7296 = vmatprep.subr.mxu0 0.0
      %7297 = vmatpush1.msra.mxu0 0.0
      %7298 = vmatprep.subr.mxu0 0.0
      %7299 = vmatpush1.msra.mxu0 0.0
      %7300 = vmatprep.subr.mxu0 0.0
      %7301 = vmatpush1.msra.mxu0 0.0
      %7302 = vmatprep.subr.mxu0 0.0
      %7303 = vmatpush1.msra.mxu0 0.0
      %7304 = vmatprep.subr.mxu0 0.0
      %7305 = vmatpush1.msra.mxu0 0.0
      %7306 = vmatprep.subr.mxu0 0.0
      %7307 = vmatpush1.msra.mxu0 0.0
      %7308 = vmatprep.subr.mxu0 0.0
      %7309 = vmatpush1.msra.mxu0 0.0
      %7310 = vmatprep.subr.mxu0 0.0
      %7311 = vmatpush1.msra.mxu0 0.0
      %7312 = vmatprep.subr.mxu0 0.0
      %7313 = vmatpush1.msra.mxu0 0.0
      %7314 = vmatprep.subr.mxu0 0.0
      %7315 = vmatpush1.msra.mxu0 0.0
      %7316 = vmatprep.subr.mxu0 0.0
      %7317 = vmatpush1.msra.mxu0 0.0
      %7318 = vmatprep.subr.mxu0 0.0
      %7319 = vmatpush1.msra.mxu0 0.0
      %7320 = vmatprep.subr.mxu0 0.0
      %7321 = vmatpush1.msra.mxu0 0.0
      %7322 = vmatprep.subr.mxu0 0.0
      %7323 = vmatpush1.msra.mxu0 0.0
      %7324 = vmatprep.subr.mxu0 0.0
      %7325 = vmatpush1.msra.mxu0 0.0
      %7326 = vmatprep.subr.mxu0 0.0
      %7327 = vmatpush1.msra.mxu0 0.0
      %7328 = vmatprep.mubr.f32.mxu0 0.0
      %7329 = vmatmul.mubr.f32.gmra.mrb[0].mxu0 %v7169
      %v7330 = vpop.f32.mrb[0].mxu0
      %v7331 = vadd.f32 0.0, %v7330
      %v7332 = vpop.f32.mrb[0].mxu0
      %7333 = vmatprep.mubr.f32.mxu0 0.0
      %7334 = vmatmul.mubr.f32.gmra.mrb[0].mxu0 %v7172
      %v7335 = vpop.f32.mrb[0].mxu0
      %v7336 = vadd.f32 0.0, %v7335
      %v7337 = vpop.f32.mrb[0].mxu0
      %7338 = vmatprep.mubr.f32.mxu0 0.0
      %7339 = vmatmul.mubr.f32.gmra.mrb[0].mxu0 %v7175
      %v7340 = vpop.f32.mrb[0].mxu0
      %v7341 = vadd.f32 0.0, %v7340
      %v7342 = vpop.f32.mrb[0].mxu0
      %7343 = vmatprep.mubr.f32.mxu0 0.0
      %7344 = vmatmul.mubr.f32.gmra.mrb[0].mxu0 %v7178
      %v7345 = vpop.f32.mrb[0].mxu0
      %v7346 = vadd.f32 0.0, %v7345
      %v7347 = vpop.f32.mrb[0].mxu0
      %7348 = vmatprep.mubr.f32.mxu0 0.0
      %7349 = vmatmul.mubr.f32.gmra.mrb[0].mxu0 %v7181
      %v7350 = vpop.f32.mrb[0].mxu0
      %v7351 = vadd.f32 0.0, %v7350
      %v7352 = vpop.f32.mrb[0].mxu0
      %7353 = vmatprep.mubr.f32.mxu0 0.0
      %7354 = vmatmul.mubr.f32.gmra.mrb[0].mxu0 %v7184
      %v7355 = vpop.f32.mrb[0].mxu0
      %v7356 = vadd.f32 0.0, %v7355
      %v7357 = vpop.f32.mrb[0].mxu0
      %7358 = vmatprep.mubr.f32.mxu0 0.0
      %7359 = vmatmul.mubr.f32.gmra.mrb[0].mxu0 %v7187
      %v7360 = vpop.f32.mrb[0].mxu0
      %v7361 = vadd.f32 0.0, %v7360
      %v7362 = vpop.f32.mrb[0].mxu0
      %7363 = vmatprep.mubr.f32.mxu0 0.0
      %7364 = vmatmul.mubr.f32.gmra.mrb[0].mxu0 %v7190
      %v7365 = vpop.f32.mrb[0].mxu0
      %v7366 = vadd.f32 0.0, %v7365
      %v7367 = vpop.f32.mrb[0].mxu0
      %7368 = vmatprep.mubr.f32.mxu0 0.0
      %7369 = vmatmul.mubr.f32.gmra.mrb[0].mxu0 %v7193
      %v7370 = vpop.f32.mrb[0].mxu0
      %v7371 = vadd.f32 0.0, %v7370
      %v7372 = vpop.f32.mrb[0].mxu0
      %7373 = vmatprep.mubr.f32.mxu0 0.0
      %7374 = vmatmul.mubr.f32.gmra.mrb[0].mxu0 %v7196
      %v7375 = vpop.f32.mrb[0].mxu0
      %v7376 = vadd.f32 0.0, %v7375
      %v7377 = vpop.f32.mrb[0].mxu0
      %7378 = vmatprep.mubr.f32.mxu0 0.0
      %7379 = vmatmul.mubr.f32.gmra.mrb[0].mxu0 %v7199
      %v7380 = vpop.f32.mrb[0].mxu0
      %v7381 = vadd.f32 0.0, %v7380
      %v7382 = vpop.f32.mrb[0].mxu0
      %7383 = vmatprep.mubr.f32.mxu0 0.0
      %7384 = vmatmul.mubr.f32.gmra.mrb[0].mxu0 %v7202
      %v7385 = vpop.f32.mrb[0].mxu0
      %v7386 = vadd.f32 0.0, %v7385
      %v7387 = vpop.f32.mrb[0].mxu0
      %7388 = vmatprep.mubr.f32.mxu0 0.0
      %7389 = vmatmul.mubr.f32.gmra.mrb[0].mxu0 %v7205
      %v7390 = vpop.f32.mrb[0].mxu0
      %v7391 = vadd.f32 0.0, %v7390
      %v7392 = vpop.f32.mrb[0].mxu0
      %7393 = vmatprep.mubr.f32.mxu0 0.0
      %7394 = vmatmul.mubr.f32.gmra.mrb[0].mxu0 %v7208
      %v7395 = vpop.f32.mrb[0].mxu0
      %v7396 = vadd.f32 0.0, %v7395
      %v7397 = vpop.f32.mrb[0].mxu0
      %7398 = vmatprep.mubr.f32.mxu0 0.0
      %7399 = vmatmul.mubr.f32.gmra.mrb[0].mxu0 %v7211
      %v7400 = vpop.f32.mrb[0].mxu0
      %v7401 = vadd.f32 0.0, %v7400
      %v7402 = vpop.f32.mrb[0].mxu0
      %7403 = vmatprep.mubr.f32.mxu0 0.0
      %7404 = vmatmul.mubr.f32.gmra.mrb[0].mxu0 %v7214
      %v7405 = vpop.f32.mrb[0].mxu0
      %v7406 = vadd.f32 0.0, %v7405
      %v7407 = vpop.f32.mrb[0].mxu0
      %7408 = vmatprep.mubr.f32.mxu0 0.0
      %7409 = vmatmul.mubr.f32.gmra.mrb[0].mxu0 %v7217
      %v7410 = vpop.f32.mrb[0].mxu0
      %v7411 = vadd.f32 0.0, %v7410
      %v7412 = vpop.f32.mrb[0].mxu0
      %7413 = vmatprep.mubr.f32.mxu0 0.0
      %7414 = vmatmul.mubr.f32.gmra.mrb[0].mxu0 %v7220
      %v7415 = vpop.f32.mrb[0].mxu0
      %v7416 = vadd.f32 0.0, %v7415
      %v7417 = vpop.f32.mrb[0].mxu0
      %7418 = vmatprep.mubr.f32.mxu0 0.0
      %7419 = vmatmul.mubr.f32.gmra.mrb[0].mxu0 %v7223
      %v7420 = vpop.f32.mrb[0].mxu0
      %v7421 = vadd.f32 0.0, %v7420
      %v7422 = vpop.f32.mrb[0].mxu0
      %7423 = vmatprep.mubr.f32.mxu0 0.0
      %7424 = vmatmul.mubr.f32.gmra.mrb[0].mxu0 %v7226
      %v7425 = vpop.f32.mrb[0].mxu0
      %v7426 = vadd.f32 0.0, %v7425
      %v7427 = vpop.f32.mrb[0].mxu0
      %7428 = vmatprep.mubr.f32.mxu0 0.0
      %7429 = vmatmul.mubr.f32.gmra.mrb[0].mxu0 %v7229
      %v7430 = vpop.f32.mrb[0].mxu0
      %v7431 = vadd.f32 0.0, %v7430
      %v7432 = vpop.f32.mrb[0].mxu0
      %7433 = vmatprep.mubr.f32.mxu0 0.0
      %7434 = vmatmul.mubr.f32.gmra.mrb[0].mxu0 %v7232
      %v7435 = vpop.f32.mrb[0].mxu0
      %v7436 = vadd.f32 0.0, %v7435
      %v7437 = vpop.f32.mrb[0].mxu0
      %7438 = vmatprep.mubr.f32.mxu0 0.0
      %7439 = vmatmul.mubr.f32.gmra.mrb[0].mxu0 %v7235
      %v7440 = vpop.f32.mrb[0].mxu0
      %v7441 = vadd.f32 0.0, %v7440
      %v7442 = vpop.f32.mrb[0].mxu0
      %7443 = vmatprep.mubr.f32.mxu0 0.0
      %7444 = vmatmul.mubr.f32.gmra.mrb[0].mxu0 %v7238
      %v7445 = vpop.f32.mrb[0].mxu0
      %v7446 = vadd.f32 0.0, %v7445
      %v7447 = vpop.f32.mrb[0].mxu0
      %7448 = vmatprep.mubr.f32.mxu0 0.0
      %7449 = vmatmul.mubr.f32.gmra.mrb[0].mxu0 %v7241
      %v7450 = vpop.f32.mrb[0].mxu0
      %v7451 = vadd.f32 0.0, %v7450
      %v7452 = vpop.f32.mrb[0].mxu0
      %7453 = vmatprep.mubr.f32.mxu0 0.0
      %7454 = vmatmul.mubr.f32.gmra.mrb[0].mxu0 %v7244
      %v7455 = vpop.f32.mrb[0].mxu0
      %v7456 = vadd.f32 0.0, %v7455
      %v7457 = vpop.f32.mrb[0].mxu0
      %7458 = vmatprep.mubr.f32.mxu0 0.0
      %7459 = vmatmul.mubr.f32.gmra.mrb[0].mxu0 %v7247
      %v7460 = vpop.f32.mrb[0].mxu0
      %v7461 = vadd.f32 0.0, %v7460
      %v7462 = vpop.f32.mrb[0].mxu0
      %7463 = vmatprep.mubr.f32.mxu0 0.0
      %7464 = vmatmul.mubr.f32.gmra.mrb[0].mxu0 %v7250
      %v7465 = vpop.f32.mrb[0].mxu0
      %v7466 = vadd.f32 0.0, %v7465
      %v7467 = vpop.f32.mrb[0].mxu0
      %7468 = vmatprep.mubr.f32.mxu0 0.0
      %7469 = vmatmul.mubr.f32.gmra.mrb[0].mxu0 %v7253
      %v7470 = vpop.f32.mrb[0].mxu0
      %v7471 = vadd.f32 0.0, %v7470
      %v7472 = vpop.f32.mrb[0].mxu0
      %7473 = vmatprep.mubr.f32.mxu0 0.0
      %7474 = vmatmul.mubr.f32.gmra.mrb[0].mxu0 %v7256
      %v7475 = vpop.f32.mrb[0].mxu0
      %v7476 = vadd.f32 0.0, %v7475
      %v7477 = vpop.f32.mrb[0].mxu0
      %7478 = vmatprep.mubr.f32.mxu0 0.0
      %7479 = vmatmul.mubr.f32.gmra.mrb[0].mxu0 %v7259
      %v7480 = vpop.f32.mrb[0].mxu0
      %v7481 = vadd.f32 0.0, %v7480
      %v7482 = vpop.f32.mrb[0].mxu0
      %7483 = vmatprep.mubr.f32.mxu0 0.0
      %7484 = vmatmul.mubr.f32.gmra.mrb[0].mxu0 %v7262
      %v7485 = vpop.f32.mrb[0].mxu0
      %v7486 = vadd.f32 0.0, %v7485
      %v7487 = vpop.f32.mrb[0].mxu0
      %7488 = vdwg.mxu0
      %v7489 = vadd.f32 %v7101, %v7331
      %v7490 = vadd.f32 %v7102, %v7336
      %v7491 = vadd.f32 %v7103, %v7341
      %v7492 = vadd.f32 %v7104, %v7346
      %v7493 = vadd.f32 %v7105, %v7351
      %v7494 = vadd.f32 %v7106, %v7356
      %v7495 = vadd.f32 %v7107, %v7361
      %v7496 = vadd.f32 %v7108, %v7366
      %v7497 = vadd.f32 %v7109, %v7371
      %v7498 = vadd.f32 %v7110, %v7376
      %v7499 = vadd.f32 %v7111, %v7381
      %v7500 = vadd.f32 %v7112, %v7386
      %v7501 = vadd.f32 %v7113, %v7391
      %v7502 = vadd.f32 %v7114, %v7396
      %v7503 = vadd.f32 %v7115, %v7401
      %v7504 = vadd.f32 %v7116, %v7406
      %v7505 = vadd.f32 %v7117, %v7411
      %v7506 = vadd.f32 %v7118, %v7416
      %v7507 = vadd.f32 %v7119, %v7421
      %v7508 = vadd.f32 %v7120, %v7426
      %v7509 = vadd.f32 %v7121, %v7431
      %v7510 = vadd.f32 %v7122, %v7436
      %v7511 = vadd.f32 %v7123, %v7441
      %v7512 = vadd.f32 %v7124, %v7446
      %v7513 = vadd.f32 %v7125, %v7451
      %v7514 = vadd.f32 %v7126, %v7456
      %v7515 = vadd.f32 %v7127, %v7461
      %v7516 = vadd.f32 %v7128, %v7466
      %v7517 = vadd.f32 %v7129, %v7471
      %v7518 = vadd.f32 %v7130, %v7476
      %v7519 = vadd.f32 %v7131, %v7481
      %v7520 = vadd.f32 %v7132, %v7486
      %v7521 = vld [vmem:[%s5] sm:$0x1]
      %v7523 = vlaneseq
      %v7524 = vshrl.u32 %v7523, 7
      %v7525 = vsub.s32 0, %v7524
      %v7526 = vrot.slane %v7521, %v7525
      %v7528 = vadd.f32 %v7489, %v7526
      %v7529 = vadd.f32 %v7490, %v7526
      %v7530 = vadd.f32 %v7491, %v7526
      %v7531 = vadd.f32 %v7492, %v7526
      %v7532 = vadd.f32 %v7493, %v7526
      %v7533 = vadd.f32 %v7494, %v7526
      %v7534 = vadd.f32 %v7495, %v7526
      %v7535 = vadd.f32 %v7496, %v7526
      %v7536 = vadd.f32 %v7497, %v7526
      %v7537 = vadd.f32 %v7498, %v7526
      %v7538 = vadd.f32 %v7499, %v7526
      %v7539 = vadd.f32 %v7500, %v7526
      %v7540 = vadd.f32 %v7501, %v7526
      %v7541 = vadd.f32 %v7502, %v7526
      %v7542 = vadd.f32 %v7503, %v7526
      %v7543 = vadd.f32 %v7504, %v7526
      %v7544 = vadd.f32 %v7505, %v7526
      %v7545 = vadd.f32 %v7506, %v7526
      %v7546 = vadd.f32 %v7507, %v7526
      %v7547 = vadd.f32 %v7508, %v7526
      %v7548 = vadd.f32 %v7509, %v7526
      %v7549 = vadd.f32 %v7510, %v7526
      %v7550 = vadd.f32 %v7511, %v7526
      %v7551 = vadd.f32 %v7512, %v7526
      %v7552 = vadd.f32 %v7513, %v7526
      %v7553 = vadd.f32 %v7514, %v7526
      %v7554 = vadd.f32 %v7515, %v7526
      %v7555 = vadd.f32 %v7516, %v7526
      %v7556 = vadd.f32 %v7517, %v7526
      %v7557 = vadd.f32 %v7518, %v7526
      %v7558 = vadd.f32 %v7519, %v7526
      %v7559 = vadd.f32 %v7520, %v7526
      %v7560 = vmax.f32 %v7528, 0.0
      %v7561 = vmax.f32 %v7529, 0.0
      %v7562 = vmax.f32 %v7530, 0.0
      %v7563 = vmax.f32 %v7531, 0.0
      %v7564 = vmax.f32 %v7532, 0.0
      %v7565 = vmax.f32 %v7533, 0.0
      %v7566 = vmax.f32 %v7534, 0.0
      %v7567 = vmax.f32 %v7535, 0.0
      %v7568 = vmax.f32 %v7536, 0.0
      %v7569 = vmax.f32 %v7537, 0.0
      %v7570 = vmax.f32 %v7538, 0.0
      %v7571 = vmax.f32 %v7539, 0.0
      %v7572 = vmax.f32 %v7540, 0.0
      %v7573 = vmax.f32 %v7541, 0.0
      %v7574 = vmax.f32 %v7542, 0.0
      %v7575 = vmax.f32 %v7543, 0.0
      %v7576 = vmax.f32 %v7544, 0.0
      %v7577 = vmax.f32 %v7545, 0.0
      %v7578 = vmax.f32 %v7546, 0.0
      %v7579 = vmax.f32 %v7547, 0.0
      %v7580 = vmax.f32 %v7548, 0.0
      %v7581 = vmax.f32 %v7549, 0.0
      %v7582 = vmax.f32 %v7550, 0.0
      %v7583 = vmax.f32 %v7551, 0.0
      %v7584 = vmax.f32 %v7552, 0.0
      %v7585 = vmax.f32 %v7553, 0.0
      %v7586 = vmax.f32 %v7554, 0.0
      %v7587 = vmax.f32 %v7555, 0.0
      %v7588 = vmax.f32 %v7556, 0.0
      %v7589 = vmax.f32 %v7557, 0.0
      %v7590 = vmax.f32 %v7558, 0.0
      %v7591 = vmax.f32 %v7559, 0.0
      %7592 = vst.msk [vmem:[#allocation4] sm:$0xff] %vm4004, 0.0
      %7593 = vst.msk [vmem:[#allocation4 + $0x8] sm:$0xff] %vm4004, 0.0
      %7594 = vst.msk [vmem:[#allocation4 + $0x10] sm:$0x3] %vm4007, 0.0
      %7595 = vst.msk [vmem:[#allocation4 + $0x18] sm:$0xff] %vm4004, 0.0
      %7596 = vst.msk [vmem:[#allocation4 + $0x20] sm:$0xff] %vm4004, 0.0
      %7597 = vst.msk [vmem:[#allocation4 + $0x28] sm:$0x3] %vm4007, 0.0
      %7598 = vst.msk [vmem:[#allocation4 + $0x30] sm:$0xff] %vm4004, 0.0
      %7599 = vst.msk [vmem:[#allocation4 + $0x38] sm:$0xff] %vm4004, 0.0
      %7600 = vst.msk [vmem:[#allocation4 + $0x40] sm:$0x3] %vm4007, 0.0
      %7601 = vst.msk [vmem:[#allocation4 + $0x48] sm:$0xff] %vm4004, 0.0
      %7602 = vst.msk [vmem:[#allocation4 + $0x50] sm:$0xff] %vm4004, 0.0
      %7603 = vst.msk [vmem:[#allocation4 + $0x58] sm:$0x3] %vm4007, 0.0
      %7604 = vst.msk [vmem:[#allocation4 + $0x60] sm:$0xff] %vm4004, 0.0
      %7605 = vst.msk [vmem:[#allocation4 + $0x68] sm:$0xff] %vm4004, 0.0
      %7606 = vst.msk [vmem:[#allocation4 + $0x70] sm:$0x3] %vm4007, 0.0
      %7607 = vst.msk [vmem:[#allocation4 + $0x78] sm:$0xff] %vm4004, 0.0
      %7608 = vst.msk [vmem:[#allocation4 + $0x80] sm:$0xff] %vm4004, 0.0
      %7609 = vst.msk [vmem:[#allocation4 + $0x88] sm:$0x3] %vm4007, 0.0
      %7610 = vst.msk [vmem:[#allocation4 + $0x90] sm:$0xff] %vm4004, 0.0
      %7611 = vst.msk [vmem:[#allocation4 + $0x98] sm:$0xff] %vm4004, 0.0
      %7612 = vst.msk [vmem:[#allocation4 + $0xa0] sm:$0x3] %vm4007, 0.0
      %7613 = vst.msk [vmem:[#allocation4 + $0xa8] sm:$0xff] %vm4004, 0.0
      %7614 = vst.msk [vmem:[#allocation4 + $0xb0] sm:$0xff] %vm4004, 0.0
      %7615 = vst.msk [vmem:[#allocation4 + $0xb8] sm:$0x3] %vm4007, 0.0
      %7616 = vst.msk [vmem:[#allocation4 + $0xc0] sm:$0xff] %vm4004, 0.0
      %7617 = vst.msk [vmem:[#allocation4 + $0xc8] sm:$0xff] %vm4004, 0.0
      %7618 = vst.msk [vmem:[#allocation4 + $0xd0] sm:$0x3] %vm4007, 0.0
      %7619 = vst.msk [vmem:[#allocation4 + $0xd8] sm:$0xff] %vm4004, 0.0
      %7620 = vst.msk [vmem:[#allocation4 + $0xe0] sm:$0xff] %vm4004, 0.0
      %7621 = vst.msk [vmem:[#allocation4 + $0xe8] sm:$0x3] %vm4007, 0.0
      %7622 = vst.msk [vmem:[#allocation4 + $0xf0] sm:$0xff] %vm4004, 0.0
      %7623 = vst.msk [vmem:[#allocation4 + $0xf8] sm:$0xff] %vm4004, 0.0
      %7624 = vst.msk [vmem:[#allocation4 + $0x100] sm:$0x3] %vm4007, 0.0
      %7625 = vst.msk [vmem:[#allocation4 + $0x108] sm:$0xff] %vm4004, 0.0
      %7626 = vst.msk [vmem:[#allocation4 + $0x110] sm:$0xff] %vm4004, 0.0
      %7627 = vst.msk [vmem:[#allocation4 + $0x118] sm:$0x3] %vm4007, 0.0
      %7628 = vst.msk [vmem:[#allocation4 + $0x120] sm:$0xff] %vm4004, 0.0
      %7629 = vst.msk [vmem:[#allocation4 + $0x128] sm:$0xff] %vm4004, 0.0
      %7630 = vst.msk [vmem:[#allocation4 + $0x130] sm:$0x3] %vm4007, 0.0
      %7631 = vst.msk [vmem:[#allocation4 + $0x138] sm:$0xff] %vm4004, 0.0
      %7632 = vst.msk [vmem:[#allocation4 + $0x140] sm:$0xff] %vm4004, 0.0
      %7633 = vst.msk [vmem:[#allocation4 + $0x148] sm:$0x3] %vm4007, 0.0
      %7634 = vst.msk [vmem:[#allocation4 + $0x150] sm:$0xff] %vm4004, 0.0
      %7635 = vst.msk [vmem:[#allocation4 + $0x158] sm:$0xff] %vm4004, 0.0
      %7636 = vst.msk [vmem:[#allocation4 + $0x160] sm:$0x3] %vm4007, 0.0
      %7637 = vst.msk [vmem:[#allocation4 + $0x168] sm:$0xff] %vm4004, 0.0
      %7638 = vst.msk [vmem:[#allocation4 + $0x170] sm:$0xff] %vm4004, 0.0
      %7639 = vst.msk [vmem:[#allocation4 + $0x178] sm:$0x3] %vm4007, 0.0
      %7640 = vst.msk [vmem:[#allocation4 + $0x180] sm:$0xff] %vm4004, 0.0
      %7641 = vst.msk [vmem:[#allocation4 + $0x188] sm:$0xff] %vm4004, 0.0
      %7642 = vst.msk [vmem:[#allocation4 + $0x190] sm:$0x3] %vm4007, 0.0
      %7643 = vst.msk [vmem:[#allocation4 + $0x198] sm:$0xff] %vm4004, 0.0
      %7644 = vst.msk [vmem:[#allocation4 + $0x1a0] sm:$0xff] %vm4004, 0.0
      %7645 = vst.msk [vmem:[#allocation4 + $0x1a8] sm:$0x3] %vm4007, 0.0
      %s7646 = scalar_lea.vmem [#allocation4], 24
      %7647 = vst.msk [vmem:[%s7646 + $0x1] sm:$0xff] %vm4004, %v7560
      %7648 = vst.msk [vmem:[%s7646 + $0x9] sm:$0xff] %vm4004, %v7561
      %7649 = vst.msk [vmem:[%s7646 + $0x19] sm:$0xff] %vm4004, %v7562
      %7650 = vst.msk [vmem:[%s7646 + $0x21] sm:$0xff] %vm4004, %v7563
      %7651 = vst.msk [vmem:[%s7646 + $0x31] sm:$0xff] %vm4004, %v7564
      %7652 = vst.msk [vmem:[%s7646 + $0x39] sm:$0xff] %vm4004, %v7565
      %7653 = vst.msk [vmem:[%s7646 + $0x49] sm:$0xff] %vm4004, %v7566
      %7654 = vst.msk [vmem:[%s7646 + $0x51] sm:$0xff] %vm4004, %v7567
      %7655 = vst.msk [vmem:[%s7646 + $0x61] sm:$0xff] %vm4004, %v7568
      %7656 = vst.msk [vmem:[%s7646 + $0x69] sm:$0xff] %vm4004, %v7569
      %7657 = vst.msk [vmem:[%s7646 + $0x79] sm:$0xff] %vm4004, %v7570
      %7658 = vst.msk [vmem:[%s7646 + $0x81] sm:$0xff] %vm4004, %v7571
      %7659 = vst.msk [vmem:[%s7646 + $0x91] sm:$0xff] %vm4004, %v7572
      %7660 = vst.msk [vmem:[%s7646 + $0x99] sm:$0xff] %vm4004, %v7573
      %7661 = vst.msk [vmem:[%s7646 + $0xa9] sm:$0xff] %vm4004, %v7574
      %7662 = vst.msk [vmem:[%s7646 + $0xb1] sm:$0xff] %vm4004, %v7575
      %7663 = vst.msk [vmem:[%s7646 + $0xc1] sm:$0xff] %vm4004, %v7576
      %7664 = vst.msk [vmem:[%s7646 + $0xc9] sm:$0xff] %vm4004, %v7577
      %7665 = vst.msk [vmem:[%s7646 + $0xd9] sm:$0xff] %vm4004, %v7578
      %7666 = vst.msk [vmem:[%s7646 + $0xe1] sm:$0xff] %vm4004, %v7579
      %7667 = vst.msk [vmem:[%s7646 + $0xf1] sm:$0xff] %vm4004, %v7580
      %7668 = vst.msk [vmem:[%s7646 + $0xf9] sm:$0xff] %vm4004, %v7581
      %7669 = vst.msk [vmem:[%s7646 + $0x109] sm:$0xff] %vm4004, %v7582
      %7670 = vst.msk [vmem:[%s7646 + $0x111] sm:$0xff] %vm4004, %v7583
      %7671 = vst.msk [vmem:[%s7646 + $0x121] sm:$0xff] %vm4004, %v7584
      %7672 = vst.msk [vmem:[%s7646 + $0x129] sm:$0xff] %vm4004, %v7585
      %7673 = vst.msk [vmem:[%s7646 + $0x139] sm:$0xff] %vm4004, %v7586
      %7674 = vst.msk [vmem:[%s7646 + $0x141] sm:$0xff] %vm4004, %v7587
      %7675 = vst.msk [vmem:[%s7646 + $0x151] sm:$0xff] %vm4004, %v7588
      %7676 = vst.msk [vmem:[%s7646 + $0x159] sm:$0xff] %vm4004, %v7589
      %7677 = vst.msk [vmem:[%s7646 + $0x169] sm:$0xff] %vm4004, %v7590
      %7678 = vst.msk [vmem:[%s7646 + $0x171] sm:$0xff] %vm4004, %v7591
      %v7679 = vld [vmem:[#allocation4] sm:$0xff]
      %v7680 = vld [vmem:[#allocation4 + $0x8] sm:$0xff]
      %v7681 = vld [vmem:[#allocation4 + $0x18] sm:$0xff]
      %v7682 = vld [vmem:[#allocation4 + $0x20] sm:$0xff]
      %v7683 = vld [vmem:[#allocation4 + $0x30] sm:$0xff]
      %v7684 = vld [vmem:[#allocation4 + $0x38] sm:$0xff]
      %v7685 = vld [vmem:[#allocation4 + $0x48] sm:$0xff]
      %v7686 = vld [vmem:[#allocation4 + $0x50] sm:$0xff]
      %v7687 = vld [vmem:[#allocation4 + $0x60] sm:$0xff]
      %v7688 = vld [vmem:[#allocation4 + $0x68] sm:$0xff]
      %v7689 = vld [vmem:[#allocation4 + $0x78] sm:$0xff]
      %v7690 = vld [vmem:[#allocation4 + $0x80] sm:$0xff]
      %v7691 = vld [vmem:[#allocation4 + $0x90] sm:$0xff]
      %v7692 = vld [vmem:[#allocation4 + $0x98] sm:$0xff]
      %v7693 = vld [vmem:[#allocation4 + $0xa8] sm:$0xff]
      %v7694 = vld [vmem:[#allocation4 + $0xb0] sm:$0xff]
      %v7695 = vld [vmem:[#allocation4 + $0xc0] sm:$0xff]
      %v7696 = vld [vmem:[#allocation4 + $0xc8] sm:$0xff]
      %v7697 = vld [vmem:[#allocation4 + $0xd8] sm:$0xff]
      %v7698 = vld [vmem:[#allocation4 + $0xe0] sm:$0xff]
      %v7699 = vld [vmem:[#allocation4 + $0xf0] sm:$0xff]
      %v7700 = vld [vmem:[#allocation4 + $0xf8] sm:$0xff]
      %v7701 = vld [vmem:[#allocation4 + $0x108] sm:$0xff]
      %v7702 = vld [vmem:[#allocation4 + $0x110] sm:$0xff]
      %v7703 = vld [vmem:[#allocation4 + $0x120] sm:$0xff]
      %v7704 = vld [vmem:[#allocation4 + $0x128] sm:$0xff]
      %v7705 = vld [vmem:[#allocation4 + $0x138] sm:$0xff]
      %v7706 = vld [vmem:[#allocation4 + $0x140] sm:$0xff]
      %v7707 = vld [vmem:[#allocation4 + $0x150] sm:$0xff]
      %v7708 = vld [vmem:[#allocation4 + $0x158] sm:$0xff]
      %v7709 = vld [vmem:[#allocation4 + $0x168] sm:$0xff]
      %v7710 = vld [vmem:[#allocation4 + $0x170] sm:$0xff]
      %v7711 = vld [vmem:[%s6] sm:$0xff]
      %v7712 = vld [vmem:[%s6 + $0x8] sm:$0xff]
      %v7713 = vld [vmem:[#allocation4 + $0x1] sm:$0xff]
      %v7714 = vld [vmem:[#allocation4 + $0x9] sm:$0xff]
      %v7715 = vld [vmem:[#allocation4 + $0x19] sm:$0xff]
      %v7716 = vld [vmem:[#allocation4 + $0x21] sm:$0xff]
      %v7717 = vld [vmem:[#allocation4 + $0x31] sm:$0xff]
      %v7718 = vld [vmem:[#allocation4 + $0x39] sm:$0xff]
      %v7719 = vld [vmem:[#allocation4 + $0x49] sm:$0xff]
      %v7720 = vld [vmem:[#allocation4 + $0x51] sm:$0xff]
      %v7721 = vld [vmem:[#allocation4 + $0x61] sm:$0xff]
      %v7722 = vld [vmem:[#allocation4 + $0x69] sm:$0xff]
      %v7723 = vld [vmem:[#allocation4 + $0x79] sm:$0xff]
      %v7724 = vld [vmem:[#allocation4 + $0x81] sm:$0xff]
      %v7725 = vld [vmem:[#allocation4 + $0x91] sm:$0xff]
      %v7726 = vld [vmem:[#allocation4 + $0x99] sm:$0xff]
      %v7727 = vld [vmem:[#allocation4 + $0xa9] sm:$0xff]
      %v7728 = vld [vmem:[#allocation4 + $0xb1] sm:$0xff]
      %v7729 = vld [vmem:[#allocation4 + $0xc1] sm:$0xff]
      %v7730 = vld [vmem:[#allocation4 + $0xc9] sm:$0xff]
      %v7731 = vld [vmem:[#allocation4 + $0xd9] sm:$0xff]
      %v7732 = vld [vmem:[#allocation4 + $0xe1] sm:$0xff]
      %v7733 = vld [vmem:[#allocation4 + $0xf1] sm:$0xff]
      %v7734 = vld [vmem:[#allocation4 + $0xf9] sm:$0xff]
      %v7735 = vld [vmem:[#allocation4 + $0x109] sm:$0xff]
      %v7736 = vld [vmem:[#allocation4 + $0x111] sm:$0xff]
      %v7737 = vld [vmem:[#allocation4 + $0x121] sm:$0xff]
      %v7738 = vld [vmem:[#allocation4 + $0x129] sm:$0xff]
      %v7739 = vld [vmem:[#allocation4 + $0x139] sm:$0xff]
      %v7740 = vld [vmem:[#allocation4 + $0x141] sm:$0xff]
      %v7741 = vld [vmem:[#allocation4 + $0x151] sm:$0xff]
      %v7742 = vld [vmem:[#allocation4 + $0x159] sm:$0xff]
      %v7743 = vld [vmem:[#allocation4 + $0x169] sm:$0xff]
      %v7744 = vld [vmem:[#allocation4 + $0x171] sm:$0xff]
      %s7745 = scalar_lea.vmem %s6, 16
      %v7746 = vld [vmem:[%s7745] sm:$0xff]
      %v7747 = vld [vmem:[%s7745 + $0x8] sm:$0xff]
      %v7749 = vsel %vm4004, %v7713, 0
      %v7752 = vsel %vm4004, %v7714, 0
      %v7755 = vsel %vm4004, %v7715, 0
      %v7758 = vsel %vm4004, %v7716, 0
      %v7761 = vsel %vm4004, %v7717, 0
      %v7764 = vsel %vm4004, %v7718, 0
      %v7767 = vsel %vm4004, %v7719, 0
      %v7770 = vsel %vm4004, %v7720, 0
      %v7773 = vsel %vm4004, %v7721, 0
      %v7776 = vsel %vm4004, %v7722, 0
      %v7779 = vsel %vm4004, %v7723, 0
      %v7782 = vsel %vm4004, %v7724, 0
      %v7785 = vsel %vm4004, %v7725, 0
      %v7788 = vsel %vm4004, %v7726, 0
      %v7791 = vsel %vm4004, %v7727, 0
      %v7794 = vsel %vm4004, %v7728, 0
      %v7797 = vsel %vm4004, %v7729, 0
      %v7800 = vsel %vm4004, %v7730, 0
      %v7803 = vsel %vm4004, %v7731, 0
      %v7806 = vsel %vm4004, %v7732, 0
      %v7809 = vsel %vm4004, %v7733, 0
      %v7812 = vsel %vm4004, %v7734, 0
      %v7815 = vsel %vm4004, %v7735, 0
      %v7818 = vsel %vm4004, %v7736, 0
      %v7821 = vsel %vm4004, %v7737, 0
      %v7824 = vsel %vm4004, %v7738, 0
      %v7827 = vsel %vm4004, %v7739, 0
      %v7830 = vsel %vm4004, %v7740, 0
      %v7833 = vsel %vm4004, %v7741, 0
      %v7836 = vsel %vm4004, %v7742, 0
      %v7839 = vsel %vm4004, %v7743, 0
      %v7842 = vsel %vm4004, %v7744, 0
      %7844 = vmatprep.subr.mxu0 0.0
      %7845 = vmatpush1.msra.mxu0 %v7746
      %7846 = vmatprep.subr.mxu0 0.0
      %7847 = vmatpush1.msra.mxu0 %v7747
      %7848 = vmatprep.subr.mxu0 0.0
      %7849 = vmatpush1.msra.mxu0 0.0
      %7850 = vmatprep.subr.mxu0 0.0
      %7851 = vmatpush1.msra.mxu0 0.0
      %7852 = vmatprep.subr.mxu0 0.0
      %7853 = vmatpush1.msra.mxu0 0.0
      %7854 = vmatprep.subr.mxu0 0.0
      %7855 = vmatpush1.msra.mxu0 0.0
      %7856 = vmatprep.subr.mxu0 0.0
      %7857 = vmatpush1.msra.mxu0 0.0
      %7858 = vmatprep.subr.mxu0 0.0
      %7859 = vmatpush1.msra.mxu0 0.0
      %7860 = vmatprep.subr.mxu0 0.0
      %7861 = vmatpush1.msra.mxu0 0.0
      %7862 = vmatprep.subr.mxu0 0.0
      %7863 = vmatpush1.msra.mxu0 0.0
      %7864 = vmatprep.subr.mxu0 0.0
      %7865 = vmatpush1.msra.mxu0 0.0
      %7866 = vmatprep.subr.mxu0 0.0
      %7867 = vmatpush1.msra.mxu0 0.0
      %7868 = vmatprep.subr.mxu0 0.0
      %7869 = vmatpush1.msra.mxu0 0.0
      %7870 = vmatprep.subr.mxu0 0.0
      %7871 = vmatpush1.msra.mxu0 0.0
      %7872 = vmatprep.subr.mxu0 0.0
      %7873 = vmatpush1.msra.mxu0 0.0
      %7874 = vmatprep.subr.mxu0 0.0
      %7875 = vmatpush1.msra.mxu0 0.0
      %7876 = vmatprep.subr.mxu0 0.0
      %7877 = vmatpush1.msra.mxu0 0.0
      %7878 = vmatprep.subr.mxu0 0.0
      %7879 = vmatpush1.msra.mxu0 0.0
      %7880 = vmatprep.subr.mxu0 0.0
      %7881 = vmatpush1.msra.mxu0 0.0
      %7882 = vmatprep.subr.mxu0 0.0
      %7883 = vmatpush1.msra.mxu0 0.0
      %7884 = vmatprep.subr.mxu0 0.0
      %7885 = vmatpush1.msra.mxu0 0.0
      %7886 = vmatprep.subr.mxu0 0.0
      %7887 = vmatpush1.msra.mxu0 0.0
      %7888 = vmatprep.subr.mxu0 0.0
      %7889 = vmatpush1.msra.mxu0 0.0
      %7890 = vmatprep.subr.mxu0 0.0
      %7891 = vmatpush1.msra.mxu0 0.0
      %7892 = vmatprep.subr.mxu0 0.0
      %7893 = vmatpush1.msra.mxu0 0.0
      %7894 = vmatprep.subr.mxu0 0.0
      %7895 = vmatpush1.msra.mxu0 0.0
      %7896 = vmatprep.subr.mxu0 0.0
      %7897 = vmatpush1.msra.mxu0 0.0
      %7898 = vmatprep.subr.mxu0 0.0
      %7899 = vmatpush1.msra.mxu0 0.0
      %7900 = vmatprep.subr.mxu0 0.0
      %7901 = vmatpush1.msra.mxu0 0.0
      %7902 = vmatprep.subr.mxu0 0.0
      %7903 = vmatpush1.msra.mxu0 0.0
      %7904 = vmatprep.subr.mxu0 0.0
      %7905 = vmatpush1.msra.mxu0 0.0
      %7906 = vmatprep.subr.mxu0 0.0
      %7907 = vmatpush1.msra.mxu0 0.0
      %7908 = vmatprep.mubr.f32.mxu0 0.0
      %7909 = vmatmul.mubr.f32.gmra.mrb[0].mxu0 %v7749
      %v7910 = vpop.f32.mrb[0].mxu0
      %v7911 = vadd.f32 0.0, %v7910
      %v7912 = vpop.f32.mrb[0].mxu0
      %7913 = vmatprep.mubr.f32.mxu0 0.0
      %7914 = vmatmul.mubr.f32.gmra.mrb[0].mxu0 %v7752
      %v7915 = vpop.f32.mrb[0].mxu0
      %v7916 = vadd.f32 0.0, %v7915
      %v7917 = vpop.f32.mrb[0].mxu0
      %7918 = vmatprep.mubr.f32.mxu0 0.0
      %7919 = vmatmul.mubr.f32.gmra.mrb[0].mxu0 %v7755
      %v7920 = vpop.f32.mrb[0].mxu0
      %v7921 = vadd.f32 0.0, %v7920
      %v7922 = vpop.f32.mrb[0].mxu0
      %7923 = vmatprep.mubr.f32.mxu0 0.0
      %7924 = vmatmul.mubr.f32.gmra.mrb[0].mxu0 %v7758
      %v7925 = vpop.f32.mrb[0].mxu0
      %v7926 = vadd.f32 0.0, %v7925
      %v7927 = vpop.f32.mrb[0].mxu0
      %7928 = vmatprep.mubr.f32.mxu0 0.0
      %7929 = vmatmul.mubr.f32.gmra.mrb[0].mxu0 %v7761
      %v7930 = vpop.f32.mrb[0].mxu0
      %v7931 = vadd.f32 0.0, %v7930
      %v7932 = vpop.f32.mrb[0].mxu0
      %7933 = vmatprep.mubr.f32.mxu0 0.0
      %7934 = vmatmul.mubr.f32.gmra.mrb[0].mxu0 %v7764
      %v7935 = vpop.f32.mrb[0].mxu0
      %v7936 = vadd.f32 0.0, %v7935
      %v7937 = vpop.f32.mrb[0].mxu0
      %7938 = vmatprep.mubr.f32.mxu0 0.0
      %7939 = vmatmul.mubr.f32.gmra.mrb[0].mxu0 %v7767
      %v7940 = vpop.f32.mrb[0].mxu0
      %v7941 = vadd.f32 0.0, %v7940
      %v7942 = vpop.f32.mrb[0].mxu0
      %7943 = vmatprep.mubr.f32.mxu0 0.0
      %7944 = vmatmul.mubr.f32.gmra.mrb[0].mxu0 %v7770
      %v7945 = vpop.f32.mrb[0].mxu0
      %v7946 = vadd.f32 0.0, %v7945
      %v7947 = vpop.f32.mrb[0].mxu0
      %7948 = vmatprep.mubr.f32.mxu0 0.0
      %7949 = vmatmul.mubr.f32.gmra.mrb[0].mxu0 %v7773
      %v7950 = vpop.f32.mrb[0].mxu0
      %v7951 = vadd.f32 0.0, %v7950
      %v7952 = vpop.f32.mrb[0].mxu0
      %7953 = vmatprep.mubr.f32.mxu0 0.0
      %7954 = vmatmul.mubr.f32.gmra.mrb[0].mxu0 %v7776
      %v7955 = vpop.f32.mrb[0].mxu0
      %v7956 = vadd.f32 0.0, %v7955
      %v7957 = vpop.f32.mrb[0].mxu0
      %7958 = vmatprep.mubr.f32.mxu0 0.0
      %7959 = vmatmul.mubr.f32.gmra.mrb[0].mxu0 %v7779
      %v7960 = vpop.f32.mrb[0].mxu0
      %v7961 = vadd.f32 0.0, %v7960
      %v7962 = vpop.f32.mrb[0].mxu0
      %7963 = vmatprep.mubr.f32.mxu0 0.0
      %7964 = vmatmul.mubr.f32.gmra.mrb[0].mxu0 %v7782
      %v7965 = vpop.f32.mrb[0].mxu0
      %v7966 = vadd.f32 0.0, %v7965
      %v7967 = vpop.f32.mrb[0].mxu0
      %7968 = vmatprep.mubr.f32.mxu0 0.0
      %7969 = vmatmul.mubr.f32.gmra.mrb[0].mxu0 %v7785
      %v7970 = vpop.f32.mrb[0].mxu0
      %v7971 = vadd.f32 0.0, %v7970
      %v7972 = vpop.f32.mrb[0].mxu0
      %7973 = vmatprep.mubr.f32.mxu0 0.0
      %7974 = vmatmul.mubr.f32.gmra.mrb[0].mxu0 %v7788
      %v7975 = vpop.f32.mrb[0].mxu0
      %v7976 = vadd.f32 0.0, %v7975
      %v7977 = vpop.f32.mrb[0].mxu0
      %7978 = vmatprep.mubr.f32.mxu0 0.0
      %7979 = vmatmul.mubr.f32.gmra.mrb[0].mxu0 %v7791
      %v7980 = vpop.f32.mrb[0].mxu0
      %v7981 = vadd.f32 0.0, %v7980
      %v7982 = vpop.f32.mrb[0].mxu0
      %7983 = vmatprep.mubr.f32.mxu0 0.0
      %7984 = vmatmul.mubr.f32.gmra.mrb[0].mxu0 %v7794
      %v7985 = vpop.f32.mrb[0].mxu0
      %v7986 = vadd.f32 0.0, %v7985
      %v7987 = vpop.f32.mrb[0].mxu0
      %7988 = vmatprep.mubr.f32.mxu0 0.0
      %7989 = vmatmul.mubr.f32.gmra.mrb[0].mxu0 %v7797
      %v7990 = vpop.f32.mrb[0].mxu0
      %v7991 = vadd.f32 0.0, %v7990
      %v7992 = vpop.f32.mrb[0].mxu0
      %7993 = vmatprep.mubr.f32.mxu0 0.0
      %7994 = vmatmul.mubr.f32.gmra.mrb[0].mxu0 %v7800
      %v7995 = vpop.f32.mrb[0].mxu0
      %v7996 = vadd.f32 0.0, %v7995
      %v7997 = vpop.f32.mrb[0].mxu0
      %7998 = vmatprep.mubr.f32.mxu0 0.0
      %7999 = vmatmul.mubr.f32.gmra.mrb[0].mxu0 %v7803
      %v8000 = vpop.f32.mrb[0].mxu0
      %v8001 = vadd.f32 0.0, %v8000
      %v8002 = vpop.f32.mrb[0].mxu0
      %8003 = vmatprep.mubr.f32.mxu0 0.0
      %8004 = vmatmul.mubr.f32.gmra.mrb[0].mxu0 %v7806
      %v8005 = vpop.f32.mrb[0].mxu0
      %v8006 = vadd.f32 0.0, %v8005
      %v8007 = vpop.f32.mrb[0].mxu0
      %8008 = vmatprep.mubr.f32.mxu0 0.0
      %8009 = vmatmul.mubr.f32.gmra.mrb[0].mxu0 %v7809
      %v8010 = vpop.f32.mrb[0].mxu0
      %v8011 = vadd.f32 0.0, %v8010
      %v8012 = vpop.f32.mrb[0].mxu0
      %8013 = vmatprep.mubr.f32.mxu0 0.0
      %8014 = vmatmul.mubr.f32.gmra.mrb[0].mxu0 %v7812
      %v8015 = vpop.f32.mrb[0].mxu0
      %v8016 = vadd.f32 0.0, %v8015
      %v8017 = vpop.f32.mrb[0].mxu0
      %8018 = vmatprep.mubr.f32.mxu0 0.0
      %8019 = vmatmul.mubr.f32.gmra.mrb[0].mxu0 %v7815
      %v8020 = vpop.f32.mrb[0].mxu0
      %v8021 = vadd.f32 0.0, %v8020
      %v8022 = vpop.f32.mrb[0].mxu0
      %8023 = vmatprep.mubr.f32.mxu0 0.0
      %8024 = vmatmul.mubr.f32.gmra.mrb[0].mxu0 %v7818
      %v8025 = vpop.f32.mrb[0].mxu0
      %v8026 = vadd.f32 0.0, %v8025
      %v8027 = vpop.f32.mrb[0].mxu0
      %8028 = vmatprep.mubr.f32.mxu0 0.0
      %8029 = vmatmul.mubr.f32.gmra.mrb[0].mxu0 %v7821
      %v8030 = vpop.f32.mrb[0].mxu0
      %v8031 = vadd.f32 0.0, %v8030
      %v8032 = vpop.f32.mrb[0].mxu0
      %8033 = vmatprep.mubr.f32.mxu0 0.0
      %8034 = vmatmul.mubr.f32.gmra.mrb[0].mxu0 %v7824
      %v8035 = vpop.f32.mrb[0].mxu0
      %v8036 = vadd.f32 0.0, %v8035
      %v8037 = vpop.f32.mrb[0].mxu0
      %8038 = vmatprep.mubr.f32.mxu0 0.0
      %8039 = vmatmul.mubr.f32.gmra.mrb[0].mxu0 %v7827
      %v8040 = vpop.f32.mrb[0].mxu0
      %v8041 = vadd.f32 0.0, %v8040
      %v8042 = vpop.f32.mrb[0].mxu0
      %8043 = vmatprep.mubr.f32.mxu0 0.0
      %8044 = vmatmul.mubr.f32.gmra.mrb[0].mxu0 %v7830
      %v8045 = vpop.f32.mrb[0].mxu0
      %v8046 = vadd.f32 0.0, %v8045
      %v8047 = vpop.f32.mrb[0].mxu0
      %8048 = vmatprep.mubr.f32.mxu0 0.0
      %8049 = vmatmul.mubr.f32.gmra.mrb[0].mxu0 %v7833
      %v8050 = vpop.f32.mrb[0].mxu0
      %v8051 = vadd.f32 0.0, %v8050
      %v8052 = vpop.f32.mrb[0].mxu0
      %8053 = vmatprep.mubr.f32.mxu0 0.0
      %8054 = vmatmul.mubr.f32.gmra.mrb[0].mxu0 %v7836
      %v8055 = vpop.f32.mrb[0].mxu0
      %v8056 = vadd.f32 0.0, %v8055
      %v8057 = vpop.f32.mrb[0].mxu0
      %8058 = vmatprep.mubr.f32.mxu0 0.0
      %8059 = vmatmul.mubr.f32.gmra.mrb[0].mxu0 %v7839
      %v8060 = vpop.f32.mrb[0].mxu0
      %v8061 = vadd.f32 0.0, %v8060
      %v8062 = vpop.f32.mrb[0].mxu0
      %8063 = vmatprep.mubr.f32.mxu0 0.0
      %8064 = vmatmul.mubr.f32.gmra.mrb[0].mxu0 %v7842
      %v8065 = vpop.f32.mrb[0].mxu0
      %v8066 = vadd.f32 0.0, %v8065
      %v8067 = vpop.f32.mrb[0].mxu0
      %8068 = vdwg.mxu0
      %v8070 = vsel %vm4004, %v7679, 0
      %v8073 = vsel %vm4004, %v7680, 0
      %v8076 = vsel %vm4004, %v7681, 0
      %v8079 = vsel %vm4004, %v7682, 0
      %v8082 = vsel %vm4004, %v7683, 0
      %v8085 = vsel %vm4004, %v7684, 0
      %v8088 = vsel %vm4004, %v7685, 0
      %v8091 = vsel %vm4004, %v7686, 0
      %v8094 = vsel %vm4004, %v7687, 0
      %v8097 = vsel %vm4004, %v7688, 0
      %v8100 = vsel %vm4004, %v7689, 0
      %v8103 = vsel %vm4004, %v7690, 0
      %v8106 = vsel %vm4004, %v7691, 0
      %v8109 = vsel %vm4004, %v7692, 0
      %v8112 = vsel %vm4004, %v7693, 0
      %v8115 = vsel %vm4004, %v7694, 0
      %v8118 = vsel %vm4004, %v7695, 0
      %v8121 = vsel %vm4004, %v7696, 0
      %v8124 = vsel %vm4004, %v7697, 0
      %v8127 = vsel %vm4004, %v7698, 0
      %v8130 = vsel %vm4004, %v7699, 0
      %v8133 = vsel %vm4004, %v7700, 0
      %v8136 = vsel %vm4004, %v7701, 0
      %v8139 = vsel %vm4004, %v7702, 0
      %v8142 = vsel %vm4004, %v7703, 0
      %v8145 = vsel %vm4004, %v7704, 0
      %v8148 = vsel %vm4004, %v7705, 0
      %v8151 = vsel %vm4004, %v7706, 0
      %v8154 = vsel %vm4004, %v7707, 0
      %v8157 = vsel %vm4004, %v7708, 0
      %v8160 = vsel %vm4004, %v7709, 0
      %v8163 = vsel %vm4004, %v7710, 0
      %8165 = vmatprep.subr.mxu0 0.0
      %8166 = vmatpush1.msra.mxu0 %v7711
      %8167 = vmatprep.subr.mxu0 0.0
      %8168 = vmatpush1.msra.mxu0 %v7712
      %8169 = vmatprep.subr.mxu0 0.0
      %8170 = vmatpush1.msra.mxu0 0.0
      %8171 = vmatprep.subr.mxu0 0.0
      %8172 = vmatpush1.msra.mxu0 0.0
      %8173 = vmatprep.subr.mxu0 0.0
      %8174 = vmatpush1.msra.mxu0 0.0
      %8175 = vmatprep.subr.mxu0 0.0
      %8176 = vmatpush1.msra.mxu0 0.0
      %8177 = vmatprep.subr.mxu0 0.0
      %8178 = vmatpush1.msra.mxu0 0.0
      %8179 = vmatprep.subr.mxu0 0.0
      %8180 = vmatpush1.msra.mxu0 0.0
      %8181 = vmatprep.subr.mxu0 0.0
      %8182 = vmatpush1.msra.mxu0 0.0
      %8183 = vmatprep.subr.mxu0 0.0
      %8184 = vmatpush1.msra.mxu0 0.0
      %8185 = vmatprep.subr.mxu0 0.0
      %8186 = vmatpush1.msra.mxu0 0.0
      %8187 = vmatprep.subr.mxu0 0.0
      %8188 = vmatpush1.msra.mxu0 0.0
      %8189 = vmatprep.subr.mxu0 0.0
      %8190 = vmatpush1.msra.mxu0 0.0
      %8191 = vmatprep.subr.mxu0 0.0
      %8192 = vmatpush1.msra.mxu0 0.0
      %8193 = vmatprep.subr.mxu0 0.0
      %8194 = vmatpush1.msra.mxu0 0.0
      %8195 = vmatprep.subr.mxu0 0.0
      %8196 = vmatpush1.msra.mxu0 0.0
      %8197 = vmatprep.subr.mxu0 0.0
      %8198 = vmatpush1.msra.mxu0 0.0
      %8199 = vmatprep.subr.mxu0 0.0
      %8200 = vmatpush1.msra.mxu0 0.0
      %8201 = vmatprep.subr.mxu0 0.0
      %8202 = vmatpush1.msra.mxu0 0.0
      %8203 = vmatprep.subr.mxu0 0.0
      %8204 = vmatpush1.msra.mxu0 0.0
      %8205 = vmatprep.subr.mxu0 0.0
      %8206 = vmatpush1.msra.mxu0 0.0
      %8207 = vmatprep.subr.mxu0 0.0
      %8208 = vmatpush1.msra.mxu0 0.0
      %8209 = vmatprep.subr.mxu0 0.0
      %8210 = vmatpush1.msra.mxu0 0.0
      %8211 = vmatprep.subr.mxu0 0.0
      %8212 = vmatpush1.msra.mxu0 0.0
      %8213 = vmatprep.subr.mxu0 0.0
      %8214 = vmatpush1.msra.mxu0 0.0
      %8215 = vmatprep.subr.mxu0 0.0
      %8216 = vmatpush1.msra.mxu0 0.0
      %8217 = vmatprep.subr.mxu0 0.0
      %8218 = vmatpush1.msra.mxu0 0.0
      %8219 = vmatprep.subr.mxu0 0.0
      %8220 = vmatpush1.msra.mxu0 0.0
      %8221 = vmatprep.subr.mxu0 0.0
      %8222 = vmatpush1.msra.mxu0 0.0
      %8223 = vmatprep.subr.mxu0 0.0
      %8224 = vmatpush1.msra.mxu0 0.0
      %8225 = vmatprep.subr.mxu0 0.0
      %8226 = vmatpush1.msra.mxu0 0.0
      %8227 = vmatprep.subr.mxu0 0.0
      %8228 = vmatpush1.msra.mxu0 0.0
      %8229 = vmatprep.mubr.f32.mxu0 0.0
      %8230 = vmatmul.mubr.f32.gmra.mrb[0].mxu0 %v8070
      %v8231 = vpop.f32.mrb[0].mxu0
      %v8232 = vadd.f32 %v7911, %v8231
      %v8233 = vpop.f32.mrb[0].mxu0
      %8234 = vmatprep.mubr.f32.mxu0 0.0
      %8235 = vmatmul.mubr.f32.gmra.mrb[0].mxu0 %v8073
      %v8236 = vpop.f32.mrb[0].mxu0
      %v8237 = vadd.f32 %v7916, %v8236
      %v8238 = vpop.f32.mrb[0].mxu0
      %8239 = vmatprep.mubr.f32.mxu0 0.0
      %8240 = vmatmul.mubr.f32.gmra.mrb[0].mxu0 %v8076
      %v8241 = vpop.f32.mrb[0].mxu0
      %v8242 = vadd.f32 %v7921, %v8241
      %v8243 = vpop.f32.mrb[0].mxu0
      %8244 = vmatprep.mubr.f32.mxu0 0.0
      %8245 = vmatmul.mubr.f32.gmra.mrb[0].mxu0 %v8079
      %v8246 = vpop.f32.mrb[0].mxu0
      %v8247 = vadd.f32 %v7926, %v8246
      %v8248 = vpop.f32.mrb[0].mxu0
      %8249 = vmatprep.mubr.f32.mxu0 0.0
      %8250 = vmatmul.mubr.f32.gmra.mrb[0].mxu0 %v8082
      %v8251 = vpop.f32.mrb[0].mxu0
      %v8252 = vadd.f32 %v7931, %v8251
      %v8253 = vpop.f32.mrb[0].mxu0
      %8254 = vmatprep.mubr.f32.mxu0 0.0
      %8255 = vmatmul.mubr.f32.gmra.mrb[0].mxu0 %v8085
      %v8256 = vpop.f32.mrb[0].mxu0
      %v8257 = vadd.f32 %v7936, %v8256
      %v8258 = vpop.f32.mrb[0].mxu0
      %8259 = vmatprep.mubr.f32.mxu0 0.0
      %8260 = vmatmul.mubr.f32.gmra.mrb[0].mxu0 %v8088
      %v8261 = vpop.f32.mrb[0].mxu0
      %v8262 = vadd.f32 %v7941, %v8261
      %v8263 = vpop.f32.mrb[0].mxu0
      %8264 = vmatprep.mubr.f32.mxu0 0.0
      %8265 = vmatmul.mubr.f32.gmra.mrb[0].mxu0 %v8091
      %v8266 = vpop.f32.mrb[0].mxu0
      %v8267 = vadd.f32 %v7946, %v8266
      %v8268 = vpop.f32.mrb[0].mxu0
      %8269 = vmatprep.mubr.f32.mxu0 0.0
      %8270 = vmatmul.mubr.f32.gmra.mrb[0].mxu0 %v8094
      %v8271 = vpop.f32.mrb[0].mxu0
      %v8272 = vadd.f32 %v7951, %v8271
      %v8273 = vpop.f32.mrb[0].mxu0
      %8274 = vmatprep.mubr.f32.mxu0 0.0
      %8275 = vmatmul.mubr.f32.gmra.mrb[0].mxu0 %v8097
      %v8276 = vpop.f32.mrb[0].mxu0
      %v8277 = vadd.f32 %v7956, %v8276
      %v8278 = vpop.f32.mrb[0].mxu0
      %8279 = vmatprep.mubr.f32.mxu0 0.0
      %8280 = vmatmul.mubr.f32.gmra.mrb[0].mxu0 %v8100
      %v8281 = vpop.f32.mrb[0].mxu0
      %v8282 = vadd.f32 %v7961, %v8281
      %v8283 = vpop.f32.mrb[0].mxu0
      %8284 = vmatprep.mubr.f32.mxu0 0.0
      %8285 = vmatmul.mubr.f32.gmra.mrb[0].mxu0 %v8103
      %v8286 = vpop.f32.mrb[0].mxu0
      %v8287 = vadd.f32 %v7966, %v8286
      %v8288 = vpop.f32.mrb[0].mxu0
      %8289 = vmatprep.mubr.f32.mxu0 0.0
      %8290 = vmatmul.mubr.f32.gmra.mrb[0].mxu0 %v8106
      %v8291 = vpop.f32.mrb[0].mxu0
      %v8292 = vadd.f32 %v7971, %v8291
      %v8293 = vpop.f32.mrb[0].mxu0
      %8294 = vmatprep.mubr.f32.mxu0 0.0
      %8295 = vmatmul.mubr.f32.gmra.mrb[0].mxu0 %v8109
      %v8296 = vpop.f32.mrb[0].mxu0
      %v8297 = vadd.f32 %v7976, %v8296
      %v8298 = vpop.f32.mrb[0].mxu0
      %8299 = vmatprep.mubr.f32.mxu0 0.0
      %8300 = vmatmul.mubr.f32.gmra.mrb[0].mxu0 %v8112
      %v8301 = vpop.f32.mrb[0].mxu0
      %v8302 = vadd.f32 %v7981, %v8301
      %v8303 = vpop.f32.mrb[0].mxu0
      %8304 = vmatprep.mubr.f32.mxu0 0.0
      %8305 = vmatmul.mubr.f32.gmra.mrb[0].mxu0 %v8115
      %v8306 = vpop.f32.mrb[0].mxu0
      %v8307 = vadd.f32 %v7986, %v8306
      %v8308 = vpop.f32.mrb[0].mxu0
      %8309 = vmatprep.mubr.f32.mxu0 0.0
      %8310 = vmatmul.mubr.f32.gmra.mrb[0].mxu0 %v8118
      %v8311 = vpop.f32.mrb[0].mxu0
      %v8312 = vadd.f32 %v7991, %v8311
      %v8313 = vpop.f32.mrb[0].mxu0
      %8314 = vmatprep.mubr.f32.mxu0 0.0
      %8315 = vmatmul.mubr.f32.gmra.mrb[0].mxu0 %v8121
      %v8316 = vpop.f32.mrb[0].mxu0
      %v8317 = vadd.f32 %v7996, %v8316
      %v8318 = vpop.f32.mrb[0].mxu0
      %8319 = vmatprep.mubr.f32.mxu0 0.0
      %8320 = vmatmul.mubr.f32.gmra.mrb[0].mxu0 %v8124
      %v8321 = vpop.f32.mrb[0].mxu0
      %v8322 = vadd.f32 %v8001, %v8321
      %v8323 = vpop.f32.mrb[0].mxu0
      %8324 = vmatprep.mubr.f32.mxu0 0.0
      %8325 = vmatmul.mubr.f32.gmra.mrb[0].mxu0 %v8127
      %v8326 = vpop.f32.mrb[0].mxu0
      %v8327 = vadd.f32 %v8006, %v8326
      %v8328 = vpop.f32.mrb[0].mxu0
      %8329 = vmatprep.mubr.f32.mxu0 0.0
      %8330 = vmatmul.mubr.f32.gmra.mrb[0].mxu0 %v8130
      %v8331 = vpop.f32.mrb[0].mxu0
      %v8332 = vadd.f32 %v8011, %v8331
      %v8333 = vpop.f32.mrb[0].mxu0
      %8334 = vmatprep.mubr.f32.mxu0 0.0
      %8335 = vmatmul.mubr.f32.gmra.mrb[0].mxu0 %v8133
      %v8336 = vpop.f32.mrb[0].mxu0
      %v8337 = vadd.f32 %v8016, %v8336
      %v8338 = vpop.f32.mrb[0].mxu0
      %8339 = vmatprep.mubr.f32.mxu0 0.0
      %8340 = vmatmul.mubr.f32.gmra.mrb[0].mxu0 %v8136
      %v8341 = vpop.f32.mrb[0].mxu0
      %v8342 = vadd.f32 %v8021, %v8341
      %v8343 = vpop.f32.mrb[0].mxu0
      %8344 = vmatprep.mubr.f32.mxu0 0.0
      %8345 = vmatmul.mubr.f32.gmra.mrb[0].mxu0 %v8139
      %v8346 = vpop.f32.mrb[0].mxu0
      %v8347 = vadd.f32 %v8026, %v8346
      %v8348 = vpop.f32.mrb[0].mxu0
      %8349 = vmatprep.mubr.f32.mxu0 0.0
      %8350 = vmatmul.mubr.f32.gmra.mrb[0].mxu0 %v8142
      %v8351 = vpop.f32.mrb[0].mxu0
      %v8352 = vadd.f32 %v8031, %v8351
      %v8353 = vpop.f32.mrb[0].mxu0
      %8354 = vmatprep.mubr.f32.mxu0 0.0
      %8355 = vmatmul.mubr.f32.gmra.mrb[0].mxu0 %v8145
      %v8356 = vpop.f32.mrb[0].mxu0
      %v8357 = vadd.f32 %v8036, %v8356
      %v8358 = vpop.f32.mrb[0].mxu0
      %8359 = vmatprep.mubr.f32.mxu0 0.0
      %8360 = vmatmul.mubr.f32.gmra.mrb[0].mxu0 %v8148
      %v8361 = vpop.f32.mrb[0].mxu0
      %v8362 = vadd.f32 %v8041, %v8361
      %v8363 = vpop.f32.mrb[0].mxu0
      %8364 = vmatprep.mubr.f32.mxu0 0.0
      %8365 = vmatmul.mubr.f32.gmra.mrb[0].mxu0 %v8151
      %v8366 = vpop.f32.mrb[0].mxu0
      %v8367 = vadd.f32 %v8046, %v8366
      %v8368 = vpop.f32.mrb[0].mxu0
      %8369 = vmatprep.mubr.f32.mxu0 0.0
      %8370 = vmatmul.mubr.f32.gmra.mrb[0].mxu0 %v8154
      %v8371 = vpop.f32.mrb[0].mxu0
      %v8372 = vadd.f32 %v8051, %v8371
      %v8373 = vpop.f32.mrb[0].mxu0
      %8374 = vmatprep.mubr.f32.mxu0 0.0
      %8375 = vmatmul.mubr.f32.gmra.mrb[0].mxu0 %v8157
      %v8376 = vpop.f32.mrb[0].mxu0
      %v8377 = vadd.f32 %v8056, %v8376
      %v8378 = vpop.f32.mrb[0].mxu0
      %8379 = vmatprep.mubr.f32.mxu0 0.0
      %8380 = vmatmul.mubr.f32.gmra.mrb[0].mxu0 %v8160
      %v8381 = vpop.f32.mrb[0].mxu0
      %v8382 = vadd.f32 %v8061, %v8381
      %v8383 = vpop.f32.mrb[0].mxu0
      %8384 = vmatprep.mubr.f32.mxu0 0.0
      %8385 = vmatmul.mubr.f32.gmra.mrb[0].mxu0 %v8163
      %v8386 = vpop.f32.mrb[0].mxu0
      %v8387 = vadd.f32 %v8066, %v8386
      %v8388 = vpop.f32.mrb[0].mxu0
      %8389 = vdwg.mxu0
      %v8390 = vld [vmem:[#allocation4 + $0x2] sm:$0xff]
      %v8391 = vld [vmem:[#allocation4 + $0xa] sm:$0xff]
      %v8392 = vld [vmem:[#allocation4 + $0x1a] sm:$0xff]
      %v8393 = vld [vmem:[#allocation4 + $0x22] sm:$0xff]
      %v8394 = vld [vmem:[#allocation4 + $0x32] sm:$0xff]
      %v8395 = vld [vmem:[#allocation4 + $0x3a] sm:$0xff]
      %v8396 = vld [vmem:[#allocation4 + $0x4a] sm:$0xff]
      %v8397 = vld [vmem:[#allocation4 + $0x52] sm:$0xff]
      %v8398 = vld [vmem:[#allocation4 + $0x62] sm:$0xff]
      %v8399 = vld [vmem:[#allocation4 + $0x6a] sm:$0xff]
      %v8400 = vld [vmem:[#allocation4 + $0x7a] sm:$0xff]
      %v8401 = vld [vmem:[#allocation4 + $0x82] sm:$0xff]
      %v8402 = vld [vmem:[#allocation4 + $0x92] sm:$0xff]
      %v8403 = vld [vmem:[#allocation4 + $0x9a] sm:$0xff]
      %v8404 = vld [vmem:[#allocation4 + $0xaa] sm:$0xff]
      %v8405 = vld [vmem:[#allocation4 + $0xb2] sm:$0xff]
      %v8406 = vld [vmem:[#allocation4 + $0xc2] sm:$0xff]
      %v8407 = vld [vmem:[#allocation4 + $0xca] sm:$0xff]
      %v8408 = vld [vmem:[#allocation4 + $0xda] sm:$0xff]
      %v8409 = vld [vmem:[#allocation4 + $0xe2] sm:$0xff]
      %v8410 = vld [vmem:[#allocation4 + $0xf2] sm:$0xff]
      %v8411 = vld [vmem:[#allocation4 + $0xfa] sm:$0xff]
      %v8412 = vld [vmem:[#allocation4 + $0x10a] sm:$0xff]
      %v8413 = vld [vmem:[#allocation4 + $0x112] sm:$0xff]
      %v8414 = vld [vmem:[#allocation4 + $0x122] sm:$0xff]
      %v8415 = vld [vmem:[#allocation4 + $0x12a] sm:$0xff]
      %v8416 = vld [vmem:[#allocation4 + $0x13a] sm:$0xff]
      %v8417 = vld [vmem:[#allocation4 + $0x142] sm:$0xff]
      %v8418 = vld [vmem:[#allocation4 + $0x152] sm:$0xff]
      %v8419 = vld [vmem:[#allocation4 + $0x15a] sm:$0xff]
      %v8420 = vld [vmem:[#allocation4 + $0x16a] sm:$0xff]
      %v8421 = vld [vmem:[#allocation4 + $0x172] sm:$0xff]
      %s8422 = scalar_lea.vmem %s6, 32
      %v8423 = vld [vmem:[%s8422] sm:$0xff]
      %v8424 = vld [vmem:[%s8422 + $0x8] sm:$0xff]
      %v8426 = vsel %vm4004, %v8390, 0
      %v8429 = vsel %vm4004, %v8391, 0
      %v8432 = vsel %vm4004, %v8392, 0
      %v8435 = vsel %vm4004, %v8393, 0
      %v8438 = vsel %vm4004, %v8394, 0
      %v8441 = vsel %vm4004, %v8395, 0
      %v8444 = vsel %vm4004, %v8396, 0
      %v8447 = vsel %vm4004, %v8397, 0
      %v8450 = vsel %vm4004, %v8398, 0
      %v8453 = vsel %vm4004, %v8399, 0
      %v8456 = vsel %vm4004, %v8400, 0
      %v8459 = vsel %vm4004, %v8401, 0
      %v8462 = vsel %vm4004, %v8402, 0
      %v8465 = vsel %vm4004, %v8403, 0
      %v8468 = vsel %vm4004, %v8404, 0
      %v8471 = vsel %vm4004, %v8405, 0
      %v8474 = vsel %vm4004, %v8406, 0
      %v8477 = vsel %vm4004, %v8407, 0
      %v8480 = vsel %vm4004, %v8408, 0
      %v8483 = vsel %vm4004, %v8409, 0
      %v8486 = vsel %vm4004, %v8410, 0
      %v8489 = vsel %vm4004, %v8411, 0
      %v8492 = vsel %vm4004, %v8412, 0
      %v8495 = vsel %vm4004, %v8413, 0
      %v8498 = vsel %vm4004, %v8414, 0
      %v8501 = vsel %vm4004, %v8415, 0
      %v8504 = vsel %vm4004, %v8416, 0
      %v8507 = vsel %vm4004, %v8417, 0
      %v8510 = vsel %vm4004, %v8418, 0
      %v8513 = vsel %vm4004, %v8419, 0
      %v8516 = vsel %vm4004, %v8420, 0
      %v8519 = vsel %vm4004, %v8421, 0
      %8521 = vmatprep.subr.mxu0 0.0
      %8522 = vmatpush1.msra.mxu0 %v8423
      %8523 = vmatprep.subr.mxu0 0.0
      %8524 = vmatpush1.msra.mxu0 %v8424
      %8525 = vmatprep.subr.mxu0 0.0
      %8526 = vmatpush1.msra.mxu0 0.0
      %8527 = vmatprep.subr.mxu0 0.0
      %8528 = vmatpush1.msra.mxu0 0.0
      %8529 = vmatprep.subr.mxu0 0.0
      %8530 = vmatpush1.msra.mxu0 0.0
      %8531 = vmatprep.subr.mxu0 0.0
      %8532 = vmatpush1.msra.mxu0 0.0
      %8533 = vmatprep.subr.mxu0 0.0
      %8534 = vmatpush1.msra.mxu0 0.0
      %8535 = vmatprep.subr.mxu0 0.0
      %8536 = vmatpush1.msra.mxu0 0.0
      %8537 = vmatprep.subr.mxu0 0.0
      %8538 = vmatpush1.msra.mxu0 0.0
      %8539 = vmatprep.subr.mxu0 0.0
      %8540 = vmatpush1.msra.mxu0 0.0
      %8541 = vmatprep.subr.mxu0 0.0
      %8542 = vmatpush1.msra.mxu0 0.0
      %8543 = vmatprep.subr.mxu0 0.0
      %8544 = vmatpush1.msra.mxu0 0.0
      %8545 = vmatprep.subr.mxu0 0.0
      %8546 = vmatpush1.msra.mxu0 0.0
      %8547 = vmatprep.subr.mxu0 0.0
      %8548 = vmatpush1.msra.mxu0 0.0
      %8549 = vmatprep.subr.mxu0 0.0
      %8550 = vmatpush1.msra.mxu0 0.0
      %8551 = vmatprep.subr.mxu0 0.0
      %8552 = vmatpush1.msra.mxu0 0.0
      %8553 = vmatprep.subr.mxu0 0.0
      %8554 = vmatpush1.msra.mxu0 0.0
      %8555 = vmatprep.subr.mxu0 0.0
      %8556 = vmatpush1.msra.mxu0 0.0
      %8557 = vmatprep.subr.mxu0 0.0
      %8558 = vmatpush1.msra.mxu0 0.0
      %8559 = vmatprep.subr.mxu0 0.0
      %8560 = vmatpush1.msra.mxu0 0.0
      %8561 = vmatprep.subr.mxu0 0.0
      %8562 = vmatpush1.msra.mxu0 0.0
      %8563 = vmatprep.subr.mxu0 0.0
      %8564 = vmatpush1.msra.mxu0 0.0
      %8565 = vmatprep.subr.mxu0 0.0
      %8566 = vmatpush1.msra.mxu0 0.0
      %8567 = vmatprep.subr.mxu0 0.0
      %8568 = vmatpush1.msra.mxu0 0.0
      %8569 = vmatprep.subr.mxu0 0.0
      %8570 = vmatpush1.msra.mxu0 0.0
      %8571 = vmatprep.subr.mxu0 0.0
      %8572 = vmatpush1.msra.mxu0 0.0
      %8573 = vmatprep.subr.mxu0 0.0
      %8574 = vmatpush1.msra.mxu0 0.0
      %8575 = vmatprep.subr.mxu0 0.0
      %8576 = vmatpush1.msra.mxu0 0.0
      %8577 = vmatprep.subr.mxu0 0.0
      %8578 = vmatpush1.msra.mxu0 0.0
      %8579 = vmatprep.subr.mxu0 0.0
      %8580 = vmatpush1.msra.mxu0 0.0
      %8581 = vmatprep.subr.mxu0 0.0
      %8582 = vmatpush1.msra.mxu0 0.0
      %8583 = vmatprep.subr.mxu0 0.0
      %8584 = vmatpush1.msra.mxu0 0.0
      %8585 = vmatprep.mubr.f32.mxu0 0.0
      %8586 = vmatmul.mubr.f32.gmra.mrb[0].mxu0 %v8426
      %v8587 = vpop.f32.mrb[0].mxu0
      %v8588 = vadd.f32 0.0, %v8587
      %v8589 = vpop.f32.mrb[0].mxu0
      %8590 = vmatprep.mubr.f32.mxu0 0.0
      %8591 = vmatmul.mubr.f32.gmra.mrb[0].mxu0 %v8429
      %v8592 = vpop.f32.mrb[0].mxu0
      %v8593 = vadd.f32 0.0, %v8592
      %v8594 = vpop.f32.mrb[0].mxu0
      %8595 = vmatprep.mubr.f32.mxu0 0.0
      %8596 = vmatmul.mubr.f32.gmra.mrb[0].mxu0 %v8432
      %v8597 = vpop.f32.mrb[0].mxu0
      %v8598 = vadd.f32 0.0, %v8597
      %v8599 = vpop.f32.mrb[0].mxu0
      %8600 = vmatprep.mubr.f32.mxu0 0.0
      %8601 = vmatmul.mubr.f32.gmra.mrb[0].mxu0 %v8435
      %v8602 = vpop.f32.mrb[0].mxu0
      %v8603 = vadd.f32 0.0, %v8602
      %v8604 = vpop.f32.mrb[0].mxu0
      %8605 = vmatprep.mubr.f32.mxu0 0.0
      %8606 = vmatmul.mubr.f32.gmra.mrb[0].mxu0 %v8438
      %v8607 = vpop.f32.mrb[0].mxu0
      %v8608 = vadd.f32 0.0, %v8607
      %v8609 = vpop.f32.mrb[0].mxu0
      %8610 = vmatprep.mubr.f32.mxu0 0.0
      %8611 = vmatmul.mubr.f32.gmra.mrb[0].mxu0 %v8441
      %v8612 = vpop.f32.mrb[0].mxu0
      %v8613 = vadd.f32 0.0, %v8612
      %v8614 = vpop.f32.mrb[0].mxu0
      %8615 = vmatprep.mubr.f32.mxu0 0.0
      %8616 = vmatmul.mubr.f32.gmra.mrb[0].mxu0 %v8444
      %v8617 = vpop.f32.mrb[0].mxu0
      %v8618 = vadd.f32 0.0, %v8617
      %v8619 = vpop.f32.mrb[0].mxu0
      %8620 = vmatprep.mubr.f32.mxu0 0.0
      %8621 = vmatmul.mubr.f32.gmra.mrb[0].mxu0 %v8447
      %v8622 = vpop.f32.mrb[0].mxu0
      %v8623 = vadd.f32 0.0, %v8622
      %v8624 = vpop.f32.mrb[0].mxu0
      %8625 = vmatprep.mubr.f32.mxu0 0.0
      %8626 = vmatmul.mubr.f32.gmra.mrb[0].mxu0 %v8450
      %v8627 = vpop.f32.mrb[0].mxu0
      %v8628 = vadd.f32 0.0, %v8627
      %v8629 = vpop.f32.mrb[0].mxu0
      %8630 = vmatprep.mubr.f32.mxu0 0.0
      %8631 = vmatmul.mubr.f32.gmra.mrb[0].mxu0 %v8453
      %v8632 = vpop.f32.mrb[0].mxu0
      %v8633 = vadd.f32 0.0, %v8632
      %v8634 = vpop.f32.mrb[0].mxu0
      %8635 = vmatprep.mubr.f32.mxu0 0.0
      %8636 = vmatmul.mubr.f32.gmra.mrb[0].mxu0 %v8456
      %v8637 = vpop.f32.mrb[0].mxu0
      %v8638 = vadd.f32 0.0, %v8637
      %v8639 = vpop.f32.mrb[0].mxu0
      %8640 = vmatprep.mubr.f32.mxu0 0.0
      %8641 = vmatmul.mubr.f32.gmra.mrb[0].mxu0 %v8459
      %v8642 = vpop.f32.mrb[0].mxu0
      %v8643 = vadd.f32 0.0, %v8642
      %v8644 = vpop.f32.mrb[0].mxu0
      %8645 = vmatprep.mubr.f32.mxu0 0.0
      %8646 = vmatmul.mubr.f32.gmra.mrb[0].mxu0 %v8462
      %v8647 = vpop.f32.mrb[0].mxu0
      %v8648 = vadd.f32 0.0, %v8647
      %v8649 = vpop.f32.mrb[0].mxu0
      %8650 = vmatprep.mubr.f32.mxu0 0.0
      %8651 = vmatmul.mubr.f32.gmra.mrb[0].mxu0 %v8465
      %v8652 = vpop.f32.mrb[0].mxu0
      %v8653 = vadd.f32 0.0, %v8652
      %v8654 = vpop.f32.mrb[0].mxu0
      %8655 = vmatprep.mubr.f32.mxu0 0.0
      %8656 = vmatmul.mubr.f32.gmra.mrb[0].mxu0 %v8468
      %v8657 = vpop.f32.mrb[0].mxu0
      %v8658 = vadd.f32 0.0, %v8657
      %v8659 = vpop.f32.mrb[0].mxu0
      %8660 = vmatprep.mubr.f32.mxu0 0.0
      %8661 = vmatmul.mubr.f32.gmra.mrb[0].mxu0 %v8471
      %v8662 = vpop.f32.mrb[0].mxu0
      %v8663 = vadd.f32 0.0, %v8662
      %v8664 = vpop.f32.mrb[0].mxu0
      %8665 = vmatprep.mubr.f32.mxu0 0.0
      %8666 = vmatmul.mubr.f32.gmra.mrb[0].mxu0 %v8474
      %v8667 = vpop.f32.mrb[0].mxu0
      %v8668 = vadd.f32 0.0, %v8667
      %v8669 = vpop.f32.mrb[0].mxu0
      %8670 = vmatprep.mubr.f32.mxu0 0.0
      %8671 = vmatmul.mubr.f32.gmra.mrb[0].mxu0 %v8477
      %v8672 = vpop.f32.mrb[0].mxu0
      %v8673 = vadd.f32 0.0, %v8672
      %v8674 = vpop.f32.mrb[0].mxu0
      %8675 = vmatprep.mubr.f32.mxu0 0.0
      %8676 = vmatmul.mubr.f32.gmra.mrb[0].mxu0 %v8480
      %v8677 = vpop.f32.mrb[0].mxu0
      %v8678 = vadd.f32 0.0, %v8677
      %v8679 = vpop.f32.mrb[0].mxu0
      %8680 = vmatprep.mubr.f32.mxu0 0.0
      %8681 = vmatmul.mubr.f32.gmra.mrb[0].mxu0 %v8483
      %v8682 = vpop.f32.mrb[0].mxu0
      %v8683 = vadd.f32 0.0, %v8682
      %v8684 = vpop.f32.mrb[0].mxu0
      %8685 = vmatprep.mubr.f32.mxu0 0.0
      %8686 = vmatmul.mubr.f32.gmra.mrb[0].mxu0 %v8486
      %v8687 = vpop.f32.mrb[0].mxu0
      %v8688 = vadd.f32 0.0, %v8687
      %v8689 = vpop.f32.mrb[0].mxu0
      %8690 = vmatprep.mubr.f32.mxu0 0.0
      %8691 = vmatmul.mubr.f32.gmra.mrb[0].mxu0 %v8489
      %v8692 = vpop.f32.mrb[0].mxu0
      %v8693 = vadd.f32 0.0, %v8692
      %v8694 = vpop.f32.mrb[0].mxu0
      %8695 = vmatprep.mubr.f32.mxu0 0.0
      %8696 = vmatmul.mubr.f32.gmra.mrb[0].mxu0 %v8492
      %v8697 = vpop.f32.mrb[0].mxu0
      %v8698 = vadd.f32 0.0, %v8697
      %v8699 = vpop.f32.mrb[0].mxu0
      %8700 = vmatprep.mubr.f32.mxu0 0.0
      %8701 = vmatmul.mubr.f32.gmra.mrb[0].mxu0 %v8495
      %v8702 = vpop.f32.mrb[0].mxu0
      %v8703 = vadd.f32 0.0, %v8702
      %v8704 = vpop.f32.mrb[0].mxu0
      %8705 = vmatprep.mubr.f32.mxu0 0.0
      %8706 = vmatmul.mubr.f32.gmra.mrb[0].mxu0 %v8498
      %v8707 = vpop.f32.mrb[0].mxu0
      %v8708 = vadd.f32 0.0, %v8707
      %v8709 = vpop.f32.mrb[0].mxu0
      %8710 = vmatprep.mubr.f32.mxu0 0.0
      %8711 = vmatmul.mubr.f32.gmra.mrb[0].mxu0 %v8501
      %v8712 = vpop.f32.mrb[0].mxu0
      %v8713 = vadd.f32 0.0, %v8712
      %v8714 = vpop.f32.mrb[0].mxu0
      %8715 = vmatprep.mubr.f32.mxu0 0.0
      %8716 = vmatmul.mubr.f32.gmra.mrb[0].mxu0 %v8504
      %v8717 = vpop.f32.mrb[0].mxu0
      %v8718 = vadd.f32 0.0, %v8717
      %v8719 = vpop.f32.mrb[0].mxu0
      %8720 = vmatprep.mubr.f32.mxu0 0.0
      %8721 = vmatmul.mubr.f32.gmra.mrb[0].mxu0 %v8507
      %v8722 = vpop.f32.mrb[0].mxu0
      %v8723 = vadd.f32 0.0, %v8722
      %v8724 = vpop.f32.mrb[0].mxu0
      %8725 = vmatprep.mubr.f32.mxu0 0.0
      %8726 = vmatmul.mubr.f32.gmra.mrb[0].mxu0 %v8510
      %v8727 = vpop.f32.mrb[0].mxu0
      %v8728 = vadd.f32 0.0, %v8727
      %v8729 = vpop.f32.mrb[0].mxu0
      %8730 = vmatprep.mubr.f32.mxu0 0.0
      %8731 = vmatmul.mubr.f32.gmra.mrb[0].mxu0 %v8513
      %v8732 = vpop.f32.mrb[0].mxu0
      %v8733 = vadd.f32 0.0, %v8732
      %v8734 = vpop.f32.mrb[0].mxu0
      %8735 = vmatprep.mubr.f32.mxu0 0.0
      %8736 = vmatmul.mubr.f32.gmra.mrb[0].mxu0 %v8516
      %v8737 = vpop.f32.mrb[0].mxu0
      %v8738 = vadd.f32 0.0, %v8737
      %v8739 = vpop.f32.mrb[0].mxu0
      %8740 = vmatprep.mubr.f32.mxu0 0.0
      %8741 = vmatmul.mubr.f32.gmra.mrb[0].mxu0 %v8519
      %v8742 = vpop.f32.mrb[0].mxu0
      %v8743 = vadd.f32 0.0, %v8742
      %v8744 = vpop.f32.mrb[0].mxu0
      %8745 = vdwg.mxu0
      %v8746 = vadd.f32 %v8232, %v8588
      %v8747 = vadd.f32 %v8237, %v8593
      %v8748 = vadd.f32 %v8242, %v8598
      %v8749 = vadd.f32 %v8247, %v8603
      %v8750 = vadd.f32 %v8252, %v8608
      %v8751 = vadd.f32 %v8257, %v8613
      %v8752 = vadd.f32 %v8262, %v8618
      %v8753 = vadd.f32 %v8267, %v8623
      %v8754 = vadd.f32 %v8272, %v8628
      %v8755 = vadd.f32 %v8277, %v8633
      %v8756 = vadd.f32 %v8282, %v8638
      %v8757 = vadd.f32 %v8287, %v8643
      %v8758 = vadd.f32 %v8292, %v8648
      %v8759 = vadd.f32 %v8297, %v8653
      %v8760 = vadd.f32 %v8302, %v8658
      %v8761 = vadd.f32 %v8307, %v8663
      %v8762 = vadd.f32 %v8312, %v8668
      %v8763 = vadd.f32 %v8317, %v8673
      %v8764 = vadd.f32 %v8322, %v8678
      %v8765 = vadd.f32 %v8327, %v8683
      %v8766 = vadd.f32 %v8332, %v8688
      %v8767 = vadd.f32 %v8337, %v8693
      %v8768 = vadd.f32 %v8342, %v8698
      %v8769 = vadd.f32 %v8347, %v8703
      %v8770 = vadd.f32 %v8352, %v8708
      %v8771 = vadd.f32 %v8357, %v8713
      %v8772 = vadd.f32 %v8362, %v8718
      %v8773 = vadd.f32 %v8367, %v8723
      %v8774 = vadd.f32 %v8372, %v8728
      %v8775 = vadd.f32 %v8377, %v8733
      %v8776 = vadd.f32 %v8382, %v8738
      %v8777 = vadd.f32 %v8387, %v8743
      %v8778 = vld [vmem:[%s7646] sm:$0xff]
      %v8779 = vld [vmem:[%s7646 + $0x8] sm:$0xff]
      %v8780 = vld [vmem:[%s7646 + $0x18] sm:$0xff]
      %v8781 = vld [vmem:[%s7646 + $0x20] sm:$0xff]
      %v8782 = vld [vmem:[%s7646 + $0x30] sm:$0xff]
      %v8783 = vld [vmem:[%s7646 + $0x38] sm:$0xff]
      %v8784 = vld [vmem:[%s7646 + $0x48] sm:$0xff]
      %v8785 = vld [vmem:[%s7646 + $0x50] sm:$0xff]
      %v8786 = vld [vmem:[%s7646 + $0x60] sm:$0xff]
      %v8787 = vld [vmem:[%s7646 + $0x68] sm:$0xff]
      %v8788 = vld [vmem:[%s7646 + $0x78] sm:$0xff]
      %v8789 = vld [vmem:[%s7646 + $0x80] sm:$0xff]
      %v8790 = vld [vmem:[%s7646 + $0x90] sm:$0xff]
      %v8791 = vld [vmem:[%s7646 + $0x98] sm:$0xff]
      %v8792 = vld [vmem:[%s7646 + $0xa8] sm:$0xff]
      %v8793 = vld [vmem:[%s7646 + $0xb0] sm:$0xff]
      %v8794 = vld [vmem:[%s7646 + $0xc0] sm:$0xff]
      %v8795 = vld [vmem:[%s7646 + $0xc8] sm:$0xff]
      %v8796 = vld [vmem:[%s7646 + $0xd8] sm:$0xff]
      %v8797 = vld [vmem:[%s7646 + $0xe0] sm:$0xff]
      %v8798 = vld [vmem:[%s7646 + $0xf0] sm:$0xff]
      %v8799 = vld [vmem:[%s7646 + $0xf8] sm:$0xff]
      %v8800 = vld [vmem:[%s7646 + $0x108] sm:$0xff]
      %v8801 = vld [vmem:[%s7646 + $0x110] sm:$0xff]
      %v8802 = vld [vmem:[%s7646 + $0x120] sm:$0xff]
      %v8803 = vld [vmem:[%s7646 + $0x128] sm:$0xff]
      %v8804 = vld [vmem:[%s7646 + $0x138] sm:$0xff]
      %v8805 = vld [vmem:[%s7646 + $0x140] sm:$0xff]
      %v8806 = vld [vmem:[%s7646 + $0x150] sm:$0xff]
      %v8807 = vld [vmem:[%s7646 + $0x158] sm:$0xff]
      %v8808 = vld [vmem:[%s7646 + $0x168] sm:$0xff]
      %v8809 = vld [vmem:[%s7646 + $0x170] sm:$0xff]
      %s8810 = scalar_lea.vmem %s6, 48
      %v8811 = vld [vmem:[%s8810] sm:$0xff]
      %v8812 = vld [vmem:[%s8810 + $0x8] sm:$0xff]
      %v8814 = vsel %vm4004, %v8778, 0
      %v8817 = vsel %vm4004, %v8779, 0
      %v8820 = vsel %vm4004, %v8780, 0
      %v8823 = vsel %vm4004, %v8781, 0
      %v8826 = vsel %vm4004, %v8782, 0
      %v8829 = vsel %vm4004, %v8783, 0
      %v8832 = vsel %vm4004, %v8784, 0
      %v8835 = vsel %vm4004, %v8785, 0
      %v8838 = vsel %vm4004, %v8786, 0
      %v8841 = vsel %vm4004, %v8787, 0
      %v8844 = vsel %vm4004, %v8788, 0
      %v8847 = vsel %vm4004, %v8789, 0
      %v8850 = vsel %vm4004, %v8790, 0
      %v8853 = vsel %vm4004, %v8791, 0
      %v8856 = vsel %vm4004, %v8792, 0
      %v8859 = vsel %vm4004, %v8793, 0
      %v8862 = vsel %vm4004, %v8794, 0
      %v8865 = vsel %vm4004, %v8795, 0
      %v8868 = vsel %vm4004, %v8796, 0
      %v8871 = vsel %vm4004, %v8797, 0
      %v8874 = vsel %vm4004, %v8798, 0
      %v8877 = vsel %vm4004, %v8799, 0
      %v8880 = vsel %vm4004, %v8800, 0
      %v8883 = vsel %vm4004, %v8801, 0
      %v8886 = vsel %vm4004, %v8802, 0
      %v8889 = vsel %vm4004, %v8803, 0
      %v8892 = vsel %vm4004, %v8804, 0
      %v8895 = vsel %vm4004, %v8805, 0
      %v8898 = vsel %vm4004, %v8806, 0
      %v8901 = vsel %vm4004, %v8807, 0
      %v8904 = vsel %vm4004, %v8808, 0
      %v8907 = vsel %vm4004, %v8809, 0
      %8909 = vmatprep.subr.mxu0 0.0
      %8910 = vmatpush1.msra.mxu0 %v8811
      %8911 = vmatprep.subr.mxu0 0.0
      %8912 = vmatpush1.msra.mxu0 %v8812
      %8913 = vmatprep.subr.mxu0 0.0
      %8914 = vmatpush1.msra.mxu0 0.0
      %8915 = vmatprep.subr.mxu0 0.0
      %8916 = vmatpush1.msra.mxu0 0.0
      %8917 = vmatprep.subr.mxu0 0.0
      %8918 = vmatpush1.msra.mxu0 0.0
      %8919 = vmatprep.subr.mxu0 0.0
      %8920 = vmatpush1.msra.mxu0 0.0
      %8921 = vmatprep.subr.mxu0 0.0
      %8922 = vmatpush1.msra.mxu0 0.0
      %8923 = vmatprep.subr.mxu0 0.0
      %8924 = vmatpush1.msra.mxu0 0.0
      %8925 = vmatprep.subr.mxu0 0.0
      %8926 = vmatpush1.msra.mxu0 0.0
      %8927 = vmatprep.subr.mxu0 0.0
      %8928 = vmatpush1.msra.mxu0 0.0
      %8929 = vmatprep.subr.mxu0 0.0
      %8930 = vmatpush1.msra.mxu0 0.0
      %8931 = vmatprep.subr.mxu0 0.0
      %8932 = vmatpush1.msra.mxu0 0.0
      %8933 = vmatprep.subr.mxu0 0.0
      %8934 = vmatpush1.msra.mxu0 0.0
      %8935 = vmatprep.subr.mxu0 0.0
      %8936 = vmatpush1.msra.mxu0 0.0
      %8937 = vmatprep.subr.mxu0 0.0
      %8938 = vmatpush1.msra.mxu0 0.0
      %8939 = vmatprep.subr.mxu0 0.0
      %8940 = vmatpush1.msra.mxu0 0.0
      %8941 = vmatprep.subr.mxu0 0.0
      %8942 = vmatpush1.msra.mxu0 0.0
      %8943 = vmatprep.subr.mxu0 0.0
      %8944 = vmatpush1.msra.mxu0 0.0
      %8945 = vmatprep.subr.mxu0 0.0
      %8946 = vmatpush1.msra.mxu0 0.0
      %8947 = vmatprep.subr.mxu0 0.0
      %8948 = vmatpush1.msra.mxu0 0.0
      %8949 = vmatprep.subr.mxu0 0.0
      %8950 = vmatpush1.msra.mxu0 0.0
      %8951 = vmatprep.subr.mxu0 0.0
      %8952 = vmatpush1.msra.mxu0 0.0
      %8953 = vmatprep.subr.mxu0 0.0
      %8954 = vmatpush1.msra.mxu0 0.0
      %8955 = vmatprep.subr.mxu0 0.0
      %8956 = vmatpush1.msra.mxu0 0.0
      %8957 = vmatprep.subr.mxu0 0.0
      %8958 = vmatpush1.msra.mxu0 0.0
      %8959 = vmatprep.subr.mxu0 0.0
      %8960 = vmatpush1.msra.mxu0 0.0
      %8961 = vmatprep.subr.mxu0 0.0
      %8962 = vmatpush1.msra.mxu0 0.0
      %8963 = vmatprep.subr.mxu0 0.0
      %8964 = vmatpush1.msra.mxu0 0.0
      %8965 = vmatprep.subr.mxu0 0.0
      %8966 = vmatpush1.msra.mxu0 0.0
      %8967 = vmatprep.subr.mxu0 0.0
      %8968 = vmatpush1.msra.mxu0 0.0
      %8969 = vmatprep.subr.mxu0 0.0
      %8970 = vmatpush1.msra.mxu0 0.0
      %8971 = vmatprep.subr.mxu0 0.0
      %8972 = vmatpush1.msra.mxu0 0.0
      %8973 = vmatprep.mubr.f32.mxu0 0.0
      %8974 = vmatmul.mubr.f32.gmra.mrb[0].mxu0 %v8814
      %v8975 = vpop.f32.mrb[0].mxu0
      %v8976 = vadd.f32 0.0, %v8975
      %v8977 = vpop.f32.mrb[0].mxu0
      %8978 = vmatprep.mubr.f32.mxu0 0.0
      %8979 = vmatmul.mubr.f32.gmra.mrb[0].mxu0 %v8817
      %v8980 = vpop.f32.mrb[0].mxu0
      %v8981 = vadd.f32 0.0, %v8980
      %v8982 = vpop.f32.mrb[0].mxu0
      %8983 = vmatprep.mubr.f32.mxu0 0.0
      %8984 = vmatmul.mubr.f32.gmra.mrb[0].mxu0 %v8820
      %v8985 = vpop.f32.mrb[0].mxu0
      %v8986 = vadd.f32 0.0, %v8985
      %v8987 = vpop.f32.mrb[0].mxu0
      %8988 = vmatprep.mubr.f32.mxu0 0.0
      %8989 = vmatmul.mubr.f32.gmra.mrb[0].mxu0 %v8823
      %v8990 = vpop.f32.mrb[0].mxu0
      %v8991 = vadd.f32 0.0, %v8990
      %v8992 = vpop.f32.mrb[0].mxu0
      %8993 = vmatprep.mubr.f32.mxu0 0.0
      %8994 = vmatmul.mubr.f32.gmra.mrb[0].mxu0 %v8826
      %v8995 = vpop.f32.mrb[0].mxu0
      %v8996 = vadd.f32 0.0, %v8995
      %v8997 = vpop.f32.mrb[0].mxu0
      %8998 = vmatprep.mubr.f32.mxu0 0.0
      %8999 = vmatmul.mubr.f32.gmra.mrb[0].mxu0 %v8829
      %v9000 = vpop.f32.mrb[0].mxu0
      %v9001 = vadd.f32 0.0, %v9000
      %v9002 = vpop.f32.mrb[0].mxu0
      %9003 = vmatprep.mubr.f32.mxu0 0.0
      %9004 = vmatmul.mubr.f32.gmra.mrb[0].mxu0 %v8832
      %v9005 = vpop.f32.mrb[0].mxu0
      %v9006 = vadd.f32 0.0, %v9005
      %v9007 = vpop.f32.mrb[0].mxu0
      %9008 = vmatprep.mubr.f32.mxu0 0.0
      %9009 = vmatmul.mubr.f32.gmra.mrb[0].mxu0 %v8835
      %v9010 = vpop.f32.mrb[0].mxu0
      %v9011 = vadd.f32 0.0, %v9010
      %v9012 = vpop.f32.mrb[0].mxu0
      %9013 = vmatprep.mubr.f32.mxu0 0.0
      %9014 = vmatmul.mubr.f32.gmra.mrb[0].mxu0 %v8838
      %v9015 = vpop.f32.mrb[0].mxu0
      %v9016 = vadd.f32 0.0, %v9015
      %v9017 = vpop.f32.mrb[0].mxu0
      %9018 = vmatprep.mubr.f32.mxu0 0.0
      %9019 = vmatmul.mubr.f32.gmra.mrb[0].mxu0 %v8841
      %v9020 = vpop.f32.mrb[0].mxu0
      %v9021 = vadd.f32 0.0, %v9020
      %v9022 = vpop.f32.mrb[0].mxu0
      %9023 = vmatprep.mubr.f32.mxu0 0.0
      %9024 = vmatmul.mubr.f32.gmra.mrb[0].mxu0 %v8844
      %v9025 = vpop.f32.mrb[0].mxu0
      %v9026 = vadd.f32 0.0, %v9025
      %v9027 = vpop.f32.mrb[0].mxu0
      %9028 = vmatprep.mubr.f32.mxu0 0.0
      %9029 = vmatmul.mubr.f32.gmra.mrb[0].mxu0 %v8847
      %v9030 = vpop.f32.mrb[0].mxu0
      %v9031 = vadd.f32 0.0, %v9030
      %v9032 = vpop.f32.mrb[0].mxu0
      %9033 = vmatprep.mubr.f32.mxu0 0.0
      %9034 = vmatmul.mubr.f32.gmra.mrb[0].mxu0 %v8850
      %v9035 = vpop.f32.mrb[0].mxu0
      %v9036 = vadd.f32 0.0, %v9035
      %v9037 = vpop.f32.mrb[0].mxu0
      %9038 = vmatprep.mubr.f32.mxu0 0.0
      %9039 = vmatmul.mubr.f32.gmra.mrb[0].mxu0 %v8853
      %v9040 = vpop.f32.mrb[0].mxu0
      %v9041 = vadd.f32 0.0, %v9040
      %v9042 = vpop.f32.mrb[0].mxu0
      %9043 = vmatprep.mubr.f32.mxu0 0.0
      %9044 = vmatmul.mubr.f32.gmra.mrb[0].mxu0 %v8856
      %v9045 = vpop.f32.mrb[0].mxu0
      %v9046 = vadd.f32 0.0, %v9045
      %v9047 = vpop.f32.mrb[0].mxu0
      %9048 = vmatprep.mubr.f32.mxu0 0.0
      %9049 = vmatmul.mubr.f32.gmra.mrb[0].mxu0 %v8859
      %v9050 = vpop.f32.mrb[0].mxu0
      %v9051 = vadd.f32 0.0, %v9050
      %v9052 = vpop.f32.mrb[0].mxu0
      %9053 = vmatprep.mubr.f32.mxu0 0.0
      %9054 = vmatmul.mubr.f32.gmra.mrb[0].mxu0 %v8862
      %v9055 = vpop.f32.mrb[0].mxu0
      %v9056 = vadd.f32 0.0, %v9055
      %v9057 = vpop.f32.mrb[0].mxu0
      %9058 = vmatprep.mubr.f32.mxu0 0.0
      %9059 = vmatmul.mubr.f32.gmra.mrb[0].mxu0 %v8865
      %v9060 = vpop.f32.mrb[0].mxu0
      %v9061 = vadd.f32 0.0, %v9060
      %v9062 = vpop.f32.mrb[0].mxu0
      %9063 = vmatprep.mubr.f32.mxu0 0.0
      %9064 = vmatmul.mubr.f32.gmra.mrb[0].mxu0 %v8868
      %v9065 = vpop.f32.mrb[0].mxu0
      %v9066 = vadd.f32 0.0, %v9065
      %v9067 = vpop.f32.mrb[0].mxu0
      %9068 = vmatprep.mubr.f32.mxu0 0.0
      %9069 = vmatmul.mubr.f32.gmra.mrb[0].mxu0 %v8871
      %v9070 = vpop.f32.mrb[0].mxu0
      %v9071 = vadd.f32 0.0, %v9070
      %v9072 = vpop.f32.mrb[0].mxu0
      %9073 = vmatprep.mubr.f32.mxu0 0.0
      %9074 = vmatmul.mubr.f32.gmra.mrb[0].mxu0 %v8874
      %v9075 = vpop.f32.mrb[0].mxu0
      %v9076 = vadd.f32 0.0, %v9075
      %v9077 = vpop.f32.mrb[0].mxu0
      %9078 = vmatprep.mubr.f32.mxu0 0.0
      %9079 = vmatmul.mubr.f32.gmra.mrb[0].mxu0 %v8877
      %v9080 = vpop.f32.mrb[0].mxu0
      %v9081 = vadd.f32 0.0, %v9080
      %v9082 = vpop.f32.mrb[0].mxu0
      %9083 = vmatprep.mubr.f32.mxu0 0.0
      %9084 = vmatmul.mubr.f32.gmra.mrb[0].mxu0 %v8880
      %v9085 = vpop.f32.mrb[0].mxu0
      %v9086 = vadd.f32 0.0, %v9085
      %v9087 = vpop.f32.mrb[0].mxu0
      %9088 = vmatprep.mubr.f32.mxu0 0.0
      %9089 = vmatmul.mubr.f32.gmra.mrb[0].mxu0 %v8883
      %v9090 = vpop.f32.mrb[0].mxu0
      %v9091 = vadd.f32 0.0, %v9090
      %v9092 = vpop.f32.mrb[0].mxu0
      %9093 = vmatprep.mubr.f32.mxu0 0.0
      %9094 = vmatmul.mubr.f32.gmra.mrb[0].mxu0 %v8886
      %v9095 = vpop.f32.mrb[0].mxu0
      %v9096 = vadd.f32 0.0, %v9095
      %v9097 = vpop.f32.mrb[0].mxu0
      %9098 = vmatprep.mubr.f32.mxu0 0.0
      %9099 = vmatmul.mubr.f32.gmra.mrb[0].mxu0 %v8889
      %v9100 = vpop.f32.mrb[0].mxu0
      %v9101 = vadd.f32 0.0, %v9100
      %v9102 = vpop.f32.mrb[0].mxu0
      %9103 = vmatprep.mubr.f32.mxu0 0.0
      %9104 = vmatmul.mubr.f32.gmra.mrb[0].mxu0 %v8892
      %v9105 = vpop.f32.mrb[0].mxu0
      %v9106 = vadd.f32 0.0, %v9105
      %v9107 = vpop.f32.mrb[0].mxu0
      %9108 = vmatprep.mubr.f32.mxu0 0.0
      %9109 = vmatmul.mubr.f32.gmra.mrb[0].mxu0 %v8895
      %v9110 = vpop.f32.mrb[0].mxu0
      %v9111 = vadd.f32 0.0, %v9110
      %v9112 = vpop.f32.mrb[0].mxu0
      %9113 = vmatprep.mubr.f32.mxu0 0.0
      %9114 = vmatmul.mubr.f32.gmra.mrb[0].mxu0 %v8898
      %v9115 = vpop.f32.mrb[0].mxu0
      %v9116 = vadd.f32 0.0, %v9115
      %v9117 = vpop.f32.mrb[0].mxu0
      %9118 = vmatprep.mubr.f32.mxu0 0.0
      %9119 = vmatmul.mubr.f32.gmra.mrb[0].mxu0 %v8901
      %v9120 = vpop.f32.mrb[0].mxu0
      %v9121 = vadd.f32 0.0, %v9120
      %v9122 = vpop.f32.mrb[0].mxu0
      %9123 = vmatprep.mubr.f32.mxu0 0.0
      %9124 = vmatmul.mubr.f32.gmra.mrb[0].mxu0 %v8904
      %v9125 = vpop.f32.mrb[0].mxu0
      %v9126 = vadd.f32 0.0, %v9125
      %v9127 = vpop.f32.mrb[0].mxu0
      %9128 = vmatprep.mubr.f32.mxu0 0.0
      %9129 = vmatmul.mubr.f32.gmra.mrb[0].mxu0 %v8907
      %v9130 = vpop.f32.mrb[0].mxu0
      %v9131 = vadd.f32 0.0, %v9130
      %v9132 = vpop.f32.mrb[0].mxu0
      %9133 = vdwg.mxu0
      %v9134 = vadd.f32 %v8746, %v8976
      %v9135 = vadd.f32 %v8747, %v8981
      %v9136 = vadd.f32 %v8748, %v8986
      %v9137 = vadd.f32 %v8749, %v8991
      %v9138 = vadd.f32 %v8750, %v8996
      %v9139 = vadd.f32 %v8751, %v9001
      %v9140 = vadd.f32 %v8752, %v9006
      %v9141 = vadd.f32 %v8753, %v9011
      %v9142 = vadd.f32 %v8754, %v9016
      %v9143 = vadd.f32 %v8755, %v9021
      %v9144 = vadd.f32 %v8756, %v9026
      %v9145 = vadd.f32 %v8757, %v9031
      %v9146 = vadd.f32 %v8758, %v9036
      %v9147 = vadd.f32 %v8759, %v9041
      %v9148 = vadd.f32 %v8760, %v9046
      %v9149 = vadd.f32 %v8761, %v9051
      %v9150 = vadd.f32 %v8762, %v9056
      %v9151 = vadd.f32 %v8763, %v9061
      %v9152 = vadd.f32 %v8764, %v9066
      %v9153 = vadd.f32 %v8765, %v9071
      %v9154 = vadd.f32 %v8766, %v9076
      %v9155 = vadd.f32 %v8767, %v9081
      %v9156 = vadd.f32 %v8768, %v9086
      %v9157 = vadd.f32 %v8769, %v9091
      %v9158 = vadd.f32 %v8770, %v9096
      %v9159 = vadd.f32 %v8771, %v9101
      %v9160 = vadd.f32 %v8772, %v9106
      %v9161 = vadd.f32 %v8773, %v9111
      %v9162 = vadd.f32 %v8774, %v9116
      %v9163 = vadd.f32 %v8775, %v9121
      %v9164 = vadd.f32 %v8776, %v9126
      %v9165 = vadd.f32 %v8777, %v9131
      %v9166 = vld [vmem:[%s7646 + $0x1] sm:$0xff]
      %v9167 = vld [vmem:[%s7646 + $0x9] sm:$0xff]
      %v9168 = vld [vmem:[%s7646 + $0x19] sm:$0xff]
      %v9169 = vld [vmem:[%s7646 + $0x21] sm:$0xff]
      %v9170 = vld [vmem:[%s7646 + $0x31] sm:$0xff]
      %v9171 = vld [vmem:[%s7646 + $0x39] sm:$0xff]
      %v9172 = vld [vmem:[%s7646 + $0x49] sm:$0xff]
      %v9173 = vld [vmem:[%s7646 + $0x51] sm:$0xff]
      %v9174 = vld [vmem:[%s7646 + $0x61] sm:$0xff]
      %v9175 = vld [vmem:[%s7646 + $0x69] sm:$0xff]
      %v9176 = vld [vmem:[%s7646 + $0x79] sm:$0xff]
      %v9177 = vld [vmem:[%s7646 + $0x81] sm:$0xff]
      %v9178 = vld [vmem:[%s7646 + $0x91] sm:$0xff]
      %v9179 = vld [vmem:[%s7646 + $0x99] sm:$0xff]
      %v9180 = vld [vmem:[%s7646 + $0xa9] sm:$0xff]
      %v9181 = vld [vmem:[%s7646 + $0xb1] sm:$0xff]
      %v9182 = vld [vmem:[%s7646 + $0xc1] sm:$0xff]
      %v9183 = vld [vmem:[%s7646 + $0xc9] sm:$0xff]
      %v9184 = vld [vmem:[%s7646 + $0xd9] sm:$0xff]
      %v9185 = vld [vmem:[%s7646 + $0xe1] sm:$0xff]
      %v9186 = vld [vmem:[%s7646 + $0xf1] sm:$0xff]
      %v9187 = vld [vmem:[%s7646 + $0xf9] sm:$0xff]
      %v9188 = vld [vmem:[%s7646 + $0x109] sm:$0xff]
      %v9189 = vld [vmem:[%s7646 + $0x111] sm:$0xff]
      %v9190 = vld [vmem:[%s7646 + $0x121] sm:$0xff]
      %v9191 = vld [vmem:[%s7646 + $0x129] sm:$0xff]
      %v9192 = vld [vmem:[%s7646 + $0x139] sm:$0xff]
      %v9193 = vld [vmem:[%s7646 + $0x141] sm:$0xff]
      %v9194 = vld [vmem:[%s7646 + $0x151] sm:$0xff]
      %v9195 = vld [vmem:[%s7646 + $0x159] sm:$0xff]
      %v9196 = vld [vmem:[%s7646 + $0x169] sm:$0xff]
      %v9197 = vld [vmem:[%s7646 + $0x171] sm:$0xff]
      %s9198 = scalar_lea.vmem %s6, 64
      %v9199 = vld [vmem:[%s9198] sm:$0xff]
      %v9200 = vld [vmem:[%s9198 + $0x8] sm:$0xff]
      %v9202 = vsel %vm4004, %v9166, 0
      %v9205 = vsel %vm4004, %v9167, 0
      %v9208 = vsel %vm4004, %v9168, 0
      %v9211 = vsel %vm4004, %v9169, 0
      %v9214 = vsel %vm4004, %v9170, 0
      %v9217 = vsel %vm4004, %v9171, 0
      %v9220 = vsel %vm4004, %v9172, 0
      %v9223 = vsel %vm4004, %v9173, 0
      %v9226 = vsel %vm4004, %v9174, 0
      %v9229 = vsel %vm4004, %v9175, 0
      %v9232 = vsel %vm4004, %v9176, 0
      %v9235 = vsel %vm4004, %v9177, 0
      %v9238 = vsel %vm4004, %v9178, 0
      %v9241 = vsel %vm4004, %v9179, 0
      %v9244 = vsel %vm4004, %v9180, 0
      %v9247 = vsel %vm4004, %v9181, 0
      %v9250 = vsel %vm4004, %v9182, 0
      %v9253 = vsel %vm4004, %v9183, 0
      %v9256 = vsel %vm4004, %v9184, 0
      %v9259 = vsel %vm4004, %v9185, 0
      %v9262 = vsel %vm4004, %v9186, 0
      %v9265 = vsel %vm4004, %v9187, 0
      %v9268 = vsel %vm4004, %v9188, 0
      %v9271 = vsel %vm4004, %v9189, 0
      %v9274 = vsel %vm4004, %v9190, 0
      %v9277 = vsel %vm4004, %v9191, 0
      %v9280 = vsel %vm4004, %v9192, 0
      %v9283 = vsel %vm4004, %v9193, 0
      %v9286 = vsel %vm4004, %v9194, 0
      %v9289 = vsel %vm4004, %v9195, 0
      %v9292 = vsel %vm4004, %v9196, 0
      %v9295 = vsel %vm4004, %v9197, 0
      %9297 = vmatprep.subr.mxu0 0.0
      %9298 = vmatpush1.msra.mxu0 %v9199
      %9299 = vmatprep.subr.mxu0 0.0
      %9300 = vmatpush1.msra.mxu0 %v9200
      %9301 = vmatprep.subr.mxu0 0.0
      %9302 = vmatpush1.msra.mxu0 0.0
      %9303 = vmatprep.subr.mxu0 0.0
      %9304 = vmatpush1.msra.mxu0 0.0
      %9305 = vmatprep.subr.mxu0 0.0
      %9306 = vmatpush1.msra.mxu0 0.0
      %9307 = vmatprep.subr.mxu0 0.0
      %9308 = vmatpush1.msra.mxu0 0.0
      %9309 = vmatprep.subr.mxu0 0.0
      %9310 = vmatpush1.msra.mxu0 0.0
      %9311 = vmatprep.subr.mxu0 0.0
      %9312 = vmatpush1.msra.mxu0 0.0
      %9313 = vmatprep.subr.mxu0 0.0
      %9314 = vmatpush1.msra.mxu0 0.0
      %9315 = vmatprep.subr.mxu0 0.0
      %9316 = vmatpush1.msra.mxu0 0.0
      %9317 = vmatprep.subr.mxu0 0.0
      %9318 = vmatpush1.msra.mxu0 0.0
      %9319 = vmatprep.subr.mxu0 0.0
      %9320 = vmatpush1.msra.mxu0 0.0
      %9321 = vmatprep.subr.mxu0 0.0
      %9322 = vmatpush1.msra.mxu0 0.0
      %9323 = vmatprep.subr.mxu0 0.0
      %9324 = vmatpush1.msra.mxu0 0.0
      %9325 = vmatprep.subr.mxu0 0.0
      %9326 = vmatpush1.msra.mxu0 0.0
      %9327 = vmatprep.subr.mxu0 0.0
      %9328 = vmatpush1.msra.mxu0 0.0
      %9329 = vmatprep.subr.mxu0 0.0
      %9330 = vmatpush1.msra.mxu0 0.0
      %9331 = vmatprep.subr.mxu0 0.0
      %9332 = vmatpush1.msra.mxu0 0.0
      %9333 = vmatprep.subr.mxu0 0.0
      %9334 = vmatpush1.msra.mxu0 0.0
      %9335 = vmatprep.subr.mxu0 0.0
      %9336 = vmatpush1.msra.mxu0 0.0
      %9337 = vmatprep.subr.mxu0 0.0
      %9338 = vmatpush1.msra.mxu0 0.0
      %9339 = vmatprep.subr.mxu0 0.0
      %9340 = vmatpush1.msra.mxu0 0.0
      %9341 = vmatprep.subr.mxu0 0.0
      %9342 = vmatpush1.msra.mxu0 0.0
      %9343 = vmatprep.subr.mxu0 0.0
      %9344 = vmatpush1.msra.mxu0 0.0
      %9345 = vmatprep.subr.mxu0 0.0
      %9346 = vmatpush1.msra.mxu0 0.0
      %9347 = vmatprep.subr.mxu0 0.0
      %9348 = vmatpush1.msra.mxu0 0.0
      %9349 = vmatprep.subr.mxu0 0.0
      %9350 = vmatpush1.msra.mxu0 0.0
      %9351 = vmatprep.subr.mxu0 0.0
      %9352 = vmatpush1.msra.mxu0 0.0
      %9353 = vmatprep.subr.mxu0 0.0
      %9354 = vmatpush1.msra.mxu0 0.0
      %9355 = vmatprep.subr.mxu0 0.0
      %9356 = vmatpush1.msra.mxu0 0.0
      %9357 = vmatprep.subr.mxu0 0.0
      %9358 = vmatpush1.msra.mxu0 0.0
      %9359 = vmatprep.subr.mxu0 0.0
      %9360 = vmatpush1.msra.mxu0 0.0
      %9361 = vmatprep.mubr.f32.mxu0 0.0
      %9362 = vmatmul.mubr.f32.gmra.mrb[0].mxu0 %v9202
      %v9363 = vpop.f32.mrb[0].mxu0
      %v9364 = vadd.f32 0.0, %v9363
      %v9365 = vpop.f32.mrb[0].mxu0
      %9366 = vmatprep.mubr.f32.mxu0 0.0
      %9367 = vmatmul.mubr.f32.gmra.mrb[0].mxu0 %v9205
      %v9368 = vpop.f32.mrb[0].mxu0
      %v9369 = vadd.f32 0.0, %v9368
      %v9370 = vpop.f32.mrb[0].mxu0
      %9371 = vmatprep.mubr.f32.mxu0 0.0
      %9372 = vmatmul.mubr.f32.gmra.mrb[0].mxu0 %v9208
      %v9373 = vpop.f32.mrb[0].mxu0
      %v9374 = vadd.f32 0.0, %v9373
      %v9375 = vpop.f32.mrb[0].mxu0
      %9376 = vmatprep.mubr.f32.mxu0 0.0
      %9377 = vmatmul.mubr.f32.gmra.mrb[0].mxu0 %v9211
      %v9378 = vpop.f32.mrb[0].mxu0
      %v9379 = vadd.f32 0.0, %v9378
      %v9380 = vpop.f32.mrb[0].mxu0
      %9381 = vmatprep.mubr.f32.mxu0 0.0
      %9382 = vmatmul.mubr.f32.gmra.mrb[0].mxu0 %v9214
      %v9383 = vpop.f32.mrb[0].mxu0
      %v9384 = vadd.f32 0.0, %v9383
      %v9385 = vpop.f32.mrb[0].mxu0
      %9386 = vmatprep.mubr.f32.mxu0 0.0
      %9387 = vmatmul.mubr.f32.gmra.mrb[0].mxu0 %v9217
      %v9388 = vpop.f32.mrb[0].mxu0
      %v9389 = vadd.f32 0.0, %v9388
      %v9390 = vpop.f32.mrb[0].mxu0
      %9391 = vmatprep.mubr.f32.mxu0 0.0
      %9392 = vmatmul.mubr.f32.gmra.mrb[0].mxu0 %v9220
      %v9393 = vpop.f32.mrb[0].mxu0
      %v9394 = vadd.f32 0.0, %v9393
      %v9395 = vpop.f32.mrb[0].mxu0
      %9396 = vmatprep.mubr.f32.mxu0 0.0
      %9397 = vmatmul.mubr.f32.gmra.mrb[0].mxu0 %v9223
      %v9398 = vpop.f32.mrb[0].mxu0
      %v9399 = vadd.f32 0.0, %v9398
      %v9400 = vpop.f32.mrb[0].mxu0
      %9401 = vmatprep.mubr.f32.mxu0 0.0
      %9402 = vmatmul.mubr.f32.gmra.mrb[0].mxu0 %v9226
      %v9403 = vpop.f32.mrb[0].mxu0
      %v9404 = vadd.f32 0.0, %v9403
      %v9405 = vpop.f32.mrb[0].mxu0
      %9406 = vmatprep.mubr.f32.mxu0 0.0
      %9407 = vmatmul.mubr.f32.gmra.mrb[0].mxu0 %v9229
      %v9408 = vpop.f32.mrb[0].mxu0
      %v9409 = vadd.f32 0.0, %v9408
      %v9410 = vpop.f32.mrb[0].mxu0
      %9411 = vmatprep.mubr.f32.mxu0 0.0
      %9412 = vmatmul.mubr.f32.gmra.mrb[0].mxu0 %v9232
      %v9413 = vpop.f32.mrb[0].mxu0
      %v9414 = vadd.f32 0.0, %v9413
      %v9415 = vpop.f32.mrb[0].mxu0
      %9416 = vmatprep.mubr.f32.mxu0 0.0
      %9417 = vmatmul.mubr.f32.gmra.mrb[0].mxu0 %v9235
      %v9418 = vpop.f32.mrb[0].mxu0
      %v9419 = vadd.f32 0.0, %v9418
      %v9420 = vpop.f32.mrb[0].mxu0
      %9421 = vmatprep.mubr.f32.mxu0 0.0
      %9422 = vmatmul.mubr.f32.gmra.mrb[0].mxu0 %v9238
      %v9423 = vpop.f32.mrb[0].mxu0
      %v9424 = vadd.f32 0.0, %v9423
      %v9425 = vpop.f32.mrb[0].mxu0
      %9426 = vmatprep.mubr.f32.mxu0 0.0
      %9427 = vmatmul.mubr.f32.gmra.mrb[0].mxu0 %v9241
      %v9428 = vpop.f32.mrb[0].mxu0
      %v9429 = vadd.f32 0.0, %v9428
      %v9430 = vpop.f32.mrb[0].mxu0
      %9431 = vmatprep.mubr.f32.mxu0 0.0
      %9432 = vmatmul.mubr.f32.gmra.mrb[0].mxu0 %v9244
      %v9433 = vpop.f32.mrb[0].mxu0
      %v9434 = vadd.f32 0.0, %v9433
      %v9435 = vpop.f32.mrb[0].mxu0
      %9436 = vmatprep.mubr.f32.mxu0 0.0
      %9437 = vmatmul.mubr.f32.gmra.mrb[0].mxu0 %v9247
      %v9438 = vpop.f32.mrb[0].mxu0
      %v9439 = vadd.f32 0.0, %v9438
      %v9440 = vpop.f32.mrb[0].mxu0
      %9441 = vmatprep.mubr.f32.mxu0 0.0
      %9442 = vmatmul.mubr.f32.gmra.mrb[0].mxu0 %v9250
      %v9443 = vpop.f32.mrb[0].mxu0
      %v9444 = vadd.f32 0.0, %v9443
      %v9445 = vpop.f32.mrb[0].mxu0
      %9446 = vmatprep.mubr.f32.mxu0 0.0
      %9447 = vmatmul.mubr.f32.gmra.mrb[0].mxu0 %v9253
      %v9448 = vpop.f32.mrb[0].mxu0
      %v9449 = vadd.f32 0.0, %v9448
      %v9450 = vpop.f32.mrb[0].mxu0
      %9451 = vmatprep.mubr.f32.mxu0 0.0
      %9452 = vmatmul.mubr.f32.gmra.mrb[0].mxu0 %v9256
      %v9453 = vpop.f32.mrb[0].mxu0
      %v9454 = vadd.f32 0.0, %v9453
      %v9455 = vpop.f32.mrb[0].mxu0
      %9456 = vmatprep.mubr.f32.mxu0 0.0
      %9457 = vmatmul.mubr.f32.gmra.mrb[0].mxu0 %v9259
      %v9458 = vpop.f32.mrb[0].mxu0
      %v9459 = vadd.f32 0.0, %v9458
      %v9460 = vpop.f32.mrb[0].mxu0
      %9461 = vmatprep.mubr.f32.mxu0 0.0
      %9462 = vmatmul.mubr.f32.gmra.mrb[0].mxu0 %v9262
      %v9463 = vpop.f32.mrb[0].mxu0
      %v9464 = vadd.f32 0.0, %v9463
      %v9465 = vpop.f32.mrb[0].mxu0
      %9466 = vmatprep.mubr.f32.mxu0 0.0
      %9467 = vmatmul.mubr.f32.gmra.mrb[0].mxu0 %v9265
      %v9468 = vpop.f32.mrb[0].mxu0
      %v9469 = vadd.f32 0.0, %v9468
      %v9470 = vpop.f32.mrb[0].mxu0
      %9471 = vmatprep.mubr.f32.mxu0 0.0
      %9472 = vmatmul.mubr.f32.gmra.mrb[0].mxu0 %v9268
      %v9473 = vpop.f32.mrb[0].mxu0
      %v9474 = vadd.f32 0.0, %v9473
      %v9475 = vpop.f32.mrb[0].mxu0
      %9476 = vmatprep.mubr.f32.mxu0 0.0
      %9477 = vmatmul.mubr.f32.gmra.mrb[0].mxu0 %v9271
      %v9478 = vpop.f32.mrb[0].mxu0
      %v9479 = vadd.f32 0.0, %v9478
      %v9480 = vpop.f32.mrb[0].mxu0
      %9481 = vmatprep.mubr.f32.mxu0 0.0
      %9482 = vmatmul.mubr.f32.gmra.mrb[0].mxu0 %v9274
      %v9483 = vpop.f32.mrb[0].mxu0
      %v9484 = vadd.f32 0.0, %v9483
      %v9485 = vpop.f32.mrb[0].mxu0
      %9486 = vmatprep.mubr.f32.mxu0 0.0
      %9487 = vmatmul.mubr.f32.gmra.mrb[0].mxu0 %v9277
      %v9488 = vpop.f32.mrb[0].mxu0
      %v9489 = vadd.f32 0.0, %v9488
      %v9490 = vpop.f32.mrb[0].mxu0
      %9491 = vmatprep.mubr.f32.mxu0 0.0
      %9492 = vmatmul.mubr.f32.gmra.mrb[0].mxu0 %v9280
      %v9493 = vpop.f32.mrb[0].mxu0
      %v9494 = vadd.f32 0.0, %v9493
      %v9495 = vpop.f32.mrb[0].mxu0
      %9496 = vmatprep.mubr.f32.mxu0 0.0
      %9497 = vmatmul.mubr.f32.gmra.mrb[0].mxu0 %v9283
      %v9498 = vpop.f32.mrb[0].mxu0
      %v9499 = vadd.f32 0.0, %v9498
      %v9500 = vpop.f32.mrb[0].mxu0
      %9501 = vmatprep.mubr.f32.mxu0 0.0
      %9502 = vmatmul.mubr.f32.gmra.mrb[0].mxu0 %v9286
      %v9503 = vpop.f32.mrb[0].mxu0
      %v9504 = vadd.f32 0.0, %v9503
      %v9505 = vpop.f32.mrb[0].mxu0
      %9506 = vmatprep.mubr.f32.mxu0 0.0
      %9507 = vmatmul.mubr.f32.gmra.mrb[0].mxu0 %v9289
      %v9508 = vpop.f32.mrb[0].mxu0
      %v9509 = vadd.f32 0.0, %v9508
      %v9510 = vpop.f32.mrb[0].mxu0
      %9511 = vmatprep.mubr.f32.mxu0 0.0
      %9512 = vmatmul.mubr.f32.gmra.mrb[0].mxu0 %v9292
      %v9513 = vpop.f32.mrb[0].mxu0
      %v9514 = vadd.f32 0.0, %v9513
      %v9515 = vpop.f32.mrb[0].mxu0
      %9516 = vmatprep.mubr.f32.mxu0 0.0
      %9517 = vmatmul.mubr.f32.gmra.mrb[0].mxu0 %v9295
      %v9518 = vpop.f32.mrb[0].mxu0
      %v9519 = vadd.f32 0.0, %v9518
      %v9520 = vpop.f32.mrb[0].mxu0
      %9521 = vdwg.mxu0
      %v9522 = vadd.f32 %v9134, %v9364
      %v9523 = vadd.f32 %v9135, %v9369
      %v9524 = vadd.f32 %v9136, %v9374
      %v9525 = vadd.f32 %v9137, %v9379
      %v9526 = vadd.f32 %v9138, %v9384
      %v9527 = vadd.f32 %v9139, %v9389
      %v9528 = vadd.f32 %v9140, %v9394
      %v9529 = vadd.f32 %v9141, %v9399
      %v9530 = vadd.f32 %v9142, %v9404
      %v9531 = vadd.f32 %v9143, %v9409
      %v9532 = vadd.f32 %v9144, %v9414
      %v9533 = vadd.f32 %v9145, %v9419
      %v9534 = vadd.f32 %v9146, %v9424
      %v9535 = vadd.f32 %v9147, %v9429
      %v9536 = vadd.f32 %v9148, %v9434
      %v9537 = vadd.f32 %v9149, %v9439
      %v9538 = vadd.f32 %v9150, %v9444
      %v9539 = vadd.f32 %v9151, %v9449
      %v9540 = vadd.f32 %v9152, %v9454
      %v9541 = vadd.f32 %v9153, %v9459
      %v9542 = vadd.f32 %v9154, %v9464
      %v9543 = vadd.f32 %v9155, %v9469
      %v9544 = vadd.f32 %v9156, %v9474
      %v9545 = vadd.f32 %v9157, %v9479
      %v9546 = vadd.f32 %v9158, %v9484
      %v9547 = vadd.f32 %v9159, %v9489
      %v9548 = vadd.f32 %v9160, %v9494
      %v9549 = vadd.f32 %v9161, %v9499
      %v9550 = vadd.f32 %v9162, %v9504
      %v9551 = vadd.f32 %v9163, %v9509
      %v9552 = vadd.f32 %v9164, %v9514
      %v9553 = vadd.f32 %v9165, %v9519
      %v9554 = vld [vmem:[%s7646 + $0x2] sm:$0xff]
      %v9555 = vld [vmem:[%s7646 + $0xa] sm:$0xff]
      %v9556 = vld [vmem:[%s7646 + $0x1a] sm:$0xff]
      %v9557 = vld [vmem:[%s7646 + $0x22] sm:$0xff]
      %v9558 = vld [vmem:[%s7646 + $0x32] sm:$0xff]
      %v9559 = vld [vmem:[%s7646 + $0x3a] sm:$0xff]
      %v9560 = vld [vmem:[%s7646 + $0x4a] sm:$0xff]
      %v9561 = vld [vmem:[%s7646 + $0x52] sm:$0xff]
      %v9562 = vld [vmem:[%s7646 + $0x62] sm:$0xff]
      %v9563 = vld [vmem:[%s7646 + $0x6a] sm:$0xff]
      %v9564 = vld [vmem:[%s7646 + $0x7a] sm:$0xff]
      %v9565 = vld [vmem:[%s7646 + $0x82] sm:$0xff]
      %v9566 = vld [vmem:[%s7646 + $0x92] sm:$0xff]
      %v9567 = vld [vmem:[%s7646 + $0x9a] sm:$0xff]
      %v9568 = vld [vmem:[%s7646 + $0xaa] sm:$0xff]
      %v9569 = vld [vmem:[%s7646 + $0xb2] sm:$0xff]
      %v9570 = vld [vmem:[%s7646 + $0xc2] sm:$0xff]
      %v9571 = vld [vmem:[%s7646 + $0xca] sm:$0xff]
      %v9572 = vld [vmem:[%s7646 + $0xda] sm:$0xff]
      %v9573 = vld [vmem:[%s7646 + $0xe2] sm:$0xff]
      %v9574 = vld [vmem:[%s7646 + $0xf2] sm:$0xff]
      %v9575 = vld [vmem:[%s7646 + $0xfa] sm:$0xff]
      %v9576 = vld [vmem:[%s7646 + $0x10a] sm:$0xff]
      %v9577 = vld [vmem:[%s7646 + $0x112] sm:$0xff]
      %v9578 = vld [vmem:[%s7646 + $0x122] sm:$0xff]
      %v9579 = vld [vmem:[%s7646 + $0x12a] sm:$0xff]
      %v9580 = vld [vmem:[%s7646 + $0x13a] sm:$0xff]
      %v9581 = vld [vmem:[%s7646 + $0x142] sm:$0xff]
      %v9582 = vld [vmem:[%s7646 + $0x152] sm:$0xff]
      %v9583 = vld [vmem:[%s7646 + $0x15a] sm:$0xff]
      %v9584 = vld [vmem:[%s7646 + $0x16a] sm:$0xff]
      %v9585 = vld [vmem:[%s7646 + $0x172] sm:$0xff]
      %s9586 = scalar_lea.vmem %s6, 80
      %v9587 = vld [vmem:[%s9586] sm:$0xff]
      %v9588 = vld [vmem:[%s9586 + $0x8] sm:$0xff]
      %v9590 = vsel %vm4004, %v9554, 0
      %v9593 = vsel %vm4004, %v9555, 0
      %v9596 = vsel %vm4004, %v9556, 0
      %v9599 = vsel %vm4004, %v9557, 0
      %v9602 = vsel %vm4004, %v9558, 0
      %v9605 = vsel %vm4004, %v9559, 0
      %v9608 = vsel %vm4004, %v9560, 0
      %v9611 = vsel %vm4004, %v9561, 0
      %v9614 = vsel %vm4004, %v9562, 0
      %v9617 = vsel %vm4004, %v9563, 0
      %v9620 = vsel %vm4004, %v9564, 0
      %v9623 = vsel %vm4004, %v9565, 0
      %v9626 = vsel %vm4004, %v9566, 0
      %v9629 = vsel %vm4004, %v9567, 0
      %v9632 = vsel %vm4004, %v9568, 0
      %v9635 = vsel %vm4004, %v9569, 0
      %v9638 = vsel %vm4004, %v9570, 0
      %v9641 = vsel %vm4004, %v9571, 0
      %v9644 = vsel %vm4004, %v9572, 0
      %v9647 = vsel %vm4004, %v9573, 0
      %v9650 = vsel %vm4004, %v9574, 0
      %v9653 = vsel %vm4004, %v9575, 0
      %v9656 = vsel %vm4004, %v9576, 0
      %v9659 = vsel %vm4004, %v9577, 0
      %v9662 = vsel %vm4004, %v9578, 0
      %v9665 = vsel %vm4004, %v9579, 0
      %v9668 = vsel %vm4004, %v9580, 0
      %v9671 = vsel %vm4004, %v9581, 0
      %v9674 = vsel %vm4004, %v9582, 0
      %v9677 = vsel %vm4004, %v9583, 0
      %v9680 = vsel %vm4004, %v9584, 0
      %v9683 = vsel %vm4004, %v9585, 0
      %9685 = vmatprep.subr.mxu0 0.0
      %9686 = vmatpush1.msra.mxu0 %v9587
      %9687 = vmatprep.subr.mxu0 0.0
      %9688 = vmatpush1.msra.mxu0 %v9588
      %9689 = vmatprep.subr.mxu0 0.0
      %9690 = vmatpush1.msra.mxu0 0.0
      %9691 = vmatprep.subr.mxu0 0.0
      %9692 = vmatpush1.msra.mxu0 0.0
      %9693 = vmatprep.subr.mxu0 0.0
      %9694 = vmatpush1.msra.mxu0 0.0
      %9695 = vmatprep.subr.mxu0 0.0
      %9696 = vmatpush1.msra.mxu0 0.0
      %9697 = vmatprep.subr.mxu0 0.0
      %9698 = vmatpush1.msra.mxu0 0.0
      %9699 = vmatprep.subr.mxu0 0.0
      %9700 = vmatpush1.msra.mxu0 0.0
      %9701 = vmatprep.subr.mxu0 0.0
      %9702 = vmatpush1.msra.mxu0 0.0
      %9703 = vmatprep.subr.mxu0 0.0
      %9704 = vmatpush1.msra.mxu0 0.0
      %9705 = vmatprep.subr.mxu0 0.0
      %9706 = vmatpush1.msra.mxu0 0.0
      %9707 = vmatprep.subr.mxu0 0.0
      %9708 = vmatpush1.msra.mxu0 0.0
      %9709 = vmatprep.subr.mxu0 0.0
      %9710 = vmatpush1.msra.mxu0 0.0
      %9711 = vmatprep.subr.mxu0 0.0
      %9712 = vmatpush1.msra.mxu0 0.0
      %9713 = vmatprep.subr.mxu0 0.0
      %9714 = vmatpush1.msra.mxu0 0.0
      %9715 = vmatprep.subr.mxu0 0.0
      %9716 = vmatpush1.msra.mxu0 0.0
      %9717 = vmatprep.subr.mxu0 0.0
      %9718 = vmatpush1.msra.mxu0 0.0
      %9719 = vmatprep.subr.mxu0 0.0
      %9720 = vmatpush1.msra.mxu0 0.0
      %9721 = vmatprep.subr.mxu0 0.0
      %9722 = vmatpush1.msra.mxu0 0.0
      %9723 = vmatprep.subr.mxu0 0.0
      %9724 = vmatpush1.msra.mxu0 0.0
      %9725 = vmatprep.subr.mxu0 0.0
      %9726 = vmatpush1.msra.mxu0 0.0
      %9727 = vmatprep.subr.mxu0 0.0
      %9728 = vmatpush1.msra.mxu0 0.0
      %9729 = vmatprep.subr.mxu0 0.0
      %9730 = vmatpush1.msra.mxu0 0.0
      %9731 = vmatprep.subr.mxu0 0.0
      %9732 = vmatpush1.msra.mxu0 0.0
      %9733 = vmatprep.subr.mxu0 0.0
      %9734 = vmatpush1.msra.mxu0 0.0
      %9735 = vmatprep.subr.mxu0 0.0
      %9736 = vmatpush1.msra.mxu0 0.0
      %9737 = vmatprep.subr.mxu0 0.0
      %9738 = vmatpush1.msra.mxu0 0.0
      %9739 = vmatprep.subr.mxu0 0.0
      %9740 = vmatpush1.msra.mxu0 0.0
      %9741 = vmatprep.subr.mxu0 0.0
      %9742 = vmatpush1.msra.mxu0 0.0
      %9743 = vmatprep.subr.mxu0 0.0
      %9744 = vmatpush1.msra.mxu0 0.0
      %9745 = vmatprep.subr.mxu0 0.0
      %9746 = vmatpush1.msra.mxu0 0.0
      %9747 = vmatprep.subr.mxu0 0.0
      %9748 = vmatpush1.msra.mxu0 0.0
      %9749 = vmatprep.mubr.f32.mxu0 0.0
      %9750 = vmatmul.mubr.f32.gmra.mrb[0].mxu0 %v9590
      %v9751 = vpop.f32.mrb[0].mxu0
      %v9752 = vadd.f32 0.0, %v9751
      %v9753 = vpop.f32.mrb[0].mxu0
      %9754 = vmatprep.mubr.f32.mxu0 0.0
      %9755 = vmatmul.mubr.f32.gmra.mrb[0].mxu0 %v9593
      %v9756 = vpop.f32.mrb[0].mxu0
      %v9757 = vadd.f32 0.0, %v9756
      %v9758 = vpop.f32.mrb[0].mxu0
      %9759 = vmatprep.mubr.f32.mxu0 0.0
      %9760 = vmatmul.mubr.f32.gmra.mrb[0].mxu0 %v9596
      %v9761 = vpop.f32.mrb[0].mxu0
      %v9762 = vadd.f32 0.0, %v9761
      %v9763 = vpop.f32.mrb[0].mxu0
      %9764 = vmatprep.mubr.f32.mxu0 0.0
      %9765 = vmatmul.mubr.f32.gmra.mrb[0].mxu0 %v9599
      %v9766 = vpop.f32.mrb[0].mxu0
      %v9767 = vadd.f32 0.0, %v9766
      %v9768 = vpop.f32.mrb[0].mxu0
      %9769 = vmatprep.mubr.f32.mxu0 0.0
      %9770 = vmatmul.mubr.f32.gmra.mrb[0].mxu0 %v9602
      %v9771 = vpop.f32.mrb[0].mxu0
      %v9772 = vadd.f32 0.0, %v9771
      %v9773 = vpop.f32.mrb[0].mxu0
      %9774 = vmatprep.mubr.f32.mxu0 0.0
      %9775 = vmatmul.mubr.f32.gmra.mrb[0].mxu0 %v9605
      %v9776 = vpop.f32.mrb[0].mxu0
      %v9777 = vadd.f32 0.0, %v9776
      %v9778 = vpop.f32.mrb[0].mxu0
      %9779 = vmatprep.mubr.f32.mxu0 0.0
      %9780 = vmatmul.mubr.f32.gmra.mrb[0].mxu0 %v9608
      %v9781 = vpop.f32.mrb[0].mxu0
      %v9782 = vadd.f32 0.0, %v9781
      %v9783 = vpop.f32.mrb[0].mxu0
      %9784 = vmatprep.mubr.f32.mxu0 0.0
      %9785 = vmatmul.mubr.f32.gmra.mrb[0].mxu0 %v9611
      %v9786 = vpop.f32.mrb[0].mxu0
      %v9787 = vadd.f32 0.0, %v9786
      %v9788 = vpop.f32.mrb[0].mxu0
      %9789 = vmatprep.mubr.f32.mxu0 0.0
      %9790 = vmatmul.mubr.f32.gmra.mrb[0].mxu0 %v9614
      %v9791 = vpop.f32.mrb[0].mxu0
      %v9792 = vadd.f32 0.0, %v9791
      %v9793 = vpop.f32.mrb[0].mxu0
      %9794 = vmatprep.mubr.f32.mxu0 0.0
      %9795 = vmatmul.mubr.f32.gmra.mrb[0].mxu0 %v9617
      %v9796 = vpop.f32.mrb[0].mxu0
      %v9797 = vadd.f32 0.0, %v9796
      %v9798 = vpop.f32.mrb[0].mxu0
      %9799 = vmatprep.mubr.f32.mxu0 0.0
      %9800 = vmatmul.mubr.f32.gmra.mrb[0].mxu0 %v9620
      %v9801 = vpop.f32.mrb[0].mxu0
      %v9802 = vadd.f32 0.0, %v9801
      %v9803 = vpop.f32.mrb[0].mxu0
      %9804 = vmatprep.mubr.f32.mxu0 0.0
      %9805 = vmatmul.mubr.f32.gmra.mrb[0].mxu0 %v9623
      %v9806 = vpop.f32.mrb[0].mxu0
      %v9807 = vadd.f32 0.0, %v9806
      %v9808 = vpop.f32.mrb[0].mxu0
      %9809 = vmatprep.mubr.f32.mxu0 0.0
      %9810 = vmatmul.mubr.f32.gmra.mrb[0].mxu0 %v9626
      %v9811 = vpop.f32.mrb[0].mxu0
      %v9812 = vadd.f32 0.0, %v9811
      %v9813 = vpop.f32.mrb[0].mxu0
      %9814 = vmatprep.mubr.f32.mxu0 0.0
      %9815 = vmatmul.mubr.f32.gmra.mrb[0].mxu0 %v9629
      %v9816 = vpop.f32.mrb[0].mxu0
      %v9817 = vadd.f32 0.0, %v9816
      %v9818 = vpop.f32.mrb[0].mxu0
      %9819 = vmatprep.mubr.f32.mxu0 0.0
      %9820 = vmatmul.mubr.f32.gmra.mrb[0].mxu0 %v9632
      %v9821 = vpop.f32.mrb[0].mxu0
      %v9822 = vadd.f32 0.0, %v9821
      %v9823 = vpop.f32.mrb[0].mxu0
      %9824 = vmatprep.mubr.f32.mxu0 0.0
      %9825 = vmatmul.mubr.f32.gmra.mrb[0].mxu0 %v9635
      %v9826 = vpop.f32.mrb[0].mxu0
      %v9827 = vadd.f32 0.0, %v9826
      %v9828 = vpop.f32.mrb[0].mxu0
      %9829 = vmatprep.mubr.f32.mxu0 0.0
      %9830 = vmatmul.mubr.f32.gmra.mrb[0].mxu0 %v9638
      %v9831 = vpop.f32.mrb[0].mxu0
      %v9832 = vadd.f32 0.0, %v9831
      %v9833 = vpop.f32.mrb[0].mxu0
      %9834 = vmatprep.mubr.f32.mxu0 0.0
      %9835 = vmatmul.mubr.f32.gmra.mrb[0].mxu0 %v9641
      %v9836 = vpop.f32.mrb[0].mxu0
      %v9837 = vadd.f32 0.0, %v9836
      %v9838 = vpop.f32.mrb[0].mxu0
      %9839 = vmatprep.mubr.f32.mxu0 0.0
      %9840 = vmatmul.mubr.f32.gmra.mrb[0].mxu0 %v9644
      %v9841 = vpop.f32.mrb[0].mxu0
      %v9842 = vadd.f32 0.0, %v9841
      %v9843 = vpop.f32.mrb[0].mxu0
      %9844 = vmatprep.mubr.f32.mxu0 0.0
      %9845 = vmatmul.mubr.f32.gmra.mrb[0].mxu0 %v9647
      %v9846 = vpop.f32.mrb[0].mxu0
      %v9847 = vadd.f32 0.0, %v9846
      %v9848 = vpop.f32.mrb[0].mxu0
      %9849 = vmatprep.mubr.f32.mxu0 0.0
      %9850 = vmatmul.mubr.f32.gmra.mrb[0].mxu0 %v9650
      %v9851 = vpop.f32.mrb[0].mxu0
      %v9852 = vadd.f32 0.0, %v9851
      %v9853 = vpop.f32.mrb[0].mxu0
      %9854 = vmatprep.mubr.f32.mxu0 0.0
      %9855 = vmatmul.mubr.f32.gmra.mrb[0].mxu0 %v9653
      %v9856 = vpop.f32.mrb[0].mxu0
      %v9857 = vadd.f32 0.0, %v9856
      %v9858 = vpop.f32.mrb[0].mxu0
      %9859 = vmatprep.mubr.f32.mxu0 0.0
      %9860 = vmatmul.mubr.f32.gmra.mrb[0].mxu0 %v9656
      %v9861 = vpop.f32.mrb[0].mxu0
      %v9862 = vadd.f32 0.0, %v9861
      %v9863 = vpop.f32.mrb[0].mxu0
      %9864 = vmatprep.mubr.f32.mxu0 0.0
      %9865 = vmatmul.mubr.f32.gmra.mrb[0].mxu0 %v9659
      %v9866 = vpop.f32.mrb[0].mxu0
      %v9867 = vadd.f32 0.0, %v9866
      %v9868 = vpop.f32.mrb[0].mxu0
      %9869 = vmatprep.mubr.f32.mxu0 0.0
      %9870 = vmatmul.mubr.f32.gmra.mrb[0].mxu0 %v9662
      %v9871 = vpop.f32.mrb[0].mxu0
      %v9872 = vadd.f32 0.0, %v9871
      %v9873 = vpop.f32.mrb[0].mxu0
      %9874 = vmatprep.mubr.f32.mxu0 0.0
      %9875 = vmatmul.mubr.f32.gmra.mrb[0].mxu0 %v9665
      %v9876 = vpop.f32.mrb[0].mxu0
      %v9877 = vadd.f32 0.0, %v9876
      %v9878 = vpop.f32.mrb[0].mxu0
      %9879 = vmatprep.mubr.f32.mxu0 0.0
      %9880 = vmatmul.mubr.f32.gmra.mrb[0].mxu0 %v9668
      %v9881 = vpop.f32.mrb[0].mxu0
      %v9882 = vadd.f32 0.0, %v9881
      %v9883 = vpop.f32.mrb[0].mxu0
      %9884 = vmatprep.mubr.f32.mxu0 0.0
      %9885 = vmatmul.mubr.f32.gmra.mrb[0].mxu0 %v9671
      %v9886 = vpop.f32.mrb[0].mxu0
      %v9887 = vadd.f32 0.0, %v9886
      %v9888 = vpop.f32.mrb[0].mxu0
      %9889 = vmatprep.mubr.f32.mxu0 0.0
      %9890 = vmatmul.mubr.f32.gmra.mrb[0].mxu0 %v9674
      %v9891 = vpop.f32.mrb[0].mxu0
      %v9892 = vadd.f32 0.0, %v9891
      %v9893 = vpop.f32.mrb[0].mxu0
      %9894 = vmatprep.mubr.f32.mxu0 0.0
      %9895 = vmatmul.mubr.f32.gmra.mrb[0].mxu0 %v9677
      %v9896 = vpop.f32.mrb[0].mxu0
      %v9897 = vadd.f32 0.0, %v9896
      %v9898 = vpop.f32.mrb[0].mxu0
      %9899 = vmatprep.mubr.f32.mxu0 0.0
      %9900 = vmatmul.mubr.f32.gmra.mrb[0].mxu0 %v9680
      %v9901 = vpop.f32.mrb[0].mxu0
      %v9902 = vadd.f32 0.0, %v9901
      %v9903 = vpop.f32.mrb[0].mxu0
      %9904 = vmatprep.mubr.f32.mxu0 0.0
      %9905 = vmatmul.mubr.f32.gmra.mrb[0].mxu0 %v9683
      %v9906 = vpop.f32.mrb[0].mxu0
      %v9907 = vadd.f32 0.0, %v9906
      %v9908 = vpop.f32.mrb[0].mxu0
      %9909 = vdwg.mxu0
      %v9910 = vadd.f32 %v9522, %v9752
      %v9911 = vadd.f32 %v9523, %v9757
      %v9912 = vadd.f32 %v9524, %v9762
      %v9913 = vadd.f32 %v9525, %v9767
      %v9914 = vadd.f32 %v9526, %v9772
      %v9915 = vadd.f32 %v9527, %v9777
      %v9916 = vadd.f32 %v9528, %v9782
      %v9917 = vadd.f32 %v9529, %v9787
      %v9918 = vadd.f32 %v9530, %v9792
      %v9919 = vadd.f32 %v9531, %v9797
      %v9920 = vadd.f32 %v9532, %v9802
      %v9921 = vadd.f32 %v9533, %v9807
      %v9922 = vadd.f32 %v9534, %v9812
      %v9923 = vadd.f32 %v9535, %v9817
      %v9924 = vadd.f32 %v9536, %v9822
      %v9925 = vadd.f32 %v9537, %v9827
      %v9926 = vadd.f32 %v9538, %v9832
      %v9927 = vadd.f32 %v9539, %v9837
      %v9928 = vadd.f32 %v9540, %v9842
      %v9929 = vadd.f32 %v9541, %v9847
      %v9930 = vadd.f32 %v9542, %v9852
      %v9931 = vadd.f32 %v9543, %v9857
      %v9932 = vadd.f32 %v9544, %v9862
      %v9933 = vadd.f32 %v9545, %v9867
      %v9934 = vadd.f32 %v9546, %v9872
      %v9935 = vadd.f32 %v9547, %v9877
      %v9936 = vadd.f32 %v9548, %v9882
      %v9937 = vadd.f32 %v9549, %v9887
      %v9938 = vadd.f32 %v9550, %v9892
      %v9939 = vadd.f32 %v9551, %v9897
      %v9940 = vadd.f32 %v9552, %v9902
      %v9941 = vadd.f32 %v9553, %v9907
      %s9942 = scalar_lea.vmem [#allocation4], 48
      %v9943 = vld [vmem:[%s9942] sm:$0xff]
      %v9944 = vld [vmem:[%s9942 + $0x8] sm:$0xff]
      %v9945 = vld [vmem:[%s9942 + $0x18] sm:$0xff]
      %v9946 = vld [vmem:[%s9942 + $0x20] sm:$0xff]
      %v9947 = vld [vmem:[%s9942 + $0x30] sm:$0xff]
      %v9948 = vld [vmem:[%s9942 + $0x38] sm:$0xff]
      %v9949 = vld [vmem:[%s9942 + $0x48] sm:$0xff]
      %v9950 = vld [vmem:[%s9942 + $0x50] sm:$0xff]
      %v9951 = vld [vmem:[%s9942 + $0x60] sm:$0xff]
      %v9952 = vld [vmem:[%s9942 + $0x68] sm:$0xff]
      %v9953 = vld [vmem:[%s9942 + $0x78] sm:$0xff]
      %v9954 = vld [vmem:[%s9942 + $0x80] sm:$0xff]
      %v9955 = vld [vmem:[%s9942 + $0x90] sm:$0xff]
      %v9956 = vld [vmem:[%s9942 + $0x98] sm:$0xff]
      %v9957 = vld [vmem:[%s9942 + $0xa8] sm:$0xff]
      %v9958 = vld [vmem:[%s9942 + $0xb0] sm:$0xff]
      %v9959 = vld [vmem:[%s9942 + $0xc0] sm:$0xff]
      %v9960 = vld [vmem:[%s9942 + $0xc8] sm:$0xff]
      %v9961 = vld [vmem:[%s9942 + $0xd8] sm:$0xff]
      %v9962 = vld [vmem:[%s9942 + $0xe0] sm:$0xff]
      %v9963 = vld [vmem:[%s9942 + $0xf0] sm:$0xff]
      %v9964 = vld [vmem:[%s9942 + $0xf8] sm:$0xff]
      %v9965 = vld [vmem:[%s9942 + $0x108] sm:$0xff]
      %v9966 = vld [vmem:[%s9942 + $0x110] sm:$0xff]
      %v9967 = vld [vmem:[%s9942 + $0x120] sm:$0xff]
      %v9968 = vld [vmem:[%s9942 + $0x128] sm:$0xff]
      %v9969 = vld [vmem:[%s9942 + $0x138] sm:$0xff]
      %v9970 = vld [vmem:[%s9942 + $0x140] sm:$0xff]
      %v9971 = vld [vmem:[%s9942 + $0x150] sm:$0xff]
      %v9972 = vld [vmem:[%s9942 + $0x158] sm:$0xff]
      %v9973 = vld [vmem:[%s9942 + $0x168] sm:$0xff]
      %v9974 = vld [vmem:[%s9942 + $0x170] sm:$0xff]
      %s9975 = scalar_lea.vmem %s6, 96
      %v9976 = vld [vmem:[%s9975] sm:$0xff]
      %v9977 = vld [vmem:[%s9975 + $0x8] sm:$0xff]
      %v9979 = vsel %vm4004, %v9943, 0
      %v9982 = vsel %vm4004, %v9944, 0
      %v9985 = vsel %vm4004, %v9945, 0
      %v9988 = vsel %vm4004, %v9946, 0
      %v9991 = vsel %vm4004, %v9947, 0
      %v9994 = vsel %vm4004, %v9948, 0
      %v9997 = vsel %vm4004, %v9949, 0
      %v10000 = vsel %vm4004, %v9950, 0
      %v10003 = vsel %vm4004, %v9951, 0
      %v10006 = vsel %vm4004, %v9952, 0
      %v10009 = vsel %vm4004, %v9953, 0
      %v10012 = vsel %vm4004, %v9954, 0
      %v10015 = vsel %vm4004, %v9955, 0
      %v10018 = vsel %vm4004, %v9956, 0
      %v10021 = vsel %vm4004, %v9957, 0
      %v10024 = vsel %vm4004, %v9958, 0
      %v10027 = vsel %vm4004, %v9959, 0
      %v10030 = vsel %vm4004, %v9960, 0
      %v10033 = vsel %vm4004, %v9961, 0
      %v10036 = vsel %vm4004, %v9962, 0
      %v10039 = vsel %vm4004, %v9963, 0
      %v10042 = vsel %vm4004, %v9964, 0
      %v10045 = vsel %vm4004, %v9965, 0
      %v10048 = vsel %vm4004, %v9966, 0
      %v10051 = vsel %vm4004, %v9967, 0
      %v10054 = vsel %vm4004, %v9968, 0
      %v10057 = vsel %vm4004, %v9969, 0
      %v10060 = vsel %vm4004, %v9970, 0
      %v10063 = vsel %vm4004, %v9971, 0
      %v10066 = vsel %vm4004, %v9972, 0
      %v10069 = vsel %vm4004, %v9973, 0
      %v10072 = vsel %vm4004, %v9974, 0
      %10074 = vmatprep.subr.mxu0 0.0
      %10075 = vmatpush1.msra.mxu0 %v9976
      %10076 = vmatprep.subr.mxu0 0.0
      %10077 = vmatpush1.msra.mxu0 %v9977
      %10078 = vmatprep.subr.mxu0 0.0
      %10079 = vmatpush1.msra.mxu0 0.0
      %10080 = vmatprep.subr.mxu0 0.0
      %10081 = vmatpush1.msra.mxu0 0.0
      %10082 = vmatprep.subr.mxu0 0.0
      %10083 = vmatpush1.msra.mxu0 0.0
      %10084 = vmatprep.subr.mxu0 0.0
      %10085 = vmatpush1.msra.mxu0 0.0
      %10086 = vmatprep.subr.mxu0 0.0
      %10087 = vmatpush1.msra.mxu0 0.0
      %10088 = vmatprep.subr.mxu0 0.0
      %10089 = vmatpush1.msra.mxu0 0.0
      %10090 = vmatprep.subr.mxu0 0.0
      %10091 = vmatpush1.msra.mxu0 0.0
      %10092 = vmatprep.subr.mxu0 0.0
      %10093 = vmatpush1.msra.mxu0 0.0
      %10094 = vmatprep.subr.mxu0 0.0
      %10095 = vmatpush1.msra.mxu0 0.0
      %10096 = vmatprep.subr.mxu0 0.0
      %10097 = vmatpush1.msra.mxu0 0.0
      %10098 = vmatprep.subr.mxu0 0.0
      %10099 = vmatpush1.msra.mxu0 0.0
      %10100 = vmatprep.subr.mxu0 0.0
      %10101 = vmatpush1.msra.mxu0 0.0
      %10102 = vmatprep.subr.mxu0 0.0
      %10103 = vmatpush1.msra.mxu0 0.0
      %10104 = vmatprep.subr.mxu0 0.0
      %10105 = vmatpush1.msra.mxu0 0.0
      %10106 = vmatprep.subr.mxu0 0.0
      %10107 = vmatpush1.msra.mxu0 0.0
      %10108 = vmatprep.subr.mxu0 0.0
      %10109 = vmatpush1.msra.mxu0 0.0
      %10110 = vmatprep.subr.mxu0 0.0
      %10111 = vmatpush1.msra.mxu0 0.0
      %10112 = vmatprep.subr.mxu0 0.0
      %10113 = vmatpush1.msra.mxu0 0.0
      %10114 = vmatprep.subr.mxu0 0.0
      %10115 = vmatpush1.msra.mxu0 0.0
      %10116 = vmatprep.subr.mxu0 0.0
      %10117 = vmatpush1.msra.mxu0 0.0
      %10118 = vmatprep.subr.mxu0 0.0
      %10119 = vmatpush1.msra.mxu0 0.0
      %10120 = vmatprep.subr.mxu0 0.0
      %10121 = vmatpush1.msra.mxu0 0.0
      %10122 = vmatprep.subr.mxu0 0.0
      %10123 = vmatpush1.msra.mxu0 0.0
      %10124 = vmatprep.subr.mxu0 0.0
      %10125 = vmatpush1.msra.mxu0 0.0
      %10126 = vmatprep.subr.mxu0 0.0
      %10127 = vmatpush1.msra.mxu0 0.0
      %10128 = vmatprep.subr.mxu0 0.0
      %10129 = vmatpush1.msra.mxu0 0.0
      %10130 = vmatprep.subr.mxu0 0.0
      %10131 = vmatpush1.msra.mxu0 0.0
      %10132 = vmatprep.subr.mxu0 0.0
      %10133 = vmatpush1.msra.mxu0 0.0
      %10134 = vmatprep.subr.mxu0 0.0
      %10135 = vmatpush1.msra.mxu0 0.0
      %10136 = vmatprep.subr.mxu0 0.0
      %10137 = vmatpush1.msra.mxu0 0.0
      %10138 = vmatprep.mubr.f32.mxu0 0.0
      %10139 = vmatmul.mubr.f32.gmra.mrb[0].mxu0 %v9979
      %v10140 = vpop.f32.mrb[0].mxu0
      %v10141 = vadd.f32 0.0, %v10140
      %v10142 = vpop.f32.mrb[0].mxu0
      %10143 = vmatprep.mubr.f32.mxu0 0.0
      %10144 = vmatmul.mubr.f32.gmra.mrb[0].mxu0 %v9982
      %v10145 = vpop.f32.mrb[0].mxu0
      %v10146 = vadd.f32 0.0, %v10145
      %v10147 = vpop.f32.mrb[0].mxu0
      %10148 = vmatprep.mubr.f32.mxu0 0.0
      %10149 = vmatmul.mubr.f32.gmra.mrb[0].mxu0 %v9985
      %v10150 = vpop.f32.mrb[0].mxu0
      %v10151 = vadd.f32 0.0, %v10150
      %v10152 = vpop.f32.mrb[0].mxu0
      %10153 = vmatprep.mubr.f32.mxu0 0.0
      %10154 = vmatmul.mubr.f32.gmra.mrb[0].mxu0 %v9988
      %v10155 = vpop.f32.mrb[0].mxu0
      %v10156 = vadd.f32 0.0, %v10155
      %v10157 = vpop.f32.mrb[0].mxu0
      %10158 = vmatprep.mubr.f32.mxu0 0.0
      %10159 = vmatmul.mubr.f32.gmra.mrb[0].mxu0 %v9991
      %v10160 = vpop.f32.mrb[0].mxu0
      %v10161 = vadd.f32 0.0, %v10160
      %v10162 = vpop.f32.mrb[0].mxu0
      %10163 = vmatprep.mubr.f32.mxu0 0.0
      %10164 = vmatmul.mubr.f32.gmra.mrb[0].mxu0 %v9994
      %v10165 = vpop.f32.mrb[0].mxu0
      %v10166 = vadd.f32 0.0, %v10165
      %v10167 = vpop.f32.mrb[0].mxu0
      %10168 = vmatprep.mubr.f32.mxu0 0.0
      %10169 = vmatmul.mubr.f32.gmra.mrb[0].mxu0 %v9997
      %v10170 = vpop.f32.mrb[0].mxu0
      %v10171 = vadd.f32 0.0, %v10170
      %v10172 = vpop.f32.mrb[0].mxu0
      %10173 = vmatprep.mubr.f32.mxu0 0.0
      %10174 = vmatmul.mubr.f32.gmra.mrb[0].mxu0 %v10000
      %v10175 = vpop.f32.mrb[0].mxu0
      %v10176 = vadd.f32 0.0, %v10175
      %v10177 = vpop.f32.mrb[0].mxu0
      %10178 = vmatprep.mubr.f32.mxu0 0.0
      %10179 = vmatmul.mubr.f32.gmra.mrb[0].mxu0 %v10003
      %v10180 = vpop.f32.mrb[0].mxu0
      %v10181 = vadd.f32 0.0, %v10180
      %v10182 = vpop.f32.mrb[0].mxu0
      %10183 = vmatprep.mubr.f32.mxu0 0.0
      %10184 = vmatmul.mubr.f32.gmra.mrb[0].mxu0 %v10006
      %v10185 = vpop.f32.mrb[0].mxu0
      %v10186 = vadd.f32 0.0, %v10185
      %v10187 = vpop.f32.mrb[0].mxu0
      %10188 = vmatprep.mubr.f32.mxu0 0.0
      %10189 = vmatmul.mubr.f32.gmra.mrb[0].mxu0 %v10009
      %v10190 = vpop.f32.mrb[0].mxu0
      %v10191 = vadd.f32 0.0, %v10190
      %v10192 = vpop.f32.mrb[0].mxu0
      %10193 = vmatprep.mubr.f32.mxu0 0.0
      %10194 = vmatmul.mubr.f32.gmra.mrb[0].mxu0 %v10012
      %v10195 = vpop.f32.mrb[0].mxu0
      %v10196 = vadd.f32 0.0, %v10195
      %v10197 = vpop.f32.mrb[0].mxu0
      %10198 = vmatprep.mubr.f32.mxu0 0.0
      %10199 = vmatmul.mubr.f32.gmra.mrb[0].mxu0 %v10015
      %v10200 = vpop.f32.mrb[0].mxu0
      %v10201 = vadd.f32 0.0, %v10200
      %v10202 = vpop.f32.mrb[0].mxu0
      %10203 = vmatprep.mubr.f32.mxu0 0.0
      %10204 = vmatmul.mubr.f32.gmra.mrb[0].mxu0 %v10018
      %v10205 = vpop.f32.mrb[0].mxu0
      %v10206 = vadd.f32 0.0, %v10205
      %v10207 = vpop.f32.mrb[0].mxu0
      %10208 = vmatprep.mubr.f32.mxu0 0.0
      %10209 = vmatmul.mubr.f32.gmra.mrb[0].mxu0 %v10021
      %v10210 = vpop.f32.mrb[0].mxu0
      %v10211 = vadd.f32 0.0, %v10210
      %v10212 = vpop.f32.mrb[0].mxu0
      %10213 = vmatprep.mubr.f32.mxu0 0.0
      %10214 = vmatmul.mubr.f32.gmra.mrb[0].mxu0 %v10024
      %v10215 = vpop.f32.mrb[0].mxu0
      %v10216 = vadd.f32 0.0, %v10215
      %v10217 = vpop.f32.mrb[0].mxu0
      %10218 = vmatprep.mubr.f32.mxu0 0.0
      %10219 = vmatmul.mubr.f32.gmra.mrb[0].mxu0 %v10027
      %v10220 = vpop.f32.mrb[0].mxu0
      %v10221 = vadd.f32 0.0, %v10220
      %v10222 = vpop.f32.mrb[0].mxu0
      %10223 = vmatprep.mubr.f32.mxu0 0.0
      %10224 = vmatmul.mubr.f32.gmra.mrb[0].mxu0 %v10030
      %v10225 = vpop.f32.mrb[0].mxu0
      %v10226 = vadd.f32 0.0, %v10225
      %v10227 = vpop.f32.mrb[0].mxu0
      %10228 = vmatprep.mubr.f32.mxu0 0.0
      %10229 = vmatmul.mubr.f32.gmra.mrb[0].mxu0 %v10033
      %v10230 = vpop.f32.mrb[0].mxu0
      %v10231 = vadd.f32 0.0, %v10230
      %v10232 = vpop.f32.mrb[0].mxu0
      %10233 = vmatprep.mubr.f32.mxu0 0.0
      %10234 = vmatmul.mubr.f32.gmra.mrb[0].mxu0 %v10036
      %v10235 = vpop.f32.mrb[0].mxu0
      %v10236 = vadd.f32 0.0, %v10235
      %v10237 = vpop.f32.mrb[0].mxu0
      %10238 = vmatprep.mubr.f32.mxu0 0.0
      %10239 = vmatmul.mubr.f32.gmra.mrb[0].mxu0 %v10039
      %v10240 = vpop.f32.mrb[0].mxu0
      %v10241 = vadd.f32 0.0, %v10240
      %v10242 = vpop.f32.mrb[0].mxu0
      %10243 = vmatprep.mubr.f32.mxu0 0.0
      %10244 = vmatmul.mubr.f32.gmra.mrb[0].mxu0 %v10042
      %v10245 = vpop.f32.mrb[0].mxu0
      %v10246 = vadd.f32 0.0, %v10245
      %v10247 = vpop.f32.mrb[0].mxu0
      %10248 = vmatprep.mubr.f32.mxu0 0.0
      %10249 = vmatmul.mubr.f32.gmra.mrb[0].mxu0 %v10045
      %v10250 = vpop.f32.mrb[0].mxu0
      %v10251 = vadd.f32 0.0, %v10250
      %v10252 = vpop.f32.mrb[0].mxu0
      %10253 = vmatprep.mubr.f32.mxu0 0.0
      %10254 = vmatmul.mubr.f32.gmra.mrb[0].mxu0 %v10048
      %v10255 = vpop.f32.mrb[0].mxu0
      %v10256 = vadd.f32 0.0, %v10255
      %v10257 = vpop.f32.mrb[0].mxu0
      %10258 = vmatprep.mubr.f32.mxu0 0.0
      %10259 = vmatmul.mubr.f32.gmra.mrb[0].mxu0 %v10051
      %v10260 = vpop.f32.mrb[0].mxu0
      %v10261 = vadd.f32 0.0, %v10260
      %v10262 = vpop.f32.mrb[0].mxu0
      %10263 = vmatprep.mubr.f32.mxu0 0.0
      %10264 = vmatmul.mubr.f32.gmra.mrb[0].mxu0 %v10054
      %v10265 = vpop.f32.mrb[0].mxu0
      %v10266 = vadd.f32 0.0, %v10265
      %v10267 = vpop.f32.mrb[0].mxu0
      %10268 = vmatprep.mubr.f32.mxu0 0.0
      %10269 = vmatmul.mubr.f32.gmra.mrb[0].mxu0 %v10057
      %v10270 = vpop.f32.mrb[0].mxu0
      %v10271 = vadd.f32 0.0, %v10270
      %v10272 = vpop.f32.mrb[0].mxu0
      %10273 = vmatprep.mubr.f32.mxu0 0.0
      %10274 = vmatmul.mubr.f32.gmra.mrb[0].mxu0 %v10060
      %v10275 = vpop.f32.mrb[0].mxu0
      %v10276 = vadd.f32 0.0, %v10275
      %v10277 = vpop.f32.mrb[0].mxu0
      %10278 = vmatprep.mubr.f32.mxu0 0.0
      %10279 = vmatmul.mubr.f32.gmra.mrb[0].mxu0 %v10063
      %v10280 = vpop.f32.mrb[0].mxu0
      %v10281 = vadd.f32 0.0, %v10280
      %v10282 = vpop.f32.mrb[0].mxu0
      %10283 = vmatprep.mubr.f32.mxu0 0.0
      %10284 = vmatmul.mubr.f32.gmra.mrb[0].mxu0 %v10066
      %v10285 = vpop.f32.mrb[0].mxu0
      %v10286 = vadd.f32 0.0, %v10285
      %v10287 = vpop.f32.mrb[0].mxu0
      %10288 = vmatprep.mubr.f32.mxu0 0.0
      %10289 = vmatmul.mubr.f32.gmra.mrb[0].mxu0 %v10069
      %v10290 = vpop.f32.mrb[0].mxu0
      %v10291 = vadd.f32 0.0, %v10290
      %v10292 = vpop.f32.mrb[0].mxu0
      %10293 = vmatprep.mubr.f32.mxu0 0.0
      %10294 = vmatmul.mubr.f32.gmra.mrb[0].mxu0 %v10072
      %v10295 = vpop.f32.mrb[0].mxu0
      %v10296 = vadd.f32 0.0, %v10295
      %v10297 = vpop.f32.mrb[0].mxu0
      %10298 = vdwg.mxu0
      %v10299 = vadd.f32 %v9910, %v10141
      %v10300 = vadd.f32 %v9911, %v10146
      %v10301 = vadd.f32 %v9912, %v10151
      %v10302 = vadd.f32 %v9913, %v10156
      %v10303 = vadd.f32 %v9914, %v10161
      %v10304 = vadd.f32 %v9915, %v10166
      %v10305 = vadd.f32 %v9916, %v10171
      %v10306 = vadd.f32 %v9917, %v10176
      %v10307 = vadd.f32 %v9918, %v10181
      %v10308 = vadd.f32 %v9919, %v10186
      %v10309 = vadd.f32 %v9920, %v10191
      %v10310 = vadd.f32 %v9921, %v10196
      %v10311 = vadd.f32 %v9922, %v10201
      %v10312 = vadd.f32 %v9923, %v10206
      %v10313 = vadd.f32 %v9924, %v10211
      %v10314 = vadd.f32 %v9925, %v10216
      %v10315 = vadd.f32 %v9926, %v10221
      %v10316 = vadd.f32 %v9927, %v10226
      %v10317 = vadd.f32 %v9928, %v10231
      %v10318 = vadd.f32 %v9929, %v10236
      %v10319 = vadd.f32 %v9930, %v10241
      %v10320 = vadd.f32 %v9931, %v10246
      %v10321 = vadd.f32 %v9932, %v10251
      %v10322 = vadd.f32 %v9933, %v10256
      %v10323 = vadd.f32 %v9934, %v10261
      %v10324 = vadd.f32 %v9935, %v10266
      %v10325 = vadd.f32 %v9936, %v10271
      %v10326 = vadd.f32 %v9937, %v10276
      %v10327 = vadd.f32 %v9938, %v10281
      %v10328 = vadd.f32 %v9939, %v10286
      %v10329 = vadd.f32 %v9940, %v10291
      %v10330 = vadd.f32 %v9941, %v10296
      %v10331 = vld [vmem:[%s9942 + $0x1] sm:$0xff]
      %v10332 = vld [vmem:[%s9942 + $0x9] sm:$0xff]
      %v10333 = vld [vmem:[%s9942 + $0x19] sm:$0xff]
      %v10334 = vld [vmem:[%s9942 + $0x21] sm:$0xff]
      %v10335 = vld [vmem:[%s9942 + $0x31] sm:$0xff]
      %v10336 = vld [vmem:[%s9942 + $0x39] sm:$0xff]
      %v10337 = vld [vmem:[%s9942 + $0x49] sm:$0xff]
      %v10338 = vld [vmem:[%s9942 + $0x51] sm:$0xff]
      %v10339 = vld [vmem:[%s9942 + $0x61] sm:$0xff]
      %v10340 = vld [vmem:[%s9942 + $0x69] sm:$0xff]
      %v10341 = vld [vmem:[%s9942 + $0x79] sm:$0xff]
      %v10342 = vld [vmem:[%s9942 + $0x81] sm:$0xff]
      %v10343 = vld [vmem:[%s9942 + $0x91] sm:$0xff]
      %v10344 = vld [vmem:[%s9942 + $0x99] sm:$0xff]
      %v10345 = vld [vmem:[%s9942 + $0xa9] sm:$0xff]
      %v10346 = vld [vmem:[%s9942 + $0xb1] sm:$0xff]
      %v10347 = vld [vmem:[%s9942 + $0xc1] sm:$0xff]
      %v10348 = vld [vmem:[%s9942 + $0xc9] sm:$0xff]
      %v10349 = vld [vmem:[%s9942 + $0xd9] sm:$0xff]
      %v10350 = vld [vmem:[%s9942 + $0xe1] sm:$0xff]
      %v10351 = vld [vmem:[%s9942 + $0xf1] sm:$0xff]
      %v10352 = vld [vmem:[%s9942 + $0xf9] sm:$0xff]
      %v10353 = vld [vmem:[%s9942 + $0x109] sm:$0xff]
      %v10354 = vld [vmem:[%s9942 + $0x111] sm:$0xff]
      %v10355 = vld [vmem:[%s9942 + $0x121] sm:$0xff]
      %v10356 = vld [vmem:[%s9942 + $0x129] sm:$0xff]
      %v10357 = vld [vmem:[%s9942 + $0x139] sm:$0xff]
      %v10358 = vld [vmem:[%s9942 + $0x141] sm:$0xff]
      %v10359 = vld [vmem:[%s9942 + $0x151] sm:$0xff]
      %v10360 = vld [vmem:[%s9942 + $0x159] sm:$0xff]
      %v10361 = vld [vmem:[%s9942 + $0x169] sm:$0xff]
      %v10362 = vld [vmem:[%s9942 + $0x171] sm:$0xff]
      %s10363 = scalar_lea.vmem %s6, 112
      %v10364 = vld [vmem:[%s10363] sm:$0xff]
      %v10365 = vld [vmem:[%s10363 + $0x8] sm:$0xff]
      %v10367 = vsel %vm4004, %v10331, 0
      %v10370 = vsel %vm4004, %v10332, 0
      %v10373 = vsel %vm4004, %v10333, 0
      %v10376 = vsel %vm4004, %v10334, 0
      %v10379 = vsel %vm4004, %v10335, 0
      %v10382 = vsel %vm4004, %v10336, 0
      %v10385 = vsel %vm4004, %v10337, 0
      %v10388 = vsel %vm4004, %v10338, 0
      %v10391 = vsel %vm4004, %v10339, 0
      %v10394 = vsel %vm4004, %v10340, 0
      %v10397 = vsel %vm4004, %v10341, 0
      %v10400 = vsel %vm4004, %v10342, 0
      %v10403 = vsel %vm4004, %v10343, 0
      %v10406 = vsel %vm4004, %v10344, 0
      %v10409 = vsel %vm4004, %v10345, 0
      %v10412 = vsel %vm4004, %v10346, 0
      %v10415 = vsel %vm4004, %v10347, 0
      %v10418 = vsel %vm4004, %v10348, 0
      %v10421 = vsel %vm4004, %v10349, 0
      %v10424 = vsel %vm4004, %v10350, 0
      %v10427 = vsel %vm4004, %v10351, 0
      %v10430 = vsel %vm4004, %v10352, 0
      %v10433 = vsel %vm4004, %v10353, 0
      %v10436 = vsel %vm4004, %v10354, 0
      %v10439 = vsel %vm4004, %v10355, 0
      %v10442 = vsel %vm4004, %v10356, 0
      %v10445 = vsel %vm4004, %v10357, 0
      %v10448 = vsel %vm4004, %v10358, 0
      %v10451 = vsel %vm4004, %v10359, 0
      %v10454 = vsel %vm4004, %v10360, 0
      %v10457 = vsel %vm4004, %v10361, 0
      %v10460 = vsel %vm4004, %v10362, 0
      %10462 = vmatprep.subr.mxu0 0.0
      %10463 = vmatpush1.msra.mxu0 %v10364
      %10464 = vmatprep.subr.mxu0 0.0
      %10465 = vmatpush1.msra.mxu0 %v10365
      %10466 = vmatprep.subr.mxu0 0.0
      %10467 = vmatpush1.msra.mxu0 0.0
      %10468 = vmatprep.subr.mxu0 0.0
      %10469 = vmatpush1.msra.mxu0 0.0
      %10470 = vmatprep.subr.mxu0 0.0
      %10471 = vmatpush1.msra.mxu0 0.0
      %10472 = vmatprep.subr.mxu0 0.0
      %10473 = vmatpush1.msra.mxu0 0.0
      %10474 = vmatprep.subr.mxu0 0.0
      %10475 = vmatpush1.msra.mxu0 0.0
      %10476 = vmatprep.subr.mxu0 0.0
      %10477 = vmatpush1.msra.mxu0 0.0
      %10478 = vmatprep.subr.mxu0 0.0
      %10479 = vmatpush1.msra.mxu0 0.0
      %10480 = vmatprep.subr.mxu0 0.0
      %10481 = vmatpush1.msra.mxu0 0.0
      %10482 = vmatprep.subr.mxu0 0.0
      %10483 = vmatpush1.msra.mxu0 0.0
      %10484 = vmatprep.subr.mxu0 0.0
      %10485 = vmatpush1.msra.mxu0 0.0
      %10486 = vmatprep.subr.mxu0 0.0
      %10487 = vmatpush1.msra.mxu0 0.0
      %10488 = vmatprep.subr.mxu0 0.0
      %10489 = vmatpush1.msra.mxu0 0.0
      %10490 = vmatprep.subr.mxu0 0.0
      %10491 = vmatpush1.msra.mxu0 0.0
      %10492 = vmatprep.subr.mxu0 0.0
      %10493 = vmatpush1.msra.mxu0 0.0
      %10494 = vmatprep.subr.mxu0 0.0
      %10495 = vmatpush1.msra.mxu0 0.0
      %10496 = vmatprep.subr.mxu0 0.0
      %10497 = vmatpush1.msra.mxu0 0.0
      %10498 = vmatprep.subr.mxu0 0.0
      %10499 = vmatpush1.msra.mxu0 0.0
      %10500 = vmatprep.subr.mxu0 0.0
      %10501 = vmatpush1.msra.mxu0 0.0
      %10502 = vmatprep.subr.mxu0 0.0
      %10503 = vmatpush1.msra.mxu0 0.0
      %10504 = vmatprep.subr.mxu0 0.0
      %10505 = vmatpush1.msra.mxu0 0.0
      %10506 = vmatprep.subr.mxu0 0.0
      %10507 = vmatpush1.msra.mxu0 0.0
      %10508 = vmatprep.subr.mxu0 0.0
      %10509 = vmatpush1.msra.mxu0 0.0
      %10510 = vmatprep.subr.mxu0 0.0
      %10511 = vmatpush1.msra.mxu0 0.0
      %10512 = vmatprep.subr.mxu0 0.0
      %10513 = vmatpush1.msra.mxu0 0.0
      %10514 = vmatprep.subr.mxu0 0.0
      %10515 = vmatpush1.msra.mxu0 0.0
      %10516 = vmatprep.subr.mxu0 0.0
      %10517 = vmatpush1.msra.mxu0 0.0
      %10518 = vmatprep.subr.mxu0 0.0
      %10519 = vmatpush1.msra.mxu0 0.0
      %10520 = vmatprep.subr.mxu0 0.0
      %10521 = vmatpush1.msra.mxu0 0.0
      %10522 = vmatprep.subr.mxu0 0.0
      %10523 = vmatpush1.msra.mxu0 0.0
      %10524 = vmatprep.subr.mxu0 0.0
      %10525 = vmatpush1.msra.mxu0 0.0
      %10526 = vmatprep.mubr.f32.mxu0 0.0
      %10527 = vmatmul.mubr.f32.gmra.mrb[0].mxu0 %v10367
      %v10528 = vpop.f32.mrb[0].mxu0
      %v10529 = vadd.f32 0.0, %v10528
      %v10530 = vpop.f32.mrb[0].mxu0
      %10531 = vmatprep.mubr.f32.mxu0 0.0
      %10532 = vmatmul.mubr.f32.gmra.mrb[0].mxu0 %v10370
      %v10533 = vpop.f32.mrb[0].mxu0
      %v10534 = vadd.f32 0.0, %v10533
      %v10535 = vpop.f32.mrb[0].mxu0
      %10536 = vmatprep.mubr.f32.mxu0 0.0
      %10537 = vmatmul.mubr.f32.gmra.mrb[0].mxu0 %v10373
      %v10538 = vpop.f32.mrb[0].mxu0
      %v10539 = vadd.f32 0.0, %v10538
      %v10540 = vpop.f32.mrb[0].mxu0
      %10541 = vmatprep.mubr.f32.mxu0 0.0
      %10542 = vmatmul.mubr.f32.gmra.mrb[0].mxu0 %v10376
      %v10543 = vpop.f32.mrb[0].mxu0
      %v10544 = vadd.f32 0.0, %v10543
      %v10545 = vpop.f32.mrb[0].mxu0
      %10546 = vmatprep.mubr.f32.mxu0 0.0
      %10547 = vmatmul.mubr.f32.gmra.mrb[0].mxu0 %v10379
      %v10548 = vpop.f32.mrb[0].mxu0
      %v10549 = vadd.f32 0.0, %v10548
      %v10550 = vpop.f32.mrb[0].mxu0
      %10551 = vmatprep.mubr.f32.mxu0 0.0
      %10552 = vmatmul.mubr.f32.gmra.mrb[0].mxu0 %v10382
      %v10553 = vpop.f32.mrb[0].mxu0
      %v10554 = vadd.f32 0.0, %v10553
      %v10555 = vpop.f32.mrb[0].mxu0
      %10556 = vmatprep.mubr.f32.mxu0 0.0
      %10557 = vmatmul.mubr.f32.gmra.mrb[0].mxu0 %v10385
      %v10558 = vpop.f32.mrb[0].mxu0
      %v10559 = vadd.f32 0.0, %v10558
      %v10560 = vpop.f32.mrb[0].mxu0
      %10561 = vmatprep.mubr.f32.mxu0 0.0
      %10562 = vmatmul.mubr.f32.gmra.mrb[0].mxu0 %v10388
      %v10563 = vpop.f32.mrb[0].mxu0
      %v10564 = vadd.f32 0.0, %v10563
      %v10565 = vpop.f32.mrb[0].mxu0
      %10566 = vmatprep.mubr.f32.mxu0 0.0
      %10567 = vmatmul.mubr.f32.gmra.mrb[0].mxu0 %v10391
      %v10568 = vpop.f32.mrb[0].mxu0
      %v10569 = vadd.f32 0.0, %v10568
      %v10570 = vpop.f32.mrb[0].mxu0
      %10571 = vmatprep.mubr.f32.mxu0 0.0
      %10572 = vmatmul.mubr.f32.gmra.mrb[0].mxu0 %v10394
      %v10573 = vpop.f32.mrb[0].mxu0
      %v10574 = vadd.f32 0.0, %v10573
      %v10575 = vpop.f32.mrb[0].mxu0
      %10576 = vmatprep.mubr.f32.mxu0 0.0
      %10577 = vmatmul.mubr.f32.gmra.mrb[0].mxu0 %v10397
      %v10578 = vpop.f32.mrb[0].mxu0
      %v10579 = vadd.f32 0.0, %v10578
      %v10580 = vpop.f32.mrb[0].mxu0
      %10581 = vmatprep.mubr.f32.mxu0 0.0
      %10582 = vmatmul.mubr.f32.gmra.mrb[0].mxu0 %v10400
      %v10583 = vpop.f32.mrb[0].mxu0
      %v10584 = vadd.f32 0.0, %v10583
      %v10585 = vpop.f32.mrb[0].mxu0
      %10586 = vmatprep.mubr.f32.mxu0 0.0
      %10587 = vmatmul.mubr.f32.gmra.mrb[0].mxu0 %v10403
      %v10588 = vpop.f32.mrb[0].mxu0
      %v10589 = vadd.f32 0.0, %v10588
      %v10590 = vpop.f32.mrb[0].mxu0
      %10591 = vmatprep.mubr.f32.mxu0 0.0
      %10592 = vmatmul.mubr.f32.gmra.mrb[0].mxu0 %v10406
      %v10593 = vpop.f32.mrb[0].mxu0
      %v10594 = vadd.f32 0.0, %v10593
      %v10595 = vpop.f32.mrb[0].mxu0
      %10596 = vmatprep.mubr.f32.mxu0 0.0
      %10597 = vmatmul.mubr.f32.gmra.mrb[0].mxu0 %v10409
      %v10598 = vpop.f32.mrb[0].mxu0
      %v10599 = vadd.f32 0.0, %v10598
      %v10600 = vpop.f32.mrb[0].mxu0
      %10601 = vmatprep.mubr.f32.mxu0 0.0
      %10602 = vmatmul.mubr.f32.gmra.mrb[0].mxu0 %v10412
      %v10603 = vpop.f32.mrb[0].mxu0
      %v10604 = vadd.f32 0.0, %v10603
      %v10605 = vpop.f32.mrb[0].mxu0
      %10606 = vmatprep.mubr.f32.mxu0 0.0
      %10607 = vmatmul.mubr.f32.gmra.mrb[0].mxu0 %v10415
      %v10608 = vpop.f32.mrb[0].mxu0
      %v10609 = vadd.f32 0.0, %v10608
      %v10610 = vpop.f32.mrb[0].mxu0
      %10611 = vmatprep.mubr.f32.mxu0 0.0
      %10612 = vmatmul.mubr.f32.gmra.mrb[0].mxu0 %v10418
      %v10613 = vpop.f32.mrb[0].mxu0
      %v10614 = vadd.f32 0.0, %v10613
      %v10615 = vpop.f32.mrb[0].mxu0
      %10616 = vmatprep.mubr.f32.mxu0 0.0
      %10617 = vmatmul.mubr.f32.gmra.mrb[0].mxu0 %v10421
      %v10618 = vpop.f32.mrb[0].mxu0
      %v10619 = vadd.f32 0.0, %v10618
      %v10620 = vpop.f32.mrb[0].mxu0
      %10621 = vmatprep.mubr.f32.mxu0 0.0
      %10622 = vmatmul.mubr.f32.gmra.mrb[0].mxu0 %v10424
      %v10623 = vpop.f32.mrb[0].mxu0
      %v10624 = vadd.f32 0.0, %v10623
      %v10625 = vpop.f32.mrb[0].mxu0
      %10626 = vmatprep.mubr.f32.mxu0 0.0
      %10627 = vmatmul.mubr.f32.gmra.mrb[0].mxu0 %v10427
      %v10628 = vpop.f32.mrb[0].mxu0
      %v10629 = vadd.f32 0.0, %v10628
      %v10630 = vpop.f32.mrb[0].mxu0
      %10631 = vmatprep.mubr.f32.mxu0 0.0
      %10632 = vmatmul.mubr.f32.gmra.mrb[0].mxu0 %v10430
      %v10633 = vpop.f32.mrb[0].mxu0
      %v10634 = vadd.f32 0.0, %v10633
      %v10635 = vpop.f32.mrb[0].mxu0
      %10636 = vmatprep.mubr.f32.mxu0 0.0
      %10637 = vmatmul.mubr.f32.gmra.mrb[0].mxu0 %v10433
      %v10638 = vpop.f32.mrb[0].mxu0
      %v10639 = vadd.f32 0.0, %v10638
      %v10640 = vpop.f32.mrb[0].mxu0
      %10641 = vmatprep.mubr.f32.mxu0 0.0
      %10642 = vmatmul.mubr.f32.gmra.mrb[0].mxu0 %v10436
      %v10643 = vpop.f32.mrb[0].mxu0
      %v10644 = vadd.f32 0.0, %v10643
      %v10645 = vpop.f32.mrb[0].mxu0
      %10646 = vmatprep.mubr.f32.mxu0 0.0
      %10647 = vmatmul.mubr.f32.gmra.mrb[0].mxu0 %v10439
      %v10648 = vpop.f32.mrb[0].mxu0
      %v10649 = vadd.f32 0.0, %v10648
      %v10650 = vpop.f32.mrb[0].mxu0
      %10651 = vmatprep.mubr.f32.mxu0 0.0
      %10652 = vmatmul.mubr.f32.gmra.mrb[0].mxu0 %v10442
      %v10653 = vpop.f32.mrb[0].mxu0
      %v10654 = vadd.f32 0.0, %v10653
      %v10655 = vpop.f32.mrb[0].mxu0
      %10656 = vmatprep.mubr.f32.mxu0 0.0
      %10657 = vmatmul.mubr.f32.gmra.mrb[0].mxu0 %v10445
      %v10658 = vpop.f32.mrb[0].mxu0
      %v10659 = vadd.f32 0.0, %v10658
      %v10660 = vpop.f32.mrb[0].mxu0
      %10661 = vmatprep.mubr.f32.mxu0 0.0
      %10662 = vmatmul.mubr.f32.gmra.mrb[0].mxu0 %v10448
      %v10663 = vpop.f32.mrb[0].mxu0
      %v10664 = vadd.f32 0.0, %v10663
      %v10665 = vpop.f32.mrb[0].mxu0
      %10666 = vmatprep.mubr.f32.mxu0 0.0
      %10667 = vmatmul.mubr.f32.gmra.mrb[0].mxu0 %v10451
      %v10668 = vpop.f32.mrb[0].mxu0
      %v10669 = vadd.f32 0.0, %v10668
      %v10670 = vpop.f32.mrb[0].mxu0
      %10671 = vmatprep.mubr.f32.mxu0 0.0
      %10672 = vmatmul.mubr.f32.gmra.mrb[0].mxu0 %v10454
      %v10673 = vpop.f32.mrb[0].mxu0
      %v10674 = vadd.f32 0.0, %v10673
      %v10675 = vpop.f32.mrb[0].mxu0
      %10676 = vmatprep.mubr.f32.mxu0 0.0
      %10677 = vmatmul.mubr.f32.gmra.mrb[0].mxu0 %v10457
      %v10678 = vpop.f32.mrb[0].mxu0
      %v10679 = vadd.f32 0.0, %v10678
      %v10680 = vpop.f32.mrb[0].mxu0
      %10681 = vmatprep.mubr.f32.mxu0 0.0
      %10682 = vmatmul.mubr.f32.gmra.mrb[0].mxu0 %v10460
      %v10683 = vpop.f32.mrb[0].mxu0
      %v10684 = vadd.f32 0.0, %v10683
      %v10685 = vpop.f32.mrb[0].mxu0
      %10686 = vdwg.mxu0
      %v10687 = vadd.f32 %v10299, %v10529
      %v10688 = vadd.f32 %v10300, %v10534
      %v10689 = vadd.f32 %v10301, %v10539
      %v10690 = vadd.f32 %v10302, %v10544
      %v10691 = vadd.f32 %v10303, %v10549
      %v10692 = vadd.f32 %v10304, %v10554
      %v10693 = vadd.f32 %v10305, %v10559
      %v10694 = vadd.f32 %v10306, %v10564
      %v10695 = vadd.f32 %v10307, %v10569
      %v10696 = vadd.f32 %v10308, %v10574
      %v10697 = vadd.f32 %v10309, %v10579
      %v10698 = vadd.f32 %v10310, %v10584
      %v10699 = vadd.f32 %v10311, %v10589
      %v10700 = vadd.f32 %v10312, %v10594
      %v10701 = vadd.f32 %v10313, %v10599
      %v10702 = vadd.f32 %v10314, %v10604
      %v10703 = vadd.f32 %v10315, %v10609
      %v10704 = vadd.f32 %v10316, %v10614
      %v10705 = vadd.f32 %v10317, %v10619
      %v10706 = vadd.f32 %v10318, %v10624
      %v10707 = vadd.f32 %v10319, %v10629
      %v10708 = vadd.f32 %v10320, %v10634
      %v10709 = vadd.f32 %v10321, %v10639
      %v10710 = vadd.f32 %v10322, %v10644
      %v10711 = vadd.f32 %v10323, %v10649
      %v10712 = vadd.f32 %v10324, %v10654
      %v10713 = vadd.f32 %v10325, %v10659
      %v10714 = vadd.f32 %v10326, %v10664
      %v10715 = vadd.f32 %v10327, %v10669
      %v10716 = vadd.f32 %v10328, %v10674
      %v10717 = vadd.f32 %v10329, %v10679
      %v10718 = vadd.f32 %v10330, %v10684
      %v10719 = vld [vmem:[%s9942 + $0x2] sm:$0xff]
      %v10720 = vld [vmem:[%s9942 + $0xa] sm:$0xff]
      %v10721 = vld [vmem:[%s9942 + $0x1a] sm:$0xff]
      %v10722 = vld [vmem:[%s9942 + $0x22] sm:$0xff]
      %v10723 = vld [vmem:[%s9942 + $0x32] sm:$0xff]
      %v10724 = vld [vmem:[%s9942 + $0x3a] sm:$0xff]
      %v10725 = vld [vmem:[%s9942 + $0x4a] sm:$0xff]
      %v10726 = vld [vmem:[%s9942 + $0x52] sm:$0xff]
      %v10727 = vld [vmem:[%s9942 + $0x62] sm:$0xff]
      %v10728 = vld [vmem:[%s9942 + $0x6a] sm:$0xff]
      %v10729 = vld [vmem:[%s9942 + $0x7a] sm:$0xff]
      %v10730 = vld [vmem:[%s9942 + $0x82] sm:$0xff]
      %v10731 = vld [vmem:[%s9942 + $0x92] sm:$0xff]
      %v10732 = vld [vmem:[%s9942 + $0x9a] sm:$0xff]
      %v10733 = vld [vmem:[%s9942 + $0xaa] sm:$0xff]
      %v10734 = vld [vmem:[%s9942 + $0xb2] sm:$0xff]
      %v10735 = vld [vmem:[%s9942 + $0xc2] sm:$0xff]
      %v10736 = vld [vmem:[%s9942 + $0xca] sm:$0xff]
      %v10737 = vld [vmem:[%s9942 + $0xda] sm:$0xff]
      %v10738 = vld [vmem:[%s9942 + $0xe2] sm:$0xff]
      %v10739 = vld [vmem:[%s9942 + $0xf2] sm:$0xff]
      %v10740 = vld [vmem:[%s9942 + $0xfa] sm:$0xff]
      %v10741 = vld [vmem:[%s9942 + $0x10a] sm:$0xff]
      %v10742 = vld [vmem:[%s9942 + $0x112] sm:$0xff]
      %v10743 = vld [vmem:[%s9942 + $0x122] sm:$0xff]
      %v10744 = vld [vmem:[%s9942 + $0x12a] sm:$0xff]
      %v10745 = vld [vmem:[%s9942 + $0x13a] sm:$0xff]
      %v10746 = vld [vmem:[%s9942 + $0x142] sm:$0xff]
      %v10747 = vld [vmem:[%s9942 + $0x152] sm:$0xff]
      %v10748 = vld [vmem:[%s9942 + $0x15a] sm:$0xff]
      %v10749 = vld [vmem:[%s9942 + $0x16a] sm:$0xff]
      %v10750 = vld [vmem:[%s9942 + $0x172] sm:$0xff]
      %s10751 = scalar_lea.vmem %s6, 128
      %v10752 = vld [vmem:[%s10751] sm:$0xff]
      %v10753 = vld [vmem:[%s10751 + $0x8] sm:$0xff]
      %v10755 = vsel %vm4004, %v10719, 0
      %v10758 = vsel %vm4004, %v10720, 0
      %v10761 = vsel %vm4004, %v10721, 0
      %v10764 = vsel %vm4004, %v10722, 0
      %v10767 = vsel %vm4004, %v10723, 0
      %v10770 = vsel %vm4004, %v10724, 0
      %v10773 = vsel %vm4004, %v10725, 0
      %v10776 = vsel %vm4004, %v10726, 0
      %v10779 = vsel %vm4004, %v10727, 0
      %v10782 = vsel %vm4004, %v10728, 0
      %v10785 = vsel %vm4004, %v10729, 0
      %v10788 = vsel %vm4004, %v10730, 0
      %v10791 = vsel %vm4004, %v10731, 0
      %v10794 = vsel %vm4004, %v10732, 0
      %v10797 = vsel %vm4004, %v10733, 0
      %v10800 = vsel %vm4004, %v10734, 0
      %v10803 = vsel %vm4004, %v10735, 0
      %v10806 = vsel %vm4004, %v10736, 0
      %v10809 = vsel %vm4004, %v10737, 0
      %v10812 = vsel %vm4004, %v10738, 0
      %v10815 = vsel %vm4004, %v10739, 0
      %v10818 = vsel %vm4004, %v10740, 0
      %v10821 = vsel %vm4004, %v10741, 0
      %v10824 = vsel %vm4004, %v10742, 0
      %v10827 = vsel %vm4004, %v10743, 0
      %v10830 = vsel %vm4004, %v10744, 0
      %v10833 = vsel %vm4004, %v10745, 0
      %v10836 = vsel %vm4004, %v10746, 0
      %v10839 = vsel %vm4004, %v10747, 0
      %v10842 = vsel %vm4004, %v10748, 0
      %v10845 = vsel %vm4004, %v10749, 0
      %v10848 = vsel %vm4004, %v10750, 0
      %10850 = vmatprep.subr.mxu0 0.0
      %10851 = vmatpush1.msra.mxu0 %v10752
      %10852 = vmatprep.subr.mxu0 0.0
      %10853 = vmatpush1.msra.mxu0 %v10753
      %10854 = vmatprep.subr.mxu0 0.0
      %10855 = vmatpush1.msra.mxu0 0.0
      %10856 = vmatprep.subr.mxu0 0.0
      %10857 = vmatpush1.msra.mxu0 0.0
      %10858 = vmatprep.subr.mxu0 0.0
      %10859 = vmatpush1.msra.mxu0 0.0
      %10860 = vmatprep.subr.mxu0 0.0
      %10861 = vmatpush1.msra.mxu0 0.0
      %10862 = vmatprep.subr.mxu0 0.0
      %10863 = vmatpush1.msra.mxu0 0.0
      %10864 = vmatprep.subr.mxu0 0.0
      %10865 = vmatpush1.msra.mxu0 0.0
      %10866 = vmatprep.subr.mxu0 0.0
      %10867 = vmatpush1.msra.mxu0 0.0
      %10868 = vmatprep.subr.mxu0 0.0
      %10869 = vmatpush1.msra.mxu0 0.0
      %10870 = vmatprep.subr.mxu0 0.0
      %10871 = vmatpush1.msra.mxu0 0.0
      %10872 = vmatprep.subr.mxu0 0.0
      %10873 = vmatpush1.msra.mxu0 0.0
      %10874 = vmatprep.subr.mxu0 0.0
      %10875 = vmatpush1.msra.mxu0 0.0
      %10876 = vmatprep.subr.mxu0 0.0
      %10877 = vmatpush1.msra.mxu0 0.0
      %10878 = vmatprep.subr.mxu0 0.0
      %10879 = vmatpush1.msra.mxu0 0.0
      %10880 = vmatprep.subr.mxu0 0.0
      %10881 = vmatpush1.msra.mxu0 0.0
      %10882 = vmatprep.subr.mxu0 0.0
      %10883 = vmatpush1.msra.mxu0 0.0
      %10884 = vmatprep.subr.mxu0 0.0
      %10885 = vmatpush1.msra.mxu0 0.0
      %10886 = vmatprep.subr.mxu0 0.0
      %10887 = vmatpush1.msra.mxu0 0.0
      %10888 = vmatprep.subr.mxu0 0.0
      %10889 = vmatpush1.msra.mxu0 0.0
      %10890 = vmatprep.subr.mxu0 0.0
      %10891 = vmatpush1.msra.mxu0 0.0
      %10892 = vmatprep.subr.mxu0 0.0
      %10893 = vmatpush1.msra.mxu0 0.0
      %10894 = vmatprep.subr.mxu0 0.0
      %10895 = vmatpush1.msra.mxu0 0.0
      %10896 = vmatprep.subr.mxu0 0.0
      %10897 = vmatpush1.msra.mxu0 0.0
      %10898 = vmatprep.subr.mxu0 0.0
      %10899 = vmatpush1.msra.mxu0 0.0
      %10900 = vmatprep.subr.mxu0 0.0
      %10901 = vmatpush1.msra.mxu0 0.0
      %10902 = vmatprep.subr.mxu0 0.0
      %10903 = vmatpush1.msra.mxu0 0.0
      %10904 = vmatprep.subr.mxu0 0.0
      %10905 = vmatpush1.msra.mxu0 0.0
      %10906 = vmatprep.subr.mxu0 0.0
      %10907 = vmatpush1.msra.mxu0 0.0
      %10908 = vmatprep.subr.mxu0 0.0
      %10909 = vmatpush1.msra.mxu0 0.0
      %10910 = vmatprep.subr.mxu0 0.0
      %10911 = vmatpush1.msra.mxu0 0.0
      %10912 = vmatprep.subr.mxu0 0.0
      %10913 = vmatpush1.msra.mxu0 0.0
      %10914 = vmatprep.mubr.f32.mxu0 0.0
      %10915 = vmatmul.mubr.f32.gmra.mrb[0].mxu0 %v10755
      %v10916 = vpop.f32.mrb[0].mxu0
      %v10917 = vadd.f32 0.0, %v10916
      %v10918 = vpop.f32.mrb[0].mxu0
      %10919 = vmatprep.mubr.f32.mxu0 0.0
      %10920 = vmatmul.mubr.f32.gmra.mrb[0].mxu0 %v10758
      %v10921 = vpop.f32.mrb[0].mxu0
      %v10922 = vadd.f32 0.0, %v10921
      %v10923 = vpop.f32.mrb[0].mxu0
      %10924 = vmatprep.mubr.f32.mxu0 0.0
      %10925 = vmatmul.mubr.f32.gmra.mrb[0].mxu0 %v10761
      %v10926 = vpop.f32.mrb[0].mxu0
      %v10927 = vadd.f32 0.0, %v10926
      %v10928 = vpop.f32.mrb[0].mxu0
      %10929 = vmatprep.mubr.f32.mxu0 0.0
      %10930 = vmatmul.mubr.f32.gmra.mrb[0].mxu0 %v10764
      %v10931 = vpop.f32.mrb[0].mxu0
      %v10932 = vadd.f32 0.0, %v10931
      %v10933 = vpop.f32.mrb[0].mxu0
      %10934 = vmatprep.mubr.f32.mxu0 0.0
      %10935 = vmatmul.mubr.f32.gmra.mrb[0].mxu0 %v10767
      %v10936 = vpop.f32.mrb[0].mxu0
      %v10937 = vadd.f32 0.0, %v10936
      %v10938 = vpop.f32.mrb[0].mxu0
      %10939 = vmatprep.mubr.f32.mxu0 0.0
      %10940 = vmatmul.mubr.f32.gmra.mrb[0].mxu0 %v10770
      %v10941 = vpop.f32.mrb[0].mxu0
      %v10942 = vadd.f32 0.0, %v10941
      %v10943 = vpop.f32.mrb[0].mxu0
      %10944 = vmatprep.mubr.f32.mxu0 0.0
      %10945 = vmatmul.mubr.f32.gmra.mrb[0].mxu0 %v10773
      %v10946 = vpop.f32.mrb[0].mxu0
      %v10947 = vadd.f32 0.0, %v10946
      %v10948 = vpop.f32.mrb[0].mxu0
      %10949 = vmatprep.mubr.f32.mxu0 0.0
      %10950 = vmatmul.mubr.f32.gmra.mrb[0].mxu0 %v10776
      %v10951 = vpop.f32.mrb[0].mxu0
      %v10952 = vadd.f32 0.0, %v10951
      %v10953 = vpop.f32.mrb[0].mxu0
      %10954 = vmatprep.mubr.f32.mxu0 0.0
      %10955 = vmatmul.mubr.f32.gmra.mrb[0].mxu0 %v10779
      %v10956 = vpop.f32.mrb[0].mxu0
      %v10957 = vadd.f32 0.0, %v10956
      %v10958 = vpop.f32.mrb[0].mxu0
      %10959 = vmatprep.mubr.f32.mxu0 0.0
      %10960 = vmatmul.mubr.f32.gmra.mrb[0].mxu0 %v10782
      %v10961 = vpop.f32.mrb[0].mxu0
      %v10962 = vadd.f32 0.0, %v10961
      %v10963 = vpop.f32.mrb[0].mxu0
      %10964 = vmatprep.mubr.f32.mxu0 0.0
      %10965 = vmatmul.mubr.f32.gmra.mrb[0].mxu0 %v10785
      %v10966 = vpop.f32.mrb[0].mxu0
      %v10967 = vadd.f32 0.0, %v10966
      %v10968 = vpop.f32.mrb[0].mxu0
      %10969 = vmatprep.mubr.f32.mxu0 0.0
      %10970 = vmatmul.mubr.f32.gmra.mrb[0].mxu0 %v10788
      %v10971 = vpop.f32.mrb[0].mxu0
      %v10972 = vadd.f32 0.0, %v10971
      %v10973 = vpop.f32.mrb[0].mxu0
      %10974 = vmatprep.mubr.f32.mxu0 0.0
      %10975 = vmatmul.mubr.f32.gmra.mrb[0].mxu0 %v10791
      %v10976 = vpop.f32.mrb[0].mxu0
      %v10977 = vadd.f32 0.0, %v10976
      %v10978 = vpop.f32.mrb[0].mxu0
      %10979 = vmatprep.mubr.f32.mxu0 0.0
      %10980 = vmatmul.mubr.f32.gmra.mrb[0].mxu0 %v10794
      %v10981 = vpop.f32.mrb[0].mxu0
      %v10982 = vadd.f32 0.0, %v10981
      %v10983 = vpop.f32.mrb[0].mxu0
      %10984 = vmatprep.mubr.f32.mxu0 0.0
      %10985 = vmatmul.mubr.f32.gmra.mrb[0].mxu0 %v10797
      %v10986 = vpop.f32.mrb[0].mxu0
      %v10987 = vadd.f32 0.0, %v10986
      %v10988 = vpop.f32.mrb[0].mxu0
      %10989 = vmatprep.mubr.f32.mxu0 0.0
      %10990 = vmatmul.mubr.f32.gmra.mrb[0].mxu0 %v10800
      %v10991 = vpop.f32.mrb[0].mxu0
      %v10992 = vadd.f32 0.0, %v10991
      %v10993 = vpop.f32.mrb[0].mxu0
      %10994 = vmatprep.mubr.f32.mxu0 0.0
      %10995 = vmatmul.mubr.f32.gmra.mrb[0].mxu0 %v10803
      %v10996 = vpop.f32.mrb[0].mxu0
      %v10997 = vadd.f32 0.0, %v10996
      %v10998 = vpop.f32.mrb[0].mxu0
      %10999 = vmatprep.mubr.f32.mxu0 0.0
      %11000 = vmatmul.mubr.f32.gmra.mrb[0].mxu0 %v10806
      %v11001 = vpop.f32.mrb[0].mxu0
      %v11002 = vadd.f32 0.0, %v11001
      %v11003 = vpop.f32.mrb[0].mxu0
      %11004 = vmatprep.mubr.f32.mxu0 0.0
      %11005 = vmatmul.mubr.f32.gmra.mrb[0].mxu0 %v10809
      %v11006 = vpop.f32.mrb[0].mxu0
      %v11007 = vadd.f32 0.0, %v11006
      %v11008 = vpop.f32.mrb[0].mxu0
      %11009 = vmatprep.mubr.f32.mxu0 0.0
      %11010 = vmatmul.mubr.f32.gmra.mrb[0].mxu0 %v10812
      %v11011 = vpop.f32.mrb[0].mxu0
      %v11012 = vadd.f32 0.0, %v11011
      %v11013 = vpop.f32.mrb[0].mxu0
      %11014 = vmatprep.mubr.f32.mxu0 0.0
      %11015 = vmatmul.mubr.f32.gmra.mrb[0].mxu0 %v10815
      %v11016 = vpop.f32.mrb[0].mxu0
      %v11017 = vadd.f32 0.0, %v11016
      %v11018 = vpop.f32.mrb[0].mxu0
      %11019 = vmatprep.mubr.f32.mxu0 0.0
      %11020 = vmatmul.mubr.f32.gmra.mrb[0].mxu0 %v10818
      %v11021 = vpop.f32.mrb[0].mxu0
      %v11022 = vadd.f32 0.0, %v11021
      %v11023 = vpop.f32.mrb[0].mxu0
      %11024 = vmatprep.mubr.f32.mxu0 0.0
      %11025 = vmatmul.mubr.f32.gmra.mrb[0].mxu0 %v10821
      %v11026 = vpop.f32.mrb[0].mxu0
      %v11027 = vadd.f32 0.0, %v11026
      %v11028 = vpop.f32.mrb[0].mxu0
      %11029 = vmatprep.mubr.f32.mxu0 0.0
      %11030 = vmatmul.mubr.f32.gmra.mrb[0].mxu0 %v10824
      %v11031 = vpop.f32.mrb[0].mxu0
      %v11032 = vadd.f32 0.0, %v11031
      %v11033 = vpop.f32.mrb[0].mxu0
      %11034 = vmatprep.mubr.f32.mxu0 0.0
      %11035 = vmatmul.mubr.f32.gmra.mrb[0].mxu0 %v10827
      %v11036 = vpop.f32.mrb[0].mxu0
      %v11037 = vadd.f32 0.0, %v11036
      %v11038 = vpop.f32.mrb[0].mxu0
      %11039 = vmatprep.mubr.f32.mxu0 0.0
      %11040 = vmatmul.mubr.f32.gmra.mrb[0].mxu0 %v10830
      %v11041 = vpop.f32.mrb[0].mxu0
      %v11042 = vadd.f32 0.0, %v11041
      %v11043 = vpop.f32.mrb[0].mxu0
      %11044 = vmatprep.mubr.f32.mxu0 0.0
      %11045 = vmatmul.mubr.f32.gmra.mrb[0].mxu0 %v10833
      %v11046 = vpop.f32.mrb[0].mxu0
      %v11047 = vadd.f32 0.0, %v11046
      %v11048 = vpop.f32.mrb[0].mxu0
      %11049 = vmatprep.mubr.f32.mxu0 0.0
      %11050 = vmatmul.mubr.f32.gmra.mrb[0].mxu0 %v10836
      %v11051 = vpop.f32.mrb[0].mxu0
      %v11052 = vadd.f32 0.0, %v11051
      %v11053 = vpop.f32.mrb[0].mxu0
      %11054 = vmatprep.mubr.f32.mxu0 0.0
      %11055 = vmatmul.mubr.f32.gmra.mrb[0].mxu0 %v10839
      %v11056 = vpop.f32.mrb[0].mxu0
      %v11057 = vadd.f32 0.0, %v11056
      %v11058 = vpop.f32.mrb[0].mxu0
      %11059 = vmatprep.mubr.f32.mxu0 0.0
      %11060 = vmatmul.mubr.f32.gmra.mrb[0].mxu0 %v10842
      %v11061 = vpop.f32.mrb[0].mxu0
      %v11062 = vadd.f32 0.0, %v11061
      %v11063 = vpop.f32.mrb[0].mxu0
      %11064 = vmatprep.mubr.f32.mxu0 0.0
      %11065 = vmatmul.mubr.f32.gmra.mrb[0].mxu0 %v10845
      %v11066 = vpop.f32.mrb[0].mxu0
      %v11067 = vadd.f32 0.0, %v11066
      %v11068 = vpop.f32.mrb[0].mxu0
      %11069 = vmatprep.mubr.f32.mxu0 0.0
      %11070 = vmatmul.mubr.f32.gmra.mrb[0].mxu0 %v10848
      %v11071 = vpop.f32.mrb[0].mxu0
      %v11072 = vadd.f32 0.0, %v11071
      %v11073 = vpop.f32.mrb[0].mxu0
      %11074 = vdwg.mxu0
      %v11075 = vadd.f32 %v10687, %v10917
      %v11076 = vadd.f32 %v10688, %v10922
      %v11077 = vadd.f32 %v10689, %v10927
      %v11078 = vadd.f32 %v10690, %v10932
      %v11079 = vadd.f32 %v10691, %v10937
      %v11080 = vadd.f32 %v10692, %v10942
      %v11081 = vadd.f32 %v10693, %v10947
      %v11082 = vadd.f32 %v10694, %v10952
      %v11083 = vadd.f32 %v10695, %v10957
      %v11084 = vadd.f32 %v10696, %v10962
      %v11085 = vadd.f32 %v10697, %v10967
      %v11086 = vadd.f32 %v10698, %v10972
      %v11087 = vadd.f32 %v10699, %v10977
      %v11088 = vadd.f32 %v10700, %v10982
      %v11089 = vadd.f32 %v10701, %v10987
      %v11090 = vadd.f32 %v10702, %v10992
      %v11091 = vadd.f32 %v10703, %v10997
      %v11092 = vadd.f32 %v10704, %v11002
      %v11093 = vadd.f32 %v10705, %v11007
      %v11094 = vadd.f32 %v10706, %v11012
      %v11095 = vadd.f32 %v10707, %v11017
      %v11096 = vadd.f32 %v10708, %v11022
      %v11097 = vadd.f32 %v10709, %v11027
      %v11098 = vadd.f32 %v10710, %v11032
      %v11099 = vadd.f32 %v10711, %v11037
      %v11100 = vadd.f32 %v10712, %v11042
      %v11101 = vadd.f32 %v10713, %v11047
      %v11102 = vadd.f32 %v10714, %v11052
      %v11103 = vadd.f32 %v10715, %v11057
      %v11104 = vadd.f32 %v10716, %v11062
      %v11105 = vadd.f32 %v10717, %v11067
      %v11106 = vadd.f32 %v10718, %v11072
      %v11107 = vld [vmem:[%s7] sm:$0x1]
      %v11109 = vlaneseq
      %v11110 = vshrl.u32 %v11109, 7
      %v11111 = vsub.s32 0, %v11110
      %v11112 = vrot.slane %v11107, %v11111
      %v11114 = vadd.f32 %v11075, %v11112
      %v11115 = vadd.f32 %v11076, %v11112
      %v11116 = vadd.f32 %v11077, %v11112
      %v11117 = vadd.f32 %v11078, %v11112
      %v11118 = vadd.f32 %v11079, %v11112
      %v11119 = vadd.f32 %v11080, %v11112
      %v11120 = vadd.f32 %v11081, %v11112
      %v11121 = vadd.f32 %v11082, %v11112
      %v11122 = vadd.f32 %v11083, %v11112
      %v11123 = vadd.f32 %v11084, %v11112
      %v11124 = vadd.f32 %v11085, %v11112
      %v11125 = vadd.f32 %v11086, %v11112
      %v11126 = vadd.f32 %v11087, %v11112
      %v11127 = vadd.f32 %v11088, %v11112
      %v11128 = vadd.f32 %v11089, %v11112
      %v11129 = vadd.f32 %v11090, %v11112
      %v11130 = vadd.f32 %v11091, %v11112
      %v11131 = vadd.f32 %v11092, %v11112
      %v11132 = vadd.f32 %v11093, %v11112
      %v11133 = vadd.f32 %v11094, %v11112
      %v11134 = vadd.f32 %v11095, %v11112
      %v11135 = vadd.f32 %v11096, %v11112
      %v11136 = vadd.f32 %v11097, %v11112
      %v11137 = vadd.f32 %v11098, %v11112
      %v11138 = vadd.f32 %v11099, %v11112
      %v11139 = vadd.f32 %v11100, %v11112
      %v11140 = vadd.f32 %v11101, %v11112
      %v11141 = vadd.f32 %v11102, %v11112
      %v11142 = vadd.f32 %v11103, %v11112
      %v11143 = vadd.f32 %v11104, %v11112
      %v11144 = vadd.f32 %v11105, %v11112
      %v11145 = vadd.f32 %v11106, %v11112
      %v11146 = vld [vmem:[%s4060 + $0x1] sm:$0xff]
      %v11147 = vld [vmem:[%s4060 + $0x9] sm:$0xff]
      %v11148 = vld [vmem:[%s4060 + $0x19] sm:$0xff]
      %v11149 = vld [vmem:[%s4060 + $0x21] sm:$0xff]
      %v11150 = vld [vmem:[%s4060 + $0x31] sm:$0xff]
      %v11151 = vld [vmem:[%s4060 + $0x39] sm:$0xff]
      %v11152 = vld [vmem:[%s4060 + $0x49] sm:$0xff]
      %v11153 = vld [vmem:[%s4060 + $0x51] sm:$0xff]
      %v11154 = vld [vmem:[%s4060 + $0x61] sm:$0xff]
      %v11155 = vld [vmem:[%s4060 + $0x69] sm:$0xff]
      %v11156 = vld [vmem:[%s4060 + $0x79] sm:$0xff]
      %v11157 = vld [vmem:[%s4060 + $0x81] sm:$0xff]
      %v11158 = vld [vmem:[%s4060 + $0x91] sm:$0xff]
      %v11159 = vld [vmem:[%s4060 + $0x99] sm:$0xff]
      %v11160 = vld [vmem:[%s4060 + $0xa9] sm:$0xff]
      %v11161 = vld [vmem:[%s4060 + $0xb1] sm:$0xff]
      %v11162 = vld [vmem:[%s4060 + $0xc1] sm:$0xff]
      %v11163 = vld [vmem:[%s4060 + $0xc9] sm:$0xff]
      %v11164 = vld [vmem:[%s4060 + $0xd9] sm:$0xff]
      %v11165 = vld [vmem:[%s4060 + $0xe1] sm:$0xff]
      %v11166 = vld [vmem:[%s4060 + $0xf1] sm:$0xff]
      %v11167 = vld [vmem:[%s4060 + $0xf9] sm:$0xff]
      %v11168 = vld [vmem:[%s4060 + $0x109] sm:$0xff]
      %v11169 = vld [vmem:[%s4060 + $0x111] sm:$0xff]
      %v11170 = vld [vmem:[%s4060 + $0x121] sm:$0xff]
      %v11171 = vld [vmem:[%s4060 + $0x129] sm:$0xff]
      %v11172 = vld [vmem:[%s4060 + $0x139] sm:$0xff]
      %v11173 = vld [vmem:[%s4060 + $0x141] sm:$0xff]
      %v11174 = vld [vmem:[%s4060 + $0x151] sm:$0xff]
      %v11175 = vld [vmem:[%s4060 + $0x159] sm:$0xff]
      %v11176 = vld [vmem:[%s4060 + $0x169] sm:$0xff]
      %v11177 = vld [vmem:[%s4060 + $0x171] sm:$0xff]
      %v11178 = vadd.f32 %v11114, %v11146
      %v11179 = vadd.f32 %v11115, %v11147
      %v11180 = vadd.f32 %v11116, %v11148
      %v11181 = vadd.f32 %v11117, %v11149
      %v11182 = vadd.f32 %v11118, %v11150
      %v11183 = vadd.f32 %v11119, %v11151
      %v11184 = vadd.f32 %v11120, %v11152
      %v11185 = vadd.f32 %v11121, %v11153
      %v11186 = vadd.f32 %v11122, %v11154
      %v11187 = vadd.f32 %v11123, %v11155
      %v11188 = vadd.f32 %v11124, %v11156
      %v11189 = vadd.f32 %v11125, %v11157
      %v11190 = vadd.f32 %v11126, %v11158
      %v11191 = vadd.f32 %v11127, %v11159
      %v11192 = vadd.f32 %v11128, %v11160
      %v11193 = vadd.f32 %v11129, %v11161
      %v11194 = vadd.f32 %v11130, %v11162
      %v11195 = vadd.f32 %v11131, %v11163
      %v11196 = vadd.f32 %v11132, %v11164
      %v11197 = vadd.f32 %v11133, %v11165
      %v11198 = vadd.f32 %v11134, %v11166
      %v11199 = vadd.f32 %v11135, %v11167
      %v11200 = vadd.f32 %v11136, %v11168
      %v11201 = vadd.f32 %v11137, %v11169
      %v11202 = vadd.f32 %v11138, %v11170
      %v11203 = vadd.f32 %v11139, %v11171
      %v11204 = vadd.f32 %v11140, %v11172
      %v11205 = vadd.f32 %v11141, %v11173
      %v11206 = vadd.f32 %v11142, %v11174
      %v11207 = vadd.f32 %v11143, %v11175
      %v11208 = vadd.f32 %v11144, %v11176
      %v11209 = vadd.f32 %v11145, %v11177
      %v11210 = vmax.f32 %v11178, 0.0
      %v11211 = vmax.f32 %v11179, 0.0
      %v11212 = vmax.f32 %v11180, 0.0
      %v11213 = vmax.f32 %v11181, 0.0
      %v11214 = vmax.f32 %v11182, 0.0
      %v11215 = vmax.f32 %v11183, 0.0
      %v11216 = vmax.f32 %v11184, 0.0
      %v11217 = vmax.f32 %v11185, 0.0
      %v11218 = vmax.f32 %v11186, 0.0
      %v11219 = vmax.f32 %v11187, 0.0
      %v11220 = vmax.f32 %v11188, 0.0
      %v11221 = vmax.f32 %v11189, 0.0
      %v11222 = vmax.f32 %v11190, 0.0
      %v11223 = vmax.f32 %v11191, 0.0
      %v11224 = vmax.f32 %v11192, 0.0
      %v11225 = vmax.f32 %v11193, 0.0
      %v11226 = vmax.f32 %v11194, 0.0
      %v11227 = vmax.f32 %v11195, 0.0
      %v11228 = vmax.f32 %v11196, 0.0
      %v11229 = vmax.f32 %v11197, 0.0
      %v11230 = vmax.f32 %v11198, 0.0
      %v11231 = vmax.f32 %v11199, 0.0
      %v11232 = vmax.f32 %v11200, 0.0
      %v11233 = vmax.f32 %v11201, 0.0
      %v11234 = vmax.f32 %v11202, 0.0
      %v11235 = vmax.f32 %v11203, 0.0
      %v11236 = vmax.f32 %v11204, 0.0
      %v11237 = vmax.f32 %v11205, 0.0
      %v11238 = vmax.f32 %v11206, 0.0
      %v11239 = vmax.f32 %v11207, 0.0
      %v11240 = vmax.f32 %v11208, 0.0
      %v11241 = vmax.f32 %v11209, 0.0
      %v11242 = vsel %vm4004, %v11210, 0.0
      %v11243 = vsel %vm4004, %v11211, 0.0
      %v11244 = vadd.f32 %v11242, %v11243
      %v11245 = vsel %vm4004, %v11212, 0.0
      %v11246 = vadd.f32 %v11244, %v11245
      %v11247 = vsel %vm4004, %v11213, 0.0
      %v11248 = vadd.f32 %v11246, %v11247
      %v11249 = vsel %vm4004, %v11214, 0.0
      %v11250 = vadd.f32 %v11248, %v11249
      %v11251 = vsel %vm4004, %v11215, 0.0
      %v11252 = vadd.f32 %v11250, %v11251
      %v11253 = vsel %vm4004, %v11216, 0.0
      %v11254 = vadd.f32 %v11252, %v11253
      %v11255 = vsel %vm4004, %v11217, 0.0
      %v11256 = vadd.f32 %v11254, %v11255
      %v11257 = vsel %vm4004, %v11218, 0.0
      %v11258 = vadd.f32 %v11256, %v11257
      %v11259 = vsel %vm4004, %v11219, 0.0
      %v11260 = vadd.f32 %v11258, %v11259
      %v11261 = vsel %vm4004, %v11220, 0.0
      %v11262 = vadd.f32 %v11260, %v11261
      %v11263 = vsel %vm4004, %v11221, 0.0
      %v11264 = vadd.f32 %v11262, %v11263
      %v11265 = vsel %vm4004, %v11222, 0.0
      %v11266 = vadd.f32 %v11264, %v11265
      %v11267 = vsel %vm4004, %v11223, 0.0
      %v11268 = vadd.f32 %v11266, %v11267
      %v11269 = vsel %vm4004, %v11224, 0.0
      %v11270 = vadd.f32 %v11268, %v11269
      %v11271 = vsel %vm4004, %v11225, 0.0
      %v11272 = vadd.f32 %v11270, %v11271
      %v11273 = vsel %vm4004, %v11226, 0.0
      %v11274 = vadd.f32 %v11272, %v11273
      %v11275 = vsel %vm4004, %v11227, 0.0
      %v11276 = vadd.f32 %v11274, %v11275
      %v11277 = vsel %vm4004, %v11228, 0.0
      %v11278 = vadd.f32 %v11276, %v11277
      %v11279 = vsel %vm4004, %v11229, 0.0
      %v11280 = vadd.f32 %v11278, %v11279
      %v11281 = vsel %vm4004, %v11230, 0.0
      %v11282 = vadd.f32 %v11280, %v11281
      %v11283 = vsel %vm4004, %v11231, 0.0
      %v11284 = vadd.f32 %v11282, %v11283
      %v11285 = vsel %vm4004, %v11232, 0.0
      %v11286 = vadd.f32 %v11284, %v11285
      %v11287 = vsel %vm4004, %v11233, 0.0
      %v11288 = vadd.f32 %v11286, %v11287
      %v11289 = vsel %vm4004, %v11234, 0.0
      %v11290 = vadd.f32 %v11288, %v11289
      %v11291 = vsel %vm4004, %v11235, 0.0
      %v11292 = vadd.f32 %v11290, %v11291
      %v11293 = vsel %vm4004, %v11236, 0.0
      %v11294 = vadd.f32 %v11292, %v11293
      %v11295 = vsel %vm4004, %v11237, 0.0
      %v11296 = vadd.f32 %v11294, %v11295
      %v11297 = vsel %vm4004, %v11238, 0.0
      %v11298 = vadd.f32 %v11296, %v11297
      %v11299 = vsel %vm4004, %v11239, 0.0
      %v11300 = vadd.f32 %v11298, %v11299
      %v11301 = vsel %vm4004, %v11240, 0.0
      %v11302 = vadd.f32 %v11300, %v11301
      %v11303 = vsel %vm4004, %v11241, 0.0
      %v11304 = vadd.f32 %v11302, %v11303
      %v11305 = vrot.slane %v11304, 4
      %v11306 = vadd.f32 %v11304, %v11305
      %v11307 = vrot.slane %v11306, 2
      %v11308 = vadd.f32 %v11306, %v11307
      %v11309 = vrot.slane %v11308, 1
      %v11310 = vadd.f32 %v11308, %v11309
      %v11311 = vmul.f32 %v11310, 0.00390625
      %v11312 = vld [vmem:[%s8] sm:$0xff]
      %v11313 = vld [vmem:[%s8 + $0x8] sm:$0xff]
      %v11314 = vld [vmem:[%s8 + $0x10] sm:$0xff]
      %v11315 = vld [vmem:[%s8 + $0x18] sm:$0xff]
      %v11316 = vld [vmem:[%s8 + $0x20] sm:$0xff]
      %v11317 = vld [vmem:[%s8 + $0x28] sm:$0xff]
      %v11318 = vld [vmem:[%s8 + $0x30] sm:$0xff]
      %v11319 = vld [vmem:[%s8 + $0x38] sm:$0xff]
      %v11320 = vld [vmem:[%s8 + $0x40] sm:$0xff]
      %v11321 = vld [vmem:[%s8 + $0x48] sm:$0xff]
      %v11322 = vld [vmem:[%s8 + $0x50] sm:$0xff]
      %v11323 = vld [vmem:[%s8 + $0x58] sm:$0xff]
      %v11324 = vld [vmem:[%s8 + $0x60] sm:$0xff]
      %v11325 = vld [vmem:[%s8 + $0x68] sm:$0xff]
      %v11326 = vld [vmem:[%s8 + $0x70] sm:$0xff]
      %v11327 = vld [vmem:[%s8 + $0x78] sm:$0xff]
      %v11328 = vld [vmem:[%s9] sm:$0xff]
      %v11330 = vlaneseq
      %v11331 = vshrl.u32 %v11330, 7
      %v11332 = vsub.s32 0, %v11331
      %v11333 = vrot.slane %v11328, %v11332
      %v11334 = vlaneseq
      %v11335 = vshrl.u32 %v11334, 7
      %v11336 = vsub.s32 1, %v11335
      %v11337 = vrot.slane %v11328, %v11336
      %v11338 = vlaneseq
      %v11339 = vshrl.u32 %v11338, 7
      %v11340 = vsub.s32 2, %v11339
      %v11341 = vrot.slane %v11328, %v11340
      %v11342 = vlaneseq
      %v11343 = vshrl.u32 %v11342, 7
      %v11344 = vsub.s32 3, %v11343
      %v11345 = vrot.slane %v11328, %v11344
      %v11346 = vlaneseq
      %v11347 = vshrl.u32 %v11346, 7
      %v11348 = vsub.s32 4, %v11347
      %v11349 = vrot.slane %v11328, %v11348
      %v11350 = vlaneseq
      %v11351 = vshrl.u32 %v11350, 7
      %v11352 = vsub.s32 5, %v11351
      %v11353 = vrot.slane %v11328, %v11352
      %v11354 = vlaneseq
      %v11355 = vshrl.u32 %v11354, 7
      %v11356 = vsub.s32 6, %v11355
      %v11357 = vrot.slane %v11328, %v11356
      %v11358 = vlaneseq
      %v11359 = vshrl.u32 %v11358, 7
      %v11360 = vsub.s32 7, %v11359
      %v11361 = vrot.slane %v11328, %v11360
      %v11371 = vsel %vm4004, %v11311, 0
      %11373 = vmatprep.subr.mxu0 %v11313
      %11374 = vmatpush1.msra.mxu0 %v11312
      %11375 = vmatprep.subr.mxu0 %v11321
      %11376 = vmatpush1.msra.mxu0 %v11320
      %11377 = vmatprep.subr.mxu0 0.0
      %11378 = vmatpush1.msra.mxu0 0.0
      %11379 = vmatprep.subr.mxu0 0.0
      %11380 = vmatpush1.msra.mxu0 0.0
      %11381 = vmatprep.subr.mxu0 0.0
      %11382 = vmatpush1.msra.mxu0 0.0
      %11383 = vmatprep.subr.mxu0 0.0
      %11384 = vmatpush1.msra.mxu0 0.0
      %11385 = vmatprep.subr.mxu0 0.0
      %11386 = vmatpush1.msra.mxu0 0.0
      %11387 = vmatprep.subr.mxu0 0.0
      %11388 = vmatpush1.msra.mxu0 0.0
      %11389 = vmatprep.subr.mxu0 0.0
      %11390 = vmatpush1.msra.mxu0 0.0
      %11391 = vmatprep.subr.mxu0 0.0
      %11392 = vmatpush1.msra.mxu0 0.0
      %11393 = vmatprep.subr.mxu0 0.0
      %11394 = vmatpush1.msra.mxu0 0.0
      %11395 = vmatprep.subr.mxu0 0.0
      %11396 = vmatpush1.msra.mxu0 0.0
      %11397 = vmatprep.subr.mxu0 0.0
      %11398 = vmatpush1.msra.mxu0 0.0
      %11399 = vmatprep.subr.mxu0 0.0
      %11400 = vmatpush1.msra.mxu0 0.0
      %11401 = vmatprep.subr.mxu0 0.0
      %11402 = vmatpush1.msra.mxu0 0.0
      %11403 = vmatprep.subr.mxu0 0.0
      %11404 = vmatpush1.msra.mxu0 0.0
      %11405 = vmatprep.subr.mxu0 0.0
      %11406 = vmatpush1.msra.mxu0 0.0
      %11407 = vmatprep.subr.mxu0 0.0
      %11408 = vmatpush1.msra.mxu0 0.0
      %11409 = vmatprep.subr.mxu0 0.0
      %11410 = vmatpush1.msra.mxu0 0.0
      %11411 = vmatprep.subr.mxu0 0.0
      %11412 = vmatpush1.msra.mxu0 0.0
      %11413 = vmatprep.subr.mxu0 0.0
      %11414 = vmatpush1.msra.mxu0 0.0
      %11415 = vmatprep.subr.mxu0 0.0
      %11416 = vmatpush1.msra.mxu0 0.0
      %11417 = vmatprep.subr.mxu0 0.0
      %11418 = vmatpush1.msra.mxu0 0.0
      %11419 = vmatprep.subr.mxu0 0.0
      %11420 = vmatpush1.msra.mxu0 0.0
      %11421 = vmatprep.subr.mxu0 0.0
      %11422 = vmatpush1.msra.mxu0 0.0
      %11423 = vmatprep.subr.mxu0 0.0
      %11424 = vmatpush1.msra.mxu0 0.0
      %11425 = vmatprep.subr.mxu0 0.0
      %11426 = vmatpush1.msra.mxu0 0.0
      %11427 = vmatprep.subr.mxu0 0.0
      %11428 = vmatpush1.msra.mxu0 0.0
      %11429 = vmatprep.subr.mxu0 0.0
      %11430 = vmatpush1.msra.mxu0 0.0
      %11431 = vmatprep.subr.mxu0 0.0
      %11432 = vmatpush1.msra.mxu0 0.0
      %11433 = vmatprep.subr.mxu0 0.0
      %11434 = vmatpush1.msra.mxu0 0.0
      %11435 = vmatprep.subr.mxu0 0.0
      %11436 = vmatpush1.msra.mxu0 0.0
      %11437 = vmatprep.mubr.f32.mxu0 0.0
      %11438 = vmatmul.mubr.f32.gmra.mrb[0].mxu0 %v11371
      %v11439 = vpop.f32.mrb[0].mxu0
      %v11440 = vadd.f32 %v11333, %v11439
      %v11441 = vpop.f32.mrb[0].mxu0
      %v11442 = vadd.f32 %v11337, %v11441
      %11443 = vdwg.mxu0
      %11444 = vmatprep.subr.mxu0 %v11315
      %11445 = vmatpush1.msra.mxu0 %v11314
      %11446 = vmatprep.subr.mxu0 %v11323
      %11447 = vmatpush1.msra.mxu0 %v11322
      %11448 = vmatprep.subr.mxu0 0.0
      %11449 = vmatpush1.msra.mxu0 0.0
      %11450 = vmatprep.subr.mxu0 0.0
      %11451 = vmatpush1.msra.mxu0 0.0
      %11452 = vmatprep.subr.mxu0 0.0
      %11453 = vmatpush1.msra.mxu0 0.0
      %11454 = vmatprep.subr.mxu0 0.0
      %11455 = vmatpush1.msra.mxu0 0.0
      %11456 = vmatprep.subr.mxu0 0.0
      %11457 = vmatpush1.msra.mxu0 0.0
      %11458 = vmatprep.subr.mxu0 0.0
      %11459 = vmatpush1.msra.mxu0 0.0
      %11460 = vmatprep.subr.mxu0 0.0
      %11461 = vmatpush1.msra.mxu0 0.0
      %11462 = vmatprep.subr.mxu0 0.0
      %11463 = vmatpush1.msra.mxu0 0.0
      %11464 = vmatprep.subr.mxu0 0.0
      %11465 = vmatpush1.msra.mxu0 0.0
      %11466 = vmatprep.subr.mxu0 0.0
      %11467 = vmatpush1.msra.mxu0 0.0
      %11468 = vmatprep.subr.mxu0 0.0
      %11469 = vmatpush1.msra.mxu0 0.0
      %11470 = vmatprep.subr.mxu0 0.0
      %11471 = vmatpush1.msra.mxu0 0.0
      %11472 = vmatprep.subr.mxu0 0.0
      %11473 = vmatpush1.msra.mxu0 0.0
      %11474 = vmatprep.subr.mxu0 0.0
      %11475 = vmatpush1.msra.mxu0 0.0
      %11476 = vmatprep.subr.mxu0 0.0
      %11477 = vmatpush1.msra.mxu0 0.0
      %11478 = vmatprep.subr.mxu0 0.0
      %11479 = vmatpush1.msra.mxu0 0.0
      %11480 = vmatprep.subr.mxu0 0.0
      %11481 = vmatpush1.msra.mxu0 0.0
      %11482 = vmatprep.subr.mxu0 0.0
      %11483 = vmatpush1.msra.mxu0 0.0
      %11484 = vmatprep.subr.mxu0 0.0
      %11485 = vmatpush1.msra.mxu0 0.0
      %11486 = vmatprep.subr.mxu0 0.0
      %11487 = vmatpush1.msra.mxu0 0.0
      %11488 = vmatprep.subr.mxu0 0.0
      %11489 = vmatpush1.msra.mxu0 0.0
      %11490 = vmatprep.subr.mxu0 0.0
      %11491 = vmatpush1.msra.mxu0 0.0
      %11492 = vmatprep.subr.mxu0 0.0
      %11493 = vmatpush1.msra.mxu0 0.0
      %11494 = vmatprep.subr.mxu0 0.0
      %11495 = vmatpush1.msra.mxu0 0.0
      %11496 = vmatprep.subr.mxu0 0.0
      %11497 = vmatpush1.msra.mxu0 0.0
      %11498 = vmatprep.subr.mxu0 0.0
      %11499 = vmatpush1.msra.mxu0 0.0
      %11500 = vmatprep.subr.mxu0 0.0
      %11501 = vmatpush1.msra.mxu0 0.0
      %11502 = vmatprep.subr.mxu0 0.0
      %11503 = vmatpush1.msra.mxu0 0.0
      %11504 = vmatprep.subr.mxu0 0.0
      %11505 = vmatpush1.msra.mxu0 0.0
      %11506 = vmatprep.subr.mxu0 0.0
      %11507 = vmatpush1.msra.mxu0 0.0
      %11508 = vmatprep.mubr.f32.mxu0 0.0
      %11509 = vmatmul.mubr.f32.gmra.mrb[0].mxu0 %v11371
      %v11510 = vpop.f32.mrb[0].mxu0
      %v11511 = vadd.f32 %v11341, %v11510
      %v11512 = vpop.f32.mrb[0].mxu0
      %v11513 = vadd.f32 %v11345, %v11512
      %11514 = vdwg.mxu0
      %11515 = vmatprep.subr.mxu0 %v11317
      %11516 = vmatpush1.msra.mxu0 %v11316
      %11517 = vmatprep.subr.mxu0 %v11325
      %11518 = vmatpush1.msra.mxu0 %v11324
      %11519 = vmatprep.subr.mxu0 0.0
      %11520 = vmatpush1.msra.mxu0 0.0
      %11521 = vmatprep.subr.mxu0 0.0
      %11522 = vmatpush1.msra.mxu0 0.0
      %11523 = vmatprep.subr.mxu0 0.0
      %11524 = vmatpush1.msra.mxu0 0.0
      %11525 = vmatprep.subr.mxu0 0.0
      %11526 = vmatpush1.msra.mxu0 0.0
      %11527 = vmatprep.subr.mxu0 0.0
      %11528 = vmatpush1.msra.mxu0 0.0
      %11529 = vmatprep.subr.mxu0 0.0
      %11530 = vmatpush1.msra.mxu0 0.0
      %11531 = vmatprep.subr.mxu0 0.0
      %11532 = vmatpush1.msra.mxu0 0.0
      %11533 = vmatprep.subr.mxu0 0.0
      %11534 = vmatpush1.msra.mxu0 0.0
      %11535 = vmatprep.subr.mxu0 0.0
      %11536 = vmatpush1.msra.mxu0 0.0
      %11537 = vmatprep.subr.mxu0 0.0
      %11538 = vmatpush1.msra.mxu0 0.0
      %11539 = vmatprep.subr.mxu0 0.0
      %11540 = vmatpush1.msra.mxu0 0.0
      %11541 = vmatprep.subr.mxu0 0.0
      %11542 = vmatpush1.msra.mxu0 0.0
      %11543 = vmatprep.subr.mxu0 0.0
      %11544 = vmatpush1.msra.mxu0 0.0
      %11545 = vmatprep.subr.mxu0 0.0
      %11546 = vmatpush1.msra.mxu0 0.0
      %11547 = vmatprep.subr.mxu0 0.0
      %11548 = vmatpush1.msra.mxu0 0.0
      %11549 = vmatprep.subr.mxu0 0.0
      %11550 = vmatpush1.msra.mxu0 0.0
      %11551 = vmatprep.subr.mxu0 0.0
      %11552 = vmatpush1.msra.mxu0 0.0
      %11553 = vmatprep.subr.mxu0 0.0
      %11554 = vmatpush1.msra.mxu0 0.0
      %11555 = vmatprep.subr.mxu0 0.0
      %11556 = vmatpush1.msra.mxu0 0.0
      %11557 = vmatprep.subr.mxu0 0.0
      %11558 = vmatpush1.msra.mxu0 0.0
      %11559 = vmatprep.subr.mxu0 0.0
      %11560 = vmatpush1.msra.mxu0 0.0
      %11561 = vmatprep.subr.mxu0 0.0
      %11562 = vmatpush1.msra.mxu0 0.0
      %11563 = vmatprep.subr.mxu0 0.0
      %11564 = vmatpush1.msra.mxu0 0.0
      %11565 = vmatprep.subr.mxu0 0.0
      %11566 = vmatpush1.msra.mxu0 0.0
      %11567 = vmatprep.subr.mxu0 0.0
      %11568 = vmatpush1.msra.mxu0 0.0
      %11569 = vmatprep.subr.mxu0 0.0
      %11570 = vmatpush1.msra.mxu0 0.0
      %11571 = vmatprep.subr.mxu0 0.0
      %11572 = vmatpush1.msra.mxu0 0.0
      %11573 = vmatprep.subr.mxu0 0.0
      %11574 = vmatpush1.msra.mxu0 0.0
      %11575 = vmatprep.subr.mxu0 0.0
      %11576 = vmatpush1.msra.mxu0 0.0
      %11577 = vmatprep.subr.mxu0 0.0
      %11578 = vmatpush1.msra.mxu0 0.0
      %11579 = vmatprep.mubr.f32.mxu0 0.0
      %11580 = vmatmul.mubr.f32.gmra.mrb[0].mxu0 %v11371
      %v11581 = vpop.f32.mrb[0].mxu0
      %v11582 = vadd.f32 %v11349, %v11581
      %v11583 = vpop.f32.mrb[0].mxu0
      %v11584 = vadd.f32 %v11353, %v11583
      %11585 = vdwg.mxu0
      %11586 = vmatprep.subr.mxu0 %v11319
      %11587 = vmatpush1.msra.mxu0 %v11318
      %11588 = vmatprep.subr.mxu0 %v11327
      %11589 = vmatpush1.msra.mxu0 %v11326
      %11590 = vmatprep.subr.mxu0 0.0
      %11591 = vmatpush1.msra.mxu0 0.0
      %11592 = vmatprep.subr.mxu0 0.0
      %11593 = vmatpush1.msra.mxu0 0.0
      %11594 = vmatprep.subr.mxu0 0.0
      %11595 = vmatpush1.msra.mxu0 0.0
      %11596 = vmatprep.subr.mxu0 0.0
      %11597 = vmatpush1.msra.mxu0 0.0
      %11598 = vmatprep.subr.mxu0 0.0
      %11599 = vmatpush1.msra.mxu0 0.0
      %11600 = vmatprep.subr.mxu0 0.0
      %11601 = vmatpush1.msra.mxu0 0.0
      %11602 = vmatprep.subr.mxu0 0.0
      %11603 = vmatpush1.msra.mxu0 0.0
      %11604 = vmatprep.subr.mxu0 0.0
      %11605 = vmatpush1.msra.mxu0 0.0
      %11606 = vmatprep.subr.mxu0 0.0
      %11607 = vmatpush1.msra.mxu0 0.0
      %11608 = vmatprep.subr.mxu0 0.0
      %11609 = vmatpush1.msra.mxu0 0.0
      %11610 = vmatprep.subr.mxu0 0.0
      %11611 = vmatpush1.msra.mxu0 0.0
      %11612 = vmatprep.subr.mxu0 0.0
      %11613 = vmatpush1.msra.mxu0 0.0
      %11614 = vmatprep.subr.mxu0 0.0
      %11615 = vmatpush1.msra.mxu0 0.0
      %11616 = vmatprep.subr.mxu0 0.0
      %11617 = vmatpush1.msra.mxu0 0.0
      %11618 = vmatprep.subr.mxu0 0.0
      %11619 = vmatpush1.msra.mxu0 0.0
      %11620 = vmatprep.subr.mxu0 0.0
      %11621 = vmatpush1.msra.mxu0 0.0
      %11622 = vmatprep.subr.mxu0 0.0
      %11623 = vmatpush1.msra.mxu0 0.0
      %11624 = vmatprep.subr.mxu0 0.0
      %11625 = vmatpush1.msra.mxu0 0.0
      %11626 = vmatprep.subr.mxu0 0.0
      %11627 = vmatpush1.msra.mxu0 0.0
      %11628 = vmatprep.subr.mxu0 0.0
      %11629 = vmatpush1.msra.mxu0 0.0
      %11630 = vmatprep.subr.mxu0 0.0
      %11631 = vmatpush1.msra.mxu0 0.0
      %11632 = vmatprep.subr.mxu0 0.0
      %11633 = vmatpush1.msra.mxu0 0.0
      %11634 = vmatprep.subr.mxu0 0.0
      %11635 = vmatpush1.msra.mxu0 0.0
      %11636 = vmatprep.subr.mxu0 0.0
      %11637 = vmatpush1.msra.mxu0 0.0
      %11638 = vmatprep.subr.mxu0 0.0
      %11639 = vmatpush1.msra.mxu0 0.0
      %11640 = vmatprep.subr.mxu0 0.0
      %11641 = vmatpush1.msra.mxu0 0.0
      %11642 = vmatprep.subr.mxu0 0.0
      %11643 = vmatpush1.msra.mxu0 0.0
      %11644 = vmatprep.subr.mxu0 0.0
      %11645 = vmatpush1.msra.mxu0 0.0
      %11646 = vmatprep.subr.mxu0 0.0
      %11647 = vmatpush1.msra.mxu0 0.0
      %11648 = vmatprep.subr.mxu0 0.0
      %11649 = vmatpush1.msra.mxu0 0.0
      %11650 = vmatprep.mubr.f32.mxu0 0.0
      %11651 = vmatmul.mubr.f32.gmra.mrb[0].mxu0 %v11371
      %v11652 = vpop.f32.mrb[0].mxu0
      %v11653 = vadd.f32 %v11357, %v11652
      %v11654 = vpop.f32.mrb[0].mxu0
      %v11655 = vadd.f32 %v11361, %v11654
      %11656 = vdwg.mxu0
      %v11665 = vcombine.low %v11440, %v11442
      %v11666 = vcombine.low %v11511, %v11513
      %v11667 = vcombine.low %v11582, %v11584
      %v11668 = vcombine.low %v11653, %v11655
      %v11670 = vunpack.c.l.s4 1966171168
      %v11671 = vunpack.c.0.s8 %v11670
      %v11672 = vlaneseq
      %v11673 = vshrl.u32 %v11672, 7
      %v11674 = vsub.s32 %v11671, %v11673
      %v11675 = vrot.slane %v11665, %v11674
      %v11677 = vunpack.c.l.s4 1966171168
      %v11678 = vunpack.c.0.s8 %v11677
      %v11679 = vlaneseq
      %v11680 = vshrl.u32 %v11679, 7
      %v11681 = vsub.s32 %v11678, %v11680
      %v11682 = vrot.slane %v11666, %v11681
      %v11684 = vunpack.c.l.s4 1966171168
      %v11685 = vunpack.c.0.s8 %v11684
      %v11686 = vlaneseq
      %v11687 = vshrl.u32 %v11686, 7
      %v11688 = vsub.s32 %v11685, %v11687
      %v11689 = vrot.slane %v11667, %v11688
      %v11691 = vunpack.c.l.s4 1966171168
      %v11692 = vunpack.c.0.s8 %v11691
      %v11693 = vlaneseq
      %v11694 = vshrl.u32 %v11693, 7
      %v11695 = vsub.s32 %v11692, %v11694
      %v11696 = vrot.slane %v11668, %v11695
      %v11697 = vcombine.low %v11675, %v11682
      %v11698 = vcombine.low %v11689, %v11696
      %v11700 = vunpack.c.l.s4 1966171168
      %v11701 = vunpack.c.0.s8 %v11700
      %v11702 = vlaneseq
      %v11703 = vshrl.u32 %v11702, 7
      %v11704 = vsub.s32 %v11701, %v11703
      %v11705 = vrot.slane %v11697, %v11704
      %v11707 = vunpack.c.l.s4 1966171168
      %v11708 = vunpack.c.0.s8 %v11707
      %v11709 = vlaneseq
      %v11710 = vshrl.u32 %v11709, 7
      %v11711 = vsub.s32 %v11708, %v11710
      %v11712 = vrot.slane %v11698, %v11711
      %v11713 = vcombine.low %v11705, %v11712
      %v11715 = vlaneseq
      %vm11716 = vcmp.ge.s32.totalorder %v11715, 0
      %vm11717 = vcmp.lt.s32.totalorder %v11715, 1000
      %vm11718 = vmand %vm11716, %vm11717
      %11719 = vst.msk [vmem:[%s357] sm:$0xff] %vm11718, %v11713
      %p11720 = scmp.lt.s32.totalorder %s21, 1
      %s11721 = scalar_select %p11720, %s21, 1
      %s11722 = smul.addr %s11721, 8
      %s11723 = scalar_lea.vmem %s10, %s11722
      // Predicated region
      $region61: #{tsipras_cnn_forward.1} parent=59 // pred_check
        %p11724 = pneg %p254
      $region62: #{tsipras_cnn_forward.1} parent=59 // pred_check_branch
        %11726 = sbr.rel (%p11724) target = $region64
      $region63: #{tsipras_cnn_forward.1} parent=59 // pred_region
        _
      $region64: #{tsipras_cnn_forward.1} parent=59 // pred_fallthru
        _
    $region60: #{tsipras_cnn_forward.1} parent=5 // pred_fallthru
      _
    %p11727 = scmp.le.s32.totalorder 2, %s16
    // Predicated region
    $region65: #{tsipras_cnn_forward.1} parent=5 // pred_check
      %p11728 = pneg %p11727
    $region66: #{tsipras_cnn_forward.1} parent=5 // pred_check_branch
      %11730 = sbr.rel (%p11728) target = $region68
    $region67: #{tsipras_cnn_forward.1} parent=5 // pred_region
      %s11731 = ssub.s32 %s16, 2
      // Predicated region
      $region69: #{tsipras_cnn_forward.1} parent=67 // pred_check
        %p11732 = pneg %p260
      $region70: #{tsipras_cnn_forward.1} parent=67 // pred_check_branch
        %11734 = sbr.rel (%p11732) target = $region72
      $region71: #{tsipras_cnn_forward.1} parent=67 // pred_region
        %p11735 = scmp.lt.s32.totalorder %s22, 1
        %s11736 = scalar_select %p11735, %s22, 1
        %s11737 = smul.addr %s11736, 8
        %s11738 = scalar_lea.vmem %s10, %s11737
      $region72: #{tsipras_cnn_forward.1} parent=67 // pred_fallthru
        _
    $region68: #{tsipras_cnn_forward.1} parent=5 // pred_fallthru
      _
  $region6: #{tsipras_cnn_forward.1} parent=0 // loop_footer
    %s20 = sadd.s32 1, %s16
  $region7: #{tsipras_cnn_forward.1} parent=0 // loop_footer_branch
    %15 = sbr.rel target = $region3
  $region8: #{tsipras_cnn_forward.1} parent=0 // loop_exit
    _

</llo_original>
